<compile_context>
chip_gen: v7x
topology: tpu7x:2x2x1
jax: 0.10.0
libtpu: 0.0.40
codegen_flags: <defaults>
</compile_context>

<pallas_src>
import functools
import math

import jax
import jax.numpy as jnp
from jax.experimental import pallas as pl
from jax.experimental.pallas import tpu as pltpu


# ----------------------------------------------------------------------------
# Model configuration (small, consistent with the module's forward semantics)
# ----------------------------------------------------------------------------
IMG = 16
PATCH = 4
IN_CHANS = 3
EMBED = 32
DEPTH = 2
N_HEADS = 4
MLP_RATIO = 4.0
N_CLASSES = 10
N_PATCHES = (IMG // PATCH) ** 2          # 16
TOKENS = N_PATCHES + 1                   # 17
HEAD_DIM = EMBED // N_HEADS              # 8
HIDDEN = int(EMBED * MLP_RATIO)          # 128
HEAD_PAD = 128                           # lane-dense padded classifier width
T_PAD = 32                               # tokens padded to a sublane-tile multiple
CPP = IN_CHANS * PATCH * PATCH           # 48
CPP_PAD = 64                             # patch vector padded to 64 lanes
LN_EPS = 1e-6                            # matches nn.LayerNorm(dim, eps=1e-06)


# ----------------------------------------------------------------------------
# Fused ViT kernel: one grid step == one tile of images, all in VMEM.
# ----------------------------------------------------------------------------
def _vit_fused_kernel(
    patches_ref,                                   # (b_tile, T_PAD, CPP_PAD) bf16
    pe_w_ref, tok_add_ref,                         # patch embed + (cls/pos/bias) fold
    ln1_g_ref, ln1_b_ref, qkv_w_ref, qkv_b_ref,    # per-block / per-head stacks
    proj_w_ref, proj_b_ref, ln2_g_ref, ln2_b_ref,
    fc1_w_ref, fc1_b_ref, fc2_w_ref, fc2_b_ref,
    lnf_g_ref, lnf_b_ref, head_w_ref, head_b_ref,  # final LN + padded head
    out_ref,                                       # (1, b_tile, HEAD_PAD) f32
    *, b_tile, t_pad, tokens, depth, n_heads, head_dim, eps):
    f32 = jnp.float32
    bf16 = jnp.bfloat16
    D = pe_w_ref.shape[-1]
    R = b_tile * t_pad

    def layernorm(v, g, b):
        mean = jnp.mean(v, axis=-1, keepdims=True)
        vc = v - mean
        var = jnp.mean(vc * vc, axis=-1, keepdims=True)
        return vc * jax.lax.rsqrt(var + eps) * g + b

    def mm(a, w):
        # bf16 MXU inputs, f32 accumulation
        return jnp.dot(a.astype(bf16), w, preferred_element_type=f32)

    def gelu(v):
        # exact (erf-based) GELU, matching torch.nn.GELU() default
        return 0.5 * v * (1.0 + jax.lax.erf(v * (1.0 / math.sqrt(2.0))))

    # ---- PatchEmbed + cls token + positional embedding ---------------------
    # Row 0 of each image is zero (cls slot), pad rows are zero; pe bias, cls
    # and pos are all folded into tok_add on the host, so pad rows stay 0.
    patches = patches_ref[...].reshape(R, patches_ref.shape[-1])        # (R, CPP_PAD)
    x = jnp.dot(patches, pe_w_ref[...], preferred_element_type=f32)     # (R, D)
    x = (x.reshape(b_tile, t_pad, D) + tok_add_ref[...]).reshape(R, D)

    # Additive key mask: padded token columns never receive attention weight.
    key_ids = jax.lax.broadcasted_iota(jnp.int32, (1, 1, t_pad), 2)
    key_bias = jnp.where(key_ids < tokens, 0.0, -1e30).astype(f32)

    # ---- Transformer blocks -------------------------------------------------
    for d in range(depth):
        # --- attention: LN1 -> per-head q/k/v matmuls -> softmax(qk^T)v -> proj
        h = layernorm(x, ln1_g_ref[d], ln1_b_ref[d])
        h_bf = h.astype(bf16)                                            # one cast, reused
        att = None
        for hh in range(n_heads):
            base = (d * n_heads + hh) * 3
            # per-head weights (host pre-split): no 8-lane slicing of qkv acts
            qh = jnp.dot(h_bf, qkv_w_ref[base + 0], preferred_element_type=f32) + qkv_b_ref[base + 0]
            kh = jnp.dot(h_bf, qkv_w_ref[base + 1], preferred_element_type=f32) + qkv_b_ref[base + 1]
            vh = jnp.dot(h_bf, qkv_w_ref[base + 2], preferred_element_type=f32) + qkv_b_ref[base + 2]
            q3 = qh.reshape(b_tile, t_pad, head_dim).astype(bf16)        # scale folded into W_q
            k3 = kh.reshape(b_tile, t_pad, head_dim).astype(bf16)
            v3 = vh.reshape(b_tile, t_pad, head_dim).astype(bf16)
            # per-image attention via batched dot_general (batch dim = image)
            s = jax.lax.dot_general(q3, k3, (((2,), (2,)), ((0,), (0,))),
                                    preferred_element_type=f32)          # (b, t, t)
            s = s + key_bias
            s = s - jnp.max(s, axis=-1, keepdims=True)
            prob = jnp.exp(s)
            prob = prob * pl.reciprocal(jnp.sum(prob, axis=-1, keepdims=True), approx=True)
            o3 = jax.lax.dot_general(prob.astype(bf16), v3, (((2,), (1,)), ((0,), (0,))),
                                     preferred_element_type=f32)         # (b, t, hd)
            # fold head-concat + proj into per-head partial matmuls:
            # concat(heads) @ W_proj == sum_h  oh @ W_proj[h*hd:(h+1)*hd, :]
            contrib = jnp.dot(o3.reshape(R, head_dim).astype(bf16),
                              proj_w_ref[d * n_heads + hh],
                              preferred_element_type=f32)                # (R, D)
            att = contrib if att is None else att + contrib
        x = x + att + proj_b_ref[d]                                      # residual fused

        # --- MLP sub-block: LN2 -> fc1 + GELU -> fc2, residual fused --------
        h2 = layernorm(x, ln2_g_ref[d], ln2_b_ref[d])
        hid = gelu(mm(h2, fc1_w_ref[d]) + fc1_b_ref[d])                  # (R, HIDDEN)
        x = x + mm(hid, fc2_w_ref[d]) + fc2_b_ref[d]

    # ---- final LN on the cls rows + lane-dense padded classifier head ------
    cls_tok = x.reshape(b_tile, t_pad, D)[:, 0, :]                       # (b_tile, D)
    cls_tok = layernorm(cls_tok, lnf_g_ref[...], lnf_b_ref[...])
    logits = mm(cls_tok, head_w_ref[...]) + head_b_ref[...]              # (b_tile, HEAD_PAD)
    out_ref[0] = logits.astype(out_ref.dtype)


# ----------------------------------------------------------------------------
# Parameter init (f32 master params, mirroring the torch module's structure)
# ----------------------------------------------------------------------------
def init_params(key):
    def dense(key, fan_in, fan_out):
        kw, kb = jax.random.split(key)
        w = jax.random.normal(kw, (fan_in, fan_out), jnp.float32) * 0.02
        b = jax.random.normal(kb, (fan_out,), jnp.float32) * 0.02
        return w, b

    keys = jax.random.split(key, 4 + DEPTH)
    params = {}
    # Patch embed: Conv2d(in_chans, embed, k=p, stride=p) == matmul over (C*p*p)
    params["pe_w"], params["pe_b"] = dense(keys[0], CPP, EMBED)
    params["cls"] = jax.random.normal(keys[1], (1, 1, EMBED), jnp.float32) * 0.02
    params["pos"] = jax.random.normal(keys[2], (1, TOKENS, EMBED), jnp.float32) * 0.02
    params["ln_g"] = jnp.ones((EMBED,), jnp.float32)
    params["ln_b"] = jnp.zeros((EMBED,), jnp.float32)
    params["head_w"], params["head_b"] = dense(keys[3], EMBED, N_CLASSES)

    blocks = []
    for d in range(DEPTH):
        bk = jax.random.split(keys[4 + d], 4)
        blk = {
            "ln1_g": jnp.ones((EMBED,), jnp.float32),
            "ln1_b": jnp.zeros((EMBED,), jnp.float32),
            "ln2_g": jnp.ones((EMBED,), jnp.float32),
            "ln2_b": jnp.zeros((EMBED,), jnp.float32),
        }
        blk["qkv_w"], blk["qkv_b"] = dense(bk[0], EMBED, 3 * EMBED)  # qkv_bias=True
        blk["proj_w"], blk["proj_b"] = dense(bk[1], EMBED, EMBED)
        blk["fc1_w"], blk["fc1_b"] = dense(bk[2], EMBED, HIDDEN)
        blk["fc2_w"], blk["fc2_b"] = dense(bk[3], HIDDEN, EMBED)
        blocks.append(blk)
    params["blocks"] = blocks
    return params


# ----------------------------------------------------------------------------
# Forward pass: layout glue in JAX, the whole network in one pallas_call.
# ----------------------------------------------------------------------------
def vit_forward(x, params, *, b_tile=None):
    B = x.shape[0]
    bf16 = jnp.bfloat16
    f32 = jnp.float32

    # Biggest image tile that still leaves >=2 grid steps (v7x has 2 TCs),
    # capped at 8 so the per-step output block is sublane-dense and the fused
    # activations stay far below the VMEM limit on every generation.
    if b_tile is None:
        b_tile = max(1, min(8, B // 2)) if B >= 2 else 1
    n_steps = -(-B // b_tile)
    b_pad = n_steps * b_tile

    # --- PatchEmbed input prep (pure layout): conv(k=p, stride=p) == per-patch
    #     flatten.  Row 0 per image is the (zero) cls slot; token rows padded
    #     to T_PAD, patch vector padded to CPP_PAD lanes; bf16 to halve the DMA.
    p = PATCH
    patches = x.reshape(B, IN_CHANS, IMG // p, p, IMG // p, p)
    patches = patches.transpose(0, 2, 4, 1, 3, 5).reshape(B, N_PATCHES, CPP)
    patches = jnp.pad(patches, ((0, b_pad - B), (1, T_PAD - TOKENS), (0, CPP_PAD - CPP)))
    patches = patches.astype(bf16)                                  # (b_pad, T_PAD, CPP_PAD)

    # Token additive term: row0 = cls + pos0 (no pe bias for the cls row),
    # rows 1..16 = pos + pe bias, pad rows = 0 so padded tokens stay zero.
    pos = params["pos"].reshape(TOKENS, EMBED)
    cls = params["cls"].reshape(EMBED)
    tok_add = jnp.zeros((T_PAD, EMBED), f32)
    tok_add = tok_add.at[0].set(cls + pos[0])
    tok_add = tok_add.at[1:TOKENS].set(pos[1:] + params["pe_b"][None, :])

    blocks = params["blocks"]
    stack = lambda name: jnp.stack([blk[name] for blk in blocks], axis=0)

    # Per-head q/k/v weights/biases (host pre-split), attention scale folded
    # into the q rows (free on the host, saves a (b,t,t) VPU mul per head).
    scale = HEAD_DIM ** (-0.5)
    qkv_w = stack("qkv_w").reshape(DEPTH, EMBED, 3, N_HEADS, HEAD_DIM)
    qkv_w = qkv_w.at[:, :, 0].multiply(scale)
    qkv_w = qkv_w.transpose(0, 3, 2, 1, 4).reshape(DEPTH * N_HEADS * 3, EMBED, HEAD_DIM)
    qkv_b = stack("qkv_b").reshape(DEPTH, 3, N_HEADS, HEAD_DIM)
    qkv_b = qkv_b.at[:, 0].multiply(scale)
    qkv_b = qkv_b.transpose(0, 2, 1, 3).reshape(DEPTH * N_HEADS * 3, 1, HEAD_DIM)

    weights = [
        jnp.pad(params["pe_w"], ((0, CPP_PAD - CPP), (0, 0))).astype(bf16),   # (CPP_PAD, D)
        tok_add,                                                              # (T_PAD, D)
        stack("ln1_g").reshape(DEPTH, 1, EMBED),
        stack("ln1_b").reshape(DEPTH, 1, EMBED),
        qkv_w.astype(bf16),                                                   # (D*H*3, D, hd)
        qkv_b,                                                                # (D*H*3, 1, hd)
        stack("proj_w").reshape(DEPTH * N_HEADS, HEAD_DIM, EMBED).astype(bf16),
        stack("proj_b").reshape(DEPTH, 1, EMBED),
        stack("ln2_g").reshape(DEPTH, 1, EMBED),
        stack("ln2_b").reshape(DEPTH, 1, EMBED),
        stack("fc1_w").astype(bf16),                                          # (depth, D, HID)
        stack("fc1_b").reshape(DEPTH, 1, HIDDEN),
        stack("fc2_w").astype(bf16),                                          # (depth, HID, D)
        stack("fc2_b").reshape(DEPTH, 1, EMBED),
        params["ln_g"].reshape(1, EMBED),
        params["ln_b"].reshape(1, EMBED),
        jnp.zeros((EMBED, HEAD_PAD), f32).at[:, :N_CLASSES].set(params["head_w"]).astype(bf16),
        jnp.zeros((1, HEAD_PAD), f32).at[0, :N_CLASSES].set(params["head_b"]),
    ]

    def rep_spec(arr):
        zeros = (0,) * arr.ndim
        return pl.BlockSpec(arr.shape, lambda i, _z=zeros: _z)

    in_specs = [pl.BlockSpec((b_tile, T_PAD, CPP_PAD), lambda i: (i, 0, 0))]
    in_specs += [rep_spec(w) for w in weights]

    # Advisory cost estimate so XLA schedules the fused call sensibly.
    per_img_flops = 2 * T_PAD * CPP_PAD * EMBED
    per_img_flops += DEPTH * (
        2 * T_PAD * EMBED * 3 * EMBED                      # per-head q/k/v
        + N_HEADS * 2 * 2 * T_PAD * T_PAD * HEAD_DIM       # qk^T and p@v
        + 2 * T_PAD * EMBED * EMBED                        # proj partials
        + 2 * 2 * T_PAD * EMBED * HIDDEN)                  # fc1 + fc2
    per_img_flops += 2 * EMBED * HEAD_PAD
    per_img_transc = DEPTH * (N_HEADS * T_PAD * T_PAD + T_PAD * HIDDEN)
    bytes_accessed = (int(patches.size) * patches.dtype.itemsize
                      + sum(int(w.size) * w.dtype.itemsize for w in weights)
                      + b_pad * HEAD_PAD * 4)
    cost = pl.CostEstimate(flops=int(b_pad * per_img_flops),
                           transcendentals=int(b_pad * per_img_transc),
                           bytes_accessed=int(bytes_accessed))

    out = pl.pallas_call(
        functools.partial(
            _vit_fused_kernel,
            b_tile=b_tile, t_pad=T_PAD, tokens=TOKENS, depth=DEPTH,
            n_heads=N_HEADS, head_dim=HEAD_DIM, eps=LN_EPS),
        out_shape=jax.ShapeDtypeStruct((n_steps, b_tile, HEAD_PAD), jnp.float32),
        grid=(n_steps,),
        in_specs=in_specs,
        out_specs=pl.BlockSpec((1, b_tile, HEAD_PAD), lambda i: (i, 0, 0)),
        compiler_params=pltpu.CompilerParams(
            dimension_semantics=("parallel",)),
        cost_estimate=cost,
    )(patches, *weights)

    return out.reshape(b_pad, HEAD_PAD)[:B, :N_CLASSES]                # (B, n_classes)


if __name__ == "__main__":
    key = jax.random.PRNGKey(0)
    k_param, k_input = jax.random.split(key)
    params = init_params(k_param)
    x = jax.random.normal(k_input, (2, IN_CHANS, IMG, IMG), jnp.float32)

    logits = jax.jit(vit_forward)(x, params)
    logits = jax.block_until_ready(logits)

    assert logits.shape == (2, N_CLASSES), logits.shape
    assert bool(jnp.all(jnp.isfinite(logits)))
    print("KERNEL_OK")
</pallas_src>

<mosaic_0001>
module attributes {stable_mosaic.version = 11 : i64} {
  func.func @_vit_fused_kernel(%arg0: i32, %arg1: memref<1x32x64xbf16, #tpu.memory_space<vmem>>, %arg2: memref<64x32xbf16, #tpu.memory_space<vmem>>, %arg3: memref<32x32xf32, #tpu.memory_space<vmem>>, %arg4: memref<2x1x32xf32, #tpu.memory_space<vmem>>, %arg5: memref<2x1x32xf32, #tpu.memory_space<vmem>>, %arg6: memref<24x32x8xbf16, #tpu.memory_space<vmem>>, %arg7: memref<24x1x8xf32, #tpu.memory_space<vmem>>, %arg8: memref<8x8x32xbf16, #tpu.memory_space<vmem>>, %arg9: memref<2x1x32xf32, #tpu.memory_space<vmem>>, %arg10: memref<2x1x32xf32, #tpu.memory_space<vmem>>, %arg11: memref<2x1x32xf32, #tpu.memory_space<vmem>>, %arg12: memref<2x32x128xbf16, #tpu.memory_space<vmem>>, %arg13: memref<2x1x128xf32, #tpu.memory_space<vmem>>, %arg14: memref<2x128x32xbf16, #tpu.memory_space<vmem>>, %arg15: memref<2x1x32xf32, #tpu.memory_space<vmem>>, %arg16: memref<1x32xf32, #tpu.memory_space<vmem>>, %arg17: memref<1x32xf32, #tpu.memory_space<vmem>>, %arg18: memref<32x128xbf16, #tpu.memory_space<vmem>>, %arg19: memref<1x128xf32, #tpu.memory_space<vmem>>, %arg20: memref<1x1x128xf32, #tpu.memory_space<vmem>>) attributes {dimension_semantics = [#tpu.dimension_semantics<parallel>], iteration_bounds = array<i64: 2>, scalar_prefetch = 0 : i64, scratch_operands = 0 : i64, tpu.core_type = #tpu.core_type<tc>, window_params = [{transform_indices = @transform_0, window_bounds = array<i64: 1, 32, 64>}, {pipeline_mode = #tpu.pipeline_mode<synchronous>, transform_indices = @transform_1, window_bounds = array<i64: 64, 32>}, {pipeline_mode = #tpu.pipeline_mode<synchronous>, transform_indices = @transform_2, window_bounds = array<i64: 32, 32>}, {pipeline_mode = #tpu.pipeline_mode<synchronous>, transform_indices = @transform_3, window_bounds = array<i64: 2, 1, 32>}, {pipeline_mode = #tpu.pipeline_mode<synchronous>, transform_indices = @transform_4, window_bounds = array<i64: 2, 1, 32>}, {pipeline_mode = #tpu.pipeline_mode<synchronous>, transform_indices = @transform_5, window_bounds = array<i64: 24, 32, 8>}, {pipeline_mode = #tpu.pipeline_mode<synchronous>, transform_indices = @transform_6, window_bounds = array<i64: 24, 1, 8>}, {pipeline_mode = #tpu.pipeline_mode<synchronous>, transform_indices = @transform_7, window_bounds = array<i64: 8, 8, 32>}, {pipeline_mode = #tpu.pipeline_mode<synchronous>, transform_indices = @transform_8, window_bounds = array<i64: 2, 1, 32>}, {pipeline_mode = #tpu.pipeline_mode<synchronous>, transform_indices = @transform_9, window_bounds = array<i64: 2, 1, 32>}, {pipeline_mode = #tpu.pipeline_mode<synchronous>, transform_indices = @transform_10, window_bounds = array<i64: 2, 1, 32>}, {pipeline_mode = #tpu.pipeline_mode<synchronous>, transform_indices = @transform_11, window_bounds = array<i64: 2, 32, 128>}, {pipeline_mode = #tpu.pipeline_mode<synchronous>, transform_indices = @transform_12, window_bounds = array<i64: 2, 1, 128>}, {pipeline_mode = #tpu.pipeline_mode<synchronous>, transform_indices = @transform_13, window_bounds = array<i64: 2, 128, 32>}, {pipeline_mode = #tpu.pipeline_mode<synchronous>, transform_indices = @transform_14, window_bounds = array<i64: 2, 1, 32>}, {pipeline_mode = #tpu.pipeline_mode<synchronous>, transform_indices = @transform_15, window_bounds = array<i64: 1, 32>}, {pipeline_mode = #tpu.pipeline_mode<synchronous>, transform_indices = @transform_16, window_bounds = array<i64: 1, 32>}, {pipeline_mode = #tpu.pipeline_mode<synchronous>, transform_indices = @transform_17, window_bounds = array<i64: 32, 128>}, {pipeline_mode = #tpu.pipeline_mode<synchronous>, transform_indices = @transform_18, window_bounds = array<i64: 1, 128>}, {transform_indices = @transform_19, window_bounds = array<i64: 1, 1, 128>}]} {
    %c0 = arith.constant 0 : index
    %c0_0 = arith.constant 0 : index
    %c0_1 = arith.constant 0 : index
    %0 = vector.load %arg1[%c0, %c0_0, %c0_1] : memref<1x32x64xbf16, #tpu.memory_space<vmem>>, vector<1x32x64xbf16>
    %1 = vector.shape_cast %0 : vector<1x32x64xbf16> to vector<32x64xbf16>
    %c0_2 = arith.constant 0 : index
    %c0_3 = arith.constant 0 : index
    %2 = vector.load %arg2[%c0_2, %c0_3] : memref<64x32xbf16, #tpu.memory_space<vmem>>, vector<64x32xbf16>
    %cst = arith.constant dense<0.000000e+00> : vector<32x32xf32>
    %3 = tpu.matmul %1, %2, %cst {dimension_numbers = #tpu.dot_dimension_numbers<[1], [0], [0], [1], [0, 0, 1, 1], [], []>} : vector<32x64xbf16>, vector<64x32xbf16>, vector<32x32xf32> -> vector<32x32xf32>
    %4 = vector.shape_cast %3 : vector<32x32xf32> to vector<1x32x32xf32>
    %c0_4 = arith.constant 0 : index
    %c0_5 = arith.constant 0 : index
    %5 = vector.load %arg3[%c0_4, %c0_5] : memref<32x32xf32, #tpu.memory_space<vmem>>, vector<32x32xf32>
    %6 = vector.shape_cast %5 : vector<32x32xf32> to vector<1x32x32xf32>
    %7 = arith.addf %4, %6 : vector<1x32x32xf32>
    %8 = vector.shape_cast %7 : vector<1x32x32xf32> to vector<32x32xf32>
    %9 = tpu.iota {dimensions = array<i32: 2>} : vector<1x1x32xi32>
    %c17_i32 = arith.constant 17 : i32
    %10 = vector.broadcast %c17_i32 : i32 to vector<1x1x32xi32>
    %11 = arith.cmpi slt, %9, %10 : vector<1x1x32xi32>
    %cst_6 = arith.constant 0.000000e+00 : f32
    %cst_7 = arith.constant -1.000000e+30 : f32
    %12 = vector.broadcast %cst_6 : f32 to vector<1x1x32xf32>
    %13 = vector.broadcast %cst_7 : f32 to vector<1x1x32xf32>
    %14 = arith.select %11, %12, %13 : vector<1x1x32xi1>, vector<1x1x32xf32>
    %c0_8 = arith.constant 0 : index
    %c0_9 = arith.constant 0 : index
    %c0_10 = arith.constant 0 : index
    %15 = vector.load %arg4[%c0_8, %c0_9, %c0_10] : memref<2x1x32xf32, #tpu.memory_space<vmem>>, vector<1x1x32xf32>
    %16 = vector.shape_cast %15 : vector<1x1x32xf32> to vector<1x32xf32>
    %c0_11 = arith.constant 0 : index
    %c0_12 = arith.constant 0 : index
    %c0_13 = arith.constant 0 : index
    %17 = vector.load %arg5[%c0_11, %c0_12, %c0_13] : memref<2x1x32xf32, #tpu.memory_space<vmem>>, vector<1x1x32xf32>
    %18 = vector.shape_cast %17 : vector<1x1x32xf32> to vector<1x32xf32>
    %cst_14 = arith.constant dense<0.000000e+00> : vector<32xf32>
    %19 = vector.multi_reduction <add>, %8, %cst_14 [1] : vector<32x32xf32> to vector<32xf32>
    %20 = vector.shape_cast %19 : vector<32xf32> to vector<32x1xf32>
    %cst_15 = arith.constant 3.200000e+01 : f32
    %21 = vector.broadcast %cst_15 : f32 to vector<32x1xf32>
    %22 = arith.divf %20, %21 : vector<32x1xf32>
    %23 = vector.broadcast %22 : vector<32x1xf32> to vector<32x32xf32>
    %24 = arith.subf %8, %23 : vector<32x32xf32>
    %25 = arith.mulf %24, %24 : vector<32x32xf32>
    %cst_16 = arith.constant dense<0.000000e+00> : vector<32xf32>
    %26 = vector.multi_reduction <add>, %25, %cst_16 [1] : vector<32x32xf32> to vector<32xf32>
    %27 = vector.shape_cast %26 : vector<32xf32> to vector<32x1xf32>
    %cst_17 = arith.constant 3.200000e+01 : f32
    %28 = vector.broadcast %cst_17 : f32 to vector<32x1xf32>
    %29 = arith.divf %27, %28 : vector<32x1xf32>
    %cst_18 = arith.constant 9.99999997E-7 : f32
    %30 = vector.broadcast %cst_18 : f32 to vector<32x1xf32>
    %31 = arith.addf %29, %30 : vector<32x1xf32>
    %32 = math.rsqrt %31 : vector<32x1xf32>
    %33 = vector.broadcast %32 : vector<32x1xf32> to vector<32x32xf32>
    %34 = arith.mulf %24, %33 : vector<32x32xf32>
    %35 = vector.broadcast %16 : vector<1x32xf32> to vector<32x32xf32>
    %36 = arith.mulf %34, %35 : vector<32x32xf32>
    %37 = vector.broadcast %18 : vector<1x32xf32> to vector<32x32xf32>
    %38 = arith.addf %36, %37 : vector<32x32xf32>
    %39 = arith.truncf %38 : vector<32x32xf32> to vector<32x32xbf16>
    %c0_19 = arith.constant 0 : index
    %c0_20 = arith.constant 0 : index
    %c0_21 = arith.constant 0 : index
    %40 = vector.load %arg6[%c0_19, %c0_20, %c0_21] : memref<24x32x8xbf16, #tpu.memory_space<vmem>>, vector<1x32x8xbf16>
    %41 = vector.shape_cast %40 : vector<1x32x8xbf16> to vector<32x8xbf16>
    %cst_22 = arith.constant dense<0.000000e+00> : vector<32x8xf32>
    %42 = tpu.matmul %39, %41, %cst_22 {dimension_numbers = #tpu.dot_dimension_numbers<[1], [0], [0], [1], [0, 0, 1, 1], [], []>} : vector<32x32xbf16>, vector<32x8xbf16>, vector<32x8xf32> -> vector<32x8xf32>
    %c0_23 = arith.constant 0 : index
    %c0_24 = arith.constant 0 : index
    %c0_25 = arith.constant 0 : index
    %43 = vector.load %arg7[%c0_23, %c0_24, %c0_25] : memref<24x1x8xf32, #tpu.memory_space<vmem>>, vector<1x1x8xf32>
    %44 = vector.shape_cast %43 : vector<1x1x8xf32> to vector<1x8xf32>
    %45 = vector.broadcast %44 : vector<1x8xf32> to vector<32x8xf32>
    %46 = arith.addf %42, %45 : vector<32x8xf32>
    %c1 = arith.constant 1 : index
    %c0_26 = arith.constant 0 : index
    %c0_27 = arith.constant 0 : index
    %47 = vector.load %arg6[%c1, %c0_26, %c0_27] : memref<24x32x8xbf16, #tpu.memory_space<vmem>>, vector<1x32x8xbf16>
    %48 = vector.shape_cast %47 : vector<1x32x8xbf16> to vector<32x8xbf16>
    %cst_28 = arith.constant dense<0.000000e+00> : vector<32x8xf32>
    %49 = tpu.matmul %39, %48, %cst_28 {dimension_numbers = #tpu.dot_dimension_numbers<[1], [0], [0], [1], [0, 0, 1, 1], [], []>} : vector<32x32xbf16>, vector<32x8xbf16>, vector<32x8xf32> -> vector<32x8xf32>
    %c1_29 = arith.constant 1 : index
    %c0_30 = arith.constant 0 : index
    %c0_31 = arith.constant 0 : index
    %50 = vector.load %arg7[%c1_29, %c0_30, %c0_31] : memref<24x1x8xf32, #tpu.memory_space<vmem>>, vector<1x1x8xf32>
    %51 = vector.shape_cast %50 : vector<1x1x8xf32> to vector<1x8xf32>
    %52 = vector.broadcast %51 : vector<1x8xf32> to vector<32x8xf32>
    %53 = arith.addf %49, %52 : vector<32x8xf32>
    %c2 = arith.constant 2 : index
    %c0_32 = arith.constant 0 : index
    %c0_33 = arith.constant 0 : index
    %54 = vector.load %arg6[%c2, %c0_32, %c0_33] : memref<24x32x8xbf16, #tpu.memory_space<vmem>>, vector<1x32x8xbf16>
    %55 = vector.shape_cast %54 : vector<1x32x8xbf16> to vector<32x8xbf16>
    %cst_34 = arith.constant dense<0.000000e+00> : vector<32x8xf32>
    %56 = tpu.matmul %39, %55, %cst_34 {dimension_numbers = #tpu.dot_dimension_numbers<[1], [0], [0], [1], [0, 0, 1, 1], [], []>} : vector<32x32xbf16>, vector<32x8xbf16>, vector<32x8xf32> -> vector<32x8xf32>
    %c2_35 = arith.constant 2 : index
    %c0_36 = arith.constant 0 : index
    %c0_37 = arith.constant 0 : index
    %57 = vector.load %arg7[%c2_35, %c0_36, %c0_37] : memref<24x1x8xf32, #tpu.memory_space<vmem>>, vector<1x1x8xf32>
    %58 = vector.shape_cast %57 : vector<1x1x8xf32> to vector<1x8xf32>
    %59 = vector.broadcast %58 : vector<1x8xf32> to vector<32x8xf32>
    %60 = arith.addf %56, %59 : vector<32x8xf32>
    %61 = vector.shape_cast %46 : vector<32x8xf32> to vector<1x32x8xf32>
    %62 = arith.truncf %61 : vector<1x32x8xf32> to vector<1x32x8xbf16>
    %63 = vector.shape_cast %53 : vector<32x8xf32> to vector<1x32x8xf32>
    %64 = arith.truncf %63 : vector<1x32x8xf32> to vector<1x32x8xbf16>
    %65 = vector.shape_cast %60 : vector<32x8xf32> to vector<1x32x8xf32>
    %66 = arith.truncf %65 : vector<1x32x8xf32> to vector<1x32x8xbf16>
    %cst_38 = arith.constant dense<0.000000e+00> : vector<1x32x32xf32>
    %67 = tpu.matmul %62, %64, %cst_38 {dimension_numbers = #tpu.dot_dimension_numbers<[2], [2], [1], [1], [0, 0, 0, 1, 1, 1], [0], [0]>} : vector<1x32x8xbf16>, vector<1x32x8xbf16>, vector<1x32x32xf32> -> vector<1x32x32xf32>
    %68 = vector.broadcast %14 : vector<1x1x32xf32> to vector<1x32x32xf32>
    %69 = arith.addf %67, %68 : vector<1x32x32xf32>
    %cst_39 = arith.constant dense<0xFF800000> : vector<1x32xf32>
    %70 = vector.multi_reduction <maximumf>, %69, %cst_39 [2] : vector<1x32x32xf32> to vector<1x32xf32>
    %71 = vector.shape_cast %70 : vector<1x32xf32> to vector<1x32x1xf32>
    %72 = vector.broadcast %71 : vector<1x32x1xf32> to vector<1x32x32xf32>
    %73 = arith.subf %69, %72 : vector<1x32x32xf32>
    %74 = math.exp %73 : vector<1x32x32xf32>
    %cst_40 = arith.constant dense<0.000000e+00> : vector<1x32xf32>
    %75 = vector.multi_reduction <add>, %74, %cst_40 [2] : vector<1x32x32xf32> to vector<1x32xf32>
    %76 = vector.shape_cast %75 : vector<1x32xf32> to vector<1x32x1xf32>
    %77 = tpu.reciprocal %76 {approx = true} : vector<1x32x1xf32> -> vector<1x32x1xf32>
    %78 = vector.broadcast %77 : vector<1x32x1xf32> to vector<1x32x32xf32>
    %79 = arith.mulf %74, %78 : vector<1x32x32xf32>
    %80 = arith.truncf %79 : vector<1x32x32xf32> to vector<1x32x32xbf16>
    %cst_41 = arith.constant dense<0.000000e+00> : vector<1x32x8xf32>
    %81 = tpu.matmul %80, %66, %cst_41 {dimension_numbers = #tpu.dot_dimension_numbers<[2], [1], [1], [2], [0, 0, 0, 1, 1, 2], [0], [0]>} : vector<1x32x32xbf16>, vector<1x32x8xbf16>, vector<1x32x8xf32> -> vector<1x32x8xf32>
    %82 = vector.shape_cast %81 : vector<1x32x8xf32> to vector<32x8xf32>
    %83 = arith.truncf %82 : vector<32x8xf32> to vector<32x8xbf16>
    %c0_42 = arith.constant 0 : index
    %c0_43 = arith.constant 0 : index
    %c0_44 = arith.constant 0 : index
    %84 = vector.load %arg8[%c0_42, %c0_43, %c0_44] : memref<8x8x32xbf16, #tpu.memory_space<vmem>>, vector<1x8x32xbf16>
    %85 = vector.shape_cast %84 : vector<1x8x32xbf16> to vector<8x32xbf16>
    %cst_45 = arith.constant dense<0.000000e+00> : vector<32x32xf32>
    %86 = tpu.matmul %83, %85, %cst_45 {dimension_numbers = #tpu.dot_dimension_numbers<[1], [0], [0], [1], [0, 0, 1, 1], [], []>} : vector<32x8xbf16>, vector<8x32xbf16>, vector<32x32xf32> -> vector<32x32xf32>
    %c3 = arith.constant 3 : index
    %c0_46 = arith.constant 0 : index
    %c0_47 = arith.constant 0 : index
    %87 = vector.load %arg6[%c3, %c0_46, %c0_47] : memref<24x32x8xbf16, #tpu.memory_space<vmem>>, vector<1x32x8xbf16>
    %88 = vector.shape_cast %87 : vector<1x32x8xbf16> to vector<32x8xbf16>
    %cst_48 = arith.constant dense<0.000000e+00> : vector<32x8xf32>
    %89 = tpu.matmul %39, %88, %cst_48 {dimension_numbers = #tpu.dot_dimension_numbers<[1], [0], [0], [1], [0, 0, 1, 1], [], []>} : vector<32x32xbf16>, vector<32x8xbf16>, vector<32x8xf32> -> vector<32x8xf32>
    %c3_49 = arith.constant 3 : index
    %c0_50 = arith.constant 0 : index
    %c0_51 = arith.constant 0 : index
    %90 = vector.load %arg7[%c3_49, %c0_50, %c0_51] : memref<24x1x8xf32, #tpu.memory_space<vmem>>, vector<1x1x8xf32>
    %91 = vector.shape_cast %90 : vector<1x1x8xf32> to vector<1x8xf32>
    %92 = vector.broadcast %91 : vector<1x8xf32> to vector<32x8xf32>
    %93 = arith.addf %89, %92 : vector<32x8xf32>
    %c4 = arith.constant 4 : index
    %c0_52 = arith.constant 0 : index
    %c0_53 = arith.constant 0 : index
    %94 = vector.load %arg6[%c4, %c0_52, %c0_53] : memref<24x32x8xbf16, #tpu.memory_space<vmem>>, vector<1x32x8xbf16>
    %95 = vector.shape_cast %94 : vector<1x32x8xbf16> to vector<32x8xbf16>
    %cst_54 = arith.constant dense<0.000000e+00> : vector<32x8xf32>
    %96 = tpu.matmul %39, %95, %cst_54 {dimension_numbers = #tpu.dot_dimension_numbers<[1], [0], [0], [1], [0, 0, 1, 1], [], []>} : vector<32x32xbf16>, vector<32x8xbf16>, vector<32x8xf32> -> vector<32x8xf32>
    %c4_55 = arith.constant 4 : index
    %c0_56 = arith.constant 0 : index
    %c0_57 = arith.constant 0 : index
    %97 = vector.load %arg7[%c4_55, %c0_56, %c0_57] : memref<24x1x8xf32, #tpu.memory_space<vmem>>, vector<1x1x8xf32>
    %98 = vector.shape_cast %97 : vector<1x1x8xf32> to vector<1x8xf32>
    %99 = vector.broadcast %98 : vector<1x8xf32> to vector<32x8xf32>
    %100 = arith.addf %96, %99 : vector<32x8xf32>
    %c5 = arith.constant 5 : index
    %c0_58 = arith.constant 0 : index
    %c0_59 = arith.constant 0 : index
    %101 = vector.load %arg6[%c5, %c0_58, %c0_59] : memref<24x32x8xbf16, #tpu.memory_space<vmem>>, vector<1x32x8xbf16>
    %102 = vector.shape_cast %101 : vector<1x32x8xbf16> to vector<32x8xbf16>
    %cst_60 = arith.constant dense<0.000000e+00> : vector<32x8xf32>
    %103 = tpu.matmul %39, %102, %cst_60 {dimension_numbers = #tpu.dot_dimension_numbers<[1], [0], [0], [1], [0, 0, 1, 1], [], []>} : vector<32x32xbf16>, vector<32x8xbf16>, vector<32x8xf32> -> vector<32x8xf32>
    %c5_61 = arith.constant 5 : index
    %c0_62 = arith.constant 0 : index
    %c0_63 = arith.constant 0 : index
    %104 = vector.load %arg7[%c5_61, %c0_62, %c0_63] : memref<24x1x8xf32, #tpu.memory_space<vmem>>, vector<1x1x8xf32>
    %105 = vector.shape_cast %104 : vector<1x1x8xf32> to vector<1x8xf32>
    %106 = vector.broadcast %105 : vector<1x8xf32> to vector<32x8xf32>
    %107 = arith.addf %103, %106 : vector<32x8xf32>
    %108 = vector.shape_cast %93 : vector<32x8xf32> to vector<1x32x8xf32>
    %109 = arith.truncf %108 : vector<1x32x8xf32> to vector<1x32x8xbf16>
    %110 = vector.shape_cast %100 : vector<32x8xf32> to vector<1x32x8xf32>
    %111 = arith.truncf %110 : vector<1x32x8xf32> to vector<1x32x8xbf16>
    %112 = vector.shape_cast %107 : vector<32x8xf32> to vector<1x32x8xf32>
    %113 = arith.truncf %112 : vector<1x32x8xf32> to vector<1x32x8xbf16>
    %cst_64 = arith.constant dense<0.000000e+00> : vector<1x32x32xf32>
    %114 = tpu.matmul %109, %111, %cst_64 {dimension_numbers = #tpu.dot_dimension_numbers<[2], [2], [1], [1], [0, 0, 0, 1, 1, 1], [0], [0]>} : vector<1x32x8xbf16>, vector<1x32x8xbf16>, vector<1x32x32xf32> -> vector<1x32x32xf32>
    %115 = vector.broadcast %14 : vector<1x1x32xf32> to vector<1x32x32xf32>
    %116 = arith.addf %114, %115 : vector<1x32x32xf32>
    %cst_65 = arith.constant dense<0xFF800000> : vector<1x32xf32>
    %117 = vector.multi_reduction <maximumf>, %116, %cst_65 [2] : vector<1x32x32xf32> to vector<1x32xf32>
    %118 = vector.shape_cast %117 : vector<1x32xf32> to vector<1x32x1xf32>
    %119 = vector.broadcast %118 : vector<1x32x1xf32> to vector<1x32x32xf32>
    %120 = arith.subf %116, %119 : vector<1x32x32xf32>
    %121 = math.exp %120 : vector<1x32x32xf32>
    %cst_66 = arith.constant dense<0.000000e+00> : vector<1x32xf32>
    %122 = vector.multi_reduction <add>, %121, %cst_66 [2] : vector<1x32x32xf32> to vector<1x32xf32>
    %123 = vector.shape_cast %122 : vector<1x32xf32> to vector<1x32x1xf32>
    %124 = tpu.reciprocal %123 {approx = true} : vector<1x32x1xf32> -> vector<1x32x1xf32>
    %125 = vector.broadcast %124 : vector<1x32x1xf32> to vector<1x32x32xf32>
    %126 = arith.mulf %121, %125 : vector<1x32x32xf32>
    %127 = arith.truncf %126 : vector<1x32x32xf32> to vector<1x32x32xbf16>
    %cst_67 = arith.constant dense<0.000000e+00> : vector<1x32x8xf32>
    %128 = tpu.matmul %127, %113, %cst_67 {dimension_numbers = #tpu.dot_dimension_numbers<[2], [1], [1], [2], [0, 0, 0, 1, 1, 2], [0], [0]>} : vector<1x32x32xbf16>, vector<1x32x8xbf16>, vector<1x32x8xf32> -> vector<1x32x8xf32>
    %129 = vector.shape_cast %128 : vector<1x32x8xf32> to vector<32x8xf32>
    %130 = arith.truncf %129 : vector<32x8xf32> to vector<32x8xbf16>
    %c1_68 = arith.constant 1 : index
    %c0_69 = arith.constant 0 : index
    %c0_70 = arith.constant 0 : index
    %131 = vector.load %arg8[%c1_68, %c0_69, %c0_70] : memref<8x8x32xbf16, #tpu.memory_space<vmem>>, vector<1x8x32xbf16>
    %132 = vector.shape_cast %131 : vector<1x8x32xbf16> to vector<8x32xbf16>
    %cst_71 = arith.constant dense<0.000000e+00> : vector<32x32xf32>
    %133 = tpu.matmul %130, %132, %cst_71 {dimension_numbers = #tpu.dot_dimension_numbers<[1], [0], [0], [1], [0, 0, 1, 1], [], []>} : vector<32x8xbf16>, vector<8x32xbf16>, vector<32x32xf32> -> vector<32x32xf32>
    %134 = arith.addf %86, %133 : vector<32x32xf32>
    %c6 = arith.constant 6 : index
    %c0_72 = arith.constant 0 : index
    %c0_73 = arith.constant 0 : index
    %135 = vector.load %arg6[%c6, %c0_72, %c0_73] : memref<24x32x8xbf16, #tpu.memory_space<vmem>>, vector<1x32x8xbf16>
    %136 = vector.shape_cast %135 : vector<1x32x8xbf16> to vector<32x8xbf16>
    %cst_74 = arith.constant dense<0.000000e+00> : vector<32x8xf32>
    %137 = tpu.matmul %39, %136, %cst_74 {dimension_numbers = #tpu.dot_dimension_numbers<[1], [0], [0], [1], [0, 0, 1, 1], [], []>} : vector<32x32xbf16>, vector<32x8xbf16>, vector<32x8xf32> -> vector<32x8xf32>
    %c6_75 = arith.constant 6 : index
    %c0_76 = arith.constant 0 : index
    %c0_77 = arith.constant 0 : index
    %138 = vector.load %arg7[%c6_75, %c0_76, %c0_77] : memref<24x1x8xf32, #tpu.memory_space<vmem>>, vector<1x1x8xf32>
    %139 = vector.shape_cast %138 : vector<1x1x8xf32> to vector<1x8xf32>
    %140 = vector.broadcast %139 : vector<1x8xf32> to vector<32x8xf32>
    %141 = arith.addf %137, %140 : vector<32x8xf32>
    %c7 = arith.constant 7 : index
    %c0_78 = arith.constant 0 : index
    %c0_79 = arith.constant 0 : index
    %142 = vector.load %arg6[%c7, %c0_78, %c0_79] : memref<24x32x8xbf16, #tpu.memory_space<vmem>>, vector<1x32x8xbf16>
    %143 = vector.shape_cast %142 : vector<1x32x8xbf16> to vector<32x8xbf16>
    %cst_80 = arith.constant dense<0.000000e+00> : vector<32x8xf32>
    %144 = tpu.matmul %39, %143, %cst_80 {dimension_numbers = #tpu.dot_dimension_numbers<[1], [0], [0], [1], [0, 0, 1, 1], [], []>} : vector<32x32xbf16>, vector<32x8xbf16>, vector<32x8xf32> -> vector<32x8xf32>
    %c7_81 = arith.constant 7 : index
    %c0_82 = arith.constant 0 : index
    %c0_83 = arith.constant 0 : index
    %145 = vector.load %arg7[%c7_81, %c0_82, %c0_83] : memref<24x1x8xf32, #tpu.memory_space<vmem>>, vector<1x1x8xf32>
    %146 = vector.shape_cast %145 : vector<1x1x8xf32> to vector<1x8xf32>
    %147 = vector.broadcast %146 : vector<1x8xf32> to vector<32x8xf32>
    %148 = arith.addf %144, %147 : vector<32x8xf32>
    %c8 = arith.constant 8 : index
    %c0_84 = arith.constant 0 : index
    %c0_85 = arith.constant 0 : index
    %149 = vector.load %arg6[%c8, %c0_84, %c0_85] : memref<24x32x8xbf16, #tpu.memory_space<vmem>>, vector<1x32x8xbf16>
    %150 = vector.shape_cast %149 : vector<1x32x8xbf16> to vector<32x8xbf16>
    %cst_86 = arith.constant dense<0.000000e+00> : vector<32x8xf32>
    %151 = tpu.matmul %39, %150, %cst_86 {dimension_numbers = #tpu.dot_dimension_numbers<[1], [0], [0], [1], [0, 0, 1, 1], [], []>} : vector<32x32xbf16>, vector<32x8xbf16>, vector<32x8xf32> -> vector<32x8xf32>
    %c8_87 = arith.constant 8 : index
    %c0_88 = arith.constant 0 : index
    %c0_89 = arith.constant 0 : index
    %152 = vector.load %arg7[%c8_87, %c0_88, %c0_89] : memref<24x1x8xf32, #tpu.memory_space<vmem>>, vector<1x1x8xf32>
    %153 = vector.shape_cast %152 : vector<1x1x8xf32> to vector<1x8xf32>
    %154 = vector.broadcast %153 : vector<1x8xf32> to vector<32x8xf32>
    %155 = arith.addf %151, %154 : vector<32x8xf32>
    %156 = vector.shape_cast %141 : vector<32x8xf32> to vector<1x32x8xf32>
    %157 = arith.truncf %156 : vector<1x32x8xf32> to vector<1x32x8xbf16>
    %158 = vector.shape_cast %148 : vector<32x8xf32> to vector<1x32x8xf32>
    %159 = arith.truncf %158 : vector<1x32x8xf32> to vector<1x32x8xbf16>
    %160 = vector.shape_cast %155 : vector<32x8xf32> to vector<1x32x8xf32>
    %161 = arith.truncf %160 : vector<1x32x8xf32> to vector<1x32x8xbf16>
    %cst_90 = arith.constant dense<0.000000e+00> : vector<1x32x32xf32>
    %162 = tpu.matmul %157, %159, %cst_90 {dimension_numbers = #tpu.dot_dimension_numbers<[2], [2], [1], [1], [0, 0, 0, 1, 1, 1], [0], [0]>} : vector<1x32x8xbf16>, vector<1x32x8xbf16>, vector<1x32x32xf32> -> vector<1x32x32xf32>
    %163 = vector.broadcast %14 : vector<1x1x32xf32> to vector<1x32x32xf32>
    %164 = arith.addf %162, %163 : vector<1x32x32xf32>
    %cst_91 = arith.constant dense<0xFF800000> : vector<1x32xf32>
    %165 = vector.multi_reduction <maximumf>, %164, %cst_91 [2] : vector<1x32x32xf32> to vector<1x32xf32>
    %166 = vector.shape_cast %165 : vector<1x32xf32> to vector<1x32x1xf32>
    %167 = vector.broadcast %166 : vector<1x32x1xf32> to vector<1x32x32xf32>
    %168 = arith.subf %164, %167 : vector<1x32x32xf32>
    %169 = math.exp %168 : vector<1x32x32xf32>
    %cst_92 = arith.constant dense<0.000000e+00> : vector<1x32xf32>
    %170 = vector.multi_reduction <add>, %169, %cst_92 [2] : vector<1x32x32xf32> to vector<1x32xf32>
    %171 = vector.shape_cast %170 : vector<1x32xf32> to vector<1x32x1xf32>
    %172 = tpu.reciprocal %171 {approx = true} : vector<1x32x1xf32> -> vector<1x32x1xf32>
    %173 = vector.broadcast %172 : vector<1x32x1xf32> to vector<1x32x32xf32>
    %174 = arith.mulf %169, %173 : vector<1x32x32xf32>
    %175 = arith.truncf %174 : vector<1x32x32xf32> to vector<1x32x32xbf16>
    %cst_93 = arith.constant dense<0.000000e+00> : vector<1x32x8xf32>
    %176 = tpu.matmul %175, %161, %cst_93 {dimension_numbers = #tpu.dot_dimension_numbers<[2], [1], [1], [2], [0, 0, 0, 1, 1, 2], [0], [0]>} : vector<1x32x32xbf16>, vector<1x32x8xbf16>, vector<1x32x8xf32> -> vector<1x32x8xf32>
    %177 = vector.shape_cast %176 : vector<1x32x8xf32> to vector<32x8xf32>
    %178 = arith.truncf %177 : vector<32x8xf32> to vector<32x8xbf16>
    %c2_94 = arith.constant 2 : index
    %c0_95 = arith.constant 0 : index
    %c0_96 = arith.constant 0 : index
    %179 = vector.load %arg8[%c2_94, %c0_95, %c0_96] : memref<8x8x32xbf16, #tpu.memory_space<vmem>>, vector<1x8x32xbf16>
    %180 = vector.shape_cast %179 : vector<1x8x32xbf16> to vector<8x32xbf16>
    %cst_97 = arith.constant dense<0.000000e+00> : vector<32x32xf32>
    %181 = tpu.matmul %178, %180, %cst_97 {dimension_numbers = #tpu.dot_dimension_numbers<[1], [0], [0], [1], [0, 0, 1, 1], [], []>} : vector<32x8xbf16>, vector<8x32xbf16>, vector<32x32xf32> -> vector<32x32xf32>
    %182 = arith.addf %134, %181 : vector<32x32xf32>
    %c9 = arith.constant 9 : index
    %c0_98 = arith.constant 0 : index
    %c0_99 = arith.constant 0 : index
    %183 = vector.load %arg6[%c9, %c0_98, %c0_99] : memref<24x32x8xbf16, #tpu.memory_space<vmem>>, vector<1x32x8xbf16>
    %184 = vector.shape_cast %183 : vector<1x32x8xbf16> to vector<32x8xbf16>
    %cst_100 = arith.constant dense<0.000000e+00> : vector<32x8xf32>
    %185 = tpu.matmul %39, %184, %cst_100 {dimension_numbers = #tpu.dot_dimension_numbers<[1], [0], [0], [1], [0, 0, 1, 1], [], []>} : vector<32x32xbf16>, vector<32x8xbf16>, vector<32x8xf32> -> vector<32x8xf32>
    %c9_101 = arith.constant 9 : index
    %c0_102 = arith.constant 0 : index
    %c0_103 = arith.constant 0 : index
    %186 = vector.load %arg7[%c9_101, %c0_102, %c0_103] : memref<24x1x8xf32, #tpu.memory_space<vmem>>, vector<1x1x8xf32>
    %187 = vector.shape_cast %186 : vector<1x1x8xf32> to vector<1x8xf32>
    %188 = vector.broadcast %187 : vector<1x8xf32> to vector<32x8xf32>
    %189 = arith.addf %185, %188 : vector<32x8xf32>
    %c10 = arith.constant 10 : index
    %c0_104 = arith.constant 0 : index
    %c0_105 = arith.constant 0 : index
    %190 = vector.load %arg6[%c10, %c0_104, %c0_105] : memref<24x32x8xbf16, #tpu.memory_space<vmem>>, vector<1x32x8xbf16>
    %191 = vector.shape_cast %190 : vector<1x32x8xbf16> to vector<32x8xbf16>
    %cst_106 = arith.constant dense<0.000000e+00> : vector<32x8xf32>
    %192 = tpu.matmul %39, %191, %cst_106 {dimension_numbers = #tpu.dot_dimension_numbers<[1], [0], [0], [1], [0, 0, 1, 1], [], []>} : vector<32x32xbf16>, vector<32x8xbf16>, vector<32x8xf32> -> vector<32x8xf32>
    %c10_107 = arith.constant 10 : index
    %c0_108 = arith.constant 0 : index
    %c0_109 = arith.constant 0 : index
    %193 = vector.load %arg7[%c10_107, %c0_108, %c0_109] : memref<24x1x8xf32, #tpu.memory_space<vmem>>, vector<1x1x8xf32>
    %194 = vector.shape_cast %193 : vector<1x1x8xf32> to vector<1x8xf32>
    %195 = vector.broadcast %194 : vector<1x8xf32> to vector<32x8xf32>
    %196 = arith.addf %192, %195 : vector<32x8xf32>
    %c11 = arith.constant 11 : index
    %c0_110 = arith.constant 0 : index
    %c0_111 = arith.constant 0 : index
    %197 = vector.load %arg6[%c11, %c0_110, %c0_111] : memref<24x32x8xbf16, #tpu.memory_space<vmem>>, vector<1x32x8xbf16>
    %198 = vector.shape_cast %197 : vector<1x32x8xbf16> to vector<32x8xbf16>
    %cst_112 = arith.constant dense<0.000000e+00> : vector<32x8xf32>
    %199 = tpu.matmul %39, %198, %cst_112 {dimension_numbers = #tpu.dot_dimension_numbers<[1], [0], [0], [1], [0, 0, 1, 1], [], []>} : vector<32x32xbf16>, vector<32x8xbf16>, vector<32x8xf32> -> vector<32x8xf32>
    %c11_113 = arith.constant 11 : index
    %c0_114 = arith.constant 0 : index
    %c0_115 = arith.constant 0 : index
    %200 = vector.load %arg7[%c11_113, %c0_114, %c0_115] : memref<24x1x8xf32, #tpu.memory_space<vmem>>, vector<1x1x8xf32>
    %201 = vector.shape_cast %200 : vector<1x1x8xf32> to vector<1x8xf32>
    %202 = vector.broadcast %201 : vector<1x8xf32> to vector<32x8xf32>
    %203 = arith.addf %199, %202 : vector<32x8xf32>
    %204 = vector.shape_cast %189 : vector<32x8xf32> to vector<1x32x8xf32>
    %205 = arith.truncf %204 : vector<1x32x8xf32> to vector<1x32x8xbf16>
    %206 = vector.shape_cast %196 : vector<32x8xf32> to vector<1x32x8xf32>
    %207 = arith.truncf %206 : vector<1x32x8xf32> to vector<1x32x8xbf16>
    %208 = vector.shape_cast %203 : vector<32x8xf32> to vector<1x32x8xf32>
    %209 = arith.truncf %208 : vector<1x32x8xf32> to vector<1x32x8xbf16>
    %cst_116 = arith.constant dense<0.000000e+00> : vector<1x32x32xf32>
    %210 = tpu.matmul %205, %207, %cst_116 {dimension_numbers = #tpu.dot_dimension_numbers<[2], [2], [1], [1], [0, 0, 0, 1, 1, 1], [0], [0]>} : vector<1x32x8xbf16>, vector<1x32x8xbf16>, vector<1x32x32xf32> -> vector<1x32x32xf32>
    %211 = vector.broadcast %14 : vector<1x1x32xf32> to vector<1x32x32xf32>
    %212 = arith.addf %210, %211 : vector<1x32x32xf32>
    %cst_117 = arith.constant dense<0xFF800000> : vector<1x32xf32>
    %213 = vector.multi_reduction <maximumf>, %212, %cst_117 [2] : vector<1x32x32xf32> to vector<1x32xf32>
    %214 = vector.shape_cast %213 : vector<1x32xf32> to vector<1x32x1xf32>
    %215 = vector.broadcast %214 : vector<1x32x1xf32> to vector<1x32x32xf32>
    %216 = arith.subf %212, %215 : vector<1x32x32xf32>
    %217 = math.exp %216 : vector<1x32x32xf32>
    %cst_118 = arith.constant dense<0.000000e+00> : vector<1x32xf32>
    %218 = vector.multi_reduction <add>, %217, %cst_118 [2] : vector<1x32x32xf32> to vector<1x32xf32>
    %219 = vector.shape_cast %218 : vector<1x32xf32> to vector<1x32x1xf32>
    %220 = tpu.reciprocal %219 {approx = true} : vector<1x32x1xf32> -> vector<1x32x1xf32>
    %221 = vector.broadcast %220 : vector<1x32x1xf32> to vector<1x32x32xf32>
    %222 = arith.mulf %217, %221 : vector<1x32x32xf32>
    %223 = arith.truncf %222 : vector<1x32x32xf32> to vector<1x32x32xbf16>
    %cst_119 = arith.constant dense<0.000000e+00> : vector<1x32x8xf32>
    %224 = tpu.matmul %223, %209, %cst_119 {dimension_numbers = #tpu.dot_dimension_numbers<[2], [1], [1], [2], [0, 0, 0, 1, 1, 2], [0], [0]>} : vector<1x32x32xbf16>, vector<1x32x8xbf16>, vector<1x32x8xf32> -> vector<1x32x8xf32>
    %225 = vector.shape_cast %224 : vector<1x32x8xf32> to vector<32x8xf32>
    %226 = arith.truncf %225 : vector<32x8xf32> to vector<32x8xbf16>
    %c3_120 = arith.constant 3 : index
    %c0_121 = arith.constant 0 : index
    %c0_122 = arith.constant 0 : index
    %227 = vector.load %arg8[%c3_120, %c0_121, %c0_122] : memref<8x8x32xbf16, #tpu.memory_space<vmem>>, vector<1x8x32xbf16>
    %228 = vector.shape_cast %227 : vector<1x8x32xbf16> to vector<8x32xbf16>
    %cst_123 = arith.constant dense<0.000000e+00> : vector<32x32xf32>
    %229 = tpu.matmul %226, %228, %cst_123 {dimension_numbers = #tpu.dot_dimension_numbers<[1], [0], [0], [1], [0, 0, 1, 1], [], []>} : vector<32x8xbf16>, vector<8x32xbf16>, vector<32x32xf32> -> vector<32x32xf32>
    %230 = arith.addf %182, %229 : vector<32x32xf32>
    %231 = arith.addf %8, %230 : vector<32x32xf32>
    %c0_124 = arith.constant 0 : index
    %c0_125 = arith.constant 0 : index
    %c0_126 = arith.constant 0 : index
    %232 = vector.load %arg9[%c0_124, %c0_125, %c0_126] : memref<2x1x32xf32, #tpu.memory_space<vmem>>, vector<1x1x32xf32>
    %233 = vector.shape_cast %232 : vector<1x1x32xf32> to vector<1x32xf32>
    %234 = vector.broadcast %233 : vector<1x32xf32> to vector<32x32xf32>
    %235 = arith.addf %231, %234 : vector<32x32xf32>
    %c0_127 = arith.constant 0 : index
    %c0_128 = arith.constant 0 : index
    %c0_129 = arith.constant 0 : index
    %236 = vector.load %arg10[%c0_127, %c0_128, %c0_129] : memref<2x1x32xf32, #tpu.memory_space<vmem>>, vector<1x1x32xf32>
    %237 = vector.shape_cast %236 : vector<1x1x32xf32> to vector<1x32xf32>
    %c0_130 = arith.constant 0 : index
    %c0_131 = arith.constant 0 : index
    %c0_132 = arith.constant 0 : index
    %238 = vector.load %arg11[%c0_130, %c0_131, %c0_132] : memref<2x1x32xf32, #tpu.memory_space<vmem>>, vector<1x1x32xf32>
    %239 = vector.shape_cast %238 : vector<1x1x32xf32> to vector<1x32xf32>
    %cst_133 = arith.constant dense<0.000000e+00> : vector<32xf32>
    %240 = vector.multi_reduction <add>, %235, %cst_133 [1] : vector<32x32xf32> to vector<32xf32>
    %241 = vector.shape_cast %240 : vector<32xf32> to vector<32x1xf32>
    %cst_134 = arith.constant 3.200000e+01 : f32
    %242 = vector.broadcast %cst_134 : f32 to vector<32x1xf32>
    %243 = arith.divf %241, %242 : vector<32x1xf32>
    %244 = vector.broadcast %243 : vector<32x1xf32> to vector<32x32xf32>
    %245 = arith.subf %235, %244 : vector<32x32xf32>
    %246 = arith.mulf %245, %245 : vector<32x32xf32>
    %cst_135 = arith.constant dense<0.000000e+00> : vector<32xf32>
    %247 = vector.multi_reduction <add>, %246, %cst_135 [1] : vector<32x32xf32> to vector<32xf32>
    %248 = vector.shape_cast %247 : vector<32xf32> to vector<32x1xf32>
    %cst_136 = arith.constant 3.200000e+01 : f32
    %249 = vector.broadcast %cst_136 : f32 to vector<32x1xf32>
    %250 = arith.divf %248, %249 : vector<32x1xf32>
    %cst_137 = arith.constant 9.99999997E-7 : f32
    %251 = vector.broadcast %cst_137 : f32 to vector<32x1xf32>
    %252 = arith.addf %250, %251 : vector<32x1xf32>
    %253 = math.rsqrt %252 : vector<32x1xf32>
    %254 = vector.broadcast %253 : vector<32x1xf32> to vector<32x32xf32>
    %255 = arith.mulf %245, %254 : vector<32x32xf32>
    %256 = vector.broadcast %237 : vector<1x32xf32> to vector<32x32xf32>
    %257 = arith.mulf %255, %256 : vector<32x32xf32>
    %258 = vector.broadcast %239 : vector<1x32xf32> to vector<32x32xf32>
    %259 = arith.addf %257, %258 : vector<32x32xf32>
    %c0_138 = arith.constant 0 : index
    %c0_139 = arith.constant 0 : index
    %c0_140 = arith.constant 0 : index
    %260 = vector.load %arg12[%c0_138, %c0_139, %c0_140] : memref<2x32x128xbf16, #tpu.memory_space<vmem>>, vector<1x32x128xbf16>
    %261 = vector.shape_cast %260 : vector<1x32x128xbf16> to vector<32x128xbf16>
    %262 = arith.truncf %259 : vector<32x32xf32> to vector<32x32xbf16>
    %cst_141 = arith.constant dense<0.000000e+00> : vector<32x128xf32>
    %263 = tpu.matmul %262, %261, %cst_141 {dimension_numbers = #tpu.dot_dimension_numbers<[1], [0], [0], [1], [0, 0, 1, 1], [], []>} : vector<32x32xbf16>, vector<32x128xbf16>, vector<32x128xf32> -> vector<32x128xf32>
    %c0_142 = arith.constant 0 : index
    %c0_143 = arith.constant 0 : index
    %c0_144 = arith.constant 0 : index
    %264 = vector.load %arg13[%c0_142, %c0_143, %c0_144] : memref<2x1x128xf32, #tpu.memory_space<vmem>>, vector<1x1x128xf32>
    %265 = vector.shape_cast %264 : vector<1x1x128xf32> to vector<1x128xf32>
    %266 = vector.broadcast %265 : vector<1x128xf32> to vector<32x128xf32>
    %267 = arith.addf %263, %266 : vector<32x128xf32>
    %cst_145 = arith.constant 5.000000e-01 : f32
    %268 = vector.broadcast %cst_145 : f32 to vector<32x128xf32>
    %269 = arith.mulf %268, %267 : vector<32x128xf32>
    %cst_146 = arith.constant 0.707106769 : f32
    %270 = vector.broadcast %cst_146 : f32 to vector<32x128xf32>
    %271 = arith.mulf %267, %270 : vector<32x128xf32>
    %272 = math.erf %271 : vector<32x128xf32>
    %cst_147 = arith.constant 1.000000e+00 : f32
    %273 = vector.broadcast %cst_147 : f32 to vector<32x128xf32>
    %274 = arith.addf %273, %272 : vector<32x128xf32>
    %275 = arith.mulf %269, %274 : vector<32x128xf32>
    %c0_148 = arith.constant 0 : index
    %c0_149 = arith.constant 0 : index
    %c0_150 = arith.constant 0 : index
    %276 = vector.load %arg14[%c0_148, %c0_149, %c0_150] : memref<2x128x32xbf16, #tpu.memory_space<vmem>>, vector<1x128x32xbf16>
    %277 = vector.shape_cast %276 : vector<1x128x32xbf16> to vector<128x32xbf16>
    %278 = arith.truncf %275 : vector<32x128xf32> to vector<32x128xbf16>
    %cst_151 = arith.constant dense<0.000000e+00> : vector<32x32xf32>
    %279 = tpu.matmul %278, %277, %cst_151 {dimension_numbers = #tpu.dot_dimension_numbers<[1], [0], [0], [1], [0, 0, 1, 1], [], []>} : vector<32x128xbf16>, vector<128x32xbf16>, vector<32x32xf32> -> vector<32x32xf32>
    %280 = arith.addf %235, %279 : vector<32x32xf32>
    %c0_152 = arith.constant 0 : index
    %c0_153 = arith.constant 0 : index
    %c0_154 = arith.constant 0 : index
    %281 = vector.load %arg15[%c0_152, %c0_153, %c0_154] : memref<2x1x32xf32, #tpu.memory_space<vmem>>, vector<1x1x32xf32>
    %282 = vector.shape_cast %281 : vector<1x1x32xf32> to vector<1x32xf32>
    %283 = vector.broadcast %282 : vector<1x32xf32> to vector<32x32xf32>
    %284 = arith.addf %280, %283 : vector<32x32xf32>
    %c1_155 = arith.constant 1 : index
    %c0_156 = arith.constant 0 : index
    %c0_157 = arith.constant 0 : index
    %285 = vector.load %arg4[%c1_155, %c0_156, %c0_157] : memref<2x1x32xf32, #tpu.memory_space<vmem>>, vector<1x1x32xf32>
    %286 = vector.shape_cast %285 : vector<1x1x32xf32> to vector<1x32xf32>
    %c1_158 = arith.constant 1 : index
    %c0_159 = arith.constant 0 : index
    %c0_160 = arith.constant 0 : index
    %287 = vector.load %arg5[%c1_158, %c0_159, %c0_160] : memref<2x1x32xf32, #tpu.memory_space<vmem>>, vector<1x1x32xf32>
    %288 = vector.shape_cast %287 : vector<1x1x32xf32> to vector<1x32xf32>
    %cst_161 = arith.constant dense<0.000000e+00> : vector<32xf32>
    %289 = vector.multi_reduction <add>, %284, %cst_161 [1] : vector<32x32xf32> to vector<32xf32>
    %290 = vector.shape_cast %289 : vector<32xf32> to vector<32x1xf32>
    %cst_162 = arith.constant 3.200000e+01 : f32
    %291 = vector.broadcast %cst_162 : f32 to vector<32x1xf32>
    %292 = arith.divf %290, %291 : vector<32x1xf32>
    %293 = vector.broadcast %292 : vector<32x1xf32> to vector<32x32xf32>
    %294 = arith.subf %284, %293 : vector<32x32xf32>
    %295 = arith.mulf %294, %294 : vector<32x32xf32>
    %cst_163 = arith.constant dense<0.000000e+00> : vector<32xf32>
    %296 = vector.multi_reduction <add>, %295, %cst_163 [1] : vector<32x32xf32> to vector<32xf32>
    %297 = vector.shape_cast %296 : vector<32xf32> to vector<32x1xf32>
    %cst_164 = arith.constant 3.200000e+01 : f32
    %298 = vector.broadcast %cst_164 : f32 to vector<32x1xf32>
    %299 = arith.divf %297, %298 : vector<32x1xf32>
    %cst_165 = arith.constant 9.99999997E-7 : f32
    %300 = vector.broadcast %cst_165 : f32 to vector<32x1xf32>
    %301 = arith.addf %299, %300 : vector<32x1xf32>
    %302 = math.rsqrt %301 : vector<32x1xf32>
    %303 = vector.broadcast %302 : vector<32x1xf32> to vector<32x32xf32>
    %304 = arith.mulf %294, %303 : vector<32x32xf32>
    %305 = vector.broadcast %286 : vector<1x32xf32> to vector<32x32xf32>
    %306 = arith.mulf %304, %305 : vector<32x32xf32>
    %307 = vector.broadcast %288 : vector<1x32xf32> to vector<32x32xf32>
    %308 = arith.addf %306, %307 : vector<32x32xf32>
    %309 = arith.truncf %308 : vector<32x32xf32> to vector<32x32xbf16>
    %c12 = arith.constant 12 : index
    %c0_166 = arith.constant 0 : index
    %c0_167 = arith.constant 0 : index
    %310 = vector.load %arg6[%c12, %c0_166, %c0_167] : memref<24x32x8xbf16, #tpu.memory_space<vmem>>, vector<1x32x8xbf16>
    %311 = vector.shape_cast %310 : vector<1x32x8xbf16> to vector<32x8xbf16>
    %cst_168 = arith.constant dense<0.000000e+00> : vector<32x8xf32>
    %312 = tpu.matmul %309, %311, %cst_168 {dimension_numbers = #tpu.dot_dimension_numbers<[1], [0], [0], [1], [0, 0, 1, 1], [], []>} : vector<32x32xbf16>, vector<32x8xbf16>, vector<32x8xf32> -> vector<32x8xf32>
    %c12_169 = arith.constant 12 : index
    %c0_170 = arith.constant 0 : index
    %c0_171 = arith.constant 0 : index
    %313 = vector.load %arg7[%c12_169, %c0_170, %c0_171] : memref<24x1x8xf32, #tpu.memory_space<vmem>>, vector<1x1x8xf32>
    %314 = vector.shape_cast %313 : vector<1x1x8xf32> to vector<1x8xf32>
    %315 = vector.broadcast %314 : vector<1x8xf32> to vector<32x8xf32>
    %316 = arith.addf %312, %315 : vector<32x8xf32>
    %c13 = arith.constant 13 : index
    %c0_172 = arith.constant 0 : index
    %c0_173 = arith.constant 0 : index
    %317 = vector.load %arg6[%c13, %c0_172, %c0_173] : memref<24x32x8xbf16, #tpu.memory_space<vmem>>, vector<1x32x8xbf16>
    %318 = vector.shape_cast %317 : vector<1x32x8xbf16> to vector<32x8xbf16>
    %cst_174 = arith.constant dense<0.000000e+00> : vector<32x8xf32>
    %319 = tpu.matmul %309, %318, %cst_174 {dimension_numbers = #tpu.dot_dimension_numbers<[1], [0], [0], [1], [0, 0, 1, 1], [], []>} : vector<32x32xbf16>, vector<32x8xbf16>, vector<32x8xf32> -> vector<32x8xf32>
    %c13_175 = arith.constant 13 : index
    %c0_176 = arith.constant 0 : index
    %c0_177 = arith.constant 0 : index
    %320 = vector.load %arg7[%c13_175, %c0_176, %c0_177] : memref<24x1x8xf32, #tpu.memory_space<vmem>>, vector<1x1x8xf32>
    %321 = vector.shape_cast %320 : vector<1x1x8xf32> to vector<1x8xf32>
    %322 = vector.broadcast %321 : vector<1x8xf32> to vector<32x8xf32>
    %323 = arith.addf %319, %322 : vector<32x8xf32>
    %c14 = arith.constant 14 : index
    %c0_178 = arith.constant 0 : index
    %c0_179 = arith.constant 0 : index
    %324 = vector.load %arg6[%c14, %c0_178, %c0_179] : memref<24x32x8xbf16, #tpu.memory_space<vmem>>, vector<1x32x8xbf16>
    %325 = vector.shape_cast %324 : vector<1x32x8xbf16> to vector<32x8xbf16>
    %cst_180 = arith.constant dense<0.000000e+00> : vector<32x8xf32>
    %326 = tpu.matmul %309, %325, %cst_180 {dimension_numbers = #tpu.dot_dimension_numbers<[1], [0], [0], [1], [0, 0, 1, 1], [], []>} : vector<32x32xbf16>, vector<32x8xbf16>, vector<32x8xf32> -> vector<32x8xf32>
    %c14_181 = arith.constant 14 : index
    %c0_182 = arith.constant 0 : index
    %c0_183 = arith.constant 0 : index
    %327 = vector.load %arg7[%c14_181, %c0_182, %c0_183] : memref<24x1x8xf32, #tpu.memory_space<vmem>>, vector<1x1x8xf32>
    %328 = vector.shape_cast %327 : vector<1x1x8xf32> to vector<1x8xf32>
    %329 = vector.broadcast %328 : vector<1x8xf32> to vector<32x8xf32>
    %330 = arith.addf %326, %329 : vector<32x8xf32>
    %331 = vector.shape_cast %316 : vector<32x8xf32> to vector<1x32x8xf32>
    %332 = arith.truncf %331 : vector<1x32x8xf32> to vector<1x32x8xbf16>
    %333 = vector.shape_cast %323 : vector<32x8xf32> to vector<1x32x8xf32>
    %334 = arith.truncf %333 : vector<1x32x8xf32> to vector<1x32x8xbf16>
    %335 = vector.shape_cast %330 : vector<32x8xf32> to vector<1x32x8xf32>
    %336 = arith.truncf %335 : vector<1x32x8xf32> to vector<1x32x8xbf16>
    %cst_184 = arith.constant dense<0.000000e+00> : vector<1x32x32xf32>
    %337 = tpu.matmul %332, %334, %cst_184 {dimension_numbers = #tpu.dot_dimension_numbers<[2], [2], [1], [1], [0, 0, 0, 1, 1, 1], [0], [0]>} : vector<1x32x8xbf16>, vector<1x32x8xbf16>, vector<1x32x32xf32> -> vector<1x32x32xf32>
    %338 = vector.broadcast %14 : vector<1x1x32xf32> to vector<1x32x32xf32>
    %339 = arith.addf %337, %338 : vector<1x32x32xf32>
    %cst_185 = arith.constant dense<0xFF800000> : vector<1x32xf32>
    %340 = vector.multi_reduction <maximumf>, %339, %cst_185 [2] : vector<1x32x32xf32> to vector<1x32xf32>
    %341 = vector.shape_cast %340 : vector<1x32xf32> to vector<1x32x1xf32>
    %342 = vector.broadcast %341 : vector<1x32x1xf32> to vector<1x32x32xf32>
    %343 = arith.subf %339, %342 : vector<1x32x32xf32>
    %344 = math.exp %343 : vector<1x32x32xf32>
    %cst_186 = arith.constant dense<0.000000e+00> : vector<1x32xf32>
    %345 = vector.multi_reduction <add>, %344, %cst_186 [2] : vector<1x32x32xf32> to vector<1x32xf32>
    %346 = vector.shape_cast %345 : vector<1x32xf32> to vector<1x32x1xf32>
    %347 = tpu.reciprocal %346 {approx = true} : vector<1x32x1xf32> -> vector<1x32x1xf32>
    %348 = vector.broadcast %347 : vector<1x32x1xf32> to vector<1x32x32xf32>
    %349 = arith.mulf %344, %348 : vector<1x32x32xf32>
    %350 = arith.truncf %349 : vector<1x32x32xf32> to vector<1x32x32xbf16>
    %cst_187 = arith.constant dense<0.000000e+00> : vector<1x32x8xf32>
    %351 = tpu.matmul %350, %336, %cst_187 {dimension_numbers = #tpu.dot_dimension_numbers<[2], [1], [1], [2], [0, 0, 0, 1, 1, 2], [0], [0]>} : vector<1x32x32xbf16>, vector<1x32x8xbf16>, vector<1x32x8xf32> -> vector<1x32x8xf32>
    %352 = vector.shape_cast %351 : vector<1x32x8xf32> to vector<32x8xf32>
    %353 = arith.truncf %352 : vector<32x8xf32> to vector<32x8xbf16>
    %c4_188 = arith.constant 4 : index
    %c0_189 = arith.constant 0 : index
    %c0_190 = arith.constant 0 : index
    %354 = vector.load %arg8[%c4_188, %c0_189, %c0_190] : memref<8x8x32xbf16, #tpu.memory_space<vmem>>, vector<1x8x32xbf16>
    %355 = vector.shape_cast %354 : vector<1x8x32xbf16> to vector<8x32xbf16>
    %cst_191 = arith.constant dense<0.000000e+00> : vector<32x32xf32>
    %356 = tpu.matmul %353, %355, %cst_191 {dimension_numbers = #tpu.dot_dimension_numbers<[1], [0], [0], [1], [0, 0, 1, 1], [], []>} : vector<32x8xbf16>, vector<8x32xbf16>, vector<32x32xf32> -> vector<32x32xf32>
    %c15 = arith.constant 15 : index
    %c0_192 = arith.constant 0 : index
    %c0_193 = arith.constant 0 : index
    %357 = vector.load %arg6[%c15, %c0_192, %c0_193] : memref<24x32x8xbf16, #tpu.memory_space<vmem>>, vector<1x32x8xbf16>
    %358 = vector.shape_cast %357 : vector<1x32x8xbf16> to vector<32x8xbf16>
    %cst_194 = arith.constant dense<0.000000e+00> : vector<32x8xf32>
    %359 = tpu.matmul %309, %358, %cst_194 {dimension_numbers = #tpu.dot_dimension_numbers<[1], [0], [0], [1], [0, 0, 1, 1], [], []>} : vector<32x32xbf16>, vector<32x8xbf16>, vector<32x8xf32> -> vector<32x8xf32>
    %c15_195 = arith.constant 15 : index
    %c0_196 = arith.constant 0 : index
    %c0_197 = arith.constant 0 : index
    %360 = vector.load %arg7[%c15_195, %c0_196, %c0_197] : memref<24x1x8xf32, #tpu.memory_space<vmem>>, vector<1x1x8xf32>
    %361 = vector.shape_cast %360 : vector<1x1x8xf32> to vector<1x8xf32>
    %362 = vector.broadcast %361 : vector<1x8xf32> to vector<32x8xf32>
    %363 = arith.addf %359, %362 : vector<32x8xf32>
    %c16 = arith.constant 16 : index
    %c0_198 = arith.constant 0 : index
    %c0_199 = arith.constant 0 : index
    %364 = vector.load %arg6[%c16, %c0_198, %c0_199] : memref<24x32x8xbf16, #tpu.memory_space<vmem>>, vector<1x32x8xbf16>
    %365 = vector.shape_cast %364 : vector<1x32x8xbf16> to vector<32x8xbf16>
    %cst_200 = arith.constant dense<0.000000e+00> : vector<32x8xf32>
    %366 = tpu.matmul %309, %365, %cst_200 {dimension_numbers = #tpu.dot_dimension_numbers<[1], [0], [0], [1], [0, 0, 1, 1], [], []>} : vector<32x32xbf16>, vector<32x8xbf16>, vector<32x8xf32> -> vector<32x8xf32>
    %c16_201 = arith.constant 16 : index
    %c0_202 = arith.constant 0 : index
    %c0_203 = arith.constant 0 : index
    %367 = vector.load %arg7[%c16_201, %c0_202, %c0_203] : memref<24x1x8xf32, #tpu.memory_space<vmem>>, vector<1x1x8xf32>
    %368 = vector.shape_cast %367 : vector<1x1x8xf32> to vector<1x8xf32>
    %369 = vector.broadcast %368 : vector<1x8xf32> to vector<32x8xf32>
    %370 = arith.addf %366, %369 : vector<32x8xf32>
    %c17 = arith.constant 17 : index
    %c0_204 = arith.constant 0 : index
    %c0_205 = arith.constant 0 : index
    %371 = vector.load %arg6[%c17, %c0_204, %c0_205] : memref<24x32x8xbf16, #tpu.memory_space<vmem>>, vector<1x32x8xbf16>
    %372 = vector.shape_cast %371 : vector<1x32x8xbf16> to vector<32x8xbf16>
    %cst_206 = arith.constant dense<0.000000e+00> : vector<32x8xf32>
    %373 = tpu.matmul %309, %372, %cst_206 {dimension_numbers = #tpu.dot_dimension_numbers<[1], [0], [0], [1], [0, 0, 1, 1], [], []>} : vector<32x32xbf16>, vector<32x8xbf16>, vector<32x8xf32> -> vector<32x8xf32>
    %c17_207 = arith.constant 17 : index
    %c0_208 = arith.constant 0 : index
    %c0_209 = arith.constant 0 : index
    %374 = vector.load %arg7[%c17_207, %c0_208, %c0_209] : memref<24x1x8xf32, #tpu.memory_space<vmem>>, vector<1x1x8xf32>
    %375 = vector.shape_cast %374 : vector<1x1x8xf32> to vector<1x8xf32>
    %376 = vector.broadcast %375 : vector<1x8xf32> to vector<32x8xf32>
    %377 = arith.addf %373, %376 : vector<32x8xf32>
    %378 = vector.shape_cast %363 : vector<32x8xf32> to vector<1x32x8xf32>
    %379 = arith.truncf %378 : vector<1x32x8xf32> to vector<1x32x8xbf16>
    %380 = vector.shape_cast %370 : vector<32x8xf32> to vector<1x32x8xf32>
    %381 = arith.truncf %380 : vector<1x32x8xf32> to vector<1x32x8xbf16>
    %382 = vector.shape_cast %377 : vector<32x8xf32> to vector<1x32x8xf32>
    %383 = arith.truncf %382 : vector<1x32x8xf32> to vector<1x32x8xbf16>
    %cst_210 = arith.constant dense<0.000000e+00> : vector<1x32x32xf32>
    %384 = tpu.matmul %379, %381, %cst_210 {dimension_numbers = #tpu.dot_dimension_numbers<[2], [2], [1], [1], [0, 0, 0, 1, 1, 1], [0], [0]>} : vector<1x32x8xbf16>, vector<1x32x8xbf16>, vector<1x32x32xf32> -> vector<1x32x32xf32>
    %385 = vector.broadcast %14 : vector<1x1x32xf32> to vector<1x32x32xf32>
    %386 = arith.addf %384, %385 : vector<1x32x32xf32>
    %cst_211 = arith.constant dense<0xFF800000> : vector<1x32xf32>
    %387 = vector.multi_reduction <maximumf>, %386, %cst_211 [2] : vector<1x32x32xf32> to vector<1x32xf32>
    %388 = vector.shape_cast %387 : vector<1x32xf32> to vector<1x32x1xf32>
    %389 = vector.broadcast %388 : vector<1x32x1xf32> to vector<1x32x32xf32>
    %390 = arith.subf %386, %389 : vector<1x32x32xf32>
    %391 = math.exp %390 : vector<1x32x32xf32>
    %cst_212 = arith.constant dense<0.000000e+00> : vector<1x32xf32>
    %392 = vector.multi_reduction <add>, %391, %cst_212 [2] : vector<1x32x32xf32> to vector<1x32xf32>
    %393 = vector.shape_cast %392 : vector<1x32xf32> to vector<1x32x1xf32>
    %394 = tpu.reciprocal %393 {approx = true} : vector<1x32x1xf32> -> vector<1x32x1xf32>
    %395 = vector.broadcast %394 : vector<1x32x1xf32> to vector<1x32x32xf32>
    %396 = arith.mulf %391, %395 : vector<1x32x32xf32>
    %397 = arith.truncf %396 : vector<1x32x32xf32> to vector<1x32x32xbf16>
    %cst_213 = arith.constant dense<0.000000e+00> : vector<1x32x8xf32>
    %398 = tpu.matmul %397, %383, %cst_213 {dimension_numbers = #tpu.dot_dimension_numbers<[2], [1], [1], [2], [0, 0, 0, 1, 1, 2], [0], [0]>} : vector<1x32x32xbf16>, vector<1x32x8xbf16>, vector<1x32x8xf32> -> vector<1x32x8xf32>
    %399 = vector.shape_cast %398 : vector<1x32x8xf32> to vector<32x8xf32>
    %400 = arith.truncf %399 : vector<32x8xf32> to vector<32x8xbf16>
    %c5_214 = arith.constant 5 : index
    %c0_215 = arith.constant 0 : index
    %c0_216 = arith.constant 0 : index
    %401 = vector.load %arg8[%c5_214, %c0_215, %c0_216] : memref<8x8x32xbf16, #tpu.memory_space<vmem>>, vector<1x8x32xbf16>
    %402 = vector.shape_cast %401 : vector<1x8x32xbf16> to vector<8x32xbf16>
    %cst_217 = arith.constant dense<0.000000e+00> : vector<32x32xf32>
    %403 = tpu.matmul %400, %402, %cst_217 {dimension_numbers = #tpu.dot_dimension_numbers<[1], [0], [0], [1], [0, 0, 1, 1], [], []>} : vector<32x8xbf16>, vector<8x32xbf16>, vector<32x32xf32> -> vector<32x32xf32>
    %404 = arith.addf %356, %403 : vector<32x32xf32>
    %c18 = arith.constant 18 : index
    %c0_218 = arith.constant 0 : index
    %c0_219 = arith.constant 0 : index
    %405 = vector.load %arg6[%c18, %c0_218, %c0_219] : memref<24x32x8xbf16, #tpu.memory_space<vmem>>, vector<1x32x8xbf16>
    %406 = vector.shape_cast %405 : vector<1x32x8xbf16> to vector<32x8xbf16>
    %cst_220 = arith.constant dense<0.000000e+00> : vector<32x8xf32>
    %407 = tpu.matmul %309, %406, %cst_220 {dimension_numbers = #tpu.dot_dimension_numbers<[1], [0], [0], [1], [0, 0, 1, 1], [], []>} : vector<32x32xbf16>, vector<32x8xbf16>, vector<32x8xf32> -> vector<32x8xf32>
    %c18_221 = arith.constant 18 : index
    %c0_222 = arith.constant 0 : index
    %c0_223 = arith.constant 0 : index
    %408 = vector.load %arg7[%c18_221, %c0_222, %c0_223] : memref<24x1x8xf32, #tpu.memory_space<vmem>>, vector<1x1x8xf32>
    %409 = vector.shape_cast %408 : vector<1x1x8xf32> to vector<1x8xf32>
    %410 = vector.broadcast %409 : vector<1x8xf32> to vector<32x8xf32>
    %411 = arith.addf %407, %410 : vector<32x8xf32>
    %c19 = arith.constant 19 : index
    %c0_224 = arith.constant 0 : index
    %c0_225 = arith.constant 0 : index
    %412 = vector.load %arg6[%c19, %c0_224, %c0_225] : memref<24x32x8xbf16, #tpu.memory_space<vmem>>, vector<1x32x8xbf16>
    %413 = vector.shape_cast %412 : vector<1x32x8xbf16> to vector<32x8xbf16>
    %cst_226 = arith.constant dense<0.000000e+00> : vector<32x8xf32>
    %414 = tpu.matmul %309, %413, %cst_226 {dimension_numbers = #tpu.dot_dimension_numbers<[1], [0], [0], [1], [0, 0, 1, 1], [], []>} : vector<32x32xbf16>, vector<32x8xbf16>, vector<32x8xf32> -> vector<32x8xf32>
    %c19_227 = arith.constant 19 : index
    %c0_228 = arith.constant 0 : index
    %c0_229 = arith.constant 0 : index
    %415 = vector.load %arg7[%c19_227, %c0_228, %c0_229] : memref<24x1x8xf32, #tpu.memory_space<vmem>>, vector<1x1x8xf32>
    %416 = vector.shape_cast %415 : vector<1x1x8xf32> to vector<1x8xf32>
    %417 = vector.broadcast %416 : vector<1x8xf32> to vector<32x8xf32>
    %418 = arith.addf %414, %417 : vector<32x8xf32>
    %c20 = arith.constant 20 : index
    %c0_230 = arith.constant 0 : index
    %c0_231 = arith.constant 0 : index
    %419 = vector.load %arg6[%c20, %c0_230, %c0_231] : memref<24x32x8xbf16, #tpu.memory_space<vmem>>, vector<1x32x8xbf16>
    %420 = vector.shape_cast %419 : vector<1x32x8xbf16> to vector<32x8xbf16>
    %cst_232 = arith.constant dense<0.000000e+00> : vector<32x8xf32>
    %421 = tpu.matmul %309, %420, %cst_232 {dimension_numbers = #tpu.dot_dimension_numbers<[1], [0], [0], [1], [0, 0, 1, 1], [], []>} : vector<32x32xbf16>, vector<32x8xbf16>, vector<32x8xf32> -> vector<32x8xf32>
    %c20_233 = arith.constant 20 : index
    %c0_234 = arith.constant 0 : index
    %c0_235 = arith.constant 0 : index
    %422 = vector.load %arg7[%c20_233, %c0_234, %c0_235] : memref<24x1x8xf32, #tpu.memory_space<vmem>>, vector<1x1x8xf32>
    %423 = vector.shape_cast %422 : vector<1x1x8xf32> to vector<1x8xf32>
    %424 = vector.broadcast %423 : vector<1x8xf32> to vector<32x8xf32>
    %425 = arith.addf %421, %424 : vector<32x8xf32>
    %426 = vector.shape_cast %411 : vector<32x8xf32> to vector<1x32x8xf32>
    %427 = arith.truncf %426 : vector<1x32x8xf32> to vector<1x32x8xbf16>
    %428 = vector.shape_cast %418 : vector<32x8xf32> to vector<1x32x8xf32>
    %429 = arith.truncf %428 : vector<1x32x8xf32> to vector<1x32x8xbf16>
    %430 = vector.shape_cast %425 : vector<32x8xf32> to vector<1x32x8xf32>
    %431 = arith.truncf %430 : vector<1x32x8xf32> to vector<1x32x8xbf16>
    %cst_236 = arith.constant dense<0.000000e+00> : vector<1x32x32xf32>
    %432 = tpu.matmul %427, %429, %cst_236 {dimension_numbers = #tpu.dot_dimension_numbers<[2], [2], [1], [1], [0, 0, 0, 1, 1, 1], [0], [0]>} : vector<1x32x8xbf16>, vector<1x32x8xbf16>, vector<1x32x32xf32> -> vector<1x32x32xf32>
    %433 = vector.broadcast %14 : vector<1x1x32xf32> to vector<1x32x32xf32>
    %434 = arith.addf %432, %433 : vector<1x32x32xf32>
    %cst_237 = arith.constant dense<0xFF800000> : vector<1x32xf32>
    %435 = vector.multi_reduction <maximumf>, %434, %cst_237 [2] : vector<1x32x32xf32> to vector<1x32xf32>
    %436 = vector.shape_cast %435 : vector<1x32xf32> to vector<1x32x1xf32>
    %437 = vector.broadcast %436 : vector<1x32x1xf32> to vector<1x32x32xf32>
    %438 = arith.subf %434, %437 : vector<1x32x32xf32>
    %439 = math.exp %438 : vector<1x32x32xf32>
    %cst_238 = arith.constant dense<0.000000e+00> : vector<1x32xf32>
    %440 = vector.multi_reduction <add>, %439, %cst_238 [2] : vector<1x32x32xf32> to vector<1x32xf32>
    %441 = vector.shape_cast %440 : vector<1x32xf32> to vector<1x32x1xf32>
    %442 = tpu.reciprocal %441 {approx = true} : vector<1x32x1xf32> -> vector<1x32x1xf32>
    %443 = vector.broadcast %442 : vector<1x32x1xf32> to vector<1x32x32xf32>
    %444 = arith.mulf %439, %443 : vector<1x32x32xf32>
    %445 = arith.truncf %444 : vector<1x32x32xf32> to vector<1x32x32xbf16>
    %cst_239 = arith.constant dense<0.000000e+00> : vector<1x32x8xf32>
    %446 = tpu.matmul %445, %431, %cst_239 {dimension_numbers = #tpu.dot_dimension_numbers<[2], [1], [1], [2], [0, 0, 0, 1, 1, 2], [0], [0]>} : vector<1x32x32xbf16>, vector<1x32x8xbf16>, vector<1x32x8xf32> -> vector<1x32x8xf32>
    %447 = vector.shape_cast %446 : vector<1x32x8xf32> to vector<32x8xf32>
    %448 = arith.truncf %447 : vector<32x8xf32> to vector<32x8xbf16>
    %c6_240 = arith.constant 6 : index
    %c0_241 = arith.constant 0 : index
    %c0_242 = arith.constant 0 : index
    %449 = vector.load %arg8[%c6_240, %c0_241, %c0_242] : memref<8x8x32xbf16, #tpu.memory_space<vmem>>, vector<1x8x32xbf16>
    %450 = vector.shape_cast %449 : vector<1x8x32xbf16> to vector<8x32xbf16>
    %cst_243 = arith.constant dense<0.000000e+00> : vector<32x32xf32>
    %451 = tpu.matmul %448, %450, %cst_243 {dimension_numbers = #tpu.dot_dimension_numbers<[1], [0], [0], [1], [0, 0, 1, 1], [], []>} : vector<32x8xbf16>, vector<8x32xbf16>, vector<32x32xf32> -> vector<32x32xf32>
    %452 = arith.addf %404, %451 : vector<32x32xf32>
    %c21 = arith.constant 21 : index
    %c0_244 = arith.constant 0 : index
    %c0_245 = arith.constant 0 : index
    %453 = vector.load %arg6[%c21, %c0_244, %c0_245] : memref<24x32x8xbf16, #tpu.memory_space<vmem>>, vector<1x32x8xbf16>
    %454 = vector.shape_cast %453 : vector<1x32x8xbf16> to vector<32x8xbf16>
    %cst_246 = arith.constant dense<0.000000e+00> : vector<32x8xf32>
    %455 = tpu.matmul %309, %454, %cst_246 {dimension_numbers = #tpu.dot_dimension_numbers<[1], [0], [0], [1], [0, 0, 1, 1], [], []>} : vector<32x32xbf16>, vector<32x8xbf16>, vector<32x8xf32> -> vector<32x8xf32>
    %c21_247 = arith.constant 21 : index
    %c0_248 = arith.constant 0 : index
    %c0_249 = arith.constant 0 : index
    %456 = vector.load %arg7[%c21_247, %c0_248, %c0_249] : memref<24x1x8xf32, #tpu.memory_space<vmem>>, vector<1x1x8xf32>
    %457 = vector.shape_cast %456 : vector<1x1x8xf32> to vector<1x8xf32>
    %458 = vector.broadcast %457 : vector<1x8xf32> to vector<32x8xf32>
    %459 = arith.addf %455, %458 : vector<32x8xf32>
    %c22 = arith.constant 22 : index
    %c0_250 = arith.constant 0 : index
    %c0_251 = arith.constant 0 : index
    %460 = vector.load %arg6[%c22, %c0_250, %c0_251] : memref<24x32x8xbf16, #tpu.memory_space<vmem>>, vector<1x32x8xbf16>
    %461 = vector.shape_cast %460 : vector<1x32x8xbf16> to vector<32x8xbf16>
    %cst_252 = arith.constant dense<0.000000e+00> : vector<32x8xf32>
    %462 = tpu.matmul %309, %461, %cst_252 {dimension_numbers = #tpu.dot_dimension_numbers<[1], [0], [0], [1], [0, 0, 1, 1], [], []>} : vector<32x32xbf16>, vector<32x8xbf16>, vector<32x8xf32> -> vector<32x8xf32>
    %c22_253 = arith.constant 22 : index
    %c0_254 = arith.constant 0 : index
    %c0_255 = arith.constant 0 : index
    %463 = vector.load %arg7[%c22_253, %c0_254, %c0_255] : memref<24x1x8xf32, #tpu.memory_space<vmem>>, vector<1x1x8xf32>
    %464 = vector.shape_cast %463 : vector<1x1x8xf32> to vector<1x8xf32>
    %465 = vector.broadcast %464 : vector<1x8xf32> to vector<32x8xf32>
    %466 = arith.addf %462, %465 : vector<32x8xf32>
    %c23 = arith.constant 23 : index
    %c0_256 = arith.constant 0 : index
    %c0_257 = arith.constant 0 : index
    %467 = vector.load %arg6[%c23, %c0_256, %c0_257] : memref<24x32x8xbf16, #tpu.memory_space<vmem>>, vector<1x32x8xbf16>
    %468 = vector.shape_cast %467 : vector<1x32x8xbf16> to vector<32x8xbf16>
    %cst_258 = arith.constant dense<0.000000e+00> : vector<32x8xf32>
    %469 = tpu.matmul %309, %468, %cst_258 {dimension_numbers = #tpu.dot_dimension_numbers<[1], [0], [0], [1], [0, 0, 1, 1], [], []>} : vector<32x32xbf16>, vector<32x8xbf16>, vector<32x8xf32> -> vector<32x8xf32>
    %c23_259 = arith.constant 23 : index
    %c0_260 = arith.constant 0 : index
    %c0_261 = arith.constant 0 : index
    %470 = vector.load %arg7[%c23_259, %c0_260, %c0_261] : memref<24x1x8xf32, #tpu.memory_space<vmem>>, vector<1x1x8xf32>
    %471 = vector.shape_cast %470 : vector<1x1x8xf32> to vector<1x8xf32>
    %472 = vector.broadcast %471 : vector<1x8xf32> to vector<32x8xf32>
    %473 = arith.addf %469, %472 : vector<32x8xf32>
    %474 = vector.shape_cast %459 : vector<32x8xf32> to vector<1x32x8xf32>
    %475 = arith.truncf %474 : vector<1x32x8xf32> to vector<1x32x8xbf16>
    %476 = vector.shape_cast %466 : vector<32x8xf32> to vector<1x32x8xf32>
    %477 = arith.truncf %476 : vector<1x32x8xf32> to vector<1x32x8xbf16>
    %478 = vector.shape_cast %473 : vector<32x8xf32> to vector<1x32x8xf32>
    %479 = arith.truncf %478 : vector<1x32x8xf32> to vector<1x32x8xbf16>
    %cst_262 = arith.constant dense<0.000000e+00> : vector<1x32x32xf32>
    %480 = tpu.matmul %475, %477, %cst_262 {dimension_numbers = #tpu.dot_dimension_numbers<[2], [2], [1], [1], [0, 0, 0, 1, 1, 1], [0], [0]>} : vector<1x32x8xbf16>, vector<1x32x8xbf16>, vector<1x32x32xf32> -> vector<1x32x32xf32>
    %481 = vector.broadcast %14 : vector<1x1x32xf32> to vector<1x32x32xf32>
    %482 = arith.addf %480, %481 : vector<1x32x32xf32>
    %cst_263 = arith.constant dense<0xFF800000> : vector<1x32xf32>
    %483 = vector.multi_reduction <maximumf>, %482, %cst_263 [2] : vector<1x32x32xf32> to vector<1x32xf32>
    %484 = vector.shape_cast %483 : vector<1x32xf32> to vector<1x32x1xf32>
    %485 = vector.broadcast %484 : vector<1x32x1xf32> to vector<1x32x32xf32>
    %486 = arith.subf %482, %485 : vector<1x32x32xf32>
    %487 = math.exp %486 : vector<1x32x32xf32>
    %cst_264 = arith.constant dense<0.000000e+00> : vector<1x32xf32>
    %488 = vector.multi_reduction <add>, %487, %cst_264 [2] : vector<1x32x32xf32> to vector<1x32xf32>
    %489 = vector.shape_cast %488 : vector<1x32xf32> to vector<1x32x1xf32>
    %490 = tpu.reciprocal %489 {approx = true} : vector<1x32x1xf32> -> vector<1x32x1xf32>
    %491 = vector.broadcast %490 : vector<1x32x1xf32> to vector<1x32x32xf32>
    %492 = arith.mulf %487, %491 : vector<1x32x32xf32>
    %493 = arith.truncf %492 : vector<1x32x32xf32> to vector<1x32x32xbf16>
    %cst_265 = arith.constant dense<0.000000e+00> : vector<1x32x8xf32>
    %494 = tpu.matmul %493, %479, %cst_265 {dimension_numbers = #tpu.dot_dimension_numbers<[2], [1], [1], [2], [0, 0, 0, 1, 1, 2], [0], [0]>} : vector<1x32x32xbf16>, vector<1x32x8xbf16>, vector<1x32x8xf32> -> vector<1x32x8xf32>
    %495 = vector.shape_cast %494 : vector<1x32x8xf32> to vector<32x8xf32>
    %496 = arith.truncf %495 : vector<32x8xf32> to vector<32x8xbf16>
    %c7_266 = arith.constant 7 : index
    %c0_267 = arith.constant 0 : index
    %c0_268 = arith.constant 0 : index
    %497 = vector.load %arg8[%c7_266, %c0_267, %c0_268] : memref<8x8x32xbf16, #tpu.memory_space<vmem>>, vector<1x8x32xbf16>
    %498 = vector.shape_cast %497 : vector<1x8x32xbf16> to vector<8x32xbf16>
    %cst_269 = arith.constant dense<0.000000e+00> : vector<32x32xf32>
    %499 = tpu.matmul %496, %498, %cst_269 {dimension_numbers = #tpu.dot_dimension_numbers<[1], [0], [0], [1], [0, 0, 1, 1], [], []>} : vector<32x8xbf16>, vector<8x32xbf16>, vector<32x32xf32> -> vector<32x32xf32>
    %500 = arith.addf %452, %499 : vector<32x32xf32>
    %501 = arith.addf %284, %500 : vector<32x32xf32>
    %c1_270 = arith.constant 1 : index
    %c0_271 = arith.constant 0 : index
    %c0_272 = arith.constant 0 : index
    %502 = vector.load %arg9[%c1_270, %c0_271, %c0_272] : memref<2x1x32xf32, #tpu.memory_space<vmem>>, vector<1x1x32xf32>
    %503 = vector.shape_cast %502 : vector<1x1x32xf32> to vector<1x32xf32>
    %504 = vector.broadcast %503 : vector<1x32xf32> to vector<32x32xf32>
    %505 = arith.addf %501, %504 : vector<32x32xf32>
    %c1_273 = arith.constant 1 : index
    %c0_274 = arith.constant 0 : index
    %c0_275 = arith.constant 0 : index
    %506 = vector.load %arg10[%c1_273, %c0_274, %c0_275] : memref<2x1x32xf32, #tpu.memory_space<vmem>>, vector<1x1x32xf32>
    %507 = vector.shape_cast %506 : vector<1x1x32xf32> to vector<1x32xf32>
    %c1_276 = arith.constant 1 : index
    %c0_277 = arith.constant 0 : index
    %c0_278 = arith.constant 0 : index
    %508 = vector.load %arg11[%c1_276, %c0_277, %c0_278] : memref<2x1x32xf32, #tpu.memory_space<vmem>>, vector<1x1x32xf32>
    %509 = vector.shape_cast %508 : vector<1x1x32xf32> to vector<1x32xf32>
    %cst_279 = arith.constant dense<0.000000e+00> : vector<32xf32>
    %510 = vector.multi_reduction <add>, %505, %cst_279 [1] : vector<32x32xf32> to vector<32xf32>
    %511 = vector.shape_cast %510 : vector<32xf32> to vector<32x1xf32>
    %cst_280 = arith.constant 3.200000e+01 : f32
    %512 = vector.broadcast %cst_280 : f32 to vector<32x1xf32>
    %513 = arith.divf %511, %512 : vector<32x1xf32>
    %514 = vector.broadcast %513 : vector<32x1xf32> to vector<32x32xf32>
    %515 = arith.subf %505, %514 : vector<32x32xf32>
    %516 = arith.mulf %515, %515 : vector<32x32xf32>
    %cst_281 = arith.constant dense<0.000000e+00> : vector<32xf32>
    %517 = vector.multi_reduction <add>, %516, %cst_281 [1] : vector<32x32xf32> to vector<32xf32>
    %518 = vector.shape_cast %517 : vector<32xf32> to vector<32x1xf32>
    %cst_282 = arith.constant 3.200000e+01 : f32
    %519 = vector.broadcast %cst_282 : f32 to vector<32x1xf32>
    %520 = arith.divf %518, %519 : vector<32x1xf32>
    %cst_283 = arith.constant 9.99999997E-7 : f32
    %521 = vector.broadcast %cst_283 : f32 to vector<32x1xf32>
    %522 = arith.addf %520, %521 : vector<32x1xf32>
    %523 = math.rsqrt %522 : vector<32x1xf32>
    %524 = vector.broadcast %523 : vector<32x1xf32> to vector<32x32xf32>
    %525 = arith.mulf %515, %524 : vector<32x32xf32>
    %526 = vector.broadcast %507 : vector<1x32xf32> to vector<32x32xf32>
    %527 = arith.mulf %525, %526 : vector<32x32xf32>
    %528 = vector.broadcast %509 : vector<1x32xf32> to vector<32x32xf32>
    %529 = arith.addf %527, %528 : vector<32x32xf32>
    %c1_284 = arith.constant 1 : index
    %c0_285 = arith.constant 0 : index
    %c0_286 = arith.constant 0 : index
    %530 = vector.load %arg12[%c1_284, %c0_285, %c0_286] : memref<2x32x128xbf16, #tpu.memory_space<vmem>>, vector<1x32x128xbf16>
    %531 = vector.shape_cast %530 : vector<1x32x128xbf16> to vector<32x128xbf16>
    %532 = arith.truncf %529 : vector<32x32xf32> to vector<32x32xbf16>
    %cst_287 = arith.constant dense<0.000000e+00> : vector<32x128xf32>
    %533 = tpu.matmul %532, %531, %cst_287 {dimension_numbers = #tpu.dot_dimension_numbers<[1], [0], [0], [1], [0, 0, 1, 1], [], []>} : vector<32x32xbf16>, vector<32x128xbf16>, vector<32x128xf32> -> vector<32x128xf32>
    %c1_288 = arith.constant 1 : index
    %c0_289 = arith.constant 0 : index
    %c0_290 = arith.constant 0 : index
    %534 = vector.load %arg13[%c1_288, %c0_289, %c0_290] : memref<2x1x128xf32, #tpu.memory_space<vmem>>, vector<1x1x128xf32>
    %535 = vector.shape_cast %534 : vector<1x1x128xf32> to vector<1x128xf32>
    %536 = vector.broadcast %535 : vector<1x128xf32> to vector<32x128xf32>
    %537 = arith.addf %533, %536 : vector<32x128xf32>
    %cst_291 = arith.constant 5.000000e-01 : f32
    %538 = vector.broadcast %cst_291 : f32 to vector<32x128xf32>
    %539 = arith.mulf %538, %537 : vector<32x128xf32>
    %cst_292 = arith.constant 0.707106769 : f32
    %540 = vector.broadcast %cst_292 : f32 to vector<32x128xf32>
    %541 = arith.mulf %537, %540 : vector<32x128xf32>
    %542 = math.erf %541 : vector<32x128xf32>
    %cst_293 = arith.constant 1.000000e+00 : f32
    %543 = vector.broadcast %cst_293 : f32 to vector<32x128xf32>
    %544 = arith.addf %543, %542 : vector<32x128xf32>
    %545 = arith.mulf %539, %544 : vector<32x128xf32>
    %c1_294 = arith.constant 1 : index
    %c0_295 = arith.constant 0 : index
    %c0_296 = arith.constant 0 : index
    %546 = vector.load %arg14[%c1_294, %c0_295, %c0_296] : memref<2x128x32xbf16, #tpu.memory_space<vmem>>, vector<1x128x32xbf16>
    %547 = vector.shape_cast %546 : vector<1x128x32xbf16> to vector<128x32xbf16>
    %548 = arith.truncf %545 : vector<32x128xf32> to vector<32x128xbf16>
    %cst_297 = arith.constant dense<0.000000e+00> : vector<32x32xf32>
    %549 = tpu.matmul %548, %547, %cst_297 {dimension_numbers = #tpu.dot_dimension_numbers<[1], [0], [0], [1], [0, 0, 1, 1], [], []>} : vector<32x128xbf16>, vector<128x32xbf16>, vector<32x32xf32> -> vector<32x32xf32>
    %550 = arith.addf %505, %549 : vector<32x32xf32>
    %c1_298 = arith.constant 1 : index
    %c0_299 = arith.constant 0 : index
    %c0_300 = arith.constant 0 : index
    %551 = vector.load %arg15[%c1_298, %c0_299, %c0_300] : memref<2x1x32xf32, #tpu.memory_space<vmem>>, vector<1x1x32xf32>
    %552 = vector.shape_cast %551 : vector<1x1x32xf32> to vector<1x32xf32>
    %553 = vector.broadcast %552 : vector<1x32xf32> to vector<32x32xf32>
    %554 = arith.addf %550, %553 : vector<32x32xf32>
    %555 = vector.shape_cast %554 : vector<32x32xf32> to vector<1x32x32xf32>
    %556 = vector.extract_strided_slice %555 {offsets = [0, 0, 0], sizes = [1, 1, 32], strides = [1, 1, 1]} : vector<1x32x32xf32> to vector<1x1x32xf32>
    %557 = vector.shape_cast %556 : vector<1x1x32xf32> to vector<1x32xf32>
    %c0_301 = arith.constant 0 : index
    %c0_302 = arith.constant 0 : index
    %558 = vector.load %arg16[%c0_301, %c0_302] : memref<1x32xf32, #tpu.memory_space<vmem>>, vector<1x32xf32>
    %c0_303 = arith.constant 0 : index
    %c0_304 = arith.constant 0 : index
    %559 = vector.load %arg17[%c0_303, %c0_304] : memref<1x32xf32, #tpu.memory_space<vmem>>, vector<1x32xf32>
    %cst_305 = arith.constant dense<0.000000e+00> : vector<1xf32>
    %560 = vector.multi_reduction <add>, %557, %cst_305 [1] : vector<1x32xf32> to vector<1xf32>
    %561 = vector.shape_cast %560 : vector<1xf32> to vector<1x1xf32>
    %cst_306 = arith.constant 3.200000e+01 : f32
    %562 = vector.broadcast %cst_306 : f32 to vector<1x1xf32>
    %563 = arith.divf %561, %562 : vector<1x1xf32>
    %564 = vector.broadcast %563 : vector<1x1xf32> to vector<1x32xf32>
    %565 = arith.subf %557, %564 : vector<1x32xf32>
    %566 = arith.mulf %565, %565 : vector<1x32xf32>
    %cst_307 = arith.constant dense<0.000000e+00> : vector<1xf32>
    %567 = vector.multi_reduction <add>, %566, %cst_307 [1] : vector<1x32xf32> to vector<1xf32>
    %568 = vector.shape_cast %567 : vector<1xf32> to vector<1x1xf32>
    %cst_308 = arith.constant 3.200000e+01 : f32
    %569 = vector.broadcast %cst_308 : f32 to vector<1x1xf32>
    %570 = arith.divf %568, %569 : vector<1x1xf32>
    %cst_309 = arith.constant 9.99999997E-7 : f32
    %571 = vector.broadcast %cst_309 : f32 to vector<1x1xf32>
    %572 = arith.addf %570, %571 : vector<1x1xf32>
    %573 = math.rsqrt %572 : vector<1x1xf32>
    %574 = vector.broadcast %573 : vector<1x1xf32> to vector<1x32xf32>
    %575 = arith.mulf %565, %574 : vector<1x32xf32>
    %576 = arith.mulf %575, %558 : vector<1x32xf32>
    %577 = arith.addf %576, %559 : vector<1x32xf32>
    %c0_310 = arith.constant 0 : index
    %c0_311 = arith.constant 0 : index
    %578 = vector.load %arg18[%c0_310, %c0_311] : memref<32x128xbf16, #tpu.memory_space<vmem>>, vector<32x128xbf16>
    %579 = arith.truncf %577 : vector<1x32xf32> to vector<1x32xbf16>
    %cst_312 = arith.constant dense<0.000000e+00> : vector<1x128xf32>
    %580 = tpu.matmul %579, %578, %cst_312 {dimension_numbers = #tpu.dot_dimension_numbers<[1], [0], [0], [1], [0, 0, 1, 1], [], []>} : vector<1x32xbf16>, vector<32x128xbf16>, vector<1x128xf32> -> vector<1x128xf32>
    %c0_313 = arith.constant 0 : index
    %c0_314 = arith.constant 0 : index
    %581 = vector.load %arg19[%c0_313, %c0_314] : memref<1x128xf32, #tpu.memory_space<vmem>>, vector<1x128xf32>
    %582 = arith.addf %580, %581 : vector<1x128xf32>
    %c0_315 = arith.constant 0 : index
    %c0_316 = arith.constant 0 : index
    %c0_317 = arith.constant 0 : index
    %583 = vector.load %arg20[%c0_315, %c0_316, %c0_317] : memref<1x1x128xf32, #tpu.memory_space<vmem>>, vector<1x1x128xf32>
    %584 = vector.shape_cast %583 : vector<1x1x128xf32> to vector<1x128xf32>
    %585 = vector.shape_cast %582 : vector<1x128xf32> to vector<1x1x128xf32>
    tpu.vector_store %arg20[%c0_315, %c0_316, %c0_317], %585 {strides = array<i32>} : memref<1x1x128xf32, #tpu.memory_space<vmem>>, vector<1x1x128xf32>,
    return
  }
  func.func @transform_0(%arg0: i32) -> (i32, i32, i32) {
    %c0_i32 = arith.constant 0 : i32
    %c0_i32_0 = arith.constant 0 : i32
    %c0_i32_1 = arith.constant 0 : i32
    return %arg0, %c0_i32, %c0_i32_0 : i32, i32, i32
  }
  func.func @transform_1(%arg0: i32) -> (i32, i32) {
    %c0_i32 = arith.constant 0 : i32
    %c0_i32_0 = arith.constant 0 : i32
    %c0_i32_1 = arith.constant 0 : i32
    return %c0_i32, %c0_i32_0 : i32, i32
  }
  func.func @transform_2(%arg0: i32) -> (i32, i32) {
    %c0_i32 = arith.constant 0 : i32
    %c0_i32_0 = arith.constant 0 : i32
    %c0_i32_1 = arith.constant 0 : i32
    return %c0_i32, %c0_i32_0 : i32, i32
  }
  func.func @transform_3(%arg0: i32) -> (i32, i32, i32) {
    %c0_i32 = arith.constant 0 : i32
    %c0_i32_0 = arith.constant 0 : i32
    %c0_i32_1 = arith.constant 0 : i32
    %c0_i32_2 = arith.constant 0 : i32
    return %c0_i32, %c0_i32_0, %c0_i32_1 : i32, i32, i32
  }
  func.func @transform_4(%arg0: i32) -> (i32, i32, i32) {
    %c0_i32 = arith.constant 0 : i32
    %c0_i32_0 = arith.constant 0 : i32
    %c0_i32_1 = arith.constant 0 : i32
    %c0_i32_2 = arith.constant 0 : i32
    return %c0_i32, %c0_i32_0, %c0_i32_1 : i32, i32, i32
  }
  func.func @transform_5(%arg0: i32) -> (i32, i32, i32) {
    %c0_i32 = arith.constant 0 : i32
    %c0_i32_0 = arith.constant 0 : i32
    %c0_i32_1 = arith.constant 0 : i32
    %c0_i32_2 = arith.constant 0 : i32
    return %c0_i32, %c0_i32_0, %c0_i32_1 : i32, i32, i32
  }
  func.func @transform_6(%arg0: i32) -> (i32, i32, i32) {
    %c0_i32 = arith.constant 0 : i32
    %c0_i32_0 = arith.constant 0 : i32
    %c0_i32_1 = arith.constant 0 : i32
    %c0_i32_2 = arith.constant 0 : i32
    return %c0_i32, %c0_i32_0, %c0_i32_1 : i32, i32, i32
  }
  func.func @transform_7(%arg0: i32) -> (i32, i32, i32) {
    %c0_i32 = arith.constant 0 : i32
    %c0_i32_0 = arith.constant 0 : i32
    %c0_i32_1 = arith.constant 0 : i32
    %c0_i32_2 = arith.constant 0 : i32
    return %c0_i32, %c0_i32_0, %c0_i32_1 : i32, i32, i32
  }
  func.func @transform_8(%arg0: i32) -> (i32, i32, i32) {
    %c0_i32 = arith.constant 0 : i32
    %c0_i32_0 = arith.constant 0 : i32
    %c0_i32_1 = arith.constant 0 : i32
    %c0_i32_2 = arith.constant 0 : i32
    return %c0_i32, %c0_i32_0, %c0_i32_1 : i32, i32, i32
  }
  func.func @transform_9(%arg0: i32) -> (i32, i32, i32) {
    %c0_i32 = arith.constant 0 : i32
    %c0_i32_0 = arith.constant 0 : i32
    %c0_i32_1 = arith.constant 0 : i32
    %c0_i32_2 = arith.constant 0 : i32
    return %c0_i32, %c0_i32_0, %c0_i32_1 : i32, i32, i32
  }
  func.func @transform_10(%arg0: i32) -> (i32, i32, i32) {
    %c0_i32 = arith.constant 0 : i32
    %c0_i32_0 = arith.constant 0 : i32
    %c0_i32_1 = arith.constant 0 : i32
    %c0_i32_2 = arith.constant 0 : i32
    return %c0_i32, %c0_i32_0, %c0_i32_1 : i32, i32, i32
  }
  func.func @transform_11(%arg0: i32) -> (i32, i32, i32) {
    %c0_i32 = arith.constant 0 : i32
    %c0_i32_0 = arith.constant 0 : i32
    %c0_i32_1 = arith.constant 0 : i32
    %c0_i32_2 = arith.constant 0 : i32
    return %c0_i32, %c0_i32_0, %c0_i32_1 : i32, i32, i32
  }
  func.func @transform_12(%arg0: i32) -> (i32, i32, i32) {
    %c0_i32 = arith.constant 0 : i32
    %c0_i32_0 = arith.constant 0 : i32
    %c0_i32_1 = arith.constant 0 : i32
    %c0_i32_2 = arith.constant 0 : i32
    return %c0_i32, %c0_i32_0, %c0_i32_1 : i32, i32, i32
  }
  func.func @transform_13(%arg0: i32) -> (i32, i32, i32) {
    %c0_i32 = arith.constant 0 : i32
    %c0_i32_0 = arith.constant 0 : i32
    %c0_i32_1 = arith.constant 0 : i32
    %c0_i32_2 = arith.constant 0 : i32
    return %c0_i32, %c0_i32_0, %c0_i32_1 : i32, i32, i32
  }
  func.func @transform_14(%arg0: i32) -> (i32, i32, i32) {
    %c0_i32 = arith.constant 0 : i32
    %c0_i32_0 = arith.constant 0 : i32
    %c0_i32_1 = arith.constant 0 : i32
    %c0_i32_2 = arith.constant 0 : i32
    return %c0_i32, %c0_i32_0, %c0_i32_1 : i32, i32, i32
  }
  func.func @transform_15(%arg0: i32) -> (i32, i32) {
    %c0_i32 = arith.constant 0 : i32
    %c0_i32_0 = arith.constant 0 : i32
    %c0_i32_1 = arith.constant 0 : i32
    return %c0_i32, %c0_i32_0 : i32, i32
  }
  func.func @transform_16(%arg0: i32) -> (i32, i32) {
    %c0_i32 = arith.constant 0 : i32
    %c0_i32_0 = arith.constant 0 : i32
    %c0_i32_1 = arith.constant 0 : i32
    return %c0_i32, %c0_i32_0 : i32, i32
  }
  func.func @transform_17(%arg0: i32) -> (i32, i32) {
    %c0_i32 = arith.constant 0 : i32
    %c0_i32_0 = arith.constant 0 : i32
    %c0_i32_1 = arith.constant 0 : i32
    return %c0_i32, %c0_i32_0 : i32, i32
  }
  func.func @transform_18(%arg0: i32) -> (i32, i32) {
    %c0_i32 = arith.constant 0 : i32
    %c0_i32_0 = arith.constant 0 : i32
    %c0_i32_1 = arith.constant 0 : i32
    return %c0_i32, %c0_i32_0 : i32, i32
  }
  func.func @transform_19(%arg0: i32) -> (i32, i32, i32) {
    %c0_i32 = arith.constant 0 : i32
    %c0_i32_0 = arith.constant 0 : i32
    %c0_i32_1 = arith.constant 0 : i32
    return %arg0, %c0_i32, %c0_i32_0 : i32, i32, i32
  }
}

</mosaic_0001>

<llo_original>
// kernel: vit_forward.1
$region0: #{vit_forward.1}
  #allocation0 [shape = 'u32[]', space=smem, size = 0x4, offset = 0x4, fixed_abs, tag = 'smem constant byte address 0x4 - core index']
  #allocation1 [shape = 'u32[144,128]{1,0:T(1,128)}', space=vmem, size = 0x12000, scoped, tag = 'internal scratch']
  %s0 = inlined_call_operand.vmem [shape: bf16[2,32,64], index: 0, kind: input, shape index: {}]
  %s1 = inlined_call_operand.vmem [shape: bf16[64,32], index: 1, kind: input, shape index: {}]
  %s2 = inlined_call_operand.vmem [shape: f32[32,32], index: 2, kind: input, shape index: {}]
  %s3 = inlined_call_operand.vmem [shape: f32[2,1,32], index: 3, kind: input, shape index: {}]
  %s4 = inlined_call_operand.vmem [shape: f32[2,1,32], index: 4, kind: input, shape index: {}]
  %s5 = inlined_call_operand.vmem [shape: bf16[24,32,8], index: 5, kind: input, shape index: {}]
  %s6 = inlined_call_operand.vmem [shape: f32[24,1,8], index: 6, kind: input, shape index: {}]
  %s7 = inlined_call_operand.vmem [shape: bf16[8,8,32], index: 7, kind: input, shape index: {}]
  %s8 = inlined_call_operand.vmem [shape: f32[2,1,32], index: 8, kind: input, shape index: {}]
  %s9 = inlined_call_operand.vmem [shape: f32[2,1,32], index: 9, kind: input, shape index: {}]
  %s10 = inlined_call_operand.vmem [shape: f32[2,1,32], index: 10, kind: input, shape index: {}]
  %s11 = inlined_call_operand.vmem [shape: bf16[2,32,128], index: 11, kind: input, shape index: {}]
  %s12 = inlined_call_operand.vmem [shape: f32[2,1,128], index: 12, kind: input, shape index: {}]
  %s13 = inlined_call_operand.vmem [shape: bf16[2,128,32], index: 13, kind: input, shape index: {}]
  %s14 = inlined_call_operand.vmem [shape: f32[2,1,32], index: 14, kind: input, shape index: {}]
  %s15 = inlined_call_operand.vmem [shape: f32[1,32], index: 15, kind: input, shape index: {}]
  %s16 = inlined_call_operand.vmem [shape: f32[1,32], index: 16, kind: input, shape index: {}]
  %s17 = inlined_call_operand.vmem [shape: bf16[32,128], index: 17, kind: input, shape index: {}]
  %s18 = inlined_call_operand.vmem [shape: f32[1,128], index: 18, kind: input, shape index: {}]
  %s19 = inlined_call_operand.hbm [shape: f32[2,1,128], index: 19, kind: output, shape index: {}]
  %s20 = sld [smem:[#allocation0]]
  $region109: #{vit_forward.1} parent=0
    _
  %s22 = ssub.s32 1, %s20
  %s23 = scalar_select 0, %s22, %s20
  $region1: #{vit_forward.1} parent=0
    #allocation2 [shape = 'u8[1024]{0}', space=vmem, size = 0x400, scoped, tag = 'output window, operand 0']
    #allocation3 [shape = 's32[2]{0}', space=sflag, size = 0x8, scoped, tag = 'scoped memory for vit_forward.1']
    %24 = vsyncpa [#allocation3], 0
    %s25 = scalar_lea.sflag [#allocation3], 1
    %26 = vsyncpa %s25, 0
    loop: start=0, step=1, limit=4
    $region2: #{vit_forward.1} parent=1 // loop_pre_header
      _
    $region3: #{vit_forward.1} parent=1 // loop_header
      %s28 = sphi 0, %s32
      %p29 = scmp.ge.s32.totalorder %s28, 4
      %s38 = sphi 0, %s40
      %s41 = sphi 0, %s38
      %s42 = sphi 0, %s41
      %s58 = sphi 0, %s42
      %s62 = sphi 0, %s62
      %s64 = sphi 0, %s62
      %s65 = sphi 0, %s64
      %s79 = sphi 0, %s65
      %s83 = sphi 0, %s83
      %s85 = sphi 0, %s83
      %s86 = sphi 0, %s85
      %s100 = sphi 0, %s86
      %s104 = sphi 0, %s104
      %s106 = sphi 0, %s104
      %s107 = sphi 0, %s106
      %s121 = sphi 0, %s107
      %s125 = sphi 0, %s125
      %s127 = sphi 0, %s125
      %s128 = sphi 0, %s127
      %s142 = sphi 0, %s128
      %s146 = sphi 0, %s146
      %s148 = sphi 0, %s146
      %s149 = sphi 0, %s148
      %s163 = sphi 0, %s149
      %s167 = sphi 0, %s167
      %s169 = sphi 0, %s167
      %s170 = sphi 0, %s169
      %s184 = sphi 0, %s170
      %s188 = sphi 0, %s188
      %s190 = sphi 0, %s188
      %s191 = sphi 0, %s190
      %s205 = sphi 0, %s191
      %s209 = sphi 0, %s209
      %s211 = sphi 0, %s209
      %s212 = sphi 0, %s211
      %s226 = sphi 0, %s212
      %s230 = sphi 0, %s230
      %s232 = sphi 0, %s230
      %s233 = sphi 0, %s232
      %s247 = sphi 0, %s233
      %s251 = sphi 0, %s251
      %s253 = sphi 0, %s251
      %s254 = sphi 0, %s253
      %s268 = sphi 0, %s254
      %s272 = sphi 0, %s272
      %s274 = sphi 0, %s272
      %s275 = sphi 0, %s274
      %s289 = sphi 0, %s275
      %s293 = sphi 0, %s293
      %s295 = sphi 0, %s293
      %s296 = sphi 0, %s295
      %s310 = sphi 0, %s296
      %s314 = sphi 0, %s314
      %s316 = sphi 0, %s314
      %s317 = sphi 0, %s316
      %s331 = sphi 0, %s317
      %s335 = sphi 0, %s335
      %s337 = sphi 0, %s335
      %s338 = sphi 0, %s337
      %s352 = sphi 0, %s338
      %s356 = sphi 0, %s356
      %s358 = sphi 0, %s356
      %s359 = sphi 0, %s358
      %s373 = sphi 0, %s359
      %s377 = sphi 0, %s377
      %s379 = sphi 0, %s377
      %s380 = sphi 0, %s379
      %s394 = sphi 0, %s380
      %s398 = sphi 0, %s398
      %s400 = sphi 0, %s398
      %s401 = sphi 0, %s400
      %s415 = sphi 0, %s401
      %s419 = sphi 0, %s419
      %s421 = sphi 0, %s419
      %s422 = sphi 0, %s421
      %s436 = sphi 0, %s422
      %s442 = sphi 0, %s444
      %s445 = sphi 0, %s442
      %s446 = sphi 0, %s445
      %s462 = sphi 0, %s446
    $region4: #{vit_forward.1} parent=1 // loop_header_branch
      %31 = sbr.rel (%p29) target = $region8
    $region5: #{vit_forward.1} parent=1 // loop_body
      %s33 = ssub.s32 %s28, 1
      %s34 = ssub.s32 %s28, 2
      %s35 = sadd.s32 %s28, 1
      %s36 = ssub.s32 %s28, %s35
      %p37 = scmp.eq.s32.totalorder %s36, 0
      %s39 = sadd.s32 %s38, 1
      %s40 = scalar_select %p37, %s38, %s39
      %p43 = pneg %p37
      %p44 = scmp.eq.s32.totalorder %s28, 1
      %p45 = por %p43, %p44
      %p46 = scmp.ne.s32.totalorder %s38, %s41
      %p47 = scmp.eq.s32.totalorder %s28, 0
      %p48 = por %p46, %p47
      %p49 = scmp.ne.s32.totalorder %s38, %s41
      %p50 = scmp.eq.s32.totalorder %s33, 1
      %p51 = por %p49, %p50
      %p52 = scmp.ne.s32.totalorder %s41, %s42
      %p53 = scmp.eq.s32.totalorder %s33, 0
      %p54 = por %p52, %p53
      %p55 = scmp.ne.s32.totalorder %s41, %s42
      %p56 = scmp.eq.s32.totalorder %s34, 1
      %p57 = por %p55, %p56
      %p59 = scmp.ne.s32.totalorder %s42, %s58
      %p60 = scmp.eq.s32.totalorder %s34, 0
      %p61 = por %p59, %p60
      %s63 = sadd.s32 %s62, 1
      %p66 = scmp.eq.s32.totalorder %s28, 1
      %p67 = scmp.ne.s32.totalorder %s62, %s64
      %p68 = scmp.eq.s32.totalorder %s28, 0
      %p69 = por %p67, %p68
      %p70 = scmp.ne.s32.totalorder %s62, %s64
      %p71 = scmp.eq.s32.totalorder %s33, 1
      %p72 = por %p70, %p71
      %p73 = scmp.ne.s32.totalorder %s64, %s65
      %p74 = scmp.eq.s32.totalorder %s33, 0
      %p75 = por %p73, %p74
      %p76 = scmp.ne.s32.totalorder %s64, %s65
      %p77 = scmp.eq.s32.totalorder %s34, 1
      %p78 = por %p76, %p77
      %p80 = scmp.ne.s32.totalorder %s65, %s79
      %p81 = scmp.eq.s32.totalorder %s34, 0
      %p82 = por %p80, %p81
      %s84 = sadd.s32 %s83, 1
      %p87 = scmp.eq.s32.totalorder %s28, 1
      %p88 = scmp.ne.s32.totalorder %s83, %s85
      %p89 = scmp.eq.s32.totalorder %s28, 0
      %p90 = por %p88, %p89
      %p91 = scmp.ne.s32.totalorder %s83, %s85
      %p92 = scmp.eq.s32.totalorder %s33, 1
      %p93 = por %p91, %p92
      %p94 = scmp.ne.s32.totalorder %s85, %s86
      %p95 = scmp.eq.s32.totalorder %s33, 0
      %p96 = por %p94, %p95
      %p97 = scmp.ne.s32.totalorder %s85, %s86
      %p98 = scmp.eq.s32.totalorder %s34, 1
      %p99 = por %p97, %p98
      %p101 = scmp.ne.s32.totalorder %s86, %s100
      %p102 = scmp.eq.s32.totalorder %s34, 0
      %p103 = por %p101, %p102
      %s105 = sadd.s32 %s104, 1
      %p108 = scmp.eq.s32.totalorder %s28, 1
      %p109 = scmp.ne.s32.totalorder %s104, %s106
      %p110 = scmp.eq.s32.totalorder %s28, 0
      %p111 = por %p109, %p110
      %p112 = scmp.ne.s32.totalorder %s104, %s106
      %p113 = scmp.eq.s32.totalorder %s33, 1
      %p114 = por %p112, %p113
      %p115 = scmp.ne.s32.totalorder %s106, %s107
      %p116 = scmp.eq.s32.totalorder %s33, 0
      %p117 = por %p115, %p116
      %p118 = scmp.ne.s32.totalorder %s106, %s107
      %p119 = scmp.eq.s32.totalorder %s34, 1
      %p120 = por %p118, %p119
      %p122 = scmp.ne.s32.totalorder %s107, %s121
      %p123 = scmp.eq.s32.totalorder %s34, 0
      %p124 = por %p122, %p123
      %s126 = sadd.s32 %s125, 1
      %p129 = scmp.eq.s32.totalorder %s28, 1
      %p130 = scmp.ne.s32.totalorder %s125, %s127
      %p131 = scmp.eq.s32.totalorder %s28, 0
      %p132 = por %p130, %p131
      %p133 = scmp.ne.s32.totalorder %s125, %s127
      %p134 = scmp.eq.s32.totalorder %s33, 1
      %p135 = por %p133, %p134
      %p136 = scmp.ne.s32.totalorder %s127, %s128
      %p137 = scmp.eq.s32.totalorder %s33, 0
      %p138 = por %p136, %p137
      %p139 = scmp.ne.s32.totalorder %s127, %s128
      %p140 = scmp.eq.s32.totalorder %s34, 1
      %p141 = por %p139, %p140
      %p143 = scmp.ne.s32.totalorder %s128, %s142
      %p144 = scmp.eq.s32.totalorder %s34, 0
      %p145 = por %p143, %p144
      %s147 = sadd.s32 %s146, 1
      %p150 = scmp.eq.s32.totalorder %s28, 1
      %p151 = scmp.ne.s32.totalorder %s146, %s148
      %p152 = scmp.eq.s32.totalorder %s28, 0
      %p153 = por %p151, %p152
      %p154 = scmp.ne.s32.totalorder %s146, %s148
      %p155 = scmp.eq.s32.totalorder %s33, 1
      %p156 = por %p154, %p155
      %p157 = scmp.ne.s32.totalorder %s148, %s149
      %p158 = scmp.eq.s32.totalorder %s33, 0
      %p159 = por %p157, %p158
      %p160 = scmp.ne.s32.totalorder %s148, %s149
      %p161 = scmp.eq.s32.totalorder %s34, 1
      %p162 = por %p160, %p161
      %p164 = scmp.ne.s32.totalorder %s149, %s163
      %p165 = scmp.eq.s32.totalorder %s34, 0
      %p166 = por %p164, %p165
      %s168 = sadd.s32 %s167, 1
      %p171 = scmp.eq.s32.totalorder %s28, 1
      %p172 = scmp.ne.s32.totalorder %s167, %s169
      %p173 = scmp.eq.s32.totalorder %s28, 0
      %p174 = por %p172, %p173
      %p175 = scmp.ne.s32.totalorder %s167, %s169
      %p176 = scmp.eq.s32.totalorder %s33, 1
      %p177 = por %p175, %p176
      %p178 = scmp.ne.s32.totalorder %s169, %s170
      %p179 = scmp.eq.s32.totalorder %s33, 0
      %p180 = por %p178, %p179
      %p181 = scmp.ne.s32.totalorder %s169, %s170
      %p182 = scmp.eq.s32.totalorder %s34, 1
      %p183 = por %p181, %p182
      %p185 = scmp.ne.s32.totalorder %s170, %s184
      %p186 = scmp.eq.s32.totalorder %s34, 0
      %p187 = por %p185, %p186
      %s189 = sadd.s32 %s188, 1
      %p192 = scmp.eq.s32.totalorder %s28, 1
      %p193 = scmp.ne.s32.totalorder %s188, %s190
      %p194 = scmp.eq.s32.totalorder %s28, 0
      %p195 = por %p193, %p194
      %p196 = scmp.ne.s32.totalorder %s188, %s190
      %p197 = scmp.eq.s32.totalorder %s33, 1
      %p198 = por %p196, %p197
      %p199 = scmp.ne.s32.totalorder %s190, %s191
      %p200 = scmp.eq.s32.totalorder %s33, 0
      %p201 = por %p199, %p200
      %p202 = scmp.ne.s32.totalorder %s190, %s191
      %p203 = scmp.eq.s32.totalorder %s34, 1
      %p204 = por %p202, %p203
      %p206 = scmp.ne.s32.totalorder %s191, %s205
      %p207 = scmp.eq.s32.totalorder %s34, 0
      %p208 = por %p206, %p207
      %s210 = sadd.s32 %s209, 1
      %p213 = scmp.eq.s32.totalorder %s28, 1
      %p214 = scmp.ne.s32.totalorder %s209, %s211
      %p215 = scmp.eq.s32.totalorder %s28, 0
      %p216 = por %p214, %p215
      %p217 = scmp.ne.s32.totalorder %s209, %s211
      %p218 = scmp.eq.s32.totalorder %s33, 1
      %p219 = por %p217, %p218
      %p220 = scmp.ne.s32.totalorder %s211, %s212
      %p221 = scmp.eq.s32.totalorder %s33, 0
      %p222 = por %p220, %p221
      %p223 = scmp.ne.s32.totalorder %s211, %s212
      %p224 = scmp.eq.s32.totalorder %s34, 1
      %p225 = por %p223, %p224
      %p227 = scmp.ne.s32.totalorder %s212, %s226
      %p228 = scmp.eq.s32.totalorder %s34, 0
      %p229 = por %p227, %p228
      %s231 = sadd.s32 %s230, 1
      %p234 = scmp.eq.s32.totalorder %s28, 1
      %p235 = scmp.ne.s32.totalorder %s230, %s232
      %p236 = scmp.eq.s32.totalorder %s28, 0
      %p237 = por %p235, %p236
      %p238 = scmp.ne.s32.totalorder %s230, %s232
      %p239 = scmp.eq.s32.totalorder %s33, 1
      %p240 = por %p238, %p239
      %p241 = scmp.ne.s32.totalorder %s232, %s233
      %p242 = scmp.eq.s32.totalorder %s33, 0
      %p243 = por %p241, %p242
      %p244 = scmp.ne.s32.totalorder %s232, %s233
      %p245 = scmp.eq.s32.totalorder %s34, 1
      %p246 = por %p244, %p245
      %p248 = scmp.ne.s32.totalorder %s233, %s247
      %p249 = scmp.eq.s32.totalorder %s34, 0
      %p250 = por %p248, %p249
      %s252 = sadd.s32 %s251, 1
      %p255 = scmp.eq.s32.totalorder %s28, 1
      %p256 = scmp.ne.s32.totalorder %s251, %s253
      %p257 = scmp.eq.s32.totalorder %s28, 0
      %p258 = por %p256, %p257
      %p259 = scmp.ne.s32.totalorder %s251, %s253
      %p260 = scmp.eq.s32.totalorder %s33, 1
      %p261 = por %p259, %p260
      %p262 = scmp.ne.s32.totalorder %s253, %s254
      %p263 = scmp.eq.s32.totalorder %s33, 0
      %p264 = por %p262, %p263
      %p265 = scmp.ne.s32.totalorder %s253, %s254
      %p266 = scmp.eq.s32.totalorder %s34, 1
      %p267 = por %p265, %p266
      %p269 = scmp.ne.s32.totalorder %s254, %s268
      %p270 = scmp.eq.s32.totalorder %s34, 0
      %p271 = por %p269, %p270
      %s273 = sadd.s32 %s272, 1
      %p276 = scmp.eq.s32.totalorder %s28, 1
      %p277 = scmp.ne.s32.totalorder %s272, %s274
      %p278 = scmp.eq.s32.totalorder %s28, 0
      %p279 = por %p277, %p278
      %p280 = scmp.ne.s32.totalorder %s272, %s274
      %p281 = scmp.eq.s32.totalorder %s33, 1
      %p282 = por %p280, %p281
      %p283 = scmp.ne.s32.totalorder %s274, %s275
      %p284 = scmp.eq.s32.totalorder %s33, 0
      %p285 = por %p283, %p284
      %p286 = scmp.ne.s32.totalorder %s274, %s275
      %p287 = scmp.eq.s32.totalorder %s34, 1
      %p288 = por %p286, %p287
      %p290 = scmp.ne.s32.totalorder %s275, %s289
      %p291 = scmp.eq.s32.totalorder %s34, 0
      %p292 = por %p290, %p291
      %s294 = sadd.s32 %s293, 1
      %p297 = scmp.eq.s32.totalorder %s28, 1
      %p298 = scmp.ne.s32.totalorder %s293, %s295
      %p299 = scmp.eq.s32.totalorder %s28, 0
      %p300 = por %p298, %p299
      %p301 = scmp.ne.s32.totalorder %s293, %s295
      %p302 = scmp.eq.s32.totalorder %s33, 1
      %p303 = por %p301, %p302
      %p304 = scmp.ne.s32.totalorder %s295, %s296
      %p305 = scmp.eq.s32.totalorder %s33, 0
      %p306 = por %p304, %p305
      %p307 = scmp.ne.s32.totalorder %s295, %s296
      %p308 = scmp.eq.s32.totalorder %s34, 1
      %p309 = por %p307, %p308
      %p311 = scmp.ne.s32.totalorder %s296, %s310
      %p312 = scmp.eq.s32.totalorder %s34, 0
      %p313 = por %p311, %p312
      %s315 = sadd.s32 %s314, 1
      %p318 = scmp.eq.s32.totalorder %s28, 1
      %p319 = scmp.ne.s32.totalorder %s314, %s316
      %p320 = scmp.eq.s32.totalorder %s28, 0
      %p321 = por %p319, %p320
      %p322 = scmp.ne.s32.totalorder %s314, %s316
      %p323 = scmp.eq.s32.totalorder %s33, 1
      %p324 = por %p322, %p323
      %p325 = scmp.ne.s32.totalorder %s316, %s317
      %p326 = scmp.eq.s32.totalorder %s33, 0
      %p327 = por %p325, %p326
      %p328 = scmp.ne.s32.totalorder %s316, %s317
      %p329 = scmp.eq.s32.totalorder %s34, 1
      %p330 = por %p328, %p329
      %p332 = scmp.ne.s32.totalorder %s317, %s331
      %p333 = scmp.eq.s32.totalorder %s34, 0
      %p334 = por %p332, %p333
      %s336 = sadd.s32 %s335, 1
      %p339 = scmp.eq.s32.totalorder %s28, 1
      %p340 = scmp.ne.s32.totalorder %s335, %s337
      %p341 = scmp.eq.s32.totalorder %s28, 0
      %p342 = por %p340, %p341
      %p343 = scmp.ne.s32.totalorder %s335, %s337
      %p344 = scmp.eq.s32.totalorder %s33, 1
      %p345 = por %p343, %p344
      %p346 = scmp.ne.s32.totalorder %s337, %s338
      %p347 = scmp.eq.s32.totalorder %s33, 0
      %p348 = por %p346, %p347
      %p349 = scmp.ne.s32.totalorder %s337, %s338
      %p350 = scmp.eq.s32.totalorder %s34, 1
      %p351 = por %p349, %p350
      %p353 = scmp.ne.s32.totalorder %s338, %s352
      %p354 = scmp.eq.s32.totalorder %s34, 0
      %p355 = por %p353, %p354
      %s357 = sadd.s32 %s356, 1
      %p360 = scmp.eq.s32.totalorder %s28, 1
      %p361 = scmp.ne.s32.totalorder %s356, %s358
      %p362 = scmp.eq.s32.totalorder %s28, 0
      %p363 = por %p361, %p362
      %p364 = scmp.ne.s32.totalorder %s356, %s358
      %p365 = scmp.eq.s32.totalorder %s33, 1
      %p366 = por %p364, %p365
      %p367 = scmp.ne.s32.totalorder %s358, %s359
      %p368 = scmp.eq.s32.totalorder %s33, 0
      %p369 = por %p367, %p368
      %p370 = scmp.ne.s32.totalorder %s358, %s359
      %p371 = scmp.eq.s32.totalorder %s34, 1
      %p372 = por %p370, %p371
      %p374 = scmp.ne.s32.totalorder %s359, %s373
      %p375 = scmp.eq.s32.totalorder %s34, 0
      %p376 = por %p374, %p375
      %s378 = sadd.s32 %s377, 1
      %p381 = scmp.eq.s32.totalorder %s28, 1
      %p382 = scmp.ne.s32.totalorder %s377, %s379
      %p383 = scmp.eq.s32.totalorder %s28, 0
      %p384 = por %p382, %p383
      %p385 = scmp.ne.s32.totalorder %s377, %s379
      %p386 = scmp.eq.s32.totalorder %s33, 1
      %p387 = por %p385, %p386
      %p388 = scmp.ne.s32.totalorder %s379, %s380
      %p389 = scmp.eq.s32.totalorder %s33, 0
      %p390 = por %p388, %p389
      %p391 = scmp.ne.s32.totalorder %s379, %s380
      %p392 = scmp.eq.s32.totalorder %s34, 1
      %p393 = por %p391, %p392
      %p395 = scmp.ne.s32.totalorder %s380, %s394
      %p396 = scmp.eq.s32.totalorder %s34, 0
      %p397 = por %p395, %p396
      %s399 = sadd.s32 %s398, 1
      %p402 = scmp.eq.s32.totalorder %s28, 1
      %p403 = scmp.ne.s32.totalorder %s398, %s400
      %p404 = scmp.eq.s32.totalorder %s28, 0
      %p405 = por %p403, %p404
      %p406 = scmp.ne.s32.totalorder %s398, %s400
      %p407 = scmp.eq.s32.totalorder %s33, 1
      %p408 = por %p406, %p407
      %p409 = scmp.ne.s32.totalorder %s400, %s401
      %p410 = scmp.eq.s32.totalorder %s33, 0
      %p411 = por %p409, %p410
      %p412 = scmp.ne.s32.totalorder %s400, %s401
      %p413 = scmp.eq.s32.totalorder %s34, 1
      %p414 = por %p412, %p413
      %p416 = scmp.ne.s32.totalorder %s401, %s415
      %p417 = scmp.eq.s32.totalorder %s34, 0
      %p418 = por %p416, %p417
      %s420 = sadd.s32 %s419, 1
      %p423 = scmp.eq.s32.totalorder %s28, 1
      %p424 = scmp.ne.s32.totalorder %s419, %s421
      %p425 = scmp.eq.s32.totalorder %s28, 0
      %p426 = por %p424, %p425
      %p427 = scmp.ne.s32.totalorder %s419, %s421
      %p428 = scmp.eq.s32.totalorder %s33, 1
      %p429 = por %p427, %p428
      %p430 = scmp.ne.s32.totalorder %s421, %s422
      %p431 = scmp.eq.s32.totalorder %s33, 0
      %p432 = por %p430, %p431
      %p433 = scmp.ne.s32.totalorder %s421, %s422
      %p434 = scmp.eq.s32.totalorder %s34, 1
      %p435 = por %p433, %p434
      %p437 = scmp.ne.s32.totalorder %s422, %s436
      %p438 = scmp.eq.s32.totalorder %s34, 0
      %p439 = por %p437, %p438
      %s440 = ssub.s32 %s28, %s35
      %p441 = scmp.eq.s32.totalorder %s440, 0
      %s443 = sadd.s32 %s442, 1
      %s444 = scalar_select %p441, %s442, %s443
      %p447 = pneg %p441
      %p448 = scmp.eq.s32.totalorder %s28, 1
      %p449 = por %p447, %p448
      %p450 = scmp.ne.s32.totalorder %s442, %s445
      %p451 = scmp.eq.s32.totalorder %s28, 0
      %p452 = por %p450, %p451
      %p453 = scmp.ne.s32.totalorder %s442, %s445
      %p454 = scmp.eq.s32.totalorder %s33, 1
      %p455 = por %p453, %p454
      %p456 = scmp.ne.s32.totalorder %s445, %s446
      %p457 = scmp.eq.s32.totalorder %s33, 0
      %p458 = por %p456, %p457
      %p459 = scmp.ne.s32.totalorder %s445, %s446
      %p460 = scmp.eq.s32.totalorder %s34, 1
      %p461 = por %p459, %p460
      %p463 = scmp.ne.s32.totalorder %s446, %s462
      %p464 = scmp.eq.s32.totalorder %s34, 0
      %p465 = por %p463, %p464
      %p466 = scmp.le.s32.totalorder 1, %s28
      %p467 = scmp.lt.s32.totalorder %s28, 3
      %p468 = pnand %p466, %p467
      %p469 = pneg %p468
      // Predicated region
      $region9: #{vit_forward.1} parent=5 // pred_check
        _
      $region10: #{vit_forward.1} parent=5 // pred_check_branch
        %471 = sbr.rel (%p468) target = $region12
      $region11: #{vit_forward.1} parent=5 // pred_region
        %s472 = ssub.s32 %s28, 1
        // Predicated region
        $region13: #{vit_forward.1} parent=11 // pred_check
          %p473 = pneg %p75
        $region14: #{vit_forward.1} parent=11 // pred_check_branch
          %475 = sbr.rel (%p473) target = $region16
        $region15: #{vit_forward.1} parent=11 // pred_region
          _
        $region16: #{vit_forward.1} parent=11 // pred_fallthru
          _
        // Predicated region
        $region17: #{vit_forward.1} parent=11 // pred_check
          %p476 = pneg %p96
        $region18: #{vit_forward.1} parent=11 // pred_check_branch
          %478 = sbr.rel (%p476) target = $region20
        $region19: #{vit_forward.1} parent=11 // pred_region
          _
        $region20: #{vit_forward.1} parent=11 // pred_fallthru
          _
        // Predicated region
        $region21: #{vit_forward.1} parent=11 // pred_check
          %p479 = pneg %p117
        $region22: #{vit_forward.1} parent=11 // pred_check_branch
          %481 = sbr.rel (%p479) target = $region24
        $region23: #{vit_forward.1} parent=11 // pred_region
          _
        $region24: #{vit_forward.1} parent=11 // pred_fallthru
          _
        // Predicated region
        $region25: #{vit_forward.1} parent=11 // pred_check
          %p482 = pneg %p138
        $region26: #{vit_forward.1} parent=11 // pred_check_branch
          %484 = sbr.rel (%p482) target = $region28
        $region27: #{vit_forward.1} parent=11 // pred_region
          _
        $region28: #{vit_forward.1} parent=11 // pred_fallthru
          _
        // Predicated region
        $region29: #{vit_forward.1} parent=11 // pred_check
          %p485 = pneg %p159
        $region30: #{vit_forward.1} parent=11 // pred_check_branch
          %487 = sbr.rel (%p485) target = $region32
        $region31: #{vit_forward.1} parent=11 // pred_region
          _
        $region32: #{vit_forward.1} parent=11 // pred_fallthru
          _
        // Predicated region
        $region33: #{vit_forward.1} parent=11 // pred_check
          %p488 = pneg %p180
        $region34: #{vit_forward.1} parent=11 // pred_check_branch
          %490 = sbr.rel (%p488) target = $region36
        $region35: #{vit_forward.1} parent=11 // pred_region
          _
        $region36: #{vit_forward.1} parent=11 // pred_fallthru
          _
        // Predicated region
        $region37: #{vit_forward.1} parent=11 // pred_check
          %p491 = pneg %p201
        $region38: #{vit_forward.1} parent=11 // pred_check_branch
          %493 = sbr.rel (%p491) target = $region40
        $region39: #{vit_forward.1} parent=11 // pred_region
          _
        $region40: #{vit_forward.1} parent=11 // pred_fallthru
          _
        // Predicated region
        $region41: #{vit_forward.1} parent=11 // pred_check
          %p494 = pneg %p222
        $region42: #{vit_forward.1} parent=11 // pred_check_branch
          %496 = sbr.rel (%p494) target = $region44
        $region43: #{vit_forward.1} parent=11 // pred_region
          _
        $region44: #{vit_forward.1} parent=11 // pred_fallthru
          _
        // Predicated region
        $region45: #{vit_forward.1} parent=11 // pred_check
          %p497 = pneg %p243
        $region46: #{vit_forward.1} parent=11 // pred_check_branch
          %499 = sbr.rel (%p497) target = $region48
        $region47: #{vit_forward.1} parent=11 // pred_region
          _
        $region48: #{vit_forward.1} parent=11 // pred_fallthru
          _
        // Predicated region
        $region49: #{vit_forward.1} parent=11 // pred_check
          %p500 = pneg %p264
        $region50: #{vit_forward.1} parent=11 // pred_check_branch
          %502 = sbr.rel (%p500) target = $region52
        $region51: #{vit_forward.1} parent=11 // pred_region
          _
        $region52: #{vit_forward.1} parent=11 // pred_fallthru
          _
        // Predicated region
        $region53: #{vit_forward.1} parent=11 // pred_check
          %p503 = pneg %p285
        $region54: #{vit_forward.1} parent=11 // pred_check_branch
          %505 = sbr.rel (%p503) target = $region56
        $region55: #{vit_forward.1} parent=11 // pred_region
          _
        $region56: #{vit_forward.1} parent=11 // pred_fallthru
          _
        // Predicated region
        $region57: #{vit_forward.1} parent=11 // pred_check
          %p506 = pneg %p306
        $region58: #{vit_forward.1} parent=11 // pred_check_branch
          %508 = sbr.rel (%p506) target = $region60
        $region59: #{vit_forward.1} parent=11 // pred_region
          _
        $region60: #{vit_forward.1} parent=11 // pred_fallthru
          _
        // Predicated region
        $region61: #{vit_forward.1} parent=11 // pred_check
          %p509 = pneg %p327
        $region62: #{vit_forward.1} parent=11 // pred_check_branch
          %511 = sbr.rel (%p509) target = $region64
        $region63: #{vit_forward.1} parent=11 // pred_region
          _
        $region64: #{vit_forward.1} parent=11 // pred_fallthru
          _
        // Predicated region
        $region65: #{vit_forward.1} parent=11 // pred_check
          %p512 = pneg %p348
        $region66: #{vit_forward.1} parent=11 // pred_check_branch
          %514 = sbr.rel (%p512) target = $region68
        $region67: #{vit_forward.1} parent=11 // pred_region
          _
        $region68: #{vit_forward.1} parent=11 // pred_fallthru
          _
        // Predicated region
        $region69: #{vit_forward.1} parent=11 // pred_check
          %p515 = pneg %p369
        $region70: #{vit_forward.1} parent=11 // pred_check_branch
          %517 = sbr.rel (%p515) target = $region72
        $region71: #{vit_forward.1} parent=11 // pred_region
          _
        $region72: #{vit_forward.1} parent=11 // pred_fallthru
          _
        // Predicated region
        $region73: #{vit_forward.1} parent=11 // pred_check
          %p518 = pneg %p390
        $region74: #{vit_forward.1} parent=11 // pred_check_branch
          %520 = sbr.rel (%p518) target = $region76
        $region75: #{vit_forward.1} parent=11 // pred_region
          _
        $region76: #{vit_forward.1} parent=11 // pred_fallthru
          _
        // Predicated region
        $region77: #{vit_forward.1} parent=11 // pred_check
          %p521 = pneg %p411
        $region78: #{vit_forward.1} parent=11 // pred_check_branch
          %523 = sbr.rel (%p521) target = $region80
        $region79: #{vit_forward.1} parent=11 // pred_region
          _
        $region80: #{vit_forward.1} parent=11 // pred_fallthru
          _
        // Predicated region
        $region81: #{vit_forward.1} parent=11 // pred_check
          %p524 = pneg %p432
        $region82: #{vit_forward.1} parent=11 // pred_check_branch
          %526 = sbr.rel (%p524) target = $region84
        $region83: #{vit_forward.1} parent=11 // pred_region
          _
        $region84: #{vit_forward.1} parent=11 // pred_fallthru
          _
      $region12: #{vit_forward.1} parent=5 // pred_fallthru
        _
      %p527 = scmp.lt.s32.totalorder %s28, 2
      // Predicated region
      $region85: #{vit_forward.1} parent=5 // pred_check
        %p528 = pneg %p527
      $region86: #{vit_forward.1} parent=5 // pred_check_branch
        %530 = sbr.rel (%p528) target = $region88
      $region87: #{vit_forward.1} parent=5 // pred_region
        // Predicated region
        $region89: #{vit_forward.1} parent=87 // pred_check
          %p531 = pneg %p48
        $region90: #{vit_forward.1} parent=87 // pred_check_branch
          %533 = sbr.rel (%p531) target = $region92
        $region91: #{vit_forward.1} parent=87 // pred_region
          %p534 = scmp.lt.s32.totalorder %s28, 1
          %s535 = scalar_select %p534, %s28, 1
          %s536 = smul.addr %s535, 4
          %s537 = smul.addr %s536, 4
          %s538 = scalar_lea.vmem %s0, %s537
        $region92: #{vit_forward.1} parent=87 // pred_fallthru
          _
      $region88: #{vit_forward.1} parent=5 // pred_fallthru
        _
      %p539 = scmp.le.s32.totalorder 1, %s28
      %p540 = scmp.lt.s32.totalorder %s28, 3
      %p541 = pnand %p539, %p540
      %p542 = pneg %p541
      // Predicated region
      $region93: #{vit_forward.1} parent=5 // pred_check
        _
      $region94: #{vit_forward.1} parent=5 // pred_check_branch
        %544 = sbr.rel (%p541) target = $region96
      $region95: #{vit_forward.1} parent=5 // pred_region
        %s545 = ssub.s32 %s28, 1
        %p546 = scmp.lt.s32.totalorder %s33, 1
        %s547 = scalar_select %p546, %s33, 1
        %s548 = smul.addr %s547, 4
        %s549 = smul.addr %s548, 4
        %s550 = scalar_lea.vmem %s0, %s549
        %p551 = pneg %p54
        %p552 = pneg %p51
        %p553 = pneg %p75
        %p554 = pneg %p72
        %p555 = pneg %p96
        %p556 = pneg %p93
        %p557 = pneg %p117
        %p558 = pneg %p114
        %p559 = pneg %p138
        %p560 = pneg %p135
        %p561 = pneg %p159
        %p562 = pneg %p156
        %p563 = pneg %p180
        %p564 = pneg %p177
        %p565 = pneg %p201
        %p566 = pneg %p198
        %p567 = pneg %p222
        %p568 = pneg %p219
        %p569 = pneg %p243
        %p570 = pneg %p240
        %p571 = pneg %p264
        %p572 = pneg %p261
        %p573 = pneg %p285
        %p574 = pneg %p282
        %p575 = pneg %p306
        %p576 = pneg %p303
        %p577 = pneg %p327
        %p578 = pneg %p324
        %p579 = pneg %p348
        %p580 = pneg %p345
        %p581 = pneg %p369
        %p582 = pneg %p366
        %p583 = pneg %p390
        %p584 = pneg %p387
        %p585 = pneg %p411
        %p586 = pneg %p408
        %p587 = pneg %p432
        %p588 = pneg %p429
        %p589 = pneg %p458
        %p590 = pneg %p455
        %s591 = sand.u32 %s445, 1
        %s592 = scalar_lea.sflag [#allocation3], %s591
        %s593 = sand.u32 %s445, 1
        %s594 = scalar_lea.vmem [#allocation2], %s593
        %p595 = scmp.lt.s32.totalorder %s33, 1
        %s596 = scalar_select %p595, %s33, 1
        %s597 = smul.addr %s596, 4
        %s598 = smul.addr %s597, 4
        %s599 = scalar_lea.vmem %s0, %s598
        %v601 = vld [vmem:[%s599] sm:$0xf]
        %v602 = vld [vmem:[%s599 + $0x4] sm:$0xf]
        %v603 = vld [vmem:[%s599 + $0x8] sm:$0xf]
        %v604 = vld [vmem:[%s599 + $0xc] sm:$0xf]
        %v605 = vld [vmem:[%s1] sm:$0xf]
        %v606 = vld [vmem:[%s1 + $0x4] sm:$0xf]
        %v607 = vld [vmem:[%s1 + $0x8] sm:$0xf]
        %v608 = vld [vmem:[%s1 + $0xc] sm:$0xf]
        %v609 = vld [vmem:[%s1 + $0x10] sm:$0xf]
        %v610 = vld [vmem:[%s1 + $0x14] sm:$0xf]
        %v611 = vld [vmem:[%s1 + $0x18] sm:$0xf]
        %v612 = vld [vmem:[%s1 + $0x1c] sm:$0xf]
        %v617 = vunpack.c.l.b16 %v601
        %v618 = vunpack.c.l.b16 %v602
        %v619 = vunpack.c.l.b16 %v603
        %v620 = vunpack.c.l.b16 %v604
        %v621 = vpack.c.b16 %v618, %v617
        %v622 = vpack.c.b16 %v620, %v619
        %v631 = vunpack.c.l.b16 %v605
        %v632 = vunpack.c.l.b16 %v606
        %v633 = vunpack.c.l.b16 %v607
        %v634 = vunpack.c.l.b16 %v608
        %v635 = vunpack.c.l.b16 %v609
        %v636 = vunpack.c.l.b16 %v610
        %v637 = vunpack.c.l.b16 %v611
        %v638 = vunpack.c.l.b16 %v612
        %v639 = vpack.c.b16 %v632, %v631
        %v640 = vpack.c.b16 %v634, %v633
        %v641 = vpack.c.b16 %v636, %v635
        %v642 = vpack.c.b16 %v638, %v637
        %vm647 = vcmask 523264
        %v649 = vsel %vm647, %v621, 0
        %v652 = vsel %vm647, %v622, 0
        %654 = vmatprep.subr.bf16.mxu0 0
        %655 = vmatpush1.bf16.msra.mxu0 %v639
        %656 = vmatprep.subr.bf16.mxu0 0
        %657 = vmatpush1.bf16.msra.mxu0 %v640
        %658 = vmatprep.subr.bf16.mxu0 0
        %659 = vmatpush1.bf16.msra.mxu0 %v641
        %660 = vmatprep.subr.bf16.mxu0 0
        %661 = vmatpush1.bf16.msra.mxu0 %v642
        %662 = vmatprep.subr.bf16.mxu0 0
        %663 = vmatpush1.bf16.msra.mxu0 0
        %664 = vmatprep.subr.bf16.mxu0 0
        %665 = vmatpush1.bf16.msra.mxu0 0
        %666 = vmatprep.subr.bf16.mxu0 0
        %667 = vmatpush1.bf16.msra.mxu0 0
        %668 = vmatprep.subr.bf16.mxu0 0
        %669 = vmatpush1.bf16.msra.mxu0 0
        %670 = vmatprep.subr.bf16.mxu0 0
        %671 = vmatpush1.bf16.msra.mxu0 0
        %672 = vmatprep.subr.bf16.mxu0 0
        %673 = vmatpush1.bf16.msra.mxu0 0
        %674 = vmatprep.subr.bf16.mxu0 0
        %675 = vmatpush1.bf16.msra.mxu0 0
        %676 = vmatprep.subr.bf16.mxu0 0
        %677 = vmatpush1.bf16.msra.mxu0 0
        %678 = vmatprep.subr.bf16.mxu0 0
        %679 = vmatpush1.bf16.msra.mxu0 0
        %680 = vmatprep.subr.bf16.mxu0 0
        %681 = vmatpush1.bf16.msra.mxu0 0
        %682 = vmatprep.subr.bf16.mxu0 0
        %683 = vmatpush1.bf16.msra.mxu0 0
        %684 = vmatprep.subr.bf16.mxu0 0
        %685 = vmatpush1.bf16.msra.mxu0 0
        %686 = vmatprep.mubr.bf16.mxu0 0
        %687 = vmatmul.mubr.bf16.gmra.mrb[0].mxu0 %v649
        %v688 = vpop.f32.mrb[0].mxu0
        %v689 = vadd.f32 0.0, %v688
        %v690 = vpop.f32.mrb[0].mxu0
        %v691 = vpop.f32.mrb[0].mxu0
        %v692 = vadd.f32 0.0, %v691
        %v693 = vpop.f32.mrb[0].mxu0
        %694 = vmatprep.mubr.bf16.mxu0 0
        %695 = vmatmul.mubr.bf16.gmra.mrb[0].mxu0 %v652
        %v696 = vpop.f32.mrb[0].mxu0
        %v697 = vadd.f32 0.0, %v696
        %v698 = vpop.f32.mrb[0].mxu0
        %v699 = vpop.f32.mrb[0].mxu0
        %v700 = vadd.f32 0.0, %v699
        %v701 = vpop.f32.mrb[0].mxu0
        %702 = vdwg.mxu0
        %v703 = vld [vmem:[%s2] sm:$0xff]
        %v704 = vld [vmem:[%s2 + $0x8] sm:$0xff]
        %v705 = vld [vmem:[%s2 + $0x10] sm:$0xff]
        %v706 = vld [vmem:[%s2 + $0x18] sm:$0xff]
        %v707 = vadd.f32 %v689, %v703
        %v708 = vadd.f32 %v692, %v704
        %v709 = vadd.f32 %v697, %v705
        %v710 = vadd.f32 %v700, %v706
        %v711 = vlaneseq
        %v712 = vand.u32 %v711, 127
        %vm713 = vcmp.lt.s32.totalorder %v712, 17
        %v714 = vsel %vm713, 0.0, -1e+30
        %v715 = vld [vmem:[%s3] sm:$0x1]
        %v716 = vld [vmem:[%s4] sm:$0x1]
        %vm717 = vcmask 261120
        %v718 = vsel %vm717, %v707, 0.0
        %719 = vadd.xlane.f32.xlu0 %v718
        %v720 = vpop.xlane.xlu0 %719
        %v721 = vsel %vm717, %v708, 0.0
        %722 = vadd.xlane.f32.xlu0 %v721
        %v723 = vpop.xlane.xlu0 %722
        %v724 = vsel %vm717, %v709, 0.0
        %725 = vadd.xlane.f32.xlu0 %v724
        %v726 = vpop.xlane.xlu0 %725
        %v727 = vsel %vm717, %v710, 0.0
        %728 = vadd.xlane.f32.xlu0 %v727
        %v729 = vpop.xlane.xlu0 %728
        %v730 = vrcp.pop 32.0
        %v731 = vmul.f32 %v720, %v730
        %v732 = vmul.f32 %v723, %v730
        %v733 = vmul.f32 %v726, %v730
        %v734 = vmul.f32 %v729, %v730
        %v735 = vsub.f32 %v707, %v731
        %v736 = vsub.f32 %v708, %v732
        %v737 = vsub.f32 %v709, %v733
        %v738 = vsub.f32 %v710, %v734
        %v739 = vmul.f32 %v735, %v735
        %v740 = vmul.f32 %v736, %v736
        %v741 = vmul.f32 %v737, %v737
        %v742 = vmul.f32 %v738, %v738
        %v743 = vsel %vm717, %v739, 0.0
        %744 = vadd.xlane.f32.xlu0 %v743
        %v745 = vpop.xlane.xlu0 %744
        %v746 = vsel %vm717, %v740, 0.0
        %747 = vadd.xlane.f32.xlu0 %v746
        %v748 = vpop.xlane.xlu0 %747
        %v749 = vsel %vm717, %v741, 0.0
        %750 = vadd.xlane.f32.xlu0 %v749
        %v751 = vpop.xlane.xlu0 %750
        %v752 = vsel %vm717, %v742, 0.0
        %753 = vadd.xlane.f32.xlu0 %v752
        %v754 = vpop.xlane.xlu0 %753
        %v755 = vmul.f32 %v745, %v730
        %v756 = vmul.f32 %v748, %v730
        %v757 = vmul.f32 %v751, %v730
        %v758 = vmul.f32 %v754, %v730
        %v759 = vadd.f32 %v755, 1e-06
        %v760 = vadd.f32 %v756, 1e-06
        %v761 = vadd.f32 %v757, 1e-06
        %v762 = vadd.f32 %v758, 1e-06
        %v763 = vrsqrt.pop %v759
        %v764 = vrsqrt.pop %v760
        %v765 = vrsqrt.pop %v761
        %v766 = vrsqrt.pop %v762
        %v767 = vmul.f32 %v735, %v763
        %v768 = vmul.f32 %v736, %v764
        %v769 = vmul.f32 %v737, %v765
        %v770 = vmul.f32 %v738, %v766
        %v772 = vlaneseq
        %v773 = vshrl.u32 %v772, 7
        %v774 = vsub.s32 0, %v773
        %v775 = vrot.slane %v715, %v774
        %v777 = vmul.f32 %v767, %v775
        %v778 = vmul.f32 %v768, %v775
        %v779 = vmul.f32 %v769, %v775
        %v780 = vmul.f32 %v770, %v775
        %v782 = vlaneseq
        %v783 = vshrl.u32 %v782, 7
        %v784 = vsub.s32 0, %v783
        %v785 = vrot.slane %v716, %v784
        %v787 = vadd.f32 %v777, %v785
        %v788 = vadd.f32 %v778, %v785
        %v789 = vadd.f32 %v779, %v785
        %v790 = vadd.f32 %v780, %v785
        %v791 = vpack.c.bf16 %v788, %v787
        %v792 = vpack.c.bf16 %v790, %v789
        %v793 = vld [vmem:[%s5] sm:$0xf]
        %v794 = vld [vmem:[%s5 + $0x4] sm:$0xf]
        %v795 = vld [vmem:[%s5 + $0x8] sm:$0xf]
        %v796 = vld [vmem:[%s5 + $0xc] sm:$0xf]
        %v797 = vld [vmem:[%s6] sm:$0x1]
        %v799 = vlaneseq
        %v800 = vshrl.u32 %v799, 7
        %v801 = vsub.s32 0, %v800
        %v802 = vrot.slane %v797, %v801
        %v808 = vunpack.c.l.b16 %v793
        %v809 = vunpack.c.l.b16 %v794
        %v810 = vunpack.c.l.b16 %v795
        %v811 = vunpack.c.l.b16 %v796
        %v812 = vpack.c.b16 %v809, %v808
        %v813 = vpack.c.b16 %v811, %v810
        %v817 = vsel %vm717, %v791, 0
        %v820 = vsel %vm717, %v792, 0
        %822 = vmatprep.subr.bf16.mxu0 0
        %823 = vmatpush1.bf16.msra.mxu0 %v812
        %824 = vmatprep.subr.bf16.mxu0 0
        %825 = vmatpush1.bf16.msra.mxu0 %v813
        %826 = vmatprep.subr.bf16.mxu0 0
        %827 = vmatpush1.bf16.msra.mxu0 0
        %828 = vmatprep.subr.bf16.mxu0 0
        %829 = vmatpush1.bf16.msra.mxu0 0
        %830 = vmatprep.subr.bf16.mxu0 0
        %831 = vmatpush1.bf16.msra.mxu0 0
        %832 = vmatprep.subr.bf16.mxu0 0
        %833 = vmatpush1.bf16.msra.mxu0 0
        %834 = vmatprep.subr.bf16.mxu0 0
        %835 = vmatpush1.bf16.msra.mxu0 0
        %836 = vmatprep.subr.bf16.mxu0 0
        %837 = vmatpush1.bf16.msra.mxu0 0
        %838 = vmatprep.subr.bf16.mxu0 0
        %839 = vmatpush1.bf16.msra.mxu0 0
        %840 = vmatprep.subr.bf16.mxu0 0
        %841 = vmatpush1.bf16.msra.mxu0 0
        %842 = vmatprep.subr.bf16.mxu0 0
        %843 = vmatpush1.bf16.msra.mxu0 0
        %844 = vmatprep.subr.bf16.mxu0 0
        %845 = vmatpush1.bf16.msra.mxu0 0
        %846 = vmatprep.subr.bf16.mxu0 0
        %847 = vmatpush1.bf16.msra.mxu0 0
        %848 = vmatprep.subr.bf16.mxu0 0
        %849 = vmatpush1.bf16.msra.mxu0 0
        %850 = vmatprep.subr.bf16.mxu0 0
        %851 = vmatpush1.bf16.msra.mxu0 0
        %852 = vmatprep.subr.bf16.mxu0 0
        %853 = vmatpush1.bf16.msra.mxu0 0
        %854 = vmatprep.mubr.bf16.mxu0 0
        %855 = vmatmul.mubr.bf16.gmra.mrb[0].mxu0 %v817
        %v856 = vpop.f32.mrb[0].mxu0
        %v857 = vadd.f32 %v802, %v856
        %v858 = vpop.f32.mrb[0].mxu0
        %v859 = vpop.f32.mrb[0].mxu0
        %v860 = vadd.f32 %v802, %v859
        %v861 = vpop.f32.mrb[0].mxu0
        %862 = vmatprep.mubr.bf16.mxu0 0
        %863 = vmatmul.mubr.bf16.gmra.mrb[0].mxu0 %v820
        %v864 = vpop.f32.mrb[0].mxu0
        %v865 = vadd.f32 %v802, %v864
        %v866 = vpop.f32.mrb[0].mxu0
        %v867 = vpop.f32.mrb[0].mxu0
        %v868 = vadd.f32 %v802, %v867
        %v869 = vpop.f32.mrb[0].mxu0
        %870 = vdwg.mxu0
        %s871 = scalar_lea.vmem %s5, 16
        %v872 = vld [vmem:[%s871] sm:$0xf]
        %v873 = vld [vmem:[%s871 + $0x4] sm:$0xf]
        %v874 = vld [vmem:[%s871 + $0x8] sm:$0xf]
        %v875 = vld [vmem:[%s871 + $0xc] sm:$0xf]
        %s876 = scalar_lea.vmem %s6, 1
        %v877 = vld [vmem:[%s876] sm:$0x1]
        %v879 = vlaneseq
        %v880 = vshrl.u32 %v879, 7
        %v881 = vsub.s32 0, %v880
        %v882 = vrot.slane %v877, %v881
        %v888 = vunpack.c.l.b16 %v872
        %v889 = vunpack.c.l.b16 %v873
        %v890 = vunpack.c.l.b16 %v874
        %v891 = vunpack.c.l.b16 %v875
        %v892 = vpack.c.b16 %v889, %v888
        %v893 = vpack.c.b16 %v891, %v890
        %896 = vmatprep.subr.bf16.mxu0 0
        %897 = vmatpush1.bf16.msra.mxu0 %v892
        %898 = vmatprep.subr.bf16.mxu0 0
        %899 = vmatpush1.bf16.msra.mxu0 %v893
        %900 = vmatprep.subr.bf16.mxu0 0
        %901 = vmatpush1.bf16.msra.mxu0 0
        %902 = vmatprep.subr.bf16.mxu0 0
        %903 = vmatpush1.bf16.msra.mxu0 0
        %904 = vmatprep.subr.bf16.mxu0 0
        %905 = vmatpush1.bf16.msra.mxu0 0
        %906 = vmatprep.subr.bf16.mxu0 0
        %907 = vmatpush1.bf16.msra.mxu0 0
        %908 = vmatprep.subr.bf16.mxu0 0
        %909 = vmatpush1.bf16.msra.mxu0 0
        %910 = vmatprep.subr.bf16.mxu0 0
        %911 = vmatpush1.bf16.msra.mxu0 0
        %912 = vmatprep.subr.bf16.mxu0 0
        %913 = vmatpush1.bf16.msra.mxu0 0
        %914 = vmatprep.subr.bf16.mxu0 0
        %915 = vmatpush1.bf16.msra.mxu0 0
        %916 = vmatprep.subr.bf16.mxu0 0
        %917 = vmatpush1.bf16.msra.mxu0 0
        %918 = vmatprep.subr.bf16.mxu0 0
        %919 = vmatpush1.bf16.msra.mxu0 0
        %920 = vmatprep.subr.bf16.mxu0 0
        %921 = vmatpush1.bf16.msra.mxu0 0
        %922 = vmatprep.subr.bf16.mxu0 0
        %923 = vmatpush1.bf16.msra.mxu0 0
        %924 = vmatprep.subr.bf16.mxu0 0
        %925 = vmatpush1.bf16.msra.mxu0 0
        %926 = vmatprep.subr.bf16.mxu0 0
        %927 = vmatpush1.bf16.msra.mxu0 0
        %928 = vmatprep.mubr.bf16.mxu0 0
        %929 = vmatmul.mubr.bf16.gmra.mrb[0].mxu0 %v817
        %v930 = vpop.f32.mrb[0].mxu0
        %v931 = vadd.f32 %v882, %v930
        %v932 = vpop.f32.mrb[0].mxu0
        %v933 = vpop.f32.mrb[0].mxu0
        %v934 = vadd.f32 %v882, %v933
        %v935 = vpop.f32.mrb[0].mxu0
        %936 = vmatprep.mubr.bf16.mxu0 0
        %937 = vmatmul.mubr.bf16.gmra.mrb[0].mxu0 %v820
        %v938 = vpop.f32.mrb[0].mxu0
        %v939 = vadd.f32 %v882, %v938
        %v940 = vpop.f32.mrb[0].mxu0
        %v941 = vpop.f32.mrb[0].mxu0
        %v942 = vadd.f32 %v882, %v941
        %v943 = vpop.f32.mrb[0].mxu0
        %944 = vdwg.mxu0
        %s945 = scalar_lea.vmem %s5, 32
        %v946 = vld [vmem:[%s945] sm:$0xf]
        %v947 = vld [vmem:[%s945 + $0x4] sm:$0xf]
        %v948 = vld [vmem:[%s945 + $0x8] sm:$0xf]
        %v949 = vld [vmem:[%s945 + $0xc] sm:$0xf]
        %s950 = scalar_lea.vmem %s6, 2
        %v951 = vld [vmem:[%s950] sm:$0x1]
        %v953 = vlaneseq
        %v954 = vshrl.u32 %v953, 7
        %v955 = vsub.s32 0, %v954
        %v956 = vrot.slane %v951, %v955
        %v962 = vunpack.c.l.b16 %v946
        %v963 = vunpack.c.l.b16 %v947
        %v964 = vunpack.c.l.b16 %v948
        %v965 = vunpack.c.l.b16 %v949
        %v966 = vpack.c.b16 %v963, %v962
        %v967 = vpack.c.b16 %v965, %v964
        %970 = vmatprep.subr.bf16.mxu0 0
        %971 = vmatpush1.bf16.msra.mxu0 %v966
        %972 = vmatprep.subr.bf16.mxu0 0
        %973 = vmatpush1.bf16.msra.mxu0 %v967
        %974 = vmatprep.subr.bf16.mxu0 0
        %975 = vmatpush1.bf16.msra.mxu0 0
        %976 = vmatprep.subr.bf16.mxu0 0
        %977 = vmatpush1.bf16.msra.mxu0 0
        %978 = vmatprep.subr.bf16.mxu0 0
        %979 = vmatpush1.bf16.msra.mxu0 0
        %980 = vmatprep.subr.bf16.mxu0 0
        %981 = vmatpush1.bf16.msra.mxu0 0
        %982 = vmatprep.subr.bf16.mxu0 0
        %983 = vmatpush1.bf16.msra.mxu0 0
        %984 = vmatprep.subr.bf16.mxu0 0
        %985 = vmatpush1.bf16.msra.mxu0 0
        %986 = vmatprep.subr.bf16.mxu0 0
        %987 = vmatpush1.bf16.msra.mxu0 0
        %988 = vmatprep.subr.bf16.mxu0 0
        %989 = vmatpush1.bf16.msra.mxu0 0
        %990 = vmatprep.subr.bf16.mxu0 0
        %991 = vmatpush1.bf16.msra.mxu0 0
        %992 = vmatprep.subr.bf16.mxu0 0
        %993 = vmatpush1.bf16.msra.mxu0 0
        %994 = vmatprep.subr.bf16.mxu0 0
        %995 = vmatpush1.bf16.msra.mxu0 0
        %996 = vmatprep.subr.bf16.mxu0 0
        %997 = vmatpush1.bf16.msra.mxu0 0
        %998 = vmatprep.subr.bf16.mxu0 0
        %999 = vmatpush1.bf16.msra.mxu0 0
        %1000 = vmatprep.subr.bf16.mxu0 0
        %1001 = vmatpush1.bf16.msra.mxu0 0
        %1002 = vmatprep.mubr.bf16.mxu0 0
        %1003 = vmatmul.mubr.bf16.gmra.mrb[0].mxu0 %v817
        %v1004 = vpop.f32.mrb[0].mxu0
        %v1005 = vadd.f32 %v956, %v1004
        %v1006 = vpop.f32.mrb[0].mxu0
        %v1007 = vpop.f32.mrb[0].mxu0
        %v1008 = vadd.f32 %v956, %v1007
        %v1009 = vpop.f32.mrb[0].mxu0
        %1010 = vmatprep.mubr.bf16.mxu0 0
        %1011 = vmatmul.mubr.bf16.gmra.mrb[0].mxu0 %v820
        %v1012 = vpop.f32.mrb[0].mxu0
        %v1013 = vadd.f32 %v956, %v1012
        %v1014 = vpop.f32.mrb[0].mxu0
        %v1015 = vpop.f32.mrb[0].mxu0
        %v1016 = vadd.f32 %v956, %v1015
        %v1017 = vpop.f32.mrb[0].mxu0
        %1018 = vdwg.mxu0
        %v1019 = vpack.c.bf16 %v860, %v857
        %v1020 = vpack.c.bf16 %v868, %v865
        %v1021 = vpack.c.bf16 %v934, %v931
        %v1022 = vpack.c.bf16 %v942, %v939
        %v1023 = vpack.c.bf16 %v1008, %v1005
        %v1024 = vpack.c.bf16 %v1016, %v1013
        %vm1025 = vcmask 64512
        %v1027 = vsel %vm1025, %v1019, 0
        %v1030 = vsel %vm1025, %v1020, 0
        %v1033 = vsel %vm1025, %v1021, 0
        %v1036 = vsel %vm1025, %v1022, 0
        %1038 = vmatprep.subr.bf16.mxu0 0
        %1039 = vmatpush1.bf16.xpose.msra.mxu0 %v1033
        %1040 = vmatprep.subr.bf16.mxu0 0
        %1041 = vmatpush1.bf16.xpose.msra.mxu0 %v1036
        %1042 = vmatprep.subr.bf16.mxu0 0
        %1043 = vmatpush1.bf16.xpose.msra.mxu0 0
        %1044 = vmatprep.subr.bf16.mxu0 0
        %1045 = vmatpush1.bf16.xpose.msra.mxu0 0
        %1046 = vmatprep.subr.bf16.mxu0 0
        %1047 = vmatpush1.bf16.xpose.msra.mxu0 0
        %1048 = vmatprep.subr.bf16.mxu0 0
        %1049 = vmatpush1.bf16.xpose.msra.mxu0 0
        %1050 = vmatprep.subr.bf16.mxu0 0
        %1051 = vmatpush1.bf16.xpose.msra.mxu0 0
        %1052 = vmatprep.subr.bf16.mxu0 0
        %1053 = vmatpush1.bf16.xpose.msra.mxu0 0
        %1054 = vmatprep.subr.bf16.mxu0 0
        %1055 = vmatpush1.bf16.xpose.msra.mxu0 0
        %1056 = vmatprep.subr.bf16.mxu0 0
        %1057 = vmatpush1.bf16.xpose.msra.mxu0 0
        %1058 = vmatprep.subr.bf16.mxu0 0
        %1059 = vmatpush1.bf16.xpose.msra.mxu0 0
        %1060 = vmatprep.subr.bf16.mxu0 0
        %1061 = vmatpush1.bf16.xpose.msra.mxu0 0
        %1062 = vmatprep.subr.bf16.mxu0 0
        %1063 = vmatpush1.bf16.xpose.msra.mxu0 0
        %1064 = vmatprep.subr.bf16.mxu0 0
        %1065 = vmatpush1.bf16.xpose.msra.mxu0 0
        %1066 = vmatprep.subr.bf16.mxu0 0
        %1067 = vmatpush1.bf16.xpose.msra.mxu0 0
        %1068 = vmatprep.subr.bf16.mxu0 0
        %1069 = vmatpush1.bf16.xpose.msra.mxu0 0
        %1070 = vmatprep.mubr.bf16.mxu0 0
        %1071 = vmatmul.mubr.bf16.gmra.mrb[0].mxu0 %v1027
        %v1072 = vpop.f32.mrb[0].mxu0
        %v1073 = vadd.f32 %v714, %v1072
        %v1074 = vpop.f32.mrb[0].mxu0
        %v1075 = vpop.f32.mrb[0].mxu0
        %v1076 = vadd.f32 %v714, %v1075
        %v1077 = vpop.f32.mrb[0].mxu0
        %1078 = vmatprep.mubr.bf16.mxu0 0
        %1079 = vmatmul.mubr.bf16.gmra.mrb[0].mxu0 %v1030
        %v1080 = vpop.f32.mrb[0].mxu0
        %v1081 = vadd.f32 %v714, %v1080
        %v1082 = vpop.f32.mrb[0].mxu0
        %v1083 = vpop.f32.mrb[0].mxu0
        %v1084 = vadd.f32 %v714, %v1083
        %v1085 = vpop.f32.mrb[0].mxu0
        %1086 = vdwg.mxu0
        %v1087 = vsel %vm717, %v1073, -inf
        %1088 = vmax.xlane.f32.xlu0 %v1087
        %v1089 = vpop.xlane.xlu0 %1088
        %v1090 = vsel %vm717, %v1076, -inf
        %1091 = vmax.xlane.f32.xlu0 %v1090
        %v1092 = vpop.xlane.xlu0 %1091
        %v1093 = vsel %vm717, %v1081, -inf
        %1094 = vmax.xlane.f32.xlu0 %v1093
        %v1095 = vpop.xlane.xlu0 %1094
        %v1096 = vsel %vm717, %v1084, -inf
        %1097 = vmax.xlane.f32.xlu0 %v1096
        %v1098 = vpop.xlane.xlu0 %1097
        %v1099 = vsub.f32 %v1073, %v1089
        %v1100 = vsub.f32 %v1076, %v1092
        %v1101 = vsub.f32 %v1081, %v1095
        %v1102 = vsub.f32 %v1084, %v1098
        %v1103 = vmul.f32 %v1099, 1.442695
        %v1104 = vpow.pop %v1103
        %v1105 = vmul.f32 %v1100, 1.442695
        %v1106 = vpow.pop %v1105
        %v1107 = vmul.f32 %v1101, 1.442695
        %v1108 = vpow.pop %v1107
        %v1109 = vmul.f32 %v1102, 1.442695
        %v1110 = vpow.pop %v1109
        %v1111 = vsel %vm717, %v1104, 0.0
        %1112 = vadd.xlane.f32.xlu0 %v1111
        %v1113 = vpop.xlane.xlu0 %1112
        %v1114 = vsel %vm717, %v1106, 0.0
        %1115 = vadd.xlane.f32.xlu0 %v1114
        %v1116 = vpop.xlane.xlu0 %1115
        %v1117 = vsel %vm717, %v1108, 0.0
        %1118 = vadd.xlane.f32.xlu0 %v1117
        %v1119 = vpop.xlane.xlu0 %1118
        %v1120 = vsel %vm717, %v1110, 0.0
        %1121 = vadd.xlane.f32.xlu0 %v1120
        %v1122 = vpop.xlane.xlu0 %1121
        %v1123 = vrcp.pop %v1113
        %v1124 = vrcp.pop %v1116
        %v1125 = vrcp.pop %v1119
        %v1126 = vrcp.pop %v1122
        %v1127 = vmul.f32 %v1104, %v1123
        %v1128 = vmul.f32 %v1106, %v1124
        %v1129 = vmul.f32 %v1108, %v1125
        %v1130 = vmul.f32 %v1110, %v1126
        %v1131 = vpack.c.bf16 %v1128, %v1127
        %v1132 = vpack.c.bf16 %v1130, %v1129
        %v1134 = vsel %vm717, %v1131, 0
        %v1137 = vsel %vm717, %v1132, 0
        %1139 = vmatprep.subr.bf16.mxu0 0
        %1140 = vmatpush1.bf16.msra.mxu0 %v1023
        %1141 = vmatprep.subr.bf16.mxu0 0
        %1142 = vmatpush1.bf16.msra.mxu0 %v1024
        %1143 = vmatprep.subr.bf16.mxu0 0
        %1144 = vmatpush1.bf16.msra.mxu0 0
        %1145 = vmatprep.subr.bf16.mxu0 0
        %1146 = vmatpush1.bf16.msra.mxu0 0
        %1147 = vmatprep.subr.bf16.mxu0 0
        %1148 = vmatpush1.bf16.msra.mxu0 0
        %1149 = vmatprep.subr.bf16.mxu0 0
        %1150 = vmatpush1.bf16.msra.mxu0 0
        %1151 = vmatprep.subr.bf16.mxu0 0
        %1152 = vmatpush1.bf16.msra.mxu0 0
        %1153 = vmatprep.subr.bf16.mxu0 0
        %1154 = vmatpush1.bf16.msra.mxu0 0
        %1155 = vmatprep.subr.bf16.mxu0 0
        %1156 = vmatpush1.bf16.msra.mxu0 0
        %1157 = vmatprep.subr.bf16.mxu0 0
        %1158 = vmatpush1.bf16.msra.mxu0 0
        %1159 = vmatprep.subr.bf16.mxu0 0
        %1160 = vmatpush1.bf16.msra.mxu0 0
        %1161 = vmatprep.subr.bf16.mxu0 0
        %1162 = vmatpush1.bf16.msra.mxu0 0
        %1163 = vmatprep.subr.bf16.mxu0 0
        %1164 = vmatpush1.bf16.msra.mxu0 0
        %1165 = vmatprep.subr.bf16.mxu0 0
        %1166 = vmatpush1.bf16.msra.mxu0 0
        %1167 = vmatprep.subr.bf16.mxu0 0
        %1168 = vmatpush1.bf16.msra.mxu0 0
        %1169 = vmatprep.subr.bf16.mxu0 0
        %1170 = vmatpush1.bf16.msra.mxu0 0
        %1171 = vmatprep.mubr.bf16.mxu0 0
        %1172 = vmatmul.mubr.bf16.gmra.mrb[0].mxu0 %v1134
        %v1173 = vpop.f32.mrb[0].mxu0
        %v1174 = vadd.f32 0.0, %v1173
        %v1175 = vpop.f32.mrb[0].mxu0
        %v1176 = vpop.f32.mrb[0].mxu0
        %v1177 = vadd.f32 0.0, %v1176
        %v1178 = vpop.f32.mrb[0].mxu0
        %1179 = vmatprep.mubr.bf16.mxu0 0
        %1180 = vmatmul.mubr.bf16.gmra.mrb[0].mxu0 %v1137
        %v1181 = vpop.f32.mrb[0].mxu0
        %v1182 = vadd.f32 0.0, %v1181
        %v1183 = vpop.f32.mrb[0].mxu0
        %v1184 = vpop.f32.mrb[0].mxu0
        %v1185 = vadd.f32 0.0, %v1184
        %v1186 = vpop.f32.mrb[0].mxu0
        %1187 = vdwg.mxu0
        %v1188 = vpack.c.bf16 %v1177, %v1174
        %v1189 = vpack.c.bf16 %v1185, %v1182
        %v1190 = vld [vmem:[%s7] sm:$0xf]
        %s1191 = scalar_lea.vmem %s5, 48
        %v1192 = vld [vmem:[%s1191] sm:$0xf]
        %v1193 = vld [vmem:[%s1191 + $0x4] sm:$0xf]
        %v1194 = vld [vmem:[%s1191 + $0x8] sm:$0xf]
        %v1195 = vld [vmem:[%s1191 + $0xc] sm:$0xf]
        %s1196 = scalar_lea.vmem %s6, 3
        %v1197 = vld [vmem:[%s1196] sm:$0x1]
        %v1199 = vlaneseq
        %v1200 = vshrl.u32 %v1199, 7
        %v1201 = vsub.s32 0, %v1200
        %v1202 = vrot.slane %v1197, %v1201
        %v1208 = vunpack.c.l.b16 %v1192
        %v1209 = vunpack.c.l.b16 %v1193
        %v1210 = vunpack.c.l.b16 %v1194
        %v1211 = vunpack.c.l.b16 %v1195
        %v1212 = vpack.c.b16 %v1209, %v1208
        %v1213 = vpack.c.b16 %v1211, %v1210
        %1216 = vmatprep.subr.bf16.mxu0 0
        %1217 = vmatpush1.bf16.msra.mxu0 %v1212
        %1218 = vmatprep.subr.bf16.mxu0 0
        %1219 = vmatpush1.bf16.msra.mxu0 %v1213
        %1220 = vmatprep.subr.bf16.mxu0 0
        %1221 = vmatpush1.bf16.msra.mxu0 0
        %1222 = vmatprep.subr.bf16.mxu0 0
        %1223 = vmatpush1.bf16.msra.mxu0 0
        %1224 = vmatprep.subr.bf16.mxu0 0
        %1225 = vmatpush1.bf16.msra.mxu0 0
        %1226 = vmatprep.subr.bf16.mxu0 0
        %1227 = vmatpush1.bf16.msra.mxu0 0
        %1228 = vmatprep.subr.bf16.mxu0 0
        %1229 = vmatpush1.bf16.msra.mxu0 0
        %1230 = vmatprep.subr.bf16.mxu0 0
        %1231 = vmatpush1.bf16.msra.mxu0 0
        %1232 = vmatprep.subr.bf16.mxu0 0
        %1233 = vmatpush1.bf16.msra.mxu0 0
        %1234 = vmatprep.subr.bf16.mxu0 0
        %1235 = vmatpush1.bf16.msra.mxu0 0
        %1236 = vmatprep.subr.bf16.mxu0 0
        %1237 = vmatpush1.bf16.msra.mxu0 0
        %1238 = vmatprep.subr.bf16.mxu0 0
        %1239 = vmatpush1.bf16.msra.mxu0 0
        %1240 = vmatprep.subr.bf16.mxu0 0
        %1241 = vmatpush1.bf16.msra.mxu0 0
        %1242 = vmatprep.subr.bf16.mxu0 0
        %1243 = vmatpush1.bf16.msra.mxu0 0
        %1244 = vmatprep.subr.bf16.mxu0 0
        %1245 = vmatpush1.bf16.msra.mxu0 0
        %1246 = vmatprep.subr.bf16.mxu0 0
        %1247 = vmatpush1.bf16.msra.mxu0 0
        %1248 = vmatprep.mubr.bf16.mxu0 0
        %1249 = vmatmul.mubr.bf16.gmra.mrb[0].mxu0 %v817
        %v1250 = vpop.f32.mrb[0].mxu0
        %v1251 = vadd.f32 %v1202, %v1250
        %v1252 = vpop.f32.mrb[0].mxu0
        %v1253 = vpop.f32.mrb[0].mxu0
        %v1254 = vadd.f32 %v1202, %v1253
        %v1255 = vpop.f32.mrb[0].mxu0
        %1256 = vmatprep.mubr.bf16.mxu0 0
        %1257 = vmatmul.mubr.bf16.gmra.mrb[0].mxu0 %v820
        %v1258 = vpop.f32.mrb[0].mxu0
        %v1259 = vadd.f32 %v1202, %v1258
        %v1260 = vpop.f32.mrb[0].mxu0
        %v1261 = vpop.f32.mrb[0].mxu0
        %v1262 = vadd.f32 %v1202, %v1261
        %v1263 = vpop.f32.mrb[0].mxu0
        %1264 = vdwg.mxu0
        %s1265 = scalar_lea.vmem %s5, 64
        %v1266 = vld [vmem:[%s1265] sm:$0xf]
        %v1267 = vld [vmem:[%s1265 + $0x4] sm:$0xf]
        %v1268 = vld [vmem:[%s1265 + $0x8] sm:$0xf]
        %v1269 = vld [vmem:[%s1265 + $0xc] sm:$0xf]
        %s1270 = scalar_lea.vmem %s6, 4
        %v1271 = vld [vmem:[%s1270] sm:$0x1]
        %v1273 = vlaneseq
        %v1274 = vshrl.u32 %v1273, 7
        %v1275 = vsub.s32 0, %v1274
        %v1276 = vrot.slane %v1271, %v1275
        %v1282 = vunpack.c.l.b16 %v1266
        %v1283 = vunpack.c.l.b16 %v1267
        %v1284 = vunpack.c.l.b16 %v1268
        %v1285 = vunpack.c.l.b16 %v1269
        %v1286 = vpack.c.b16 %v1283, %v1282
        %v1287 = vpack.c.b16 %v1285, %v1284
        %1290 = vmatprep.subr.bf16.mxu0 0
        %1291 = vmatpush1.bf16.msra.mxu0 %v1286
        %1292 = vmatprep.subr.bf16.mxu0 0
        %1293 = vmatpush1.bf16.msra.mxu0 %v1287
        %1294 = vmatprep.subr.bf16.mxu0 0
        %1295 = vmatpush1.bf16.msra.mxu0 0
        %1296 = vmatprep.subr.bf16.mxu0 0
        %1297 = vmatpush1.bf16.msra.mxu0 0
        %1298 = vmatprep.subr.bf16.mxu0 0
        %1299 = vmatpush1.bf16.msra.mxu0 0
        %1300 = vmatprep.subr.bf16.mxu0 0
        %1301 = vmatpush1.bf16.msra.mxu0 0
        %1302 = vmatprep.subr.bf16.mxu0 0
        %1303 = vmatpush1.bf16.msra.mxu0 0
        %1304 = vmatprep.subr.bf16.mxu0 0
        %1305 = vmatpush1.bf16.msra.mxu0 0
        %1306 = vmatprep.subr.bf16.mxu0 0
        %1307 = vmatpush1.bf16.msra.mxu0 0
        %1308 = vmatprep.subr.bf16.mxu0 0
        %1309 = vmatpush1.bf16.msra.mxu0 0
        %1310 = vmatprep.subr.bf16.mxu0 0
        %1311 = vmatpush1.bf16.msra.mxu0 0
        %1312 = vmatprep.subr.bf16.mxu0 0
        %1313 = vmatpush1.bf16.msra.mxu0 0
        %1314 = vmatprep.subr.bf16.mxu0 0
        %1315 = vmatpush1.bf16.msra.mxu0 0
        %1316 = vmatprep.subr.bf16.mxu0 0
        %1317 = vmatpush1.bf16.msra.mxu0 0
        %1318 = vmatprep.subr.bf16.mxu0 0
        %1319 = vmatpush1.bf16.msra.mxu0 0
        %1320 = vmatprep.subr.bf16.mxu0 0
        %1321 = vmatpush1.bf16.msra.mxu0 0
        %1322 = vmatprep.mubr.bf16.mxu0 0
        %1323 = vmatmul.mubr.bf16.gmra.mrb[0].mxu0 %v817
        %v1324 = vpop.f32.mrb[0].mxu0
        %v1325 = vadd.f32 %v1276, %v1324
        %v1326 = vpop.f32.mrb[0].mxu0
        %v1327 = vpop.f32.mrb[0].mxu0
        %v1328 = vadd.f32 %v1276, %v1327
        %v1329 = vpop.f32.mrb[0].mxu0
        %1330 = vmatprep.mubr.bf16.mxu0 0
        %1331 = vmatmul.mubr.bf16.gmra.mrb[0].mxu0 %v820
        %v1332 = vpop.f32.mrb[0].mxu0
        %v1333 = vadd.f32 %v1276, %v1332
        %v1334 = vpop.f32.mrb[0].mxu0
        %v1335 = vpop.f32.mrb[0].mxu0
        %v1336 = vadd.f32 %v1276, %v1335
        %v1337 = vpop.f32.mrb[0].mxu0
        %1338 = vdwg.mxu0
        %s1339 = scalar_lea.vmem %s5, 80
        %v1340 = vld [vmem:[%s1339] sm:$0xf]
        %v1341 = vld [vmem:[%s1339 + $0x4] sm:$0xf]
        %v1342 = vld [vmem:[%s1339 + $0x8] sm:$0xf]
        %v1343 = vld [vmem:[%s1339 + $0xc] sm:$0xf]
        %s1344 = scalar_lea.vmem %s6, 5
        %v1345 = vld [vmem:[%s1344] sm:$0x1]
        %v1347 = vlaneseq
        %v1348 = vshrl.u32 %v1347, 7
        %v1349 = vsub.s32 0, %v1348
        %v1350 = vrot.slane %v1345, %v1349
        %v1356 = vunpack.c.l.b16 %v1340
        %v1357 = vunpack.c.l.b16 %v1341
        %v1358 = vunpack.c.l.b16 %v1342
        %v1359 = vunpack.c.l.b16 %v1343
        %v1360 = vpack.c.b16 %v1357, %v1356
        %v1361 = vpack.c.b16 %v1359, %v1358
        %1364 = vmatprep.subr.bf16.mxu0 0
        %1365 = vmatpush1.bf16.msra.mxu0 %v1360
        %1366 = vmatprep.subr.bf16.mxu0 0
        %1367 = vmatpush1.bf16.msra.mxu0 %v1361
        %1368 = vmatprep.subr.bf16.mxu0 0
        %1369 = vmatpush1.bf16.msra.mxu0 0
        %1370 = vmatprep.subr.bf16.mxu0 0
        %1371 = vmatpush1.bf16.msra.mxu0 0
        %1372 = vmatprep.subr.bf16.mxu0 0
        %1373 = vmatpush1.bf16.msra.mxu0 0
        %1374 = vmatprep.subr.bf16.mxu0 0
        %1375 = vmatpush1.bf16.msra.mxu0 0
        %1376 = vmatprep.subr.bf16.mxu0 0
        %1377 = vmatpush1.bf16.msra.mxu0 0
        %1378 = vmatprep.subr.bf16.mxu0 0
        %1379 = vmatpush1.bf16.msra.mxu0 0
        %1380 = vmatprep.subr.bf16.mxu0 0
        %1381 = vmatpush1.bf16.msra.mxu0 0
        %1382 = vmatprep.subr.bf16.mxu0 0
        %1383 = vmatpush1.bf16.msra.mxu0 0
        %1384 = vmatprep.subr.bf16.mxu0 0
        %1385 = vmatpush1.bf16.msra.mxu0 0
        %1386 = vmatprep.subr.bf16.mxu0 0
        %1387 = vmatpush1.bf16.msra.mxu0 0
        %1388 = vmatprep.subr.bf16.mxu0 0
        %1389 = vmatpush1.bf16.msra.mxu0 0
        %1390 = vmatprep.subr.bf16.mxu0 0
        %1391 = vmatpush1.bf16.msra.mxu0 0
        %1392 = vmatprep.subr.bf16.mxu0 0
        %1393 = vmatpush1.bf16.msra.mxu0 0
        %1394 = vmatprep.subr.bf16.mxu0 0
        %1395 = vmatpush1.bf16.msra.mxu0 0
        %1396 = vmatprep.mubr.bf16.mxu0 0
        %1397 = vmatmul.mubr.bf16.gmra.mrb[0].mxu0 %v817
        %v1398 = vpop.f32.mrb[0].mxu0
        %v1399 = vadd.f32 %v1350, %v1398
        %v1400 = vpop.f32.mrb[0].mxu0
        %v1401 = vpop.f32.mrb[0].mxu0
        %v1402 = vadd.f32 %v1350, %v1401
        %v1403 = vpop.f32.mrb[0].mxu0
        %1404 = vmatprep.mubr.bf16.mxu0 0
        %1405 = vmatmul.mubr.bf16.gmra.mrb[0].mxu0 %v820
        %v1406 = vpop.f32.mrb[0].mxu0
        %v1407 = vadd.f32 %v1350, %v1406
        %v1408 = vpop.f32.mrb[0].mxu0
        %v1409 = vpop.f32.mrb[0].mxu0
        %v1410 = vadd.f32 %v1350, %v1409
        %v1411 = vpop.f32.mrb[0].mxu0
        %1412 = vdwg.mxu0
        %v1413 = vpack.c.bf16 %v1254, %v1251
        %v1414 = vpack.c.bf16 %v1262, %v1259
        %v1415 = vpack.c.bf16 %v1328, %v1325
        %v1416 = vpack.c.bf16 %v1336, %v1333
        %v1417 = vpack.c.bf16 %v1402, %v1399
        %v1418 = vpack.c.bf16 %v1410, %v1407
        %v1420 = vsel %vm1025, %v1413, 0
        %v1423 = vsel %vm1025, %v1414, 0
        %v1426 = vsel %vm1025, %v1415, 0
        %v1429 = vsel %vm1025, %v1416, 0
        %1431 = vmatprep.subr.bf16.mxu0 0
        %1432 = vmatpush1.bf16.xpose.msra.mxu0 %v1426
        %1433 = vmatprep.subr.bf16.mxu0 0
        %1434 = vmatpush1.bf16.xpose.msra.mxu0 %v1429
        %1435 = vmatprep.subr.bf16.mxu0 0
        %1436 = vmatpush1.bf16.xpose.msra.mxu0 0
        %1437 = vmatprep.subr.bf16.mxu0 0
        %1438 = vmatpush1.bf16.xpose.msra.mxu0 0
        %1439 = vmatprep.subr.bf16.mxu0 0
        %1440 = vmatpush1.bf16.xpose.msra.mxu0 0
        %1441 = vmatprep.subr.bf16.mxu0 0
        %1442 = vmatpush1.bf16.xpose.msra.mxu0 0
        %1443 = vmatprep.subr.bf16.mxu0 0
        %1444 = vmatpush1.bf16.xpose.msra.mxu0 0
        %1445 = vmatprep.subr.bf16.mxu0 0
        %1446 = vmatpush1.bf16.xpose.msra.mxu0 0
        %1447 = vmatprep.subr.bf16.mxu0 0
        %1448 = vmatpush1.bf16.xpose.msra.mxu0 0
        %1449 = vmatprep.subr.bf16.mxu0 0
        %1450 = vmatpush1.bf16.xpose.msra.mxu0 0
        %1451 = vmatprep.subr.bf16.mxu0 0
        %1452 = vmatpush1.bf16.xpose.msra.mxu0 0
        %1453 = vmatprep.subr.bf16.mxu0 0
        %1454 = vmatpush1.bf16.xpose.msra.mxu0 0
        %1455 = vmatprep.subr.bf16.mxu0 0
        %1456 = vmatpush1.bf16.xpose.msra.mxu0 0
        %1457 = vmatprep.subr.bf16.mxu0 0
        %1458 = vmatpush1.bf16.xpose.msra.mxu0 0
        %1459 = vmatprep.subr.bf16.mxu0 0
        %1460 = vmatpush1.bf16.xpose.msra.mxu0 0
        %1461 = vmatprep.subr.bf16.mxu0 0
        %1462 = vmatpush1.bf16.xpose.msra.mxu0 0
        %1463 = vmatprep.mubr.bf16.mxu0 0
        %1464 = vmatmul.mubr.bf16.gmra.mrb[0].mxu0 %v1420
        %v1465 = vpop.f32.mrb[0].mxu0
        %v1466 = vadd.f32 %v714, %v1465
        %v1467 = vpop.f32.mrb[0].mxu0
        %v1468 = vpop.f32.mrb[0].mxu0
        %v1469 = vadd.f32 %v714, %v1468
        %v1470 = vpop.f32.mrb[0].mxu0
        %1471 = vmatprep.mubr.bf16.mxu0 0
        %1472 = vmatmul.mubr.bf16.gmra.mrb[0].mxu0 %v1423
        %v1473 = vpop.f32.mrb[0].mxu0
        %v1474 = vadd.f32 %v714, %v1473
        %v1475 = vpop.f32.mrb[0].mxu0
        %v1476 = vpop.f32.mrb[0].mxu0
        %v1477 = vadd.f32 %v714, %v1476
        %v1478 = vpop.f32.mrb[0].mxu0
        %1479 = vdwg.mxu0
        %v1480 = vsel %vm717, %v1466, -inf
        %1481 = vmax.xlane.f32.xlu0 %v1480
        %v1482 = vpop.xlane.xlu0 %1481
        %v1483 = vsel %vm717, %v1469, -inf
        %1484 = vmax.xlane.f32.xlu0 %v1483
        %v1485 = vpop.xlane.xlu0 %1484
        %v1486 = vsel %vm717, %v1474, -inf
        %1487 = vmax.xlane.f32.xlu0 %v1486
        %v1488 = vpop.xlane.xlu0 %1487
        %v1489 = vsel %vm717, %v1477, -inf
        %1490 = vmax.xlane.f32.xlu0 %v1489
        %v1491 = vpop.xlane.xlu0 %1490
        %v1492 = vsub.f32 %v1466, %v1482
        %v1493 = vsub.f32 %v1469, %v1485
        %v1494 = vsub.f32 %v1474, %v1488
        %v1495 = vsub.f32 %v1477, %v1491
        %v1496 = vmul.f32 %v1492, 1.442695
        %v1497 = vpow.pop %v1496
        %v1498 = vmul.f32 %v1493, 1.442695
        %v1499 = vpow.pop %v1498
        %v1500 = vmul.f32 %v1494, 1.442695
        %v1501 = vpow.pop %v1500
        %v1502 = vmul.f32 %v1495, 1.442695
        %v1503 = vpow.pop %v1502
        %v1504 = vsel %vm717, %v1497, 0.0
        %1505 = vadd.xlane.f32.xlu0 %v1504
        %v1506 = vpop.xlane.xlu0 %1505
        %v1507 = vsel %vm717, %v1499, 0.0
        %1508 = vadd.xlane.f32.xlu0 %v1507
        %v1509 = vpop.xlane.xlu0 %1508
        %v1510 = vsel %vm717, %v1501, 0.0
        %1511 = vadd.xlane.f32.xlu0 %v1510
        %v1512 = vpop.xlane.xlu0 %1511
        %v1513 = vsel %vm717, %v1503, 0.0
        %1514 = vadd.xlane.f32.xlu0 %v1513
        %v1515 = vpop.xlane.xlu0 %1514
        %v1516 = vrcp.pop %v1506
        %v1517 = vrcp.pop %v1509
        %v1518 = vrcp.pop %v1512
        %v1519 = vrcp.pop %v1515
        %v1520 = vmul.f32 %v1497, %v1516
        %v1521 = vmul.f32 %v1499, %v1517
        %v1522 = vmul.f32 %v1501, %v1518
        %v1523 = vmul.f32 %v1503, %v1519
        %v1524 = vpack.c.bf16 %v1521, %v1520
        %v1525 = vpack.c.bf16 %v1523, %v1522
        %v1527 = vsel %vm717, %v1524, 0
        %v1530 = vsel %vm717, %v1525, 0
        %1532 = vmatprep.subr.bf16.mxu0 0
        %1533 = vmatpush1.bf16.msra.mxu0 %v1417
        %1534 = vmatprep.subr.bf16.mxu0 0
        %1535 = vmatpush1.bf16.msra.mxu0 %v1418
        %1536 = vmatprep.subr.bf16.mxu0 0
        %1537 = vmatpush1.bf16.msra.mxu0 0
        %1538 = vmatprep.subr.bf16.mxu0 0
        %1539 = vmatpush1.bf16.msra.mxu0 0
        %1540 = vmatprep.subr.bf16.mxu0 0
        %1541 = vmatpush1.bf16.msra.mxu0 0
        %1542 = vmatprep.subr.bf16.mxu0 0
        %1543 = vmatpush1.bf16.msra.mxu0 0
        %1544 = vmatprep.subr.bf16.mxu0 0
        %1545 = vmatpush1.bf16.msra.mxu0 0
        %1546 = vmatprep.subr.bf16.mxu0 0
        %1547 = vmatpush1.bf16.msra.mxu0 0
        %1548 = vmatprep.subr.bf16.mxu0 0
        %1549 = vmatpush1.bf16.msra.mxu0 0
        %1550 = vmatprep.subr.bf16.mxu0 0
        %1551 = vmatpush1.bf16.msra.mxu0 0
        %1552 = vmatprep.subr.bf16.mxu0 0
        %1553 = vmatpush1.bf16.msra.mxu0 0
        %1554 = vmatprep.subr.bf16.mxu0 0
        %1555 = vmatpush1.bf16.msra.mxu0 0
        %1556 = vmatprep.subr.bf16.mxu0 0
        %1557 = vmatpush1.bf16.msra.mxu0 0
        %1558 = vmatprep.subr.bf16.mxu0 0
        %1559 = vmatpush1.bf16.msra.mxu0 0
        %1560 = vmatprep.subr.bf16.mxu0 0
        %1561 = vmatpush1.bf16.msra.mxu0 0
        %1562 = vmatprep.subr.bf16.mxu0 0
        %1563 = vmatpush1.bf16.msra.mxu0 0
        %1564 = vmatprep.mubr.bf16.mxu0 0
        %1565 = vmatmul.mubr.bf16.gmra.mrb[0].mxu0 %v1527
        %v1566 = vpop.f32.mrb[0].mxu0
        %v1567 = vadd.f32 0.0, %v1566
        %v1568 = vpop.f32.mrb[0].mxu0
        %v1569 = vpop.f32.mrb[0].mxu0
        %v1570 = vadd.f32 0.0, %v1569
        %v1571 = vpop.f32.mrb[0].mxu0
        %1572 = vmatprep.mubr.bf16.mxu0 0
        %1573 = vmatmul.mubr.bf16.gmra.mrb[0].mxu0 %v1530
        %v1574 = vpop.f32.mrb[0].mxu0
        %v1575 = vadd.f32 0.0, %v1574
        %v1576 = vpop.f32.mrb[0].mxu0
        %v1577 = vpop.f32.mrb[0].mxu0
        %v1578 = vadd.f32 0.0, %v1577
        %v1579 = vpop.f32.mrb[0].mxu0
        %1580 = vdwg.mxu0
        %v1581 = vpack.c.bf16 %v1570, %v1567
        %v1582 = vpack.c.bf16 %v1578, %v1575
        %s1583 = scalar_lea.vmem %s7, 4
        %v1584 = vld [vmem:[%s1583] sm:$0xf]
        %v1586 = vsel %vm1025, %v1581, 0
        %v1589 = vsel %vm1025, %v1582, 0
        %vm1591 = vcmask 1043456
        %v1593 = vsel %vm1591, %v1584, 0
        %1595 = vmatprep.subr.bf16.mxu0 0
        %1596 = vmatpush1.bf16.msra.mxu0 %v1593
        %1597 = vmatprep.subr.bf16.mxu0 0
        %1598 = vmatpush1.bf16.msra.mxu0 0
        %1599 = vmatprep.subr.bf16.mxu0 0
        %1600 = vmatpush1.bf16.msra.mxu0 0
        %1601 = vmatprep.subr.bf16.mxu0 0
        %1602 = vmatpush1.bf16.msra.mxu0 0
        %1603 = vmatprep.subr.bf16.mxu0 0
        %1604 = vmatpush1.bf16.msra.mxu0 0
        %1605 = vmatprep.subr.bf16.mxu0 0
        %1606 = vmatpush1.bf16.msra.mxu0 0
        %1607 = vmatprep.subr.bf16.mxu0 0
        %1608 = vmatpush1.bf16.msra.mxu0 0
        %1609 = vmatprep.subr.bf16.mxu0 0
        %1610 = vmatpush1.bf16.msra.mxu0 0
        %1611 = vmatprep.subr.bf16.mxu0 0
        %1612 = vmatpush1.bf16.msra.mxu0 0
        %1613 = vmatprep.subr.bf16.mxu0 0
        %1614 = vmatpush1.bf16.msra.mxu0 0
        %1615 = vmatprep.subr.bf16.mxu0 0
        %1616 = vmatpush1.bf16.msra.mxu0 0
        %1617 = vmatprep.subr.bf16.mxu0 0
        %1618 = vmatpush1.bf16.msra.mxu0 0
        %1619 = vmatprep.subr.bf16.mxu0 0
        %1620 = vmatpush1.bf16.msra.mxu0 0
        %1621 = vmatprep.subr.bf16.mxu0 0
        %1622 = vmatpush1.bf16.msra.mxu0 0
        %1623 = vmatprep.subr.bf16.mxu0 0
        %1624 = vmatpush1.bf16.msra.mxu0 0
        %1625 = vmatprep.subr.bf16.mxu0 0
        %1626 = vmatpush1.bf16.msra.mxu0 0
        %1627 = vmatprep.mubr.bf16.mxu0 0
        %1628 = vmatmul.mubr.bf16.gmra.mrb[0].mxu0 %v1586
        %v1629 = vpop.f32.mrb[0].mxu0
        %v1630 = vadd.f32 0.0, %v1629
        %v1631 = vpop.f32.mrb[0].mxu0
        %v1632 = vpop.f32.mrb[0].mxu0
        %v1633 = vadd.f32 0.0, %v1632
        %v1634 = vpop.f32.mrb[0].mxu0
        %1635 = vmatprep.mubr.bf16.mxu0 0
        %1636 = vmatmul.mubr.bf16.gmra.mrb[0].mxu0 %v1589
        %v1637 = vpop.f32.mrb[0].mxu0
        %v1638 = vadd.f32 0.0, %v1637
        %v1639 = vpop.f32.mrb[0].mxu0
        %v1640 = vpop.f32.mrb[0].mxu0
        %v1641 = vadd.f32 0.0, %v1640
        %v1642 = vpop.f32.mrb[0].mxu0
        %1643 = vdwg.mxu0
        %v1645 = vsel %vm1025, %v1188, 0
        %v1648 = vsel %vm1025, %v1189, 0
        %v1651 = vsel %vm1591, %v1190, 0
        %1653 = vmatprep.subr.bf16.mxu0 0
        %1654 = vmatpush1.bf16.msra.mxu0 %v1651
        %1655 = vmatprep.subr.bf16.mxu0 0
        %1656 = vmatpush1.bf16.msra.mxu0 0
        %1657 = vmatprep.subr.bf16.mxu0 0
        %1658 = vmatpush1.bf16.msra.mxu0 0
        %1659 = vmatprep.subr.bf16.mxu0 0
        %1660 = vmatpush1.bf16.msra.mxu0 0
        %1661 = vmatprep.subr.bf16.mxu0 0
        %1662 = vmatpush1.bf16.msra.mxu0 0
        %1663 = vmatprep.subr.bf16.mxu0 0
        %1664 = vmatpush1.bf16.msra.mxu0 0
        %1665 = vmatprep.subr.bf16.mxu0 0
        %1666 = vmatpush1.bf16.msra.mxu0 0
        %1667 = vmatprep.subr.bf16.mxu0 0
        %1668 = vmatpush1.bf16.msra.mxu0 0
        %1669 = vmatprep.subr.bf16.mxu0 0
        %1670 = vmatpush1.bf16.msra.mxu0 0
        %1671 = vmatprep.subr.bf16.mxu0 0
        %1672 = vmatpush1.bf16.msra.mxu0 0
        %1673 = vmatprep.subr.bf16.mxu0 0
        %1674 = vmatpush1.bf16.msra.mxu0 0
        %1675 = vmatprep.subr.bf16.mxu0 0
        %1676 = vmatpush1.bf16.msra.mxu0 0
        %1677 = vmatprep.subr.bf16.mxu0 0
        %1678 = vmatpush1.bf16.msra.mxu0 0
        %1679 = vmatprep.subr.bf16.mxu0 0
        %1680 = vmatpush1.bf16.msra.mxu0 0
        %1681 = vmatprep.subr.bf16.mxu0 0
        %1682 = vmatpush1.bf16.msra.mxu0 0
        %1683 = vmatprep.subr.bf16.mxu0 0
        %1684 = vmatpush1.bf16.msra.mxu0 0
        %1685 = vmatprep.mubr.bf16.mxu0 0
        %1686 = vmatmul.mubr.bf16.gmra.mrb[0].mxu0 %v1645
        %v1687 = vpop.f32.mrb[0].mxu0
        %v1688 = vadd.f32 %v1630, %v1687
        %v1689 = vpop.f32.mrb[0].mxu0
        %v1690 = vpop.f32.mrb[0].mxu0
        %v1691 = vadd.f32 %v1633, %v1690
        %v1692 = vpop.f32.mrb[0].mxu0
        %1693 = vmatprep.mubr.bf16.mxu0 0
        %1694 = vmatmul.mubr.bf16.gmra.mrb[0].mxu0 %v1648
        %v1695 = vpop.f32.mrb[0].mxu0
        %v1696 = vadd.f32 %v1638, %v1695
        %v1697 = vpop.f32.mrb[0].mxu0
        %v1698 = vpop.f32.mrb[0].mxu0
        %v1699 = vadd.f32 %v1641, %v1698
        %v1700 = vpop.f32.mrb[0].mxu0
        %1701 = vdwg.mxu0
        %s1702 = scalar_lea.vmem %s5, 96
        %v1703 = vld [vmem:[%s1702] sm:$0xf]
        %v1704 = vld [vmem:[%s1702 + $0x4] sm:$0xf]
        %v1705 = vld [vmem:[%s1702 + $0x8] sm:$0xf]
        %v1706 = vld [vmem:[%s1702 + $0xc] sm:$0xf]
        %s1707 = scalar_lea.vmem %s6, 6
        %v1708 = vld [vmem:[%s1707] sm:$0x1]
        %v1710 = vlaneseq
        %v1711 = vshrl.u32 %v1710, 7
        %v1712 = vsub.s32 0, %v1711
        %v1713 = vrot.slane %v1708, %v1712
        %v1719 = vunpack.c.l.b16 %v1703
        %v1720 = vunpack.c.l.b16 %v1704
        %v1721 = vunpack.c.l.b16 %v1705
        %v1722 = vunpack.c.l.b16 %v1706
        %v1723 = vpack.c.b16 %v1720, %v1719
        %v1724 = vpack.c.b16 %v1722, %v1721
        %1727 = vmatprep.subr.bf16.mxu0 0
        %1728 = vmatpush1.bf16.msra.mxu0 %v1723
        %1729 = vmatprep.subr.bf16.mxu0 0
        %1730 = vmatpush1.bf16.msra.mxu0 %v1724
        %1731 = vmatprep.subr.bf16.mxu0 0
        %1732 = vmatpush1.bf16.msra.mxu0 0
        %1733 = vmatprep.subr.bf16.mxu0 0
        %1734 = vmatpush1.bf16.msra.mxu0 0
        %1735 = vmatprep.subr.bf16.mxu0 0
        %1736 = vmatpush1.bf16.msra.mxu0 0
        %1737 = vmatprep.subr.bf16.mxu0 0
        %1738 = vmatpush1.bf16.msra.mxu0 0
        %1739 = vmatprep.subr.bf16.mxu0 0
        %1740 = vmatpush1.bf16.msra.mxu0 0
        %1741 = vmatprep.subr.bf16.mxu0 0
        %1742 = vmatpush1.bf16.msra.mxu0 0
        %1743 = vmatprep.subr.bf16.mxu0 0
        %1744 = vmatpush1.bf16.msra.mxu0 0
        %1745 = vmatprep.subr.bf16.mxu0 0
        %1746 = vmatpush1.bf16.msra.mxu0 0
        %1747 = vmatprep.subr.bf16.mxu0 0
        %1748 = vmatpush1.bf16.msra.mxu0 0
        %1749 = vmatprep.subr.bf16.mxu0 0
        %1750 = vmatpush1.bf16.msra.mxu0 0
        %1751 = vmatprep.subr.bf16.mxu0 0
        %1752 = vmatpush1.bf16.msra.mxu0 0
        %1753 = vmatprep.subr.bf16.mxu0 0
        %1754 = vmatpush1.bf16.msra.mxu0 0
        %1755 = vmatprep.subr.bf16.mxu0 0
        %1756 = vmatpush1.bf16.msra.mxu0 0
        %1757 = vmatprep.subr.bf16.mxu0 0
        %1758 = vmatpush1.bf16.msra.mxu0 0
        %1759 = vmatprep.mubr.bf16.mxu0 0
        %1760 = vmatmul.mubr.bf16.gmra.mrb[0].mxu0 %v817
        %v1761 = vpop.f32.mrb[0].mxu0
        %v1762 = vadd.f32 %v1713, %v1761
        %v1763 = vpop.f32.mrb[0].mxu0
        %v1764 = vpop.f32.mrb[0].mxu0
        %v1765 = vadd.f32 %v1713, %v1764
        %v1766 = vpop.f32.mrb[0].mxu0
        %1767 = vmatprep.mubr.bf16.mxu0 0
        %1768 = vmatmul.mubr.bf16.gmra.mrb[0].mxu0 %v820
        %v1769 = vpop.f32.mrb[0].mxu0
        %v1770 = vadd.f32 %v1713, %v1769
        %v1771 = vpop.f32.mrb[0].mxu0
        %v1772 = vpop.f32.mrb[0].mxu0
        %v1773 = vadd.f32 %v1713, %v1772
        %v1774 = vpop.f32.mrb[0].mxu0
        %1775 = vdwg.mxu0
        %s1776 = scalar_lea.vmem %s5, 112
        %v1777 = vld [vmem:[%s1776] sm:$0xf]
        %v1778 = vld [vmem:[%s1776 + $0x4] sm:$0xf]
        %v1779 = vld [vmem:[%s1776 + $0x8] sm:$0xf]
        %v1780 = vld [vmem:[%s1776 + $0xc] sm:$0xf]
        %s1781 = scalar_lea.vmem %s6, 7
        %v1782 = vld [vmem:[%s1781] sm:$0x1]
        %v1784 = vlaneseq
        %v1785 = vshrl.u32 %v1784, 7
        %v1786 = vsub.s32 0, %v1785
        %v1787 = vrot.slane %v1782, %v1786
        %v1793 = vunpack.c.l.b16 %v1777
        %v1794 = vunpack.c.l.b16 %v1778
        %v1795 = vunpack.c.l.b16 %v1779
        %v1796 = vunpack.c.l.b16 %v1780
        %v1797 = vpack.c.b16 %v1794, %v1793
        %v1798 = vpack.c.b16 %v1796, %v1795
        %1801 = vmatprep.subr.bf16.mxu0 0
        %1802 = vmatpush1.bf16.msra.mxu0 %v1797
        %1803 = vmatprep.subr.bf16.mxu0 0
        %1804 = vmatpush1.bf16.msra.mxu0 %v1798
        %1805 = vmatprep.subr.bf16.mxu0 0
        %1806 = vmatpush1.bf16.msra.mxu0 0
        %1807 = vmatprep.subr.bf16.mxu0 0
        %1808 = vmatpush1.bf16.msra.mxu0 0
        %1809 = vmatprep.subr.bf16.mxu0 0
        %1810 = vmatpush1.bf16.msra.mxu0 0
        %1811 = vmatprep.subr.bf16.mxu0 0
        %1812 = vmatpush1.bf16.msra.mxu0 0
        %1813 = vmatprep.subr.bf16.mxu0 0
        %1814 = vmatpush1.bf16.msra.mxu0 0
        %1815 = vmatprep.subr.bf16.mxu0 0
        %1816 = vmatpush1.bf16.msra.mxu0 0
        %1817 = vmatprep.subr.bf16.mxu0 0
        %1818 = vmatpush1.bf16.msra.mxu0 0
        %1819 = vmatprep.subr.bf16.mxu0 0
        %1820 = vmatpush1.bf16.msra.mxu0 0
        %1821 = vmatprep.subr.bf16.mxu0 0
        %1822 = vmatpush1.bf16.msra.mxu0 0
        %1823 = vmatprep.subr.bf16.mxu0 0
        %1824 = vmatpush1.bf16.msra.mxu0 0
        %1825 = vmatprep.subr.bf16.mxu0 0
        %1826 = vmatpush1.bf16.msra.mxu0 0
        %1827 = vmatprep.subr.bf16.mxu0 0
        %1828 = vmatpush1.bf16.msra.mxu0 0
        %1829 = vmatprep.subr.bf16.mxu0 0
        %1830 = vmatpush1.bf16.msra.mxu0 0
        %1831 = vmatprep.subr.bf16.mxu0 0
        %1832 = vmatpush1.bf16.msra.mxu0 0
        %1833 = vmatprep.mubr.bf16.mxu0 0
        %1834 = vmatmul.mubr.bf16.gmra.mrb[0].mxu0 %v817
        %v1835 = vpop.f32.mrb[0].mxu0
        %v1836 = vadd.f32 %v1787, %v1835
        %v1837 = vpop.f32.mrb[0].mxu0
        %v1838 = vpop.f32.mrb[0].mxu0
        %v1839 = vadd.f32 %v1787, %v1838
        %v1840 = vpop.f32.mrb[0].mxu0
        %1841 = vmatprep.mubr.bf16.mxu0 0
        %1842 = vmatmul.mubr.bf16.gmra.mrb[0].mxu0 %v820
        %v1843 = vpop.f32.mrb[0].mxu0
        %v1844 = vadd.f32 %v1787, %v1843
        %v1845 = vpop.f32.mrb[0].mxu0
        %v1846 = vpop.f32.mrb[0].mxu0
        %v1847 = vadd.f32 %v1787, %v1846
        %v1848 = vpop.f32.mrb[0].mxu0
        %1849 = vdwg.mxu0
        %s1850 = scalar_lea.vmem %s5, 128
        %v1851 = vld [vmem:[%s1850] sm:$0xf]
        %v1852 = vld [vmem:[%s1850 + $0x4] sm:$0xf]
        %v1853 = vld [vmem:[%s1850 + $0x8] sm:$0xf]
        %v1854 = vld [vmem:[%s1850 + $0xc] sm:$0xf]
        %s1855 = scalar_lea.vmem %s6, 8
        %v1856 = vld [vmem:[%s1855] sm:$0x1]
        %v1858 = vlaneseq
        %v1859 = vshrl.u32 %v1858, 7
        %v1860 = vsub.s32 0, %v1859
        %v1861 = vrot.slane %v1856, %v1860
        %v1867 = vunpack.c.l.b16 %v1851
        %v1868 = vunpack.c.l.b16 %v1852
        %v1869 = vunpack.c.l.b16 %v1853
        %v1870 = vunpack.c.l.b16 %v1854
        %v1871 = vpack.c.b16 %v1868, %v1867
        %v1872 = vpack.c.b16 %v1870, %v1869
        %1875 = vmatprep.subr.bf16.mxu0 0
        %1876 = vmatpush1.bf16.msra.mxu0 %v1871
        %1877 = vmatprep.subr.bf16.mxu0 0
        %1878 = vmatpush1.bf16.msra.mxu0 %v1872
        %1879 = vmatprep.subr.bf16.mxu0 0
        %1880 = vmatpush1.bf16.msra.mxu0 0
        %1881 = vmatprep.subr.bf16.mxu0 0
        %1882 = vmatpush1.bf16.msra.mxu0 0
        %1883 = vmatprep.subr.bf16.mxu0 0
        %1884 = vmatpush1.bf16.msra.mxu0 0
        %1885 = vmatprep.subr.bf16.mxu0 0
        %1886 = vmatpush1.bf16.msra.mxu0 0
        %1887 = vmatprep.subr.bf16.mxu0 0
        %1888 = vmatpush1.bf16.msra.mxu0 0
        %1889 = vmatprep.subr.bf16.mxu0 0
        %1890 = vmatpush1.bf16.msra.mxu0 0
        %1891 = vmatprep.subr.bf16.mxu0 0
        %1892 = vmatpush1.bf16.msra.mxu0 0
        %1893 = vmatprep.subr.bf16.mxu0 0
        %1894 = vmatpush1.bf16.msra.mxu0 0
        %1895 = vmatprep.subr.bf16.mxu0 0
        %1896 = vmatpush1.bf16.msra.mxu0 0
        %1897 = vmatprep.subr.bf16.mxu0 0
        %1898 = vmatpush1.bf16.msra.mxu0 0
        %1899 = vmatprep.subr.bf16.mxu0 0
        %1900 = vmatpush1.bf16.msra.mxu0 0
        %1901 = vmatprep.subr.bf16.mxu0 0
        %1902 = vmatpush1.bf16.msra.mxu0 0
        %1903 = vmatprep.subr.bf16.mxu0 0
        %1904 = vmatpush1.bf16.msra.mxu0 0
        %1905 = vmatprep.subr.bf16.mxu0 0
        %1906 = vmatpush1.bf16.msra.mxu0 0
        %1907 = vmatprep.mubr.bf16.mxu0 0
        %1908 = vmatmul.mubr.bf16.gmra.mrb[0].mxu0 %v817
        %v1909 = vpop.f32.mrb[0].mxu0
        %v1910 = vadd.f32 %v1861, %v1909
        %v1911 = vpop.f32.mrb[0].mxu0
        %v1912 = vpop.f32.mrb[0].mxu0
        %v1913 = vadd.f32 %v1861, %v1912
        %v1914 = vpop.f32.mrb[0].mxu0
        %1915 = vmatprep.mubr.bf16.mxu0 0
        %1916 = vmatmul.mubr.bf16.gmra.mrb[0].mxu0 %v820
        %v1917 = vpop.f32.mrb[0].mxu0
        %v1918 = vadd.f32 %v1861, %v1917
        %v1919 = vpop.f32.mrb[0].mxu0
        %v1920 = vpop.f32.mrb[0].mxu0
        %v1921 = vadd.f32 %v1861, %v1920
        %v1922 = vpop.f32.mrb[0].mxu0
        %1923 = vdwg.mxu0
        %v1924 = vpack.c.bf16 %v1765, %v1762
        %v1925 = vpack.c.bf16 %v1773, %v1770
        %v1926 = vpack.c.bf16 %v1839, %v1836
        %v1927 = vpack.c.bf16 %v1847, %v1844
        %v1928 = vpack.c.bf16 %v1913, %v1910
        %v1929 = vpack.c.bf16 %v1921, %v1918
        %v1931 = vsel %vm1025, %v1924, 0
        %v1934 = vsel %vm1025, %v1925, 0
        %v1937 = vsel %vm1025, %v1926, 0
        %v1940 = vsel %vm1025, %v1927, 0
        %1942 = vmatprep.subr.bf16.mxu0 0
        %1943 = vmatpush1.bf16.xpose.msra.mxu0 %v1937
        %1944 = vmatprep.subr.bf16.mxu0 0
        %1945 = vmatpush1.bf16.xpose.msra.mxu0 %v1940
        %1946 = vmatprep.subr.bf16.mxu0 0
        %1947 = vmatpush1.bf16.xpose.msra.mxu0 0
        %1948 = vmatprep.subr.bf16.mxu0 0
        %1949 = vmatpush1.bf16.xpose.msra.mxu0 0
        %1950 = vmatprep.subr.bf16.mxu0 0
        %1951 = vmatpush1.bf16.xpose.msra.mxu0 0
        %1952 = vmatprep.subr.bf16.mxu0 0
        %1953 = vmatpush1.bf16.xpose.msra.mxu0 0
        %1954 = vmatprep.subr.bf16.mxu0 0
        %1955 = vmatpush1.bf16.xpose.msra.mxu0 0
        %1956 = vmatprep.subr.bf16.mxu0 0
        %1957 = vmatpush1.bf16.xpose.msra.mxu0 0
        %1958 = vmatprep.subr.bf16.mxu0 0
        %1959 = vmatpush1.bf16.xpose.msra.mxu0 0
        %1960 = vmatprep.subr.bf16.mxu0 0
        %1961 = vmatpush1.bf16.xpose.msra.mxu0 0
        %1962 = vmatprep.subr.bf16.mxu0 0
        %1963 = vmatpush1.bf16.xpose.msra.mxu0 0
        %1964 = vmatprep.subr.bf16.mxu0 0
        %1965 = vmatpush1.bf16.xpose.msra.mxu0 0
        %1966 = vmatprep.subr.bf16.mxu0 0
        %1967 = vmatpush1.bf16.xpose.msra.mxu0 0
        %1968 = vmatprep.subr.bf16.mxu0 0
        %1969 = vmatpush1.bf16.xpose.msra.mxu0 0
        %1970 = vmatprep.subr.bf16.mxu0 0
        %1971 = vmatpush1.bf16.xpose.msra.mxu0 0
        %1972 = vmatprep.subr.bf16.mxu0 0
        %1973 = vmatpush1.bf16.xpose.msra.mxu0 0
        %1974 = vmatprep.mubr.bf16.mxu0 0
        %1975 = vmatmul.mubr.bf16.gmra.mrb[0].mxu0 %v1931
        %v1976 = vpop.f32.mrb[0].mxu0
        %v1977 = vadd.f32 %v714, %v1976
        %v1978 = vpop.f32.mrb[0].mxu0
        %v1979 = vpop.f32.mrb[0].mxu0
        %v1980 = vadd.f32 %v714, %v1979
        %v1981 = vpop.f32.mrb[0].mxu0
        %1982 = vmatprep.mubr.bf16.mxu0 0
        %1983 = vmatmul.mubr.bf16.gmra.mrb[0].mxu0 %v1934
        %v1984 = vpop.f32.mrb[0].mxu0
        %v1985 = vadd.f32 %v714, %v1984
        %v1986 = vpop.f32.mrb[0].mxu0
        %v1987 = vpop.f32.mrb[0].mxu0
        %v1988 = vadd.f32 %v714, %v1987
        %v1989 = vpop.f32.mrb[0].mxu0
        %1990 = vdwg.mxu0
        %v1991 = vsel %vm717, %v1977, -inf
        %1992 = vmax.xlane.f32.xlu0 %v1991
        %v1993 = vpop.xlane.xlu0 %1992
        %v1994 = vsel %vm717, %v1980, -inf
        %1995 = vmax.xlane.f32.xlu0 %v1994
        %v1996 = vpop.xlane.xlu0 %1995
        %v1997 = vsel %vm717, %v1985, -inf
        %1998 = vmax.xlane.f32.xlu0 %v1997
        %v1999 = vpop.xlane.xlu0 %1998
        %v2000 = vsel %vm717, %v1988, -inf
        %2001 = vmax.xlane.f32.xlu0 %v2000
        %v2002 = vpop.xlane.xlu0 %2001
        %v2003 = vsub.f32 %v1977, %v1993
        %v2004 = vsub.f32 %v1980, %v1996
        %v2005 = vsub.f32 %v1985, %v1999
        %v2006 = vsub.f32 %v1988, %v2002
        %v2007 = vmul.f32 %v2003, 1.442695
        %v2008 = vpow.pop %v2007
        %v2009 = vmul.f32 %v2004, 1.442695
        %v2010 = vpow.pop %v2009
        %v2011 = vmul.f32 %v2005, 1.442695
        %v2012 = vpow.pop %v2011
        %v2013 = vmul.f32 %v2006, 1.442695
        %v2014 = vpow.pop %v2013
        %v2015 = vsel %vm717, %v2008, 0.0
        %2016 = vadd.xlane.f32.xlu0 %v2015
        %v2017 = vpop.xlane.xlu0 %2016
        %v2018 = vsel %vm717, %v2010, 0.0
        %2019 = vadd.xlane.f32.xlu0 %v2018
        %v2020 = vpop.xlane.xlu0 %2019
        %v2021 = vsel %vm717, %v2012, 0.0
        %2022 = vadd.xlane.f32.xlu0 %v2021
        %v2023 = vpop.xlane.xlu0 %2022
        %v2024 = vsel %vm717, %v2014, 0.0
        %2025 = vadd.xlane.f32.xlu0 %v2024
        %v2026 = vpop.xlane.xlu0 %2025
        %v2027 = vrcp.pop %v2017
        %v2028 = vrcp.pop %v2020
        %v2029 = vrcp.pop %v2023
        %v2030 = vrcp.pop %v2026
        %v2031 = vmul.f32 %v2008, %v2027
        %v2032 = vmul.f32 %v2010, %v2028
        %v2033 = vmul.f32 %v2012, %v2029
        %v2034 = vmul.f32 %v2014, %v2030
        %v2035 = vpack.c.bf16 %v2032, %v2031
        %v2036 = vpack.c.bf16 %v2034, %v2033
        %v2038 = vsel %vm717, %v2035, 0
        %v2041 = vsel %vm717, %v2036, 0
        %2043 = vmatprep.subr.bf16.mxu0 0
        %2044 = vmatpush1.bf16.msra.mxu0 %v1928
        %2045 = vmatprep.subr.bf16.mxu0 0
        %2046 = vmatpush1.bf16.msra.mxu0 %v1929
        %2047 = vmatprep.subr.bf16.mxu0 0
        %2048 = vmatpush1.bf16.msra.mxu0 0
        %2049 = vmatprep.subr.bf16.mxu0 0
        %2050 = vmatpush1.bf16.msra.mxu0 0
        %2051 = vmatprep.subr.bf16.mxu0 0
        %2052 = vmatpush1.bf16.msra.mxu0 0
        %2053 = vmatprep.subr.bf16.mxu0 0
        %2054 = vmatpush1.bf16.msra.mxu0 0
        %2055 = vmatprep.subr.bf16.mxu0 0
        %2056 = vmatpush1.bf16.msra.mxu0 0
        %2057 = vmatprep.subr.bf16.mxu0 0
        %2058 = vmatpush1.bf16.msra.mxu0 0
        %2059 = vmatprep.subr.bf16.mxu0 0
        %2060 = vmatpush1.bf16.msra.mxu0 0
        %2061 = vmatprep.subr.bf16.mxu0 0
        %2062 = vmatpush1.bf16.msra.mxu0 0
        %2063 = vmatprep.subr.bf16.mxu0 0
        %2064 = vmatpush1.bf16.msra.mxu0 0
        %2065 = vmatprep.subr.bf16.mxu0 0
        %2066 = vmatpush1.bf16.msra.mxu0 0
        %2067 = vmatprep.subr.bf16.mxu0 0
        %2068 = vmatpush1.bf16.msra.mxu0 0
        %2069 = vmatprep.subr.bf16.mxu0 0
        %2070 = vmatpush1.bf16.msra.mxu0 0
        %2071 = vmatprep.subr.bf16.mxu0 0
        %2072 = vmatpush1.bf16.msra.mxu0 0
        %2073 = vmatprep.subr.bf16.mxu0 0
        %2074 = vmatpush1.bf16.msra.mxu0 0
        %2075 = vmatprep.mubr.bf16.mxu0 0
        %2076 = vmatmul.mubr.bf16.gmra.mrb[0].mxu0 %v2038
        %v2077 = vpop.f32.mrb[0].mxu0
        %v2078 = vadd.f32 0.0, %v2077
        %v2079 = vpop.f32.mrb[0].mxu0
        %v2080 = vpop.f32.mrb[0].mxu0
        %v2081 = vadd.f32 0.0, %v2080
        %v2082 = vpop.f32.mrb[0].mxu0
        %2083 = vmatprep.mubr.bf16.mxu0 0
        %2084 = vmatmul.mubr.bf16.gmra.mrb[0].mxu0 %v2041
        %v2085 = vpop.f32.mrb[0].mxu0
        %v2086 = vadd.f32 0.0, %v2085
        %v2087 = vpop.f32.mrb[0].mxu0
        %v2088 = vpop.f32.mrb[0].mxu0
        %v2089 = vadd.f32 0.0, %v2088
        %v2090 = vpop.f32.mrb[0].mxu0
        %2091 = vdwg.mxu0
        %v2092 = vpack.c.bf16 %v2081, %v2078
        %v2093 = vpack.c.bf16 %v2089, %v2086
        %s2094 = scalar_lea.vmem %s7, 8
        %v2095 = vld [vmem:[%s2094] sm:$0xf]
        %v2097 = vsel %vm1025, %v2092, 0
        %v2100 = vsel %vm1025, %v2093, 0
        %v2103 = vsel %vm1591, %v2095, 0
        %2105 = vmatprep.subr.bf16.mxu0 0
        %2106 = vmatpush1.bf16.msra.mxu0 %v2103
        %2107 = vmatprep.subr.bf16.mxu0 0
        %2108 = vmatpush1.bf16.msra.mxu0 0
        %2109 = vmatprep.subr.bf16.mxu0 0
        %2110 = vmatpush1.bf16.msra.mxu0 0
        %2111 = vmatprep.subr.bf16.mxu0 0
        %2112 = vmatpush1.bf16.msra.mxu0 0
        %2113 = vmatprep.subr.bf16.mxu0 0
        %2114 = vmatpush1.bf16.msra.mxu0 0
        %2115 = vmatprep.subr.bf16.mxu0 0
        %2116 = vmatpush1.bf16.msra.mxu0 0
        %2117 = vmatprep.subr.bf16.mxu0 0
        %2118 = vmatpush1.bf16.msra.mxu0 0
        %2119 = vmatprep.subr.bf16.mxu0 0
        %2120 = vmatpush1.bf16.msra.mxu0 0
        %2121 = vmatprep.subr.bf16.mxu0 0
        %2122 = vmatpush1.bf16.msra.mxu0 0
        %2123 = vmatprep.subr.bf16.mxu0 0
        %2124 = vmatpush1.bf16.msra.mxu0 0
        %2125 = vmatprep.subr.bf16.mxu0 0
        %2126 = vmatpush1.bf16.msra.mxu0 0
        %2127 = vmatprep.subr.bf16.mxu0 0
        %2128 = vmatpush1.bf16.msra.mxu0 0
        %2129 = vmatprep.subr.bf16.mxu0 0
        %2130 = vmatpush1.bf16.msra.mxu0 0
        %2131 = vmatprep.subr.bf16.mxu0 0
        %2132 = vmatpush1.bf16.msra.mxu0 0
        %2133 = vmatprep.subr.bf16.mxu0 0
        %2134 = vmatpush1.bf16.msra.mxu0 0
        %2135 = vmatprep.subr.bf16.mxu0 0
        %2136 = vmatpush1.bf16.msra.mxu0 0
        %2137 = vmatprep.mubr.bf16.mxu0 0
        %2138 = vmatmul.mubr.bf16.gmra.mrb[0].mxu0 %v2097
        %v2139 = vpop.f32.mrb[0].mxu0
        %v2140 = vadd.f32 0.0, %v2139
        %v2141 = vpop.f32.mrb[0].mxu0
        %v2142 = vpop.f32.mrb[0].mxu0
        %v2143 = vadd.f32 0.0, %v2142
        %v2144 = vpop.f32.mrb[0].mxu0
        %2145 = vmatprep.mubr.bf16.mxu0 0
        %2146 = vmatmul.mubr.bf16.gmra.mrb[0].mxu0 %v2100
        %v2147 = vpop.f32.mrb[0].mxu0
        %v2148 = vadd.f32 0.0, %v2147
        %v2149 = vpop.f32.mrb[0].mxu0
        %v2150 = vpop.f32.mrb[0].mxu0
        %v2151 = vadd.f32 0.0, %v2150
        %v2152 = vpop.f32.mrb[0].mxu0
        %2153 = vdwg.mxu0
        %v2154 = vadd.f32 %v1688, %v2140
        %v2155 = vadd.f32 %v1691, %v2143
        %v2156 = vadd.f32 %v1696, %v2148
        %v2157 = vadd.f32 %v1699, %v2151
        %s2158 = scalar_lea.vmem %s5, 144
        %v2159 = vld [vmem:[%s2158] sm:$0xf]
        %v2160 = vld [vmem:[%s2158 + $0x4] sm:$0xf]
        %v2161 = vld [vmem:[%s2158 + $0x8] sm:$0xf]
        %v2162 = vld [vmem:[%s2158 + $0xc] sm:$0xf]
        %s2163 = scalar_lea.vmem %s6, 9
        %v2164 = vld [vmem:[%s2163] sm:$0x1]
        %v2166 = vlaneseq
        %v2167 = vshrl.u32 %v2166, 7
        %v2168 = vsub.s32 0, %v2167
        %v2169 = vrot.slane %v2164, %v2168
        %v2175 = vunpack.c.l.b16 %v2159
        %v2176 = vunpack.c.l.b16 %v2160
        %v2177 = vunpack.c.l.b16 %v2161
        %v2178 = vunpack.c.l.b16 %v2162
        %v2179 = vpack.c.b16 %v2176, %v2175
        %v2180 = vpack.c.b16 %v2178, %v2177
        %2183 = vmatprep.subr.bf16.mxu0 0
        %2184 = vmatpush1.bf16.msra.mxu0 %v2179
        %2185 = vmatprep.subr.bf16.mxu0 0
        %2186 = vmatpush1.bf16.msra.mxu0 %v2180
        %2187 = vmatprep.subr.bf16.mxu0 0
        %2188 = vmatpush1.bf16.msra.mxu0 0
        %2189 = vmatprep.subr.bf16.mxu0 0
        %2190 = vmatpush1.bf16.msra.mxu0 0
        %2191 = vmatprep.subr.bf16.mxu0 0
        %2192 = vmatpush1.bf16.msra.mxu0 0
        %2193 = vmatprep.subr.bf16.mxu0 0
        %2194 = vmatpush1.bf16.msra.mxu0 0
        %2195 = vmatprep.subr.bf16.mxu0 0
        %2196 = vmatpush1.bf16.msra.mxu0 0
        %2197 = vmatprep.subr.bf16.mxu0 0
        %2198 = vmatpush1.bf16.msra.mxu0 0
        %2199 = vmatprep.subr.bf16.mxu0 0
        %2200 = vmatpush1.bf16.msra.mxu0 0
        %2201 = vmatprep.subr.bf16.mxu0 0
        %2202 = vmatpush1.bf16.msra.mxu0 0
        %2203 = vmatprep.subr.bf16.mxu0 0
        %2204 = vmatpush1.bf16.msra.mxu0 0
        %2205 = vmatprep.subr.bf16.mxu0 0
        %2206 = vmatpush1.bf16.msra.mxu0 0
        %2207 = vmatprep.subr.bf16.mxu0 0
        %2208 = vmatpush1.bf16.msra.mxu0 0
        %2209 = vmatprep.subr.bf16.mxu0 0
        %2210 = vmatpush1.bf16.msra.mxu0 0
        %2211 = vmatprep.subr.bf16.mxu0 0
        %2212 = vmatpush1.bf16.msra.mxu0 0
        %2213 = vmatprep.subr.bf16.mxu0 0
        %2214 = vmatpush1.bf16.msra.mxu0 0
        %2215 = vmatprep.mubr.bf16.mxu0 0
        %2216 = vmatmul.mubr.bf16.gmra.mrb[0].mxu0 %v817
        %v2217 = vpop.f32.mrb[0].mxu0
        %v2218 = vadd.f32 %v2169, %v2217
        %v2219 = vpop.f32.mrb[0].mxu0
        %v2220 = vpop.f32.mrb[0].mxu0
        %v2221 = vadd.f32 %v2169, %v2220
        %v2222 = vpop.f32.mrb[0].mxu0
        %2223 = vmatprep.mubr.bf16.mxu0 0
        %2224 = vmatmul.mubr.bf16.gmra.mrb[0].mxu0 %v820
        %v2225 = vpop.f32.mrb[0].mxu0
        %v2226 = vadd.f32 %v2169, %v2225
        %v2227 = vpop.f32.mrb[0].mxu0
        %v2228 = vpop.f32.mrb[0].mxu0
        %v2229 = vadd.f32 %v2169, %v2228
        %v2230 = vpop.f32.mrb[0].mxu0
        %2231 = vdwg.mxu0
        %s2232 = scalar_lea.vmem %s5, 160
        %v2233 = vld [vmem:[%s2232] sm:$0xf]
        %v2234 = vld [vmem:[%s2232 + $0x4] sm:$0xf]
        %v2235 = vld [vmem:[%s2232 + $0x8] sm:$0xf]
        %v2236 = vld [vmem:[%s2232 + $0xc] sm:$0xf]
        %s2237 = scalar_lea.vmem %s6, 10
        %v2238 = vld [vmem:[%s2237] sm:$0x1]
        %v2240 = vlaneseq
        %v2241 = vshrl.u32 %v2240, 7
        %v2242 = vsub.s32 0, %v2241
        %v2243 = vrot.slane %v2238, %v2242
        %v2249 = vunpack.c.l.b16 %v2233
        %v2250 = vunpack.c.l.b16 %v2234
        %v2251 = vunpack.c.l.b16 %v2235
        %v2252 = vunpack.c.l.b16 %v2236
        %v2253 = vpack.c.b16 %v2250, %v2249
        %v2254 = vpack.c.b16 %v2252, %v2251
        %2257 = vmatprep.subr.bf16.mxu0 0
        %2258 = vmatpush1.bf16.msra.mxu0 %v2253
        %2259 = vmatprep.subr.bf16.mxu0 0
        %2260 = vmatpush1.bf16.msra.mxu0 %v2254
        %2261 = vmatprep.subr.bf16.mxu0 0
        %2262 = vmatpush1.bf16.msra.mxu0 0
        %2263 = vmatprep.subr.bf16.mxu0 0
        %2264 = vmatpush1.bf16.msra.mxu0 0
        %2265 = vmatprep.subr.bf16.mxu0 0
        %2266 = vmatpush1.bf16.msra.mxu0 0
        %2267 = vmatprep.subr.bf16.mxu0 0
        %2268 = vmatpush1.bf16.msra.mxu0 0
        %2269 = vmatprep.subr.bf16.mxu0 0
        %2270 = vmatpush1.bf16.msra.mxu0 0
        %2271 = vmatprep.subr.bf16.mxu0 0
        %2272 = vmatpush1.bf16.msra.mxu0 0
        %2273 = vmatprep.subr.bf16.mxu0 0
        %2274 = vmatpush1.bf16.msra.mxu0 0
        %2275 = vmatprep.subr.bf16.mxu0 0
        %2276 = vmatpush1.bf16.msra.mxu0 0
        %2277 = vmatprep.subr.bf16.mxu0 0
        %2278 = vmatpush1.bf16.msra.mxu0 0
        %2279 = vmatprep.subr.bf16.mxu0 0
        %2280 = vmatpush1.bf16.msra.mxu0 0
        %2281 = vmatprep.subr.bf16.mxu0 0
        %2282 = vmatpush1.bf16.msra.mxu0 0
        %2283 = vmatprep.subr.bf16.mxu0 0
        %2284 = vmatpush1.bf16.msra.mxu0 0
        %2285 = vmatprep.subr.bf16.mxu0 0
        %2286 = vmatpush1.bf16.msra.mxu0 0
        %2287 = vmatprep.subr.bf16.mxu0 0
        %2288 = vmatpush1.bf16.msra.mxu0 0
        %2289 = vmatprep.mubr.bf16.mxu0 0
        %2290 = vmatmul.mubr.bf16.gmra.mrb[0].mxu0 %v817
        %v2291 = vpop.f32.mrb[0].mxu0
        %v2292 = vadd.f32 %v2243, %v2291
        %v2293 = vpop.f32.mrb[0].mxu0
        %v2294 = vpop.f32.mrb[0].mxu0
        %v2295 = vadd.f32 %v2243, %v2294
        %v2296 = vpop.f32.mrb[0].mxu0
        %2297 = vmatprep.mubr.bf16.mxu0 0
        %2298 = vmatmul.mubr.bf16.gmra.mrb[0].mxu0 %v820
        %v2299 = vpop.f32.mrb[0].mxu0
        %v2300 = vadd.f32 %v2243, %v2299
        %v2301 = vpop.f32.mrb[0].mxu0
        %v2302 = vpop.f32.mrb[0].mxu0
        %v2303 = vadd.f32 %v2243, %v2302
        %v2304 = vpop.f32.mrb[0].mxu0
        %2305 = vdwg.mxu0
        %s2306 = scalar_lea.vmem %s5, 176
        %v2307 = vld [vmem:[%s2306] sm:$0xf]
        %v2308 = vld [vmem:[%s2306 + $0x4] sm:$0xf]
        %v2309 = vld [vmem:[%s2306 + $0x8] sm:$0xf]
        %v2310 = vld [vmem:[%s2306 + $0xc] sm:$0xf]
        %s2311 = scalar_lea.vmem %s6, 11
        %v2312 = vld [vmem:[%s2311] sm:$0x1]
        %v2314 = vlaneseq
        %v2315 = vshrl.u32 %v2314, 7
        %v2316 = vsub.s32 0, %v2315
        %v2317 = vrot.slane %v2312, %v2316
        %v2323 = vunpack.c.l.b16 %v2307
        %v2324 = vunpack.c.l.b16 %v2308
        %v2325 = vunpack.c.l.b16 %v2309
        %v2326 = vunpack.c.l.b16 %v2310
        %v2327 = vpack.c.b16 %v2324, %v2323
        %v2328 = vpack.c.b16 %v2326, %v2325
        %2331 = vmatprep.subr.bf16.mxu0 0
        %2332 = vmatpush1.bf16.msra.mxu0 %v2327
        %2333 = vmatprep.subr.bf16.mxu0 0
        %2334 = vmatpush1.bf16.msra.mxu0 %v2328
        %2335 = vmatprep.subr.bf16.mxu0 0
        %2336 = vmatpush1.bf16.msra.mxu0 0
        %2337 = vmatprep.subr.bf16.mxu0 0
        %2338 = vmatpush1.bf16.msra.mxu0 0
        %2339 = vmatprep.subr.bf16.mxu0 0
        %2340 = vmatpush1.bf16.msra.mxu0 0
        %2341 = vmatprep.subr.bf16.mxu0 0
        %2342 = vmatpush1.bf16.msra.mxu0 0
        %2343 = vmatprep.subr.bf16.mxu0 0
        %2344 = vmatpush1.bf16.msra.mxu0 0
        %2345 = vmatprep.subr.bf16.mxu0 0
        %2346 = vmatpush1.bf16.msra.mxu0 0
        %2347 = vmatprep.subr.bf16.mxu0 0
        %2348 = vmatpush1.bf16.msra.mxu0 0
        %2349 = vmatprep.subr.bf16.mxu0 0
        %2350 = vmatpush1.bf16.msra.mxu0 0
        %2351 = vmatprep.subr.bf16.mxu0 0
        %2352 = vmatpush1.bf16.msra.mxu0 0
        %2353 = vmatprep.subr.bf16.mxu0 0
        %2354 = vmatpush1.bf16.msra.mxu0 0
        %2355 = vmatprep.subr.bf16.mxu0 0
        %2356 = vmatpush1.bf16.msra.mxu0 0
        %2357 = vmatprep.subr.bf16.mxu0 0
        %2358 = vmatpush1.bf16.msra.mxu0 0
        %2359 = vmatprep.subr.bf16.mxu0 0
        %2360 = vmatpush1.bf16.msra.mxu0 0
        %2361 = vmatprep.subr.bf16.mxu0 0
        %2362 = vmatpush1.bf16.msra.mxu0 0
        %2363 = vmatprep.mubr.bf16.mxu0 0
        %2364 = vmatmul.mubr.bf16.gmra.mrb[0].mxu0 %v817
        %v2365 = vpop.f32.mrb[0].mxu0
        %v2366 = vadd.f32 %v2317, %v2365
        %v2367 = vpop.f32.mrb[0].mxu0
        %v2368 = vpop.f32.mrb[0].mxu0
        %v2369 = vadd.f32 %v2317, %v2368
        %v2370 = vpop.f32.mrb[0].mxu0
        %2371 = vmatprep.mubr.bf16.mxu0 0
        %2372 = vmatmul.mubr.bf16.gmra.mrb[0].mxu0 %v820
        %v2373 = vpop.f32.mrb[0].mxu0
        %v2374 = vadd.f32 %v2317, %v2373
        %v2375 = vpop.f32.mrb[0].mxu0
        %v2376 = vpop.f32.mrb[0].mxu0
        %v2377 = vadd.f32 %v2317, %v2376
        %v2378 = vpop.f32.mrb[0].mxu0
        %2379 = vdwg.mxu0
        %v2380 = vpack.c.bf16 %v2221, %v2218
        %v2381 = vpack.c.bf16 %v2229, %v2226
        %v2382 = vpack.c.bf16 %v2295, %v2292
        %v2383 = vpack.c.bf16 %v2303, %v2300
        %v2384 = vpack.c.bf16 %v2369, %v2366
        %v2385 = vpack.c.bf16 %v2377, %v2374
        %v2387 = vsel %vm1025, %v2380, 0
        %v2390 = vsel %vm1025, %v2381, 0
        %v2393 = vsel %vm1025, %v2382, 0
        %v2396 = vsel %vm1025, %v2383, 0
        %2398 = vmatprep.subr.bf16.mxu0 0
        %2399 = vmatpush1.bf16.xpose.msra.mxu0 %v2393
        %2400 = vmatprep.subr.bf16.mxu0 0
        %2401 = vmatpush1.bf16.xpose.msra.mxu0 %v2396
        %2402 = vmatprep.subr.bf16.mxu0 0
        %2403 = vmatpush1.bf16.xpose.msra.mxu0 0
        %2404 = vmatprep.subr.bf16.mxu0 0
        %2405 = vmatpush1.bf16.xpose.msra.mxu0 0
        %2406 = vmatprep.subr.bf16.mxu0 0
        %2407 = vmatpush1.bf16.xpose.msra.mxu0 0
        %2408 = vmatprep.subr.bf16.mxu0 0
        %2409 = vmatpush1.bf16.xpose.msra.mxu0 0
        %2410 = vmatprep.subr.bf16.mxu0 0
        %2411 = vmatpush1.bf16.xpose.msra.mxu0 0
        %2412 = vmatprep.subr.bf16.mxu0 0
        %2413 = vmatpush1.bf16.xpose.msra.mxu0 0
        %2414 = vmatprep.subr.bf16.mxu0 0
        %2415 = vmatpush1.bf16.xpose.msra.mxu0 0
        %2416 = vmatprep.subr.bf16.mxu0 0
        %2417 = vmatpush1.bf16.xpose.msra.mxu0 0
        %2418 = vmatprep.subr.bf16.mxu0 0
        %2419 = vmatpush1.bf16.xpose.msra.mxu0 0
        %2420 = vmatprep.subr.bf16.mxu0 0
        %2421 = vmatpush1.bf16.xpose.msra.mxu0 0
        %2422 = vmatprep.subr.bf16.mxu0 0
        %2423 = vmatpush1.bf16.xpose.msra.mxu0 0
        %2424 = vmatprep.subr.bf16.mxu0 0
        %2425 = vmatpush1.bf16.xpose.msra.mxu0 0
        %2426 = vmatprep.subr.bf16.mxu0 0
        %2427 = vmatpush1.bf16.xpose.msra.mxu0 0
        %2428 = vmatprep.subr.bf16.mxu0 0
        %2429 = vmatpush1.bf16.xpose.msra.mxu0 0
        %2430 = vmatprep.mubr.bf16.mxu0 0
        %2431 = vmatmul.mubr.bf16.gmra.mrb[0].mxu0 %v2387
        %v2432 = vpop.f32.mrb[0].mxu0
        %v2433 = vadd.f32 %v714, %v2432
        %v2434 = vpop.f32.mrb[0].mxu0
        %v2435 = vpop.f32.mrb[0].mxu0
        %v2436 = vadd.f32 %v714, %v2435
        %v2437 = vpop.f32.mrb[0].mxu0
        %2438 = vmatprep.mubr.bf16.mxu0 0
        %2439 = vmatmul.mubr.bf16.gmra.mrb[0].mxu0 %v2390
        %v2440 = vpop.f32.mrb[0].mxu0
        %v2441 = vadd.f32 %v714, %v2440
        %v2442 = vpop.f32.mrb[0].mxu0
        %v2443 = vpop.f32.mrb[0].mxu0
        %v2444 = vadd.f32 %v714, %v2443
        %v2445 = vpop.f32.mrb[0].mxu0
        %2446 = vdwg.mxu0
        %v2447 = vsel %vm717, %v2433, -inf
        %2448 = vmax.xlane.f32.xlu0 %v2447
        %v2449 = vpop.xlane.xlu0 %2448
        %v2450 = vsel %vm717, %v2436, -inf
        %2451 = vmax.xlane.f32.xlu0 %v2450
        %v2452 = vpop.xlane.xlu0 %2451
        %v2453 = vsel %vm717, %v2441, -inf
        %2454 = vmax.xlane.f32.xlu0 %v2453
        %v2455 = vpop.xlane.xlu0 %2454
        %v2456 = vsel %vm717, %v2444, -inf
        %2457 = vmax.xlane.f32.xlu0 %v2456
        %v2458 = vpop.xlane.xlu0 %2457
        %v2459 = vsub.f32 %v2433, %v2449
        %v2460 = vsub.f32 %v2436, %v2452
        %v2461 = vsub.f32 %v2441, %v2455
        %v2462 = vsub.f32 %v2444, %v2458
        %v2463 = vmul.f32 %v2459, 1.442695
        %v2464 = vpow.pop %v2463
        %v2465 = vmul.f32 %v2460, 1.442695
        %v2466 = vpow.pop %v2465
        %v2467 = vmul.f32 %v2461, 1.442695
        %v2468 = vpow.pop %v2467
        %v2469 = vmul.f32 %v2462, 1.442695
        %v2470 = vpow.pop %v2469
        %v2471 = vsel %vm717, %v2464, 0.0
        %2472 = vadd.xlane.f32.xlu0 %v2471
        %v2473 = vpop.xlane.xlu0 %2472
        %v2474 = vsel %vm717, %v2466, 0.0
        %2475 = vadd.xlane.f32.xlu0 %v2474
        %v2476 = vpop.xlane.xlu0 %2475
        %v2477 = vsel %vm717, %v2468, 0.0
        %2478 = vadd.xlane.f32.xlu0 %v2477
        %v2479 = vpop.xlane.xlu0 %2478
        %v2480 = vsel %vm717, %v2470, 0.0
        %2481 = vadd.xlane.f32.xlu0 %v2480
        %v2482 = vpop.xlane.xlu0 %2481
        %v2483 = vrcp.pop %v2473
        %v2484 = vrcp.pop %v2476
        %v2485 = vrcp.pop %v2479
        %v2486 = vrcp.pop %v2482
        %v2487 = vmul.f32 %v2464, %v2483
        %v2488 = vmul.f32 %v2466, %v2484
        %v2489 = vmul.f32 %v2468, %v2485
        %v2490 = vmul.f32 %v2470, %v2486
        %v2491 = vpack.c.bf16 %v2488, %v2487
        %v2492 = vpack.c.bf16 %v2490, %v2489
        %v2494 = vsel %vm717, %v2491, 0
        %v2497 = vsel %vm717, %v2492, 0
        %2499 = vmatprep.subr.bf16.mxu0 0
        %2500 = vmatpush1.bf16.msra.mxu0 %v2384
        %2501 = vmatprep.subr.bf16.mxu0 0
        %2502 = vmatpush1.bf16.msra.mxu0 %v2385
        %2503 = vmatprep.subr.bf16.mxu0 0
        %2504 = vmatpush1.bf16.msra.mxu0 0
        %2505 = vmatprep.subr.bf16.mxu0 0
        %2506 = vmatpush1.bf16.msra.mxu0 0
        %2507 = vmatprep.subr.bf16.mxu0 0
        %2508 = vmatpush1.bf16.msra.mxu0 0
        %2509 = vmatprep.subr.bf16.mxu0 0
        %2510 = vmatpush1.bf16.msra.mxu0 0
        %2511 = vmatprep.subr.bf16.mxu0 0
        %2512 = vmatpush1.bf16.msra.mxu0 0
        %2513 = vmatprep.subr.bf16.mxu0 0
        %2514 = vmatpush1.bf16.msra.mxu0 0
        %2515 = vmatprep.subr.bf16.mxu0 0
        %2516 = vmatpush1.bf16.msra.mxu0 0
        %2517 = vmatprep.subr.bf16.mxu0 0
        %2518 = vmatpush1.bf16.msra.mxu0 0
        %2519 = vmatprep.subr.bf16.mxu0 0
        %2520 = vmatpush1.bf16.msra.mxu0 0
        %2521 = vmatprep.subr.bf16.mxu0 0
        %2522 = vmatpush1.bf16.msra.mxu0 0
        %2523 = vmatprep.subr.bf16.mxu0 0
        %2524 = vmatpush1.bf16.msra.mxu0 0
        %2525 = vmatprep.subr.bf16.mxu0 0
        %2526 = vmatpush1.bf16.msra.mxu0 0
        %2527 = vmatprep.subr.bf16.mxu0 0
        %2528 = vmatpush1.bf16.msra.mxu0 0
        %2529 = vmatprep.subr.bf16.mxu0 0
        %2530 = vmatpush1.bf16.msra.mxu0 0
        %2531 = vmatprep.mubr.bf16.mxu0 0
        %2532 = vmatmul.mubr.bf16.gmra.mrb[0].mxu0 %v2494
        %v2533 = vpop.f32.mrb[0].mxu0
        %v2534 = vadd.f32 0.0, %v2533
        %v2535 = vpop.f32.mrb[0].mxu0
        %v2536 = vpop.f32.mrb[0].mxu0
        %v2537 = vadd.f32 0.0, %v2536
        %v2538 = vpop.f32.mrb[0].mxu0
        %2539 = vmatprep.mubr.bf16.mxu0 0
        %2540 = vmatmul.mubr.bf16.gmra.mrb[0].mxu0 %v2497
        %v2541 = vpop.f32.mrb[0].mxu0
        %v2542 = vadd.f32 0.0, %v2541
        %v2543 = vpop.f32.mrb[0].mxu0
        %v2544 = vpop.f32.mrb[0].mxu0
        %v2545 = vadd.f32 0.0, %v2544
        %v2546 = vpop.f32.mrb[0].mxu0
        %2547 = vdwg.mxu0
        %v2548 = vpack.c.bf16 %v2537, %v2534
        %v2549 = vpack.c.bf16 %v2545, %v2542
        %s2550 = scalar_lea.vmem %s7, 12
        %v2551 = vld [vmem:[%s2550] sm:$0xf]
        %v2553 = vsel %vm1025, %v2548, 0
        %v2556 = vsel %vm1025, %v2549, 0
        %v2559 = vsel %vm1591, %v2551, 0
        %2561 = vmatprep.subr.bf16.mxu0 0
        %2562 = vmatpush1.bf16.msra.mxu0 %v2559
        %2563 = vmatprep.subr.bf16.mxu0 0
        %2564 = vmatpush1.bf16.msra.mxu0 0
        %2565 = vmatprep.subr.bf16.mxu0 0
        %2566 = vmatpush1.bf16.msra.mxu0 0
        %2567 = vmatprep.subr.bf16.mxu0 0
        %2568 = vmatpush1.bf16.msra.mxu0 0
        %2569 = vmatprep.subr.bf16.mxu0 0
        %2570 = vmatpush1.bf16.msra.mxu0 0
        %2571 = vmatprep.subr.bf16.mxu0 0
        %2572 = vmatpush1.bf16.msra.mxu0 0
        %2573 = vmatprep.subr.bf16.mxu0 0
        %2574 = vmatpush1.bf16.msra.mxu0 0
        %2575 = vmatprep.subr.bf16.mxu0 0
        %2576 = vmatpush1.bf16.msra.mxu0 0
        %2577 = vmatprep.subr.bf16.mxu0 0
        %2578 = vmatpush1.bf16.msra.mxu0 0
        %2579 = vmatprep.subr.bf16.mxu0 0
        %2580 = vmatpush1.bf16.msra.mxu0 0
        %2581 = vmatprep.subr.bf16.mxu0 0
        %2582 = vmatpush1.bf16.msra.mxu0 0
        %2583 = vmatprep.subr.bf16.mxu0 0
        %2584 = vmatpush1.bf16.msra.mxu0 0
        %2585 = vmatprep.subr.bf16.mxu0 0
        %2586 = vmatpush1.bf16.msra.mxu0 0
        %2587 = vmatprep.subr.bf16.mxu0 0
        %2588 = vmatpush1.bf16.msra.mxu0 0
        %2589 = vmatprep.subr.bf16.mxu0 0
        %2590 = vmatpush1.bf16.msra.mxu0 0
        %2591 = vmatprep.subr.bf16.mxu0 0
        %2592 = vmatpush1.bf16.msra.mxu0 0
        %2593 = vmatprep.mubr.bf16.mxu0 0
        %2594 = vmatmul.mubr.bf16.gmra.mrb[0].mxu0 %v2553
        %v2595 = vpop.f32.mrb[0].mxu0
        %v2596 = vadd.f32 0.0, %v2595
        %v2597 = vpop.f32.mrb[0].mxu0
        %v2598 = vpop.f32.mrb[0].mxu0
        %v2599 = vadd.f32 0.0, %v2598
        %v2600 = vpop.f32.mrb[0].mxu0
        %2601 = vmatprep.mubr.bf16.mxu0 0
        %2602 = vmatmul.mubr.bf16.gmra.mrb[0].mxu0 %v2556
        %v2603 = vpop.f32.mrb[0].mxu0
        %v2604 = vadd.f32 0.0, %v2603
        %v2605 = vpop.f32.mrb[0].mxu0
        %v2606 = vpop.f32.mrb[0].mxu0
        %v2607 = vadd.f32 0.0, %v2606
        %v2608 = vpop.f32.mrb[0].mxu0
        %2609 = vdwg.mxu0
        %v2610 = vadd.f32 %v2154, %v2596
        %v2611 = vadd.f32 %v2155, %v2599
        %v2612 = vadd.f32 %v2156, %v2604
        %v2613 = vadd.f32 %v2157, %v2607
        %v2614 = vadd.f32 %v707, %v2610
        %v2615 = vadd.f32 %v708, %v2611
        %v2616 = vadd.f32 %v709, %v2612
        %v2617 = vadd.f32 %v710, %v2613
        %v2618 = vld [vmem:[%s8] sm:$0x1]
        %v2620 = vlaneseq
        %v2621 = vshrl.u32 %v2620, 7
        %v2622 = vsub.s32 0, %v2621
        %v2623 = vrot.slane %v2618, %v2622
        %v2625 = vadd.f32 %v2614, %v2623
        %v2626 = vadd.f32 %v2615, %v2623
        %v2627 = vadd.f32 %v2616, %v2623
        %v2628 = vadd.f32 %v2617, %v2623
        %v2629 = vld [vmem:[%s9] sm:$0x1]
        %v2630 = vld [vmem:[%s10] sm:$0x1]
        %v2631 = vsel %vm717, %v2625, 0.0
        %2632 = vadd.xlane.f32.xlu0 %v2631
        %v2633 = vpop.xlane.xlu0 %2632
        %v2634 = vsel %vm717, %v2626, 0.0
        %2635 = vadd.xlane.f32.xlu0 %v2634
        %v2636 = vpop.xlane.xlu0 %2635
        %v2637 = vsel %vm717, %v2627, 0.0
        %2638 = vadd.xlane.f32.xlu0 %v2637
        %v2639 = vpop.xlane.xlu0 %2638
        %v2640 = vsel %vm717, %v2628, 0.0
        %2641 = vadd.xlane.f32.xlu0 %v2640
        %v2642 = vpop.xlane.xlu0 %2641
        %v2643 = vmul.f32 %v2633, %v730
        %v2644 = vmul.f32 %v2636, %v730
        %v2645 = vmul.f32 %v2639, %v730
        %v2646 = vmul.f32 %v2642, %v730
        %v2647 = vsub.f32 %v2625, %v2643
        %v2648 = vsub.f32 %v2626, %v2644
        %v2649 = vsub.f32 %v2627, %v2645
        %v2650 = vsub.f32 %v2628, %v2646
        %v2651 = vmul.f32 %v2647, %v2647
        %v2652 = vmul.f32 %v2648, %v2648
        %v2653 = vmul.f32 %v2649, %v2649
        %v2654 = vmul.f32 %v2650, %v2650
        %v2655 = vsel %vm717, %v2651, 0.0
        %2656 = vadd.xlane.f32.xlu0 %v2655
        %v2657 = vpop.xlane.xlu0 %2656
        %v2658 = vsel %vm717, %v2652, 0.0
        %2659 = vadd.xlane.f32.xlu0 %v2658
        %v2660 = vpop.xlane.xlu0 %2659
        %v2661 = vsel %vm717, %v2653, 0.0
        %2662 = vadd.xlane.f32.xlu0 %v2661
        %v2663 = vpop.xlane.xlu0 %2662
        %v2664 = vsel %vm717, %v2654, 0.0
        %2665 = vadd.xlane.f32.xlu0 %v2664
        %v2666 = vpop.xlane.xlu0 %2665
        %v2667 = vmul.f32 %v2657, %v730
        %v2668 = vmul.f32 %v2660, %v730
        %v2669 = vmul.f32 %v2663, %v730
        %v2670 = vmul.f32 %v2666, %v730
        %v2671 = vadd.f32 %v2667, 1e-06
        %v2672 = vadd.f32 %v2668, 1e-06
        %v2673 = vadd.f32 %v2669, 1e-06
        %v2674 = vadd.f32 %v2670, 1e-06
        %v2675 = vrsqrt.pop %v2671
        %v2676 = vrsqrt.pop %v2672
        %v2677 = vrsqrt.pop %v2673
        %v2678 = vrsqrt.pop %v2674
        %v2679 = vmul.f32 %v2647, %v2675
        %v2680 = vmul.f32 %v2648, %v2676
        %v2681 = vmul.f32 %v2649, %v2677
        %v2682 = vmul.f32 %v2650, %v2678
        %v2684 = vlaneseq
        %v2685 = vshrl.u32 %v2684, 7
        %v2686 = vsub.s32 0, %v2685
        %v2687 = vrot.slane %v2629, %v2686
        %v2689 = vmul.f32 %v2679, %v2687
        %v2690 = vmul.f32 %v2680, %v2687
        %v2691 = vmul.f32 %v2681, %v2687
        %v2692 = vmul.f32 %v2682, %v2687
        %v2694 = vlaneseq
        %v2695 = vshrl.u32 %v2694, 7
        %v2696 = vsub.s32 0, %v2695
        %v2697 = vrot.slane %v2630, %v2696
        %v2699 = vadd.f32 %v2689, %v2697
        %v2700 = vadd.f32 %v2690, %v2697
        %v2701 = vadd.f32 %v2691, %v2697
        %v2702 = vadd.f32 %v2692, %v2697
        %v2703 = vld [vmem:[%s11] sm:$0xf]
        %v2704 = vld [vmem:[%s11 + $0x4] sm:$0xf]
        %v2705 = vld [vmem:[%s11 + $0x8] sm:$0xf]
        %v2706 = vld [vmem:[%s11 + $0xc] sm:$0xf]
        %v2707 = vpack.c.bf16 %v2700, %v2699
        %v2708 = vpack.c.bf16 %v2702, %v2701
        %v2709 = vld [vmem:[%s12] sm:$0x1]
        %v2711 = vlaneseq
        %v2712 = vshrl.u32 %v2711, 7
        %v2713 = vsub.s32 0, %v2712
        %v2714 = vrot.slane %v2709, %v2713
        %v2720 = vunpack.c.l.b16 %v2703
        %v2721 = vunpack.c.l.b16 %v2704
        %v2722 = vunpack.c.l.b16 %v2705
        %v2723 = vunpack.c.l.b16 %v2706
        %v2724 = vpack.c.b16 %v2721, %v2720
        %v2725 = vpack.c.b16 %v2723, %v2722
        %v2729 = vsel %vm717, %v2707, 0
        %v2732 = vsel %vm717, %v2708, 0
        %2734 = vmatprep.subr.bf16.mxu0 0
        %2735 = vmatpush1.bf16.msra.mxu0 %v2724
        %2736 = vmatprep.subr.bf16.mxu0 0
        %2737 = vmatpush1.bf16.msra.mxu0 %v2725
        %2738 = vmatprep.subr.bf16.mxu0 0
        %2739 = vmatpush1.bf16.msra.mxu0 0
        %2740 = vmatprep.subr.bf16.mxu0 0
        %2741 = vmatpush1.bf16.msra.mxu0 0
        %2742 = vmatprep.subr.bf16.mxu0 0
        %2743 = vmatpush1.bf16.msra.mxu0 0
        %2744 = vmatprep.subr.bf16.mxu0 0
        %2745 = vmatpush1.bf16.msra.mxu0 0
        %2746 = vmatprep.subr.bf16.mxu0 0
        %2747 = vmatpush1.bf16.msra.mxu0 0
        %2748 = vmatprep.subr.bf16.mxu0 0
        %2749 = vmatpush1.bf16.msra.mxu0 0
        %2750 = vmatprep.subr.bf16.mxu0 0
        %2751 = vmatpush1.bf16.msra.mxu0 0
        %2752 = vmatprep.subr.bf16.mxu0 0
        %2753 = vmatpush1.bf16.msra.mxu0 0
        %2754 = vmatprep.subr.bf16.mxu0 0
        %2755 = vmatpush1.bf16.msra.mxu0 0
        %2756 = vmatprep.subr.bf16.mxu0 0
        %2757 = vmatpush1.bf16.msra.mxu0 0
        %2758 = vmatprep.subr.bf16.mxu0 0
        %2759 = vmatpush1.bf16.msra.mxu0 0
        %2760 = vmatprep.subr.bf16.mxu0 0
        %2761 = vmatpush1.bf16.msra.mxu0 0
        %2762 = vmatprep.subr.bf16.mxu0 0
        %2763 = vmatpush1.bf16.msra.mxu0 0
        %2764 = vmatprep.subr.bf16.mxu0 0
        %2765 = vmatpush1.bf16.msra.mxu0 0
        %2766 = vmatprep.mubr.bf16.mxu0 0
        %2767 = vmatmul.mubr.bf16.gmra.mrb[0].mxu0 %v2729
        %v2768 = vpop.f32.mrb[0].mxu0
        %v2769 = vadd.f32 %v2714, %v2768
        %v2770 = vpop.f32.mrb[0].mxu0
        %v2771 = vpop.f32.mrb[0].mxu0
        %v2772 = vadd.f32 %v2714, %v2771
        %v2773 = vpop.f32.mrb[0].mxu0
        %2774 = vmatprep.mubr.bf16.mxu0 0
        %2775 = vmatmul.mubr.bf16.gmra.mrb[0].mxu0 %v2732
        %v2776 = vpop.f32.mrb[0].mxu0
        %v2777 = vadd.f32 %v2714, %v2776
        %v2778 = vpop.f32.mrb[0].mxu0
        %v2779 = vpop.f32.mrb[0].mxu0
        %v2780 = vadd.f32 %v2714, %v2779
        %v2781 = vpop.f32.mrb[0].mxu0
        %2782 = vdwg.mxu0
        %v2783 = vmul.f32 %v2769, 0.5
        %v2784 = vmul.f32 %v2772, 0.5
        %v2785 = vmul.f32 %v2777, 0.5
        %v2786 = vmul.f32 %v2780, 0.5
        %v2787 = vmul.f32 %v2769, 0.70710677
        %v2788 = vmul.f32 %v2772, 0.70710677
        %v2789 = vmul.f32 %v2777, 0.70710677
        %v2790 = vmul.f32 %v2780, 0.70710677
        %v2791 = verf.f32.pop %v2787
        %v2792 = verf.f32.pop %v2788
        %v2793 = verf.f32.pop %v2789
        %v2794 = verf.f32.pop %v2790
        %v2795 = vadd.f32 %v2791, 1.0
        %v2796 = vadd.f32 %v2792, 1.0
        %v2797 = vadd.f32 %v2793, 1.0
        %v2798 = vadd.f32 %v2794, 1.0
        %v2799 = vmul.f32 %v2783, %v2795
        %v2800 = vmul.f32 %v2784, %v2796
        %v2801 = vmul.f32 %v2785, %v2797
        %v2802 = vmul.f32 %v2786, %v2798
        %v2803 = vld [vmem:[%s13] sm:$0xf]
        %v2804 = vld [vmem:[%s13 + $0x4] sm:$0xf]
        %v2805 = vld [vmem:[%s13 + $0x8] sm:$0xf]
        %v2806 = vld [vmem:[%s13 + $0xc] sm:$0xf]
        %v2807 = vld [vmem:[%s13 + $0x10] sm:$0xf]
        %v2808 = vld [vmem:[%s13 + $0x14] sm:$0xf]
        %v2809 = vld [vmem:[%s13 + $0x18] sm:$0xf]
        %v2810 = vld [vmem:[%s13 + $0x1c] sm:$0xf]
        %v2811 = vld [vmem:[%s13 + $0x20] sm:$0xf]
        %v2812 = vld [vmem:[%s13 + $0x24] sm:$0xf]
        %v2813 = vld [vmem:[%s13 + $0x28] sm:$0xf]
        %v2814 = vld [vmem:[%s13 + $0x2c] sm:$0xf]
        %v2815 = vld [vmem:[%s13 + $0x30] sm:$0xf]
        %v2816 = vld [vmem:[%s13 + $0x34] sm:$0xf]
        %v2817 = vld [vmem:[%s13 + $0x38] sm:$0xf]
        %v2818 = vld [vmem:[%s13 + $0x3c] sm:$0xf]
        %v2819 = vpack.c.bf16 %v2800, %v2799
        %v2820 = vpack.c.bf16 %v2802, %v2801
        %v2837 = vunpack.c.l.b16 %v2803
        %v2838 = vunpack.c.l.b16 %v2804
        %v2839 = vunpack.c.l.b16 %v2805
        %v2840 = vunpack.c.l.b16 %v2806
        %v2841 = vunpack.c.l.b16 %v2807
        %v2842 = vunpack.c.l.b16 %v2808
        %v2843 = vunpack.c.l.b16 %v2809
        %v2844 = vunpack.c.l.b16 %v2810
        %v2845 = vunpack.c.l.b16 %v2811
        %v2846 = vunpack.c.l.b16 %v2812
        %v2847 = vunpack.c.l.b16 %v2813
        %v2848 = vunpack.c.l.b16 %v2814
        %v2849 = vunpack.c.l.b16 %v2815
        %v2850 = vunpack.c.l.b16 %v2816
        %v2851 = vunpack.c.l.b16 %v2817
        %v2852 = vunpack.c.l.b16 %v2818
        %v2853 = vpack.c.b16 %v2838, %v2837
        %v2854 = vpack.c.b16 %v2840, %v2839
        %v2855 = vpack.c.b16 %v2842, %v2841
        %v2856 = vpack.c.b16 %v2844, %v2843
        %v2857 = vpack.c.b16 %v2846, %v2845
        %v2858 = vpack.c.b16 %v2848, %v2847
        %v2859 = vpack.c.b16 %v2850, %v2849
        %v2860 = vpack.c.b16 %v2852, %v2851
        %2869 = vmatprep.subr.bf16.mxu0 0
        %2870 = vmatpush1.bf16.msra.mxu0 %v2853
        %2871 = vmatprep.subr.bf16.mxu0 0
        %2872 = vmatpush1.bf16.msra.mxu0 %v2854
        %2873 = vmatprep.subr.bf16.mxu0 0
        %2874 = vmatpush1.bf16.msra.mxu0 %v2855
        %2875 = vmatprep.subr.bf16.mxu0 0
        %2876 = vmatpush1.bf16.msra.mxu0 %v2856
        %2877 = vmatprep.subr.bf16.mxu0 0
        %2878 = vmatpush1.bf16.msra.mxu0 %v2857
        %2879 = vmatprep.subr.bf16.mxu0 0
        %2880 = vmatpush1.bf16.msra.mxu0 %v2858
        %2881 = vmatprep.subr.bf16.mxu0 0
        %2882 = vmatpush1.bf16.msra.mxu0 %v2859
        %2883 = vmatprep.subr.bf16.mxu0 0
        %2884 = vmatpush1.bf16.msra.mxu0 %v2860
        %2885 = vmatprep.subr.bf16.mxu0 0
        %2886 = vmatpush1.bf16.msra.mxu0 0
        %2887 = vmatprep.subr.bf16.mxu0 0
        %2888 = vmatpush1.bf16.msra.mxu0 0
        %2889 = vmatprep.subr.bf16.mxu0 0
        %2890 = vmatpush1.bf16.msra.mxu0 0
        %2891 = vmatprep.subr.bf16.mxu0 0
        %2892 = vmatpush1.bf16.msra.mxu0 0
        %2893 = vmatprep.subr.bf16.mxu0 0
        %2894 = vmatpush1.bf16.msra.mxu0 0
        %2895 = vmatprep.subr.bf16.mxu0 0
        %2896 = vmatpush1.bf16.msra.mxu0 0
        %2897 = vmatprep.subr.bf16.mxu0 0
        %2898 = vmatpush1.bf16.msra.mxu0 0
        %2899 = vmatprep.subr.bf16.mxu0 0
        %2900 = vmatpush1.bf16.msra.mxu0 0
        %2901 = vmatprep.mubr.bf16.mxu0 0
        %2902 = vmatmul.mubr.bf16.gmra.mrb[0].mxu0 %v2819
        %v2903 = vpop.f32.mrb[0].mxu0
        %v2904 = vadd.f32 0.0, %v2903
        %v2905 = vpop.f32.mrb[0].mxu0
        %v2906 = vpop.f32.mrb[0].mxu0
        %v2907 = vadd.f32 0.0, %v2906
        %v2908 = vpop.f32.mrb[0].mxu0
        %2909 = vmatprep.mubr.bf16.mxu0 0
        %2910 = vmatmul.mubr.bf16.gmra.mrb[0].mxu0 %v2820
        %v2911 = vpop.f32.mrb[0].mxu0
        %v2912 = vadd.f32 0.0, %v2911
        %v2913 = vpop.f32.mrb[0].mxu0
        %v2914 = vpop.f32.mrb[0].mxu0
        %v2915 = vadd.f32 0.0, %v2914
        %v2916 = vpop.f32.mrb[0].mxu0
        %2917 = vdwg.mxu0
        %v2918 = vadd.f32 %v2625, %v2904
        %v2919 = vadd.f32 %v2626, %v2907
        %v2920 = vadd.f32 %v2627, %v2912
        %v2921 = vadd.f32 %v2628, %v2915
        %v2922 = vld [vmem:[%s14] sm:$0x1]
        %v2924 = vlaneseq
        %v2925 = vshrl.u32 %v2924, 7
        %v2926 = vsub.s32 0, %v2925
        %v2927 = vrot.slane %v2922, %v2926
        %v2929 = vadd.f32 %v2918, %v2927
        %v2930 = vadd.f32 %v2919, %v2927
        %v2931 = vadd.f32 %v2920, %v2927
        %v2932 = vadd.f32 %v2921, %v2927
        %s2933 = scalar_lea.vmem %s3, 1
        %v2934 = vld [vmem:[%s2933] sm:$0x1]
        %s2935 = scalar_lea.vmem %s4, 1
        %v2936 = vld [vmem:[%s2935] sm:$0x1]
        %v2937 = vsel %vm717, %v2929, 0.0
        %2938 = vadd.xlane.f32.xlu0 %v2937
        %v2939 = vpop.xlane.xlu0 %2938
        %v2940 = vsel %vm717, %v2930, 0.0
        %2941 = vadd.xlane.f32.xlu0 %v2940
        %v2942 = vpop.xlane.xlu0 %2941
        %v2943 = vsel %vm717, %v2931, 0.0
        %2944 = vadd.xlane.f32.xlu0 %v2943
        %v2945 = vpop.xlane.xlu0 %2944
        %v2946 = vsel %vm717, %v2932, 0.0
        %2947 = vadd.xlane.f32.xlu0 %v2946
        %v2948 = vpop.xlane.xlu0 %2947
        %v2949 = vmul.f32 %v2939, %v730
        %v2950 = vmul.f32 %v2942, %v730
        %v2951 = vmul.f32 %v2945, %v730
        %v2952 = vmul.f32 %v2948, %v730
        %v2953 = vsub.f32 %v2929, %v2949
        %v2954 = vsub.f32 %v2930, %v2950
        %v2955 = vsub.f32 %v2931, %v2951
        %v2956 = vsub.f32 %v2932, %v2952
        %v2957 = vmul.f32 %v2953, %v2953
        %v2958 = vmul.f32 %v2954, %v2954
        %v2959 = vmul.f32 %v2955, %v2955
        %v2960 = vmul.f32 %v2956, %v2956
        %v2961 = vsel %vm717, %v2957, 0.0
        %2962 = vadd.xlane.f32.xlu0 %v2961
        %v2963 = vpop.xlane.xlu0 %2962
        %v2964 = vsel %vm717, %v2958, 0.0
        %2965 = vadd.xlane.f32.xlu0 %v2964
        %v2966 = vpop.xlane.xlu0 %2965
        %v2967 = vsel %vm717, %v2959, 0.0
        %2968 = vadd.xlane.f32.xlu0 %v2967
        %v2969 = vpop.xlane.xlu0 %2968
        %v2970 = vsel %vm717, %v2960, 0.0
        %2971 = vadd.xlane.f32.xlu0 %v2970
        %v2972 = vpop.xlane.xlu0 %2971
        %v2973 = vmul.f32 %v2963, %v730
        %v2974 = vmul.f32 %v2966, %v730
        %v2975 = vmul.f32 %v2969, %v730
        %v2976 = vmul.f32 %v2972, %v730
        %v2977 = vadd.f32 %v2973, 1e-06
        %v2978 = vadd.f32 %v2974, 1e-06
        %v2979 = vadd.f32 %v2975, 1e-06
        %v2980 = vadd.f32 %v2976, 1e-06
        %v2981 = vrsqrt.pop %v2977
        %v2982 = vrsqrt.pop %v2978
        %v2983 = vrsqrt.pop %v2979
        %v2984 = vrsqrt.pop %v2980
        %v2985 = vmul.f32 %v2953, %v2981
        %v2986 = vmul.f32 %v2954, %v2982
        %v2987 = vmul.f32 %v2955, %v2983
        %v2988 = vmul.f32 %v2956, %v2984
        %v2990 = vlaneseq
        %v2991 = vshrl.u32 %v2990, 7
        %v2992 = vsub.s32 0, %v2991
        %v2993 = vrot.slane %v2934, %v2992
        %v2995 = vmul.f32 %v2985, %v2993
        %v2996 = vmul.f32 %v2986, %v2993
        %v2997 = vmul.f32 %v2987, %v2993
        %v2998 = vmul.f32 %v2988, %v2993
        %v3000 = vlaneseq
        %v3001 = vshrl.u32 %v3000, 7
        %v3002 = vsub.s32 0, %v3001
        %v3003 = vrot.slane %v2936, %v3002
        %v3005 = vadd.f32 %v2995, %v3003
        %v3006 = vadd.f32 %v2996, %v3003
        %v3007 = vadd.f32 %v2997, %v3003
        %v3008 = vadd.f32 %v2998, %v3003
        %v3009 = vpack.c.bf16 %v3006, %v3005
        %v3010 = vpack.c.bf16 %v3008, %v3007
        %s3011 = scalar_lea.vmem %s5, 192
        %v3012 = vld [vmem:[%s3011] sm:$0xf]
        %v3013 = vld [vmem:[%s3011 + $0x4] sm:$0xf]
        %v3014 = vld [vmem:[%s3011 + $0x8] sm:$0xf]
        %v3015 = vld [vmem:[%s3011 + $0xc] sm:$0xf]
        %s3016 = scalar_lea.vmem %s6, 12
        %v3017 = vld [vmem:[%s3016] sm:$0x1]
        %v3019 = vlaneseq
        %v3020 = vshrl.u32 %v3019, 7
        %v3021 = vsub.s32 0, %v3020
        %v3022 = vrot.slane %v3017, %v3021
        %v3028 = vunpack.c.l.b16 %v3012
        %v3029 = vunpack.c.l.b16 %v3013
        %v3030 = vunpack.c.l.b16 %v3014
        %v3031 = vunpack.c.l.b16 %v3015
        %v3032 = vpack.c.b16 %v3029, %v3028
        %v3033 = vpack.c.b16 %v3031, %v3030
        %v3037 = vsel %vm717, %v3009, 0
        %v3040 = vsel %vm717, %v3010, 0
        %3042 = vmatprep.subr.bf16.mxu0 0
        %3043 = vmatpush1.bf16.msra.mxu0 %v3032
        %3044 = vmatprep.subr.bf16.mxu0 0
        %3045 = vmatpush1.bf16.msra.mxu0 %v3033
        %3046 = vmatprep.subr.bf16.mxu0 0
        %3047 = vmatpush1.bf16.msra.mxu0 0
        %3048 = vmatprep.subr.bf16.mxu0 0
        %3049 = vmatpush1.bf16.msra.mxu0 0
        %3050 = vmatprep.subr.bf16.mxu0 0
        %3051 = vmatpush1.bf16.msra.mxu0 0
        %3052 = vmatprep.subr.bf16.mxu0 0
        %3053 = vmatpush1.bf16.msra.mxu0 0
        %3054 = vmatprep.subr.bf16.mxu0 0
        %3055 = vmatpush1.bf16.msra.mxu0 0
        %3056 = vmatprep.subr.bf16.mxu0 0
        %3057 = vmatpush1.bf16.msra.mxu0 0
        %3058 = vmatprep.subr.bf16.mxu0 0
        %3059 = vmatpush1.bf16.msra.mxu0 0
        %3060 = vmatprep.subr.bf16.mxu0 0
        %3061 = vmatpush1.bf16.msra.mxu0 0
        %3062 = vmatprep.subr.bf16.mxu0 0
        %3063 = vmatpush1.bf16.msra.mxu0 0
        %3064 = vmatprep.subr.bf16.mxu0 0
        %3065 = vmatpush1.bf16.msra.mxu0 0
        %3066 = vmatprep.subr.bf16.mxu0 0
        %3067 = vmatpush1.bf16.msra.mxu0 0
        %3068 = vmatprep.subr.bf16.mxu0 0
        %3069 = vmatpush1.bf16.msra.mxu0 0
        %3070 = vmatprep.subr.bf16.mxu0 0
        %3071 = vmatpush1.bf16.msra.mxu0 0
        %3072 = vmatprep.subr.bf16.mxu0 0
        %3073 = vmatpush1.bf16.msra.mxu0 0
        %3074 = vmatprep.mubr.bf16.mxu0 0
        %3075 = vmatmul.mubr.bf16.gmra.mrb[0].mxu0 %v3037
        %v3076 = vpop.f32.mrb[0].mxu0
        %v3077 = vadd.f32 %v3022, %v3076
        %v3078 = vpop.f32.mrb[0].mxu0
        %v3079 = vpop.f32.mrb[0].mxu0
        %v3080 = vadd.f32 %v3022, %v3079
        %v3081 = vpop.f32.mrb[0].mxu0
        %3082 = vmatprep.mubr.bf16.mxu0 0
        %3083 = vmatmul.mubr.bf16.gmra.mrb[0].mxu0 %v3040
        %v3084 = vpop.f32.mrb[0].mxu0
        %v3085 = vadd.f32 %v3022, %v3084
        %v3086 = vpop.f32.mrb[0].mxu0
        %v3087 = vpop.f32.mrb[0].mxu0
        %v3088 = vadd.f32 %v3022, %v3087
        %v3089 = vpop.f32.mrb[0].mxu0
        %3090 = vdwg.mxu0
        %s3091 = scalar_lea.vmem %s5, 208
        %v3092 = vld [vmem:[%s3091] sm:$0xf]
        %v3093 = vld [vmem:[%s3091 + $0x4] sm:$0xf]
        %v3094 = vld [vmem:[%s3091 + $0x8] sm:$0xf]
        %v3095 = vld [vmem:[%s3091 + $0xc] sm:$0xf]
        %s3096 = scalar_lea.vmem %s6, 13
        %v3097 = vld [vmem:[%s3096] sm:$0x1]
        %v3099 = vlaneseq
        %v3100 = vshrl.u32 %v3099, 7
        %v3101 = vsub.s32 0, %v3100
        %v3102 = vrot.slane %v3097, %v3101
        %v3108 = vunpack.c.l.b16 %v3092
        %v3109 = vunpack.c.l.b16 %v3093
        %v3110 = vunpack.c.l.b16 %v3094
        %v3111 = vunpack.c.l.b16 %v3095
        %v3112 = vpack.c.b16 %v3109, %v3108
        %v3113 = vpack.c.b16 %v3111, %v3110
        %3116 = vmatprep.subr.bf16.mxu0 0
        %3117 = vmatpush1.bf16.msra.mxu0 %v3112
        %3118 = vmatprep.subr.bf16.mxu0 0
        %3119 = vmatpush1.bf16.msra.mxu0 %v3113
        %3120 = vmatprep.subr.bf16.mxu0 0
        %3121 = vmatpush1.bf16.msra.mxu0 0
        %3122 = vmatprep.subr.bf16.mxu0 0
        %3123 = vmatpush1.bf16.msra.mxu0 0
        %3124 = vmatprep.subr.bf16.mxu0 0
        %3125 = vmatpush1.bf16.msra.mxu0 0
        %3126 = vmatprep.subr.bf16.mxu0 0
        %3127 = vmatpush1.bf16.msra.mxu0 0
        %3128 = vmatprep.subr.bf16.mxu0 0
        %3129 = vmatpush1.bf16.msra.mxu0 0
        %3130 = vmatprep.subr.bf16.mxu0 0
        %3131 = vmatpush1.bf16.msra.mxu0 0
        %3132 = vmatprep.subr.bf16.mxu0 0
        %3133 = vmatpush1.bf16.msra.mxu0 0
        %3134 = vmatprep.subr.bf16.mxu0 0
        %3135 = vmatpush1.bf16.msra.mxu0 0
        %3136 = vmatprep.subr.bf16.mxu0 0
        %3137 = vmatpush1.bf16.msra.mxu0 0
        %3138 = vmatprep.subr.bf16.mxu0 0
        %3139 = vmatpush1.bf16.msra.mxu0 0
        %3140 = vmatprep.subr.bf16.mxu0 0
        %3141 = vmatpush1.bf16.msra.mxu0 0
        %3142 = vmatprep.subr.bf16.mxu0 0
        %3143 = vmatpush1.bf16.msra.mxu0 0
        %3144 = vmatprep.subr.bf16.mxu0 0
        %3145 = vmatpush1.bf16.msra.mxu0 0
        %3146 = vmatprep.subr.bf16.mxu0 0
        %3147 = vmatpush1.bf16.msra.mxu0 0
        %3148 = vmatprep.mubr.bf16.mxu0 0
        %3149 = vmatmul.mubr.bf16.gmra.mrb[0].mxu0 %v3037
        %v3150 = vpop.f32.mrb[0].mxu0
        %v3151 = vadd.f32 %v3102, %v3150
        %v3152 = vpop.f32.mrb[0].mxu0
        %v3153 = vpop.f32.mrb[0].mxu0
        %v3154 = vadd.f32 %v3102, %v3153
        %v3155 = vpop.f32.mrb[0].mxu0
        %3156 = vmatprep.mubr.bf16.mxu0 0
        %3157 = vmatmul.mubr.bf16.gmra.mrb[0].mxu0 %v3040
        %v3158 = vpop.f32.mrb[0].mxu0
        %v3159 = vadd.f32 %v3102, %v3158
        %v3160 = vpop.f32.mrb[0].mxu0
        %v3161 = vpop.f32.mrb[0].mxu0
        %v3162 = vadd.f32 %v3102, %v3161
        %v3163 = vpop.f32.mrb[0].mxu0
        %3164 = vdwg.mxu0
        %s3165 = scalar_lea.vmem %s5, 224
        %v3166 = vld [vmem:[%s3165] sm:$0xf]
        %v3167 = vld [vmem:[%s3165 + $0x4] sm:$0xf]
        %v3168 = vld [vmem:[%s3165 + $0x8] sm:$0xf]
        %v3169 = vld [vmem:[%s3165 + $0xc] sm:$0xf]
        %s3170 = scalar_lea.vmem %s6, 14
        %v3171 = vld [vmem:[%s3170] sm:$0x1]
        %v3173 = vlaneseq
        %v3174 = vshrl.u32 %v3173, 7
        %v3175 = vsub.s32 0, %v3174
        %v3176 = vrot.slane %v3171, %v3175
        %v3182 = vunpack.c.l.b16 %v3166
        %v3183 = vunpack.c.l.b16 %v3167
        %v3184 = vunpack.c.l.b16 %v3168
        %v3185 = vunpack.c.l.b16 %v3169
        %v3186 = vpack.c.b16 %v3183, %v3182
        %v3187 = vpack.c.b16 %v3185, %v3184
        %3190 = vmatprep.subr.bf16.mxu0 0
        %3191 = vmatpush1.bf16.msra.mxu0 %v3186
        %3192 = vmatprep.subr.bf16.mxu0 0
        %3193 = vmatpush1.bf16.msra.mxu0 %v3187
        %3194 = vmatprep.subr.bf16.mxu0 0
        %3195 = vmatpush1.bf16.msra.mxu0 0
        %3196 = vmatprep.subr.bf16.mxu0 0
        %3197 = vmatpush1.bf16.msra.mxu0 0
        %3198 = vmatprep.subr.bf16.mxu0 0
        %3199 = vmatpush1.bf16.msra.mxu0 0
        %3200 = vmatprep.subr.bf16.mxu0 0
        %3201 = vmatpush1.bf16.msra.mxu0 0
        %3202 = vmatprep.subr.bf16.mxu0 0
        %3203 = vmatpush1.bf16.msra.mxu0 0
        %3204 = vmatprep.subr.bf16.mxu0 0
        %3205 = vmatpush1.bf16.msra.mxu0 0
        %3206 = vmatprep.subr.bf16.mxu0 0
        %3207 = vmatpush1.bf16.msra.mxu0 0
        %3208 = vmatprep.subr.bf16.mxu0 0
        %3209 = vmatpush1.bf16.msra.mxu0 0
        %3210 = vmatprep.subr.bf16.mxu0 0
        %3211 = vmatpush1.bf16.msra.mxu0 0
        %3212 = vmatprep.subr.bf16.mxu0 0
        %3213 = vmatpush1.bf16.msra.mxu0 0
        %3214 = vmatprep.subr.bf16.mxu0 0
        %3215 = vmatpush1.bf16.msra.mxu0 0
        %3216 = vmatprep.subr.bf16.mxu0 0
        %3217 = vmatpush1.bf16.msra.mxu0 0
        %3218 = vmatprep.subr.bf16.mxu0 0
        %3219 = vmatpush1.bf16.msra.mxu0 0
        %3220 = vmatprep.subr.bf16.mxu0 0
        %3221 = vmatpush1.bf16.msra.mxu0 0
        %3222 = vmatprep.mubr.bf16.mxu0 0
        %3223 = vmatmul.mubr.bf16.gmra.mrb[0].mxu0 %v3037
        %v3224 = vpop.f32.mrb[0].mxu0
        %v3225 = vadd.f32 %v3176, %v3224
        %v3226 = vpop.f32.mrb[0].mxu0
        %v3227 = vpop.f32.mrb[0].mxu0
        %v3228 = vadd.f32 %v3176, %v3227
        %v3229 = vpop.f32.mrb[0].mxu0
        %3230 = vmatprep.mubr.bf16.mxu0 0
        %3231 = vmatmul.mubr.bf16.gmra.mrb[0].mxu0 %v3040
        %v3232 = vpop.f32.mrb[0].mxu0
        %v3233 = vadd.f32 %v3176, %v3232
        %v3234 = vpop.f32.mrb[0].mxu0
        %v3235 = vpop.f32.mrb[0].mxu0
        %v3236 = vadd.f32 %v3176, %v3235
        %v3237 = vpop.f32.mrb[0].mxu0
        %3238 = vdwg.mxu0
        %v3239 = vpack.c.bf16 %v3080, %v3077
        %v3240 = vpack.c.bf16 %v3088, %v3085
        %v3241 = vpack.c.bf16 %v3154, %v3151
        %v3242 = vpack.c.bf16 %v3162, %v3159
        %v3243 = vpack.c.bf16 %v3228, %v3225
        %v3244 = vpack.c.bf16 %v3236, %v3233
        %v3246 = vsel %vm1025, %v3239, 0
        %v3249 = vsel %vm1025, %v3240, 0
        %v3252 = vsel %vm1025, %v3241, 0
        %v3255 = vsel %vm1025, %v3242, 0
        %3257 = vmatprep.subr.bf16.mxu0 0
        %3258 = vmatpush1.bf16.xpose.msra.mxu0 %v3252
        %3259 = vmatprep.subr.bf16.mxu0 0
        %3260 = vmatpush1.bf16.xpose.msra.mxu0 %v3255
        %3261 = vmatprep.subr.bf16.mxu0 0
        %3262 = vmatpush1.bf16.xpose.msra.mxu0 0
        %3263 = vmatprep.subr.bf16.mxu0 0
        %3264 = vmatpush1.bf16.xpose.msra.mxu0 0
        %3265 = vmatprep.subr.bf16.mxu0 0
        %3266 = vmatpush1.bf16.xpose.msra.mxu0 0
        %3267 = vmatprep.subr.bf16.mxu0 0
        %3268 = vmatpush1.bf16.xpose.msra.mxu0 0
        %3269 = vmatprep.subr.bf16.mxu0 0
        %3270 = vmatpush1.bf16.xpose.msra.mxu0 0
        %3271 = vmatprep.subr.bf16.mxu0 0
        %3272 = vmatpush1.bf16.xpose.msra.mxu0 0
        %3273 = vmatprep.subr.bf16.mxu0 0
        %3274 = vmatpush1.bf16.xpose.msra.mxu0 0
        %3275 = vmatprep.subr.bf16.mxu0 0
        %3276 = vmatpush1.bf16.xpose.msra.mxu0 0
        %3277 = vmatprep.subr.bf16.mxu0 0
        %3278 = vmatpush1.bf16.xpose.msra.mxu0 0
        %3279 = vmatprep.subr.bf16.mxu0 0
        %3280 = vmatpush1.bf16.xpose.msra.mxu0 0
        %3281 = vmatprep.subr.bf16.mxu0 0
        %3282 = vmatpush1.bf16.xpose.msra.mxu0 0
        %3283 = vmatprep.subr.bf16.mxu0 0
        %3284 = vmatpush1.bf16.xpose.msra.mxu0 0
        %3285 = vmatprep.subr.bf16.mxu0 0
        %3286 = vmatpush1.bf16.xpose.msra.mxu0 0
        %3287 = vmatprep.subr.bf16.mxu0 0
        %3288 = vmatpush1.bf16.xpose.msra.mxu0 0
        %3289 = vmatprep.mubr.bf16.mxu0 0
        %3290 = vmatmul.mubr.bf16.gmra.mrb[0].mxu0 %v3246
        %v3291 = vpop.f32.mrb[0].mxu0
        %v3292 = vadd.f32 %v714, %v3291
        %v3293 = vpop.f32.mrb[0].mxu0
        %v3294 = vpop.f32.mrb[0].mxu0
        %v3295 = vadd.f32 %v714, %v3294
        %v3296 = vpop.f32.mrb[0].mxu0
        %3297 = vmatprep.mubr.bf16.mxu0 0
        %3298 = vmatmul.mubr.bf16.gmra.mrb[0].mxu0 %v3249
        %v3299 = vpop.f32.mrb[0].mxu0
        %v3300 = vadd.f32 %v714, %v3299
        %v3301 = vpop.f32.mrb[0].mxu0
        %v3302 = vpop.f32.mrb[0].mxu0
        %v3303 = vadd.f32 %v714, %v3302
        %v3304 = vpop.f32.mrb[0].mxu0
        %3305 = vdwg.mxu0
        %v3306 = vsel %vm717, %v3292, -inf
        %3307 = vmax.xlane.f32.xlu0 %v3306
        %v3308 = vpop.xlane.xlu0 %3307
        %v3309 = vsel %vm717, %v3295, -inf
        %3310 = vmax.xlane.f32.xlu0 %v3309
        %v3311 = vpop.xlane.xlu0 %3310
        %v3312 = vsel %vm717, %v3300, -inf
        %3313 = vmax.xlane.f32.xlu0 %v3312
        %v3314 = vpop.xlane.xlu0 %3313
        %v3315 = vsel %vm717, %v3303, -inf
        %3316 = vmax.xlane.f32.xlu0 %v3315
        %v3317 = vpop.xlane.xlu0 %3316
        %v3318 = vsub.f32 %v3292, %v3308
        %v3319 = vsub.f32 %v3295, %v3311
        %v3320 = vsub.f32 %v3300, %v3314
        %v3321 = vsub.f32 %v3303, %v3317
        %v3322 = vmul.f32 %v3318, 1.442695
        %v3323 = vpow.pop %v3322
        %v3324 = vmul.f32 %v3319, 1.442695
        %v3325 = vpow.pop %v3324
        %v3326 = vmul.f32 %v3320, 1.442695
        %v3327 = vpow.pop %v3326
        %v3328 = vmul.f32 %v3321, 1.442695
        %v3329 = vpow.pop %v3328
        %v3330 = vsel %vm717, %v3323, 0.0
        %3331 = vadd.xlane.f32.xlu0 %v3330
        %v3332 = vpop.xlane.xlu0 %3331
        %v3333 = vsel %vm717, %v3325, 0.0
        %3334 = vadd.xlane.f32.xlu0 %v3333
        %v3335 = vpop.xlane.xlu0 %3334
        %v3336 = vsel %vm717, %v3327, 0.0
        %3337 = vadd.xlane.f32.xlu0 %v3336
        %v3338 = vpop.xlane.xlu0 %3337
        %v3339 = vsel %vm717, %v3329, 0.0
        %3340 = vadd.xlane.f32.xlu0 %v3339
        %v3341 = vpop.xlane.xlu0 %3340
        %v3342 = vrcp.pop %v3332
        %v3343 = vrcp.pop %v3335
        %v3344 = vrcp.pop %v3338
        %v3345 = vrcp.pop %v3341
        %v3346 = vmul.f32 %v3323, %v3342
        %v3347 = vmul.f32 %v3325, %v3343
        %v3348 = vmul.f32 %v3327, %v3344
        %v3349 = vmul.f32 %v3329, %v3345
        %v3350 = vpack.c.bf16 %v3347, %v3346
        %v3351 = vpack.c.bf16 %v3349, %v3348
        %v3353 = vsel %vm717, %v3350, 0
        %v3356 = vsel %vm717, %v3351, 0
        %3358 = vmatprep.subr.bf16.mxu0 0
        %3359 = vmatpush1.bf16.msra.mxu0 %v3243
        %3360 = vmatprep.subr.bf16.mxu0 0
        %3361 = vmatpush1.bf16.msra.mxu0 %v3244
        %3362 = vmatprep.subr.bf16.mxu0 0
        %3363 = vmatpush1.bf16.msra.mxu0 0
        %3364 = vmatprep.subr.bf16.mxu0 0
        %3365 = vmatpush1.bf16.msra.mxu0 0
        %3366 = vmatprep.subr.bf16.mxu0 0
        %3367 = vmatpush1.bf16.msra.mxu0 0
        %3368 = vmatprep.subr.bf16.mxu0 0
        %3369 = vmatpush1.bf16.msra.mxu0 0
        %3370 = vmatprep.subr.bf16.mxu0 0
        %3371 = vmatpush1.bf16.msra.mxu0 0
        %3372 = vmatprep.subr.bf16.mxu0 0
        %3373 = vmatpush1.bf16.msra.mxu0 0
        %3374 = vmatprep.subr.bf16.mxu0 0
        %3375 = vmatpush1.bf16.msra.mxu0 0
        %3376 = vmatprep.subr.bf16.mxu0 0
        %3377 = vmatpush1.bf16.msra.mxu0 0
        %3378 = vmatprep.subr.bf16.mxu0 0
        %3379 = vmatpush1.bf16.msra.mxu0 0
        %3380 = vmatprep.subr.bf16.mxu0 0
        %3381 = vmatpush1.bf16.msra.mxu0 0
        %3382 = vmatprep.subr.bf16.mxu0 0
        %3383 = vmatpush1.bf16.msra.mxu0 0
        %3384 = vmatprep.subr.bf16.mxu0 0
        %3385 = vmatpush1.bf16.msra.mxu0 0
        %3386 = vmatprep.subr.bf16.mxu0 0
        %3387 = vmatpush1.bf16.msra.mxu0 0
        %3388 = vmatprep.subr.bf16.mxu0 0
        %3389 = vmatpush1.bf16.msra.mxu0 0
        %3390 = vmatprep.mubr.bf16.mxu0 0
        %3391 = vmatmul.mubr.bf16.gmra.mrb[0].mxu0 %v3353
        %v3392 = vpop.f32.mrb[0].mxu0
        %v3393 = vadd.f32 0.0, %v3392
        %v3394 = vpop.f32.mrb[0].mxu0
        %v3395 = vpop.f32.mrb[0].mxu0
        %v3396 = vadd.f32 0.0, %v3395
        %v3397 = vpop.f32.mrb[0].mxu0
        %3398 = vmatprep.mubr.bf16.mxu0 0
        %3399 = vmatmul.mubr.bf16.gmra.mrb[0].mxu0 %v3356
        %v3400 = vpop.f32.mrb[0].mxu0
        %v3401 = vadd.f32 0.0, %v3400
        %v3402 = vpop.f32.mrb[0].mxu0
        %v3403 = vpop.f32.mrb[0].mxu0
        %v3404 = vadd.f32 0.0, %v3403
        %v3405 = vpop.f32.mrb[0].mxu0
        %3406 = vdwg.mxu0
        %v3407 = vpack.c.bf16 %v3396, %v3393
        %v3408 = vpack.c.bf16 %v3404, %v3401
        %s3409 = scalar_lea.vmem %s7, 16
        %v3410 = vld [vmem:[%s3409] sm:$0xf]
        %s3411 = scalar_lea.vmem %s5, 240
        %v3412 = vld [vmem:[%s3411] sm:$0xf]
        %v3413 = vld [vmem:[%s3411 + $0x4] sm:$0xf]
        %v3414 = vld [vmem:[%s3411 + $0x8] sm:$0xf]
        %v3415 = vld [vmem:[%s3411 + $0xc] sm:$0xf]
        %s3416 = scalar_lea.vmem %s6, 15
        %v3417 = vld [vmem:[%s3416] sm:$0x1]
        %v3419 = vlaneseq
        %v3420 = vshrl.u32 %v3419, 7
        %v3421 = vsub.s32 0, %v3420
        %v3422 = vrot.slane %v3417, %v3421
        %v3428 = vunpack.c.l.b16 %v3412
        %v3429 = vunpack.c.l.b16 %v3413
        %v3430 = vunpack.c.l.b16 %v3414
        %v3431 = vunpack.c.l.b16 %v3415
        %v3432 = vpack.c.b16 %v3429, %v3428
        %v3433 = vpack.c.b16 %v3431, %v3430
        %3436 = vmatprep.subr.bf16.mxu0 0
        %3437 = vmatpush1.bf16.msra.mxu0 %v3432
        %3438 = vmatprep.subr.bf16.mxu0 0
        %3439 = vmatpush1.bf16.msra.mxu0 %v3433
        %3440 = vmatprep.subr.bf16.mxu0 0
        %3441 = vmatpush1.bf16.msra.mxu0 0
        %3442 = vmatprep.subr.bf16.mxu0 0
        %3443 = vmatpush1.bf16.msra.mxu0 0
        %3444 = vmatprep.subr.bf16.mxu0 0
        %3445 = vmatpush1.bf16.msra.mxu0 0
        %3446 = vmatprep.subr.bf16.mxu0 0
        %3447 = vmatpush1.bf16.msra.mxu0 0
        %3448 = vmatprep.subr.bf16.mxu0 0
        %3449 = vmatpush1.bf16.msra.mxu0 0
        %3450 = vmatprep.subr.bf16.mxu0 0
        %3451 = vmatpush1.bf16.msra.mxu0 0
        %3452 = vmatprep.subr.bf16.mxu0 0
        %3453 = vmatpush1.bf16.msra.mxu0 0
        %3454 = vmatprep.subr.bf16.mxu0 0
        %3455 = vmatpush1.bf16.msra.mxu0 0
        %3456 = vmatprep.subr.bf16.mxu0 0
        %3457 = vmatpush1.bf16.msra.mxu0 0
        %3458 = vmatprep.subr.bf16.mxu0 0
        %3459 = vmatpush1.bf16.msra.mxu0 0
        %3460 = vmatprep.subr.bf16.mxu0 0
        %3461 = vmatpush1.bf16.msra.mxu0 0
        %3462 = vmatprep.subr.bf16.mxu0 0
        %3463 = vmatpush1.bf16.msra.mxu0 0
        %3464 = vmatprep.subr.bf16.mxu0 0
        %3465 = vmatpush1.bf16.msra.mxu0 0
        %3466 = vmatprep.subr.bf16.mxu0 0
        %3467 = vmatpush1.bf16.msra.mxu0 0
        %3468 = vmatprep.mubr.bf16.mxu0 0
        %3469 = vmatmul.mubr.bf16.gmra.mrb[0].mxu0 %v3037
        %v3470 = vpop.f32.mrb[0].mxu0
        %v3471 = vadd.f32 %v3422, %v3470
        %v3472 = vpop.f32.mrb[0].mxu0
        %v3473 = vpop.f32.mrb[0].mxu0
        %v3474 = vadd.f32 %v3422, %v3473
        %v3475 = vpop.f32.mrb[0].mxu0
        %3476 = vmatprep.mubr.bf16.mxu0 0
        %3477 = vmatmul.mubr.bf16.gmra.mrb[0].mxu0 %v3040
        %v3478 = vpop.f32.mrb[0].mxu0
        %v3479 = vadd.f32 %v3422, %v3478
        %v3480 = vpop.f32.mrb[0].mxu0
        %v3481 = vpop.f32.mrb[0].mxu0
        %v3482 = vadd.f32 %v3422, %v3481
        %v3483 = vpop.f32.mrb[0].mxu0
        %3484 = vdwg.mxu0
        %s3485 = scalar_lea.vmem %s5, 256
        %v3486 = vld [vmem:[%s3485] sm:$0xf]
        %v3487 = vld [vmem:[%s3485 + $0x4] sm:$0xf]
        %v3488 = vld [vmem:[%s3485 + $0x8] sm:$0xf]
        %v3489 = vld [vmem:[%s3485 + $0xc] sm:$0xf]
        %s3490 = scalar_lea.vmem %s6, 16
        %v3491 = vld [vmem:[%s3490] sm:$0x1]
        %v3493 = vlaneseq
        %v3494 = vshrl.u32 %v3493, 7
        %v3495 = vsub.s32 0, %v3494
        %v3496 = vrot.slane %v3491, %v3495
        %v3502 = vunpack.c.l.b16 %v3486
        %v3503 = vunpack.c.l.b16 %v3487
        %v3504 = vunpack.c.l.b16 %v3488
        %v3505 = vunpack.c.l.b16 %v3489
        %v3506 = vpack.c.b16 %v3503, %v3502
        %v3507 = vpack.c.b16 %v3505, %v3504
        %3510 = vmatprep.subr.bf16.mxu0 0
        %3511 = vmatpush1.bf16.msra.mxu0 %v3506
        %3512 = vmatprep.subr.bf16.mxu0 0
        %3513 = vmatpush1.bf16.msra.mxu0 %v3507
        %3514 = vmatprep.subr.bf16.mxu0 0
        %3515 = vmatpush1.bf16.msra.mxu0 0
        %3516 = vmatprep.subr.bf16.mxu0 0
        %3517 = vmatpush1.bf16.msra.mxu0 0
        %3518 = vmatprep.subr.bf16.mxu0 0
        %3519 = vmatpush1.bf16.msra.mxu0 0
        %3520 = vmatprep.subr.bf16.mxu0 0
        %3521 = vmatpush1.bf16.msra.mxu0 0
        %3522 = vmatprep.subr.bf16.mxu0 0
        %3523 = vmatpush1.bf16.msra.mxu0 0
        %3524 = vmatprep.subr.bf16.mxu0 0
        %3525 = vmatpush1.bf16.msra.mxu0 0
        %3526 = vmatprep.subr.bf16.mxu0 0
        %3527 = vmatpush1.bf16.msra.mxu0 0
        %3528 = vmatprep.subr.bf16.mxu0 0
        %3529 = vmatpush1.bf16.msra.mxu0 0
        %3530 = vmatprep.subr.bf16.mxu0 0
        %3531 = vmatpush1.bf16.msra.mxu0 0
        %3532 = vmatprep.subr.bf16.mxu0 0
        %3533 = vmatpush1.bf16.msra.mxu0 0
        %3534 = vmatprep.subr.bf16.mxu0 0
        %3535 = vmatpush1.bf16.msra.mxu0 0
        %3536 = vmatprep.subr.bf16.mxu0 0
        %3537 = vmatpush1.bf16.msra.mxu0 0
        %3538 = vmatprep.subr.bf16.mxu0 0
        %3539 = vmatpush1.bf16.msra.mxu0 0
        %3540 = vmatprep.subr.bf16.mxu0 0
        %3541 = vmatpush1.bf16.msra.mxu0 0
        %3542 = vmatprep.mubr.bf16.mxu0 0
        %3543 = vmatmul.mubr.bf16.gmra.mrb[0].mxu0 %v3037
        %v3544 = vpop.f32.mrb[0].mxu0
        %v3545 = vadd.f32 %v3496, %v3544
        %v3546 = vpop.f32.mrb[0].mxu0
        %v3547 = vpop.f32.mrb[0].mxu0
        %v3548 = vadd.f32 %v3496, %v3547
        %v3549 = vpop.f32.mrb[0].mxu0
        %3550 = vmatprep.mubr.bf16.mxu0 0
        %3551 = vmatmul.mubr.bf16.gmra.mrb[0].mxu0 %v3040
        %v3552 = vpop.f32.mrb[0].mxu0
        %v3553 = vadd.f32 %v3496, %v3552
        %v3554 = vpop.f32.mrb[0].mxu0
        %v3555 = vpop.f32.mrb[0].mxu0
        %v3556 = vadd.f32 %v3496, %v3555
        %v3557 = vpop.f32.mrb[0].mxu0
        %3558 = vdwg.mxu0
        %s3559 = scalar_lea.vmem %s5, 272
        %v3560 = vld [vmem:[%s3559] sm:$0xf]
        %v3561 = vld [vmem:[%s3559 + $0x4] sm:$0xf]
        %v3562 = vld [vmem:[%s3559 + $0x8] sm:$0xf]
        %v3563 = vld [vmem:[%s3559 + $0xc] sm:$0xf]
        %s3564 = scalar_lea.vmem %s6, 17
        %v3565 = vld [vmem:[%s3564] sm:$0x1]
        %v3567 = vlaneseq
        %v3568 = vshrl.u32 %v3567, 7
        %v3569 = vsub.s32 0, %v3568
        %v3570 = vrot.slane %v3565, %v3569
        %v3576 = vunpack.c.l.b16 %v3560
        %v3577 = vunpack.c.l.b16 %v3561
        %v3578 = vunpack.c.l.b16 %v3562
        %v3579 = vunpack.c.l.b16 %v3563
        %v3580 = vpack.c.b16 %v3577, %v3576
        %v3581 = vpack.c.b16 %v3579, %v3578
        %3584 = vmatprep.subr.bf16.mxu0 0
        %3585 = vmatpush1.bf16.msra.mxu0 %v3580
        %3586 = vmatprep.subr.bf16.mxu0 0
        %3587 = vmatpush1.bf16.msra.mxu0 %v3581
        %3588 = vmatprep.subr.bf16.mxu0 0
        %3589 = vmatpush1.bf16.msra.mxu0 0
        %3590 = vmatprep.subr.bf16.mxu0 0
        %3591 = vmatpush1.bf16.msra.mxu0 0
        %3592 = vmatprep.subr.bf16.mxu0 0
        %3593 = vmatpush1.bf16.msra.mxu0 0
        %3594 = vmatprep.subr.bf16.mxu0 0
        %3595 = vmatpush1.bf16.msra.mxu0 0
        %3596 = vmatprep.subr.bf16.mxu0 0
        %3597 = vmatpush1.bf16.msra.mxu0 0
        %3598 = vmatprep.subr.bf16.mxu0 0
        %3599 = vmatpush1.bf16.msra.mxu0 0
        %3600 = vmatprep.subr.bf16.mxu0 0
        %3601 = vmatpush1.bf16.msra.mxu0 0
        %3602 = vmatprep.subr.bf16.mxu0 0
        %3603 = vmatpush1.bf16.msra.mxu0 0
        %3604 = vmatprep.subr.bf16.mxu0 0
        %3605 = vmatpush1.bf16.msra.mxu0 0
        %3606 = vmatprep.subr.bf16.mxu0 0
        %3607 = vmatpush1.bf16.msra.mxu0 0
        %3608 = vmatprep.subr.bf16.mxu0 0
        %3609 = vmatpush1.bf16.msra.mxu0 0
        %3610 = vmatprep.subr.bf16.mxu0 0
        %3611 = vmatpush1.bf16.msra.mxu0 0
        %3612 = vmatprep.subr.bf16.mxu0 0
        %3613 = vmatpush1.bf16.msra.mxu0 0
        %3614 = vmatprep.subr.bf16.mxu0 0
        %3615 = vmatpush1.bf16.msra.mxu0 0
        %3616 = vmatprep.mubr.bf16.mxu0 0
        %3617 = vmatmul.mubr.bf16.gmra.mrb[0].mxu0 %v3037
        %v3618 = vpop.f32.mrb[0].mxu0
        %v3619 = vadd.f32 %v3570, %v3618
        %v3620 = vpop.f32.mrb[0].mxu0
        %v3621 = vpop.f32.mrb[0].mxu0
        %v3622 = vadd.f32 %v3570, %v3621
        %v3623 = vpop.f32.mrb[0].mxu0
        %3624 = vmatprep.mubr.bf16.mxu0 0
        %3625 = vmatmul.mubr.bf16.gmra.mrb[0].mxu0 %v3040
        %v3626 = vpop.f32.mrb[0].mxu0
        %v3627 = vadd.f32 %v3570, %v3626
        %v3628 = vpop.f32.mrb[0].mxu0
        %v3629 = vpop.f32.mrb[0].mxu0
        %v3630 = vadd.f32 %v3570, %v3629
        %v3631 = vpop.f32.mrb[0].mxu0
        %3632 = vdwg.mxu0
        %v3633 = vpack.c.bf16 %v3474, %v3471
        %v3634 = vpack.c.bf16 %v3482, %v3479
        %v3635 = vpack.c.bf16 %v3548, %v3545
        %v3636 = vpack.c.bf16 %v3556, %v3553
        %v3637 = vpack.c.bf16 %v3622, %v3619
        %v3638 = vpack.c.bf16 %v3630, %v3627
        %v3640 = vsel %vm1025, %v3633, 0
        %v3643 = vsel %vm1025, %v3634, 0
        %v3646 = vsel %vm1025, %v3635, 0
        %v3649 = vsel %vm1025, %v3636, 0
        %3651 = vmatprep.subr.bf16.mxu0 0
        %3652 = vmatpush1.bf16.xpose.msra.mxu0 %v3646
        %3653 = vmatprep.subr.bf16.mxu0 0
        %3654 = vmatpush1.bf16.xpose.msra.mxu0 %v3649
        %3655 = vmatprep.subr.bf16.mxu0 0
        %3656 = vmatpush1.bf16.xpose.msra.mxu0 0
        %3657 = vmatprep.subr.bf16.mxu0 0
        %3658 = vmatpush1.bf16.xpose.msra.mxu0 0
        %3659 = vmatprep.subr.bf16.mxu0 0
        %3660 = vmatpush1.bf16.xpose.msra.mxu0 0
        %3661 = vmatprep.subr.bf16.mxu0 0
        %3662 = vmatpush1.bf16.xpose.msra.mxu0 0
        %3663 = vmatprep.subr.bf16.mxu0 0
        %3664 = vmatpush1.bf16.xpose.msra.mxu0 0
        %3665 = vmatprep.subr.bf16.mxu0 0
        %3666 = vmatpush1.bf16.xpose.msra.mxu0 0
        %3667 = vmatprep.subr.bf16.mxu0 0
        %3668 = vmatpush1.bf16.xpose.msra.mxu0 0
        %3669 = vmatprep.subr.bf16.mxu0 0
        %3670 = vmatpush1.bf16.xpose.msra.mxu0 0
        %3671 = vmatprep.subr.bf16.mxu0 0
        %3672 = vmatpush1.bf16.xpose.msra.mxu0 0
        %3673 = vmatprep.subr.bf16.mxu0 0
        %3674 = vmatpush1.bf16.xpose.msra.mxu0 0
        %3675 = vmatprep.subr.bf16.mxu0 0
        %3676 = vmatpush1.bf16.xpose.msra.mxu0 0
        %3677 = vmatprep.subr.bf16.mxu0 0
        %3678 = vmatpush1.bf16.xpose.msra.mxu0 0
        %3679 = vmatprep.subr.bf16.mxu0 0
        %3680 = vmatpush1.bf16.xpose.msra.mxu0 0
        %3681 = vmatprep.subr.bf16.mxu0 0
        %3682 = vmatpush1.bf16.xpose.msra.mxu0 0
        %3683 = vmatprep.mubr.bf16.mxu0 0
        %3684 = vmatmul.mubr.bf16.gmra.mrb[0].mxu0 %v3640
        %v3685 = vpop.f32.mrb[0].mxu0
        %v3686 = vadd.f32 %v714, %v3685
        %v3687 = vpop.f32.mrb[0].mxu0
        %v3688 = vpop.f32.mrb[0].mxu0
        %v3689 = vadd.f32 %v714, %v3688
        %v3690 = vpop.f32.mrb[0].mxu0
        %3691 = vmatprep.mubr.bf16.mxu0 0
        %3692 = vmatmul.mubr.bf16.gmra.mrb[0].mxu0 %v3643
        %v3693 = vpop.f32.mrb[0].mxu0
        %v3694 = vadd.f32 %v714, %v3693
        %v3695 = vpop.f32.mrb[0].mxu0
        %v3696 = vpop.f32.mrb[0].mxu0
        %v3697 = vadd.f32 %v714, %v3696
        %v3698 = vpop.f32.mrb[0].mxu0
        %3699 = vdwg.mxu0
        %v3700 = vsel %vm717, %v3686, -inf
        %3701 = vmax.xlane.f32.xlu0 %v3700
        %v3702 = vpop.xlane.xlu0 %3701
        %v3703 = vsel %vm717, %v3689, -inf
        %3704 = vmax.xlane.f32.xlu0 %v3703
        %v3705 = vpop.xlane.xlu0 %3704
        %v3706 = vsel %vm717, %v3694, -inf
        %3707 = vmax.xlane.f32.xlu0 %v3706
        %v3708 = vpop.xlane.xlu0 %3707
        %v3709 = vsel %vm717, %v3697, -inf
        %3710 = vmax.xlane.f32.xlu0 %v3709
        %v3711 = vpop.xlane.xlu0 %3710
        %v3712 = vsub.f32 %v3686, %v3702
        %v3713 = vsub.f32 %v3689, %v3705
        %v3714 = vsub.f32 %v3694, %v3708
        %v3715 = vsub.f32 %v3697, %v3711
        %v3716 = vmul.f32 %v3712, 1.442695
        %v3717 = vpow.pop %v3716
        %v3718 = vmul.f32 %v3713, 1.442695
        %v3719 = vpow.pop %v3718
        %v3720 = vmul.f32 %v3714, 1.442695
        %v3721 = vpow.pop %v3720
        %v3722 = vmul.f32 %v3715, 1.442695
        %v3723 = vpow.pop %v3722
        %v3724 = vsel %vm717, %v3717, 0.0
        %3725 = vadd.xlane.f32.xlu0 %v3724
        %v3726 = vpop.xlane.xlu0 %3725
        %v3727 = vsel %vm717, %v3719, 0.0
        %3728 = vadd.xlane.f32.xlu0 %v3727
        %v3729 = vpop.xlane.xlu0 %3728
        %v3730 = vsel %vm717, %v3721, 0.0
        %3731 = vadd.xlane.f32.xlu0 %v3730
        %v3732 = vpop.xlane.xlu0 %3731
        %v3733 = vsel %vm717, %v3723, 0.0
        %3734 = vadd.xlane.f32.xlu0 %v3733
        %v3735 = vpop.xlane.xlu0 %3734
        %v3736 = vrcp.pop %v3726
        %v3737 = vrcp.pop %v3729
        %v3738 = vrcp.pop %v3732
        %v3739 = vrcp.pop %v3735
        %v3740 = vmul.f32 %v3717, %v3736
        %v3741 = vmul.f32 %v3719, %v3737
        %v3742 = vmul.f32 %v3721, %v3738
        %v3743 = vmul.f32 %v3723, %v3739
        %v3744 = vpack.c.bf16 %v3741, %v3740
        %v3745 = vpack.c.bf16 %v3743, %v3742
        %v3747 = vsel %vm717, %v3744, 0
        %v3750 = vsel %vm717, %v3745, 0
        %3752 = vmatprep.subr.bf16.mxu0 0
        %3753 = vmatpush1.bf16.msra.mxu0 %v3637
        %3754 = vmatprep.subr.bf16.mxu0 0
        %3755 = vmatpush1.bf16.msra.mxu0 %v3638
        %3756 = vmatprep.subr.bf16.mxu0 0
        %3757 = vmatpush1.bf16.msra.mxu0 0
        %3758 = vmatprep.subr.bf16.mxu0 0
        %3759 = vmatpush1.bf16.msra.mxu0 0
        %3760 = vmatprep.subr.bf16.mxu0 0
        %3761 = vmatpush1.bf16.msra.mxu0 0
        %3762 = vmatprep.subr.bf16.mxu0 0
        %3763 = vmatpush1.bf16.msra.mxu0 0
        %3764 = vmatprep.subr.bf16.mxu0 0
        %3765 = vmatpush1.bf16.msra.mxu0 0
        %3766 = vmatprep.subr.bf16.mxu0 0
        %3767 = vmatpush1.bf16.msra.mxu0 0
        %3768 = vmatprep.subr.bf16.mxu0 0
        %3769 = vmatpush1.bf16.msra.mxu0 0
        %3770 = vmatprep.subr.bf16.mxu0 0
        %3771 = vmatpush1.bf16.msra.mxu0 0
        %3772 = vmatprep.subr.bf16.mxu0 0
        %3773 = vmatpush1.bf16.msra.mxu0 0
        %3774 = vmatprep.subr.bf16.mxu0 0
        %3775 = vmatpush1.bf16.msra.mxu0 0
        %3776 = vmatprep.subr.bf16.mxu0 0
        %3777 = vmatpush1.bf16.msra.mxu0 0
        %3778 = vmatprep.subr.bf16.mxu0 0
        %3779 = vmatpush1.bf16.msra.mxu0 0
        %3780 = vmatprep.subr.bf16.mxu0 0
        %3781 = vmatpush1.bf16.msra.mxu0 0
        %3782 = vmatprep.subr.bf16.mxu0 0
        %3783 = vmatpush1.bf16.msra.mxu0 0
        %3784 = vmatprep.mubr.bf16.mxu0 0
        %3785 = vmatmul.mubr.bf16.gmra.mrb[0].mxu0 %v3747
        %v3786 = vpop.f32.mrb[0].mxu0
        %v3787 = vadd.f32 0.0, %v3786
        %v3788 = vpop.f32.mrb[0].mxu0
        %v3789 = vpop.f32.mrb[0].mxu0
        %v3790 = vadd.f32 0.0, %v3789
        %v3791 = vpop.f32.mrb[0].mxu0
        %3792 = vmatprep.mubr.bf16.mxu0 0
        %3793 = vmatmul.mubr.bf16.gmra.mrb[0].mxu0 %v3750
        %v3794 = vpop.f32.mrb[0].mxu0
        %v3795 = vadd.f32 0.0, %v3794
        %v3796 = vpop.f32.mrb[0].mxu0
        %v3797 = vpop.f32.mrb[0].mxu0
        %v3798 = vadd.f32 0.0, %v3797
        %v3799 = vpop.f32.mrb[0].mxu0
        %3800 = vdwg.mxu0
        %v3801 = vpack.c.bf16 %v3790, %v3787
        %v3802 = vpack.c.bf16 %v3798, %v3795
        %s3803 = scalar_lea.vmem %s7, 20
        %v3804 = vld [vmem:[%s3803] sm:$0xf]
        %v3806 = vsel %vm1025, %v3801, 0
        %v3809 = vsel %vm1025, %v3802, 0
        %v3812 = vsel %vm1591, %v3804, 0
        %3814 = vmatprep.subr.bf16.mxu0 0
        %3815 = vmatpush1.bf16.msra.mxu0 %v3812
        %3816 = vmatprep.subr.bf16.mxu0 0
        %3817 = vmatpush1.bf16.msra.mxu0 0
        %3818 = vmatprep.subr.bf16.mxu0 0
        %3819 = vmatpush1.bf16.msra.mxu0 0
        %3820 = vmatprep.subr.bf16.mxu0 0
        %3821 = vmatpush1.bf16.msra.mxu0 0
        %3822 = vmatprep.subr.bf16.mxu0 0
        %3823 = vmatpush1.bf16.msra.mxu0 0
        %3824 = vmatprep.subr.bf16.mxu0 0
        %3825 = vmatpush1.bf16.msra.mxu0 0
        %3826 = vmatprep.subr.bf16.mxu0 0
        %3827 = vmatpush1.bf16.msra.mxu0 0
        %3828 = vmatprep.subr.bf16.mxu0 0
        %3829 = vmatpush1.bf16.msra.mxu0 0
        %3830 = vmatprep.subr.bf16.mxu0 0
        %3831 = vmatpush1.bf16.msra.mxu0 0
        %3832 = vmatprep.subr.bf16.mxu0 0
        %3833 = vmatpush1.bf16.msra.mxu0 0
        %3834 = vmatprep.subr.bf16.mxu0 0
        %3835 = vmatpush1.bf16.msra.mxu0 0
        %3836 = vmatprep.subr.bf16.mxu0 0
        %3837 = vmatpush1.bf16.msra.mxu0 0
        %3838 = vmatprep.subr.bf16.mxu0 0
        %3839 = vmatpush1.bf16.msra.mxu0 0
        %3840 = vmatprep.subr.bf16.mxu0 0
        %3841 = vmatpush1.bf16.msra.mxu0 0
        %3842 = vmatprep.subr.bf16.mxu0 0
        %3843 = vmatpush1.bf16.msra.mxu0 0
        %3844 = vmatprep.subr.bf16.mxu0 0
        %3845 = vmatpush1.bf16.msra.mxu0 0
        %3846 = vmatprep.mubr.bf16.mxu0 0
        %3847 = vmatmul.mubr.bf16.gmra.mrb[0].mxu0 %v3806
        %v3848 = vpop.f32.mrb[0].mxu0
        %v3849 = vadd.f32 0.0, %v3848
        %v3850 = vpop.f32.mrb[0].mxu0
        %v3851 = vpop.f32.mrb[0].mxu0
        %v3852 = vadd.f32 0.0, %v3851
        %v3853 = vpop.f32.mrb[0].mxu0
        %3854 = vmatprep.mubr.bf16.mxu0 0
        %3855 = vmatmul.mubr.bf16.gmra.mrb[0].mxu0 %v3809
        %v3856 = vpop.f32.mrb[0].mxu0
        %v3857 = vadd.f32 0.0, %v3856
        %v3858 = vpop.f32.mrb[0].mxu0
        %v3859 = vpop.f32.mrb[0].mxu0
        %v3860 = vadd.f32 0.0, %v3859
        %v3861 = vpop.f32.mrb[0].mxu0
        %3862 = vdwg.mxu0
        %v3864 = vsel %vm1025, %v3407, 0
        %v3867 = vsel %vm1025, %v3408, 0
        %v3870 = vsel %vm1591, %v3410, 0
        %3872 = vmatprep.subr.bf16.mxu0 0
        %3873 = vmatpush1.bf16.msra.mxu0 %v3870
        %3874 = vmatprep.subr.bf16.mxu0 0
        %3875 = vmatpush1.bf16.msra.mxu0 0
        %3876 = vmatprep.subr.bf16.mxu0 0
        %3877 = vmatpush1.bf16.msra.mxu0 0
        %3878 = vmatprep.subr.bf16.mxu0 0
        %3879 = vmatpush1.bf16.msra.mxu0 0
        %3880 = vmatprep.subr.bf16.mxu0 0
        %3881 = vmatpush1.bf16.msra.mxu0 0
        %3882 = vmatprep.subr.bf16.mxu0 0
        %3883 = vmatpush1.bf16.msra.mxu0 0
        %3884 = vmatprep.subr.bf16.mxu0 0
        %3885 = vmatpush1.bf16.msra.mxu0 0
        %3886 = vmatprep.subr.bf16.mxu0 0
        %3887 = vmatpush1.bf16.msra.mxu0 0
        %3888 = vmatprep.subr.bf16.mxu0 0
        %3889 = vmatpush1.bf16.msra.mxu0 0
        %3890 = vmatprep.subr.bf16.mxu0 0
        %3891 = vmatpush1.bf16.msra.mxu0 0
        %3892 = vmatprep.subr.bf16.mxu0 0
        %3893 = vmatpush1.bf16.msra.mxu0 0
        %3894 = vmatprep.subr.bf16.mxu0 0
        %3895 = vmatpush1.bf16.msra.mxu0 0
        %3896 = vmatprep.subr.bf16.mxu0 0
        %3897 = vmatpush1.bf16.msra.mxu0 0
        %3898 = vmatprep.subr.bf16.mxu0 0
        %3899 = vmatpush1.bf16.msra.mxu0 0
        %3900 = vmatprep.subr.bf16.mxu0 0
        %3901 = vmatpush1.bf16.msra.mxu0 0
        %3902 = vmatprep.subr.bf16.mxu0 0
        %3903 = vmatpush1.bf16.msra.mxu0 0
        %3904 = vmatprep.mubr.bf16.mxu0 0
        %3905 = vmatmul.mubr.bf16.gmra.mrb[0].mxu0 %v3864
        %v3906 = vpop.f32.mrb[0].mxu0
        %v3907 = vadd.f32 %v3849, %v3906
        %v3908 = vpop.f32.mrb[0].mxu0
        %v3909 = vpop.f32.mrb[0].mxu0
        %v3910 = vadd.f32 %v3852, %v3909
        %v3911 = vpop.f32.mrb[0].mxu0
        %3912 = vmatprep.mubr.bf16.mxu0 0
        %3913 = vmatmul.mubr.bf16.gmra.mrb[0].mxu0 %v3867
        %v3914 = vpop.f32.mrb[0].mxu0
        %v3915 = vadd.f32 %v3857, %v3914
        %v3916 = vpop.f32.mrb[0].mxu0
        %v3917 = vpop.f32.mrb[0].mxu0
        %v3918 = vadd.f32 %v3860, %v3917
        %v3919 = vpop.f32.mrb[0].mxu0
        %3920 = vdwg.mxu0
        %s3921 = scalar_lea.vmem %s5, 288
        %v3922 = vld [vmem:[%s3921] sm:$0xf]
        %v3923 = vld [vmem:[%s3921 + $0x4] sm:$0xf]
        %v3924 = vld [vmem:[%s3921 + $0x8] sm:$0xf]
        %v3925 = vld [vmem:[%s3921 + $0xc] sm:$0xf]
        %s3926 = scalar_lea.vmem %s6, 18
        %v3927 = vld [vmem:[%s3926] sm:$0x1]
        %v3929 = vlaneseq
        %v3930 = vshrl.u32 %v3929, 7
        %v3931 = vsub.s32 0, %v3930
        %v3932 = vrot.slane %v3927, %v3931
        %v3938 = vunpack.c.l.b16 %v3922
        %v3939 = vunpack.c.l.b16 %v3923
        %v3940 = vunpack.c.l.b16 %v3924
        %v3941 = vunpack.c.l.b16 %v3925
        %v3942 = vpack.c.b16 %v3939, %v3938
        %v3943 = vpack.c.b16 %v3941, %v3940
        %3946 = vmatprep.subr.bf16.mxu0 0
        %3947 = vmatpush1.bf16.msra.mxu0 %v3942
        %3948 = vmatprep.subr.bf16.mxu0 0
        %3949 = vmatpush1.bf16.msra.mxu0 %v3943
        %3950 = vmatprep.subr.bf16.mxu0 0
        %3951 = vmatpush1.bf16.msra.mxu0 0
        %3952 = vmatprep.subr.bf16.mxu0 0
        %3953 = vmatpush1.bf16.msra.mxu0 0
        %3954 = vmatprep.subr.bf16.mxu0 0
        %3955 = vmatpush1.bf16.msra.mxu0 0
        %3956 = vmatprep.subr.bf16.mxu0 0
        %3957 = vmatpush1.bf16.msra.mxu0 0
        %3958 = vmatprep.subr.bf16.mxu0 0
        %3959 = vmatpush1.bf16.msra.mxu0 0
        %3960 = vmatprep.subr.bf16.mxu0 0
        %3961 = vmatpush1.bf16.msra.mxu0 0
        %3962 = vmatprep.subr.bf16.mxu0 0
        %3963 = vmatpush1.bf16.msra.mxu0 0
        %3964 = vmatprep.subr.bf16.mxu0 0
        %3965 = vmatpush1.bf16.msra.mxu0 0
        %3966 = vmatprep.subr.bf16.mxu0 0
        %3967 = vmatpush1.bf16.msra.mxu0 0
        %3968 = vmatprep.subr.bf16.mxu0 0
        %3969 = vmatpush1.bf16.msra.mxu0 0
        %3970 = vmatprep.subr.bf16.mxu0 0
        %3971 = vmatpush1.bf16.msra.mxu0 0
        %3972 = vmatprep.subr.bf16.mxu0 0
        %3973 = vmatpush1.bf16.msra.mxu0 0
        %3974 = vmatprep.subr.bf16.mxu0 0
        %3975 = vmatpush1.bf16.msra.mxu0 0
        %3976 = vmatprep.subr.bf16.mxu0 0
        %3977 = vmatpush1.bf16.msra.mxu0 0
        %3978 = vmatprep.mubr.bf16.mxu0 0
        %3979 = vmatmul.mubr.bf16.gmra.mrb[0].mxu0 %v3037
        %v3980 = vpop.f32.mrb[0].mxu0
        %v3981 = vadd.f32 %v3932, %v3980
        %v3982 = vpop.f32.mrb[0].mxu0
        %v3983 = vpop.f32.mrb[0].mxu0
        %v3984 = vadd.f32 %v3932, %v3983
        %v3985 = vpop.f32.mrb[0].mxu0
        %3986 = vmatprep.mubr.bf16.mxu0 0
        %3987 = vmatmul.mubr.bf16.gmra.mrb[0].mxu0 %v3040
        %v3988 = vpop.f32.mrb[0].mxu0
        %v3989 = vadd.f32 %v3932, %v3988
        %v3990 = vpop.f32.mrb[0].mxu0
        %v3991 = vpop.f32.mrb[0].mxu0
        %v3992 = vadd.f32 %v3932, %v3991
        %v3993 = vpop.f32.mrb[0].mxu0
        %3994 = vdwg.mxu0
        %s3995 = scalar_lea.vmem %s5, 304
        %v3996 = vld [vmem:[%s3995] sm:$0xf]
        %v3997 = vld [vmem:[%s3995 + $0x4] sm:$0xf]
        %v3998 = vld [vmem:[%s3995 + $0x8] sm:$0xf]
        %v3999 = vld [vmem:[%s3995 + $0xc] sm:$0xf]
        %s4000 = scalar_lea.vmem %s6, 19
        %v4001 = vld [vmem:[%s4000] sm:$0x1]
        %v4003 = vlaneseq
        %v4004 = vshrl.u32 %v4003, 7
        %v4005 = vsub.s32 0, %v4004
        %v4006 = vrot.slane %v4001, %v4005
        %v4012 = vunpack.c.l.b16 %v3996
        %v4013 = vunpack.c.l.b16 %v3997
        %v4014 = vunpack.c.l.b16 %v3998
        %v4015 = vunpack.c.l.b16 %v3999
        %v4016 = vpack.c.b16 %v4013, %v4012
        %v4017 = vpack.c.b16 %v4015, %v4014
        %4020 = vmatprep.subr.bf16.mxu0 0
        %4021 = vmatpush1.bf16.msra.mxu0 %v4016
        %4022 = vmatprep.subr.bf16.mxu0 0
        %4023 = vmatpush1.bf16.msra.mxu0 %v4017
        %4024 = vmatprep.subr.bf16.mxu0 0
        %4025 = vmatpush1.bf16.msra.mxu0 0
        %4026 = vmatprep.subr.bf16.mxu0 0
        %4027 = vmatpush1.bf16.msra.mxu0 0
        %4028 = vmatprep.subr.bf16.mxu0 0
        %4029 = vmatpush1.bf16.msra.mxu0 0
        %4030 = vmatprep.subr.bf16.mxu0 0
        %4031 = vmatpush1.bf16.msra.mxu0 0
        %4032 = vmatprep.subr.bf16.mxu0 0
        %4033 = vmatpush1.bf16.msra.mxu0 0
        %4034 = vmatprep.subr.bf16.mxu0 0
        %4035 = vmatpush1.bf16.msra.mxu0 0
        %4036 = vmatprep.subr.bf16.mxu0 0
        %4037 = vmatpush1.bf16.msra.mxu0 0
        %4038 = vmatprep.subr.bf16.mxu0 0
        %4039 = vmatpush1.bf16.msra.mxu0 0
        %4040 = vmatprep.subr.bf16.mxu0 0
        %4041 = vmatpush1.bf16.msra.mxu0 0
        %4042 = vmatprep.subr.bf16.mxu0 0
        %4043 = vmatpush1.bf16.msra.mxu0 0
        %4044 = vmatprep.subr.bf16.mxu0 0
        %4045 = vmatpush1.bf16.msra.mxu0 0
        %4046 = vmatprep.subr.bf16.mxu0 0
        %4047 = vmatpush1.bf16.msra.mxu0 0
        %4048 = vmatprep.subr.bf16.mxu0 0
        %4049 = vmatpush1.bf16.msra.mxu0 0
        %4050 = vmatprep.subr.bf16.mxu0 0
        %4051 = vmatpush1.bf16.msra.mxu0 0
        %4052 = vmatprep.mubr.bf16.mxu0 0
        %4053 = vmatmul.mubr.bf16.gmra.mrb[0].mxu0 %v3037
        %v4054 = vpop.f32.mrb[0].mxu0
        %v4055 = vadd.f32 %v4006, %v4054
        %v4056 = vpop.f32.mrb[0].mxu0
        %v4057 = vpop.f32.mrb[0].mxu0
        %v4058 = vadd.f32 %v4006, %v4057
        %v4059 = vpop.f32.mrb[0].mxu0
        %4060 = vmatprep.mubr.bf16.mxu0 0
        %4061 = vmatmul.mubr.bf16.gmra.mrb[0].mxu0 %v3040
        %v4062 = vpop.f32.mrb[0].mxu0
        %v4063 = vadd.f32 %v4006, %v4062
        %v4064 = vpop.f32.mrb[0].mxu0
        %v4065 = vpop.f32.mrb[0].mxu0
        %v4066 = vadd.f32 %v4006, %v4065
        %v4067 = vpop.f32.mrb[0].mxu0
        %4068 = vdwg.mxu0
        %s4069 = scalar_lea.vmem %s5, 320
        %v4070 = vld [vmem:[%s4069] sm:$0xf]
        %v4071 = vld [vmem:[%s4069 + $0x4] sm:$0xf]
        %v4072 = vld [vmem:[%s4069 + $0x8] sm:$0xf]
        %v4073 = vld [vmem:[%s4069 + $0xc] sm:$0xf]
        %s4074 = scalar_lea.vmem %s6, 20
        %v4075 = vld [vmem:[%s4074] sm:$0x1]
        %v4077 = vlaneseq
        %v4078 = vshrl.u32 %v4077, 7
        %v4079 = vsub.s32 0, %v4078
        %v4080 = vrot.slane %v4075, %v4079
        %v4086 = vunpack.c.l.b16 %v4070
        %v4087 = vunpack.c.l.b16 %v4071
        %v4088 = vunpack.c.l.b16 %v4072
        %v4089 = vunpack.c.l.b16 %v4073
        %v4090 = vpack.c.b16 %v4087, %v4086
        %v4091 = vpack.c.b16 %v4089, %v4088
        %4094 = vmatprep.subr.bf16.mxu0 0
        %4095 = vmatpush1.bf16.msra.mxu0 %v4090
        %4096 = vmatprep.subr.bf16.mxu0 0
        %4097 = vmatpush1.bf16.msra.mxu0 %v4091
        %4098 = vmatprep.subr.bf16.mxu0 0
        %4099 = vmatpush1.bf16.msra.mxu0 0
        %4100 = vmatprep.subr.bf16.mxu0 0
        %4101 = vmatpush1.bf16.msra.mxu0 0
        %4102 = vmatprep.subr.bf16.mxu0 0
        %4103 = vmatpush1.bf16.msra.mxu0 0
        %4104 = vmatprep.subr.bf16.mxu0 0
        %4105 = vmatpush1.bf16.msra.mxu0 0
        %4106 = vmatprep.subr.bf16.mxu0 0
        %4107 = vmatpush1.bf16.msra.mxu0 0
        %4108 = vmatprep.subr.bf16.mxu0 0
        %4109 = vmatpush1.bf16.msra.mxu0 0
        %4110 = vmatprep.subr.bf16.mxu0 0
        %4111 = vmatpush1.bf16.msra.mxu0 0
        %4112 = vmatprep.subr.bf16.mxu0 0
        %4113 = vmatpush1.bf16.msra.mxu0 0
        %4114 = vmatprep.subr.bf16.mxu0 0
        %4115 = vmatpush1.bf16.msra.mxu0 0
        %4116 = vmatprep.subr.bf16.mxu0 0
        %4117 = vmatpush1.bf16.msra.mxu0 0
        %4118 = vmatprep.subr.bf16.mxu0 0
        %4119 = vmatpush1.bf16.msra.mxu0 0
        %4120 = vmatprep.subr.bf16.mxu0 0
        %4121 = vmatpush1.bf16.msra.mxu0 0
        %4122 = vmatprep.subr.bf16.mxu0 0
        %4123 = vmatpush1.bf16.msra.mxu0 0
        %4124 = vmatprep.subr.bf16.mxu0 0
        %4125 = vmatpush1.bf16.msra.mxu0 0
        %4126 = vmatprep.mubr.bf16.mxu0 0
        %4127 = vmatmul.mubr.bf16.gmra.mrb[0].mxu0 %v3037
        %v4128 = vpop.f32.mrb[0].mxu0
        %v4129 = vadd.f32 %v4080, %v4128
        %v4130 = vpop.f32.mrb[0].mxu0
        %v4131 = vpop.f32.mrb[0].mxu0
        %v4132 = vadd.f32 %v4080, %v4131
        %v4133 = vpop.f32.mrb[0].mxu0
        %4134 = vmatprep.mubr.bf16.mxu0 0
        %4135 = vmatmul.mubr.bf16.gmra.mrb[0].mxu0 %v3040
        %v4136 = vpop.f32.mrb[0].mxu0
        %v4137 = vadd.f32 %v4080, %v4136
        %v4138 = vpop.f32.mrb[0].mxu0
        %v4139 = vpop.f32.mrb[0].mxu0
        %v4140 = vadd.f32 %v4080, %v4139
        %v4141 = vpop.f32.mrb[0].mxu0
        %4142 = vdwg.mxu0
        %v4143 = vpack.c.bf16 %v3984, %v3981
        %v4144 = vpack.c.bf16 %v3992, %v3989
        %v4145 = vpack.c.bf16 %v4058, %v4055
        %v4146 = vpack.c.bf16 %v4066, %v4063
        %v4147 = vpack.c.bf16 %v4132, %v4129
        %v4148 = vpack.c.bf16 %v4140, %v4137
        %v4150 = vsel %vm1025, %v4143, 0
        %v4153 = vsel %vm1025, %v4144, 0
        %v4156 = vsel %vm1025, %v4145, 0
        %v4159 = vsel %vm1025, %v4146, 0
        %4161 = vmatprep.subr.bf16.mxu0 0
        %4162 = vmatpush1.bf16.xpose.msra.mxu0 %v4156
        %4163 = vmatprep.subr.bf16.mxu0 0
        %4164 = vmatpush1.bf16.xpose.msra.mxu0 %v4159
        %4165 = vmatprep.subr.bf16.mxu0 0
        %4166 = vmatpush1.bf16.xpose.msra.mxu0 0
        %4167 = vmatprep.subr.bf16.mxu0 0
        %4168 = vmatpush1.bf16.xpose.msra.mxu0 0
        %4169 = vmatprep.subr.bf16.mxu0 0
        %4170 = vmatpush1.bf16.xpose.msra.mxu0 0
        %4171 = vmatprep.subr.bf16.mxu0 0
        %4172 = vmatpush1.bf16.xpose.msra.mxu0 0
        %4173 = vmatprep.subr.bf16.mxu0 0
        %4174 = vmatpush1.bf16.xpose.msra.mxu0 0
        %4175 = vmatprep.subr.bf16.mxu0 0
        %4176 = vmatpush1.bf16.xpose.msra.mxu0 0
        %4177 = vmatprep.subr.bf16.mxu0 0
        %4178 = vmatpush1.bf16.xpose.msra.mxu0 0
        %4179 = vmatprep.subr.bf16.mxu0 0
        %4180 = vmatpush1.bf16.xpose.msra.mxu0 0
        %4181 = vmatprep.subr.bf16.mxu0 0
        %4182 = vmatpush1.bf16.xpose.msra.mxu0 0
        %4183 = vmatprep.subr.bf16.mxu0 0
        %4184 = vmatpush1.bf16.xpose.msra.mxu0 0
        %4185 = vmatprep.subr.bf16.mxu0 0
        %4186 = vmatpush1.bf16.xpose.msra.mxu0 0
        %4187 = vmatprep.subr.bf16.mxu0 0
        %4188 = vmatpush1.bf16.xpose.msra.mxu0 0
        %4189 = vmatprep.subr.bf16.mxu0 0
        %4190 = vmatpush1.bf16.xpose.msra.mxu0 0
        %4191 = vmatprep.subr.bf16.mxu0 0
        %4192 = vmatpush1.bf16.xpose.msra.mxu0 0
        %4193 = vmatprep.mubr.bf16.mxu0 0
        %4194 = vmatmul.mubr.bf16.gmra.mrb[0].mxu0 %v4150
        %v4195 = vpop.f32.mrb[0].mxu0
        %v4196 = vadd.f32 %v714, %v4195
        %v4197 = vpop.f32.mrb[0].mxu0
        %v4198 = vpop.f32.mrb[0].mxu0
        %v4199 = vadd.f32 %v714, %v4198
        %v4200 = vpop.f32.mrb[0].mxu0
        %4201 = vmatprep.mubr.bf16.mxu0 0
        %4202 = vmatmul.mubr.bf16.gmra.mrb[0].mxu0 %v4153
        %v4203 = vpop.f32.mrb[0].mxu0
        %v4204 = vadd.f32 %v714, %v4203
        %v4205 = vpop.f32.mrb[0].mxu0
        %v4206 = vpop.f32.mrb[0].mxu0
        %v4207 = vadd.f32 %v714, %v4206
        %v4208 = vpop.f32.mrb[0].mxu0
        %4209 = vdwg.mxu0
        %v4210 = vsel %vm717, %v4196, -inf
        %4211 = vmax.xlane.f32.xlu0 %v4210
        %v4212 = vpop.xlane.xlu0 %4211
        %v4213 = vsel %vm717, %v4199, -inf
        %4214 = vmax.xlane.f32.xlu0 %v4213
        %v4215 = vpop.xlane.xlu0 %4214
        %v4216 = vsel %vm717, %v4204, -inf
        %4217 = vmax.xlane.f32.xlu0 %v4216
        %v4218 = vpop.xlane.xlu0 %4217
        %v4219 = vsel %vm717, %v4207, -inf
        %4220 = vmax.xlane.f32.xlu0 %v4219
        %v4221 = vpop.xlane.xlu0 %4220
        %v4222 = vsub.f32 %v4196, %v4212
        %v4223 = vsub.f32 %v4199, %v4215
        %v4224 = vsub.f32 %v4204, %v4218
        %v4225 = vsub.f32 %v4207, %v4221
        %v4226 = vmul.f32 %v4222, 1.442695
        %v4227 = vpow.pop %v4226
        %v4228 = vmul.f32 %v4223, 1.442695
        %v4229 = vpow.pop %v4228
        %v4230 = vmul.f32 %v4224, 1.442695
        %v4231 = vpow.pop %v4230
        %v4232 = vmul.f32 %v4225, 1.442695
        %v4233 = vpow.pop %v4232
        %v4234 = vsel %vm717, %v4227, 0.0
        %4235 = vadd.xlane.f32.xlu0 %v4234
        %v4236 = vpop.xlane.xlu0 %4235
        %v4237 = vsel %vm717, %v4229, 0.0
        %4238 = vadd.xlane.f32.xlu0 %v4237
        %v4239 = vpop.xlane.xlu0 %4238
        %v4240 = vsel %vm717, %v4231, 0.0
        %4241 = vadd.xlane.f32.xlu0 %v4240
        %v4242 = vpop.xlane.xlu0 %4241
        %v4243 = vsel %vm717, %v4233, 0.0
        %4244 = vadd.xlane.f32.xlu0 %v4243
        %v4245 = vpop.xlane.xlu0 %4244
        %v4246 = vrcp.pop %v4236
        %v4247 = vrcp.pop %v4239
        %v4248 = vrcp.pop %v4242
        %v4249 = vrcp.pop %v4245
        %v4250 = vmul.f32 %v4227, %v4246
        %v4251 = vmul.f32 %v4229, %v4247
        %v4252 = vmul.f32 %v4231, %v4248
        %v4253 = vmul.f32 %v4233, %v4249
        %v4254 = vpack.c.bf16 %v4251, %v4250
        %v4255 = vpack.c.bf16 %v4253, %v4252
        %v4257 = vsel %vm717, %v4254, 0
        %v4260 = vsel %vm717, %v4255, 0
        %4262 = vmatprep.subr.bf16.mxu0 0
        %4263 = vmatpush1.bf16.msra.mxu0 %v4147
        %4264 = vmatprep.subr.bf16.mxu0 0
        %4265 = vmatpush1.bf16.msra.mxu0 %v4148
        %4266 = vmatprep.subr.bf16.mxu0 0
        %4267 = vmatpush1.bf16.msra.mxu0 0
        %4268 = vmatprep.subr.bf16.mxu0 0
        %4269 = vmatpush1.bf16.msra.mxu0 0
        %4270 = vmatprep.subr.bf16.mxu0 0
        %4271 = vmatpush1.bf16.msra.mxu0 0
        %4272 = vmatprep.subr.bf16.mxu0 0
        %4273 = vmatpush1.bf16.msra.mxu0 0
        %4274 = vmatprep.subr.bf16.mxu0 0
        %4275 = vmatpush1.bf16.msra.mxu0 0
        %4276 = vmatprep.subr.bf16.mxu0 0
        %4277 = vmatpush1.bf16.msra.mxu0 0
        %4278 = vmatprep.subr.bf16.mxu0 0
        %4279 = vmatpush1.bf16.msra.mxu0 0
        %4280 = vmatprep.subr.bf16.mxu0 0
        %4281 = vmatpush1.bf16.msra.mxu0 0
        %4282 = vmatprep.subr.bf16.mxu0 0
        %4283 = vmatpush1.bf16.msra.mxu0 0
        %4284 = vmatprep.subr.bf16.mxu0 0
        %4285 = vmatpush1.bf16.msra.mxu0 0
        %4286 = vmatprep.subr.bf16.mxu0 0
        %4287 = vmatpush1.bf16.msra.mxu0 0
        %4288 = vmatprep.subr.bf16.mxu0 0
        %4289 = vmatpush1.bf16.msra.mxu0 0
        %4290 = vmatprep.subr.bf16.mxu0 0
        %4291 = vmatpush1.bf16.msra.mxu0 0
        %4292 = vmatprep.subr.bf16.mxu0 0
        %4293 = vmatpush1.bf16.msra.mxu0 0
        %4294 = vmatprep.mubr.bf16.mxu0 0
        %4295 = vmatmul.mubr.bf16.gmra.mrb[0].mxu0 %v4257
        %v4296 = vpop.f32.mrb[0].mxu0
        %v4297 = vadd.f32 0.0, %v4296
        %v4298 = vpop.f32.mrb[0].mxu0
        %v4299 = vpop.f32.mrb[0].mxu0
        %v4300 = vadd.f32 0.0, %v4299
        %v4301 = vpop.f32.mrb[0].mxu0
        %4302 = vmatprep.mubr.bf16.mxu0 0
        %4303 = vmatmul.mubr.bf16.gmra.mrb[0].mxu0 %v4260
        %v4304 = vpop.f32.mrb[0].mxu0
        %v4305 = vadd.f32 0.0, %v4304
        %v4306 = vpop.f32.mrb[0].mxu0
        %v4307 = vpop.f32.mrb[0].mxu0
        %v4308 = vadd.f32 0.0, %v4307
        %v4309 = vpop.f32.mrb[0].mxu0
        %4310 = vdwg.mxu0
        %v4311 = vpack.c.bf16 %v4300, %v4297
        %v4312 = vpack.c.bf16 %v4308, %v4305
        %s4313 = scalar_lea.vmem %s7, 24
        %v4314 = vld [vmem:[%s4313] sm:$0xf]
        %v4316 = vsel %vm1025, %v4311, 0
        %v4319 = vsel %vm1025, %v4312, 0
        %v4322 = vsel %vm1591, %v4314, 0
        %4324 = vmatprep.subr.bf16.mxu0 0
        %4325 = vmatpush1.bf16.msra.mxu0 %v4322
        %4326 = vmatprep.subr.bf16.mxu0 0
        %4327 = vmatpush1.bf16.msra.mxu0 0
        %4328 = vmatprep.subr.bf16.mxu0 0
        %4329 = vmatpush1.bf16.msra.mxu0 0
        %4330 = vmatprep.subr.bf16.mxu0 0
        %4331 = vmatpush1.bf16.msra.mxu0 0
        %4332 = vmatprep.subr.bf16.mxu0 0
        %4333 = vmatpush1.bf16.msra.mxu0 0
        %4334 = vmatprep.subr.bf16.mxu0 0
        %4335 = vmatpush1.bf16.msra.mxu0 0
        %4336 = vmatprep.subr.bf16.mxu0 0
        %4337 = vmatpush1.bf16.msra.mxu0 0
        %4338 = vmatprep.subr.bf16.mxu0 0
        %4339 = vmatpush1.bf16.msra.mxu0 0
        %4340 = vmatprep.subr.bf16.mxu0 0
        %4341 = vmatpush1.bf16.msra.mxu0 0
        %4342 = vmatprep.subr.bf16.mxu0 0
        %4343 = vmatpush1.bf16.msra.mxu0 0
        %4344 = vmatprep.subr.bf16.mxu0 0
        %4345 = vmatpush1.bf16.msra.mxu0 0
        %4346 = vmatprep.subr.bf16.mxu0 0
        %4347 = vmatpush1.bf16.msra.mxu0 0
        %4348 = vmatprep.subr.bf16.mxu0 0
        %4349 = vmatpush1.bf16.msra.mxu0 0
        %4350 = vmatprep.subr.bf16.mxu0 0
        %4351 = vmatpush1.bf16.msra.mxu0 0
        %4352 = vmatprep.subr.bf16.mxu0 0
        %4353 = vmatpush1.bf16.msra.mxu0 0
        %4354 = vmatprep.subr.bf16.mxu0 0
        %4355 = vmatpush1.bf16.msra.mxu0 0
        %4356 = vmatprep.mubr.bf16.mxu0 0
        %4357 = vmatmul.mubr.bf16.gmra.mrb[0].mxu0 %v4316
        %v4358 = vpop.f32.mrb[0].mxu0
        %v4359 = vadd.f32 0.0, %v4358
        %v4360 = vpop.f32.mrb[0].mxu0
        %v4361 = vpop.f32.mrb[0].mxu0
        %v4362 = vadd.f32 0.0, %v4361
        %v4363 = vpop.f32.mrb[0].mxu0
        %4364 = vmatprep.mubr.bf16.mxu0 0
        %4365 = vmatmul.mubr.bf16.gmra.mrb[0].mxu0 %v4319
        %v4366 = vpop.f32.mrb[0].mxu0
        %v4367 = vadd.f32 0.0, %v4366
        %v4368 = vpop.f32.mrb[0].mxu0
        %v4369 = vpop.f32.mrb[0].mxu0
        %v4370 = vadd.f32 0.0, %v4369
        %v4371 = vpop.f32.mrb[0].mxu0
        %4372 = vdwg.mxu0
        %v4373 = vadd.f32 %v3907, %v4359
        %v4374 = vadd.f32 %v3910, %v4362
        %v4375 = vadd.f32 %v3915, %v4367
        %v4376 = vadd.f32 %v3918, %v4370
        %s4377 = scalar_lea.vmem %s5, 336
        %v4378 = vld [vmem:[%s4377] sm:$0xf]
        %v4379 = vld [vmem:[%s4377 + $0x4] sm:$0xf]
        %v4380 = vld [vmem:[%s4377 + $0x8] sm:$0xf]
        %v4381 = vld [vmem:[%s4377 + $0xc] sm:$0xf]
        %s4382 = scalar_lea.vmem %s6, 21
        %v4383 = vld [vmem:[%s4382] sm:$0x1]
        %v4385 = vlaneseq
        %v4386 = vshrl.u32 %v4385, 7
        %v4387 = vsub.s32 0, %v4386
        %v4388 = vrot.slane %v4383, %v4387
        %v4394 = vunpack.c.l.b16 %v4378
        %v4395 = vunpack.c.l.b16 %v4379
        %v4396 = vunpack.c.l.b16 %v4380
        %v4397 = vunpack.c.l.b16 %v4381
        %v4398 = vpack.c.b16 %v4395, %v4394
        %v4399 = vpack.c.b16 %v4397, %v4396
        %4402 = vmatprep.subr.bf16.mxu0 0
        %4403 = vmatpush1.bf16.msra.mxu0 %v4398
        %4404 = vmatprep.subr.bf16.mxu0 0
        %4405 = vmatpush1.bf16.msra.mxu0 %v4399
        %4406 = vmatprep.subr.bf16.mxu0 0
        %4407 = vmatpush1.bf16.msra.mxu0 0
        %4408 = vmatprep.subr.bf16.mxu0 0
        %4409 = vmatpush1.bf16.msra.mxu0 0
        %4410 = vmatprep.subr.bf16.mxu0 0
        %4411 = vmatpush1.bf16.msra.mxu0 0
        %4412 = vmatprep.subr.bf16.mxu0 0
        %4413 = vmatpush1.bf16.msra.mxu0 0
        %4414 = vmatprep.subr.bf16.mxu0 0
        %4415 = vmatpush1.bf16.msra.mxu0 0
        %4416 = vmatprep.subr.bf16.mxu0 0
        %4417 = vmatpush1.bf16.msra.mxu0 0
        %4418 = vmatprep.subr.bf16.mxu0 0
        %4419 = vmatpush1.bf16.msra.mxu0 0
        %4420 = vmatprep.subr.bf16.mxu0 0
        %4421 = vmatpush1.bf16.msra.mxu0 0
        %4422 = vmatprep.subr.bf16.mxu0 0
        %4423 = vmatpush1.bf16.msra.mxu0 0
        %4424 = vmatprep.subr.bf16.mxu0 0
        %4425 = vmatpush1.bf16.msra.mxu0 0
        %4426 = vmatprep.subr.bf16.mxu0 0
        %4427 = vmatpush1.bf16.msra.mxu0 0
        %4428 = vmatprep.subr.bf16.mxu0 0
        %4429 = vmatpush1.bf16.msra.mxu0 0
        %4430 = vmatprep.subr.bf16.mxu0 0
        %4431 = vmatpush1.bf16.msra.mxu0 0
        %4432 = vmatprep.subr.bf16.mxu0 0
        %4433 = vmatpush1.bf16.msra.mxu0 0
        %4434 = vmatprep.mubr.bf16.mxu0 0
        %4435 = vmatmul.mubr.bf16.gmra.mrb[0].mxu0 %v3037
        %v4436 = vpop.f32.mrb[0].mxu0
        %v4437 = vadd.f32 %v4388, %v4436
        %v4438 = vpop.f32.mrb[0].mxu0
        %v4439 = vpop.f32.mrb[0].mxu0
        %v4440 = vadd.f32 %v4388, %v4439
        %v4441 = vpop.f32.mrb[0].mxu0
        %4442 = vmatprep.mubr.bf16.mxu0 0
        %4443 = vmatmul.mubr.bf16.gmra.mrb[0].mxu0 %v3040
        %v4444 = vpop.f32.mrb[0].mxu0
        %v4445 = vadd.f32 %v4388, %v4444
        %v4446 = vpop.f32.mrb[0].mxu0
        %v4447 = vpop.f32.mrb[0].mxu0
        %v4448 = vadd.f32 %v4388, %v4447
        %v4449 = vpop.f32.mrb[0].mxu0
        %4450 = vdwg.mxu0
        %s4451 = scalar_lea.vmem %s5, 352
        %v4452 = vld [vmem:[%s4451] sm:$0xf]
        %v4453 = vld [vmem:[%s4451 + $0x4] sm:$0xf]
        %v4454 = vld [vmem:[%s4451 + $0x8] sm:$0xf]
        %v4455 = vld [vmem:[%s4451 + $0xc] sm:$0xf]
        %s4456 = scalar_lea.vmem %s6, 22
        %v4457 = vld [vmem:[%s4456] sm:$0x1]
        %v4459 = vlaneseq
        %v4460 = vshrl.u32 %v4459, 7
        %v4461 = vsub.s32 0, %v4460
        %v4462 = vrot.slane %v4457, %v4461
        %v4468 = vunpack.c.l.b16 %v4452
        %v4469 = vunpack.c.l.b16 %v4453
        %v4470 = vunpack.c.l.b16 %v4454
        %v4471 = vunpack.c.l.b16 %v4455
        %v4472 = vpack.c.b16 %v4469, %v4468
        %v4473 = vpack.c.b16 %v4471, %v4470
        %4476 = vmatprep.subr.bf16.mxu0 0
        %4477 = vmatpush1.bf16.msra.mxu0 %v4472
        %4478 = vmatprep.subr.bf16.mxu0 0
        %4479 = vmatpush1.bf16.msra.mxu0 %v4473
        %4480 = vmatprep.subr.bf16.mxu0 0
        %4481 = vmatpush1.bf16.msra.mxu0 0
        %4482 = vmatprep.subr.bf16.mxu0 0
        %4483 = vmatpush1.bf16.msra.mxu0 0
        %4484 = vmatprep.subr.bf16.mxu0 0
        %4485 = vmatpush1.bf16.msra.mxu0 0
        %4486 = vmatprep.subr.bf16.mxu0 0
        %4487 = vmatpush1.bf16.msra.mxu0 0
        %4488 = vmatprep.subr.bf16.mxu0 0
        %4489 = vmatpush1.bf16.msra.mxu0 0
        %4490 = vmatprep.subr.bf16.mxu0 0
        %4491 = vmatpush1.bf16.msra.mxu0 0
        %4492 = vmatprep.subr.bf16.mxu0 0
        %4493 = vmatpush1.bf16.msra.mxu0 0
        %4494 = vmatprep.subr.bf16.mxu0 0
        %4495 = vmatpush1.bf16.msra.mxu0 0
        %4496 = vmatprep.subr.bf16.mxu0 0
        %4497 = vmatpush1.bf16.msra.mxu0 0
        %4498 = vmatprep.subr.bf16.mxu0 0
        %4499 = vmatpush1.bf16.msra.mxu0 0
        %4500 = vmatprep.subr.bf16.mxu0 0
        %4501 = vmatpush1.bf16.msra.mxu0 0
        %4502 = vmatprep.subr.bf16.mxu0 0
        %4503 = vmatpush1.bf16.msra.mxu0 0
        %4504 = vmatprep.subr.bf16.mxu0 0
        %4505 = vmatpush1.bf16.msra.mxu0 0
        %4506 = vmatprep.subr.bf16.mxu0 0
        %4507 = vmatpush1.bf16.msra.mxu0 0
        %4508 = vmatprep.mubr.bf16.mxu0 0
        %4509 = vmatmul.mubr.bf16.gmra.mrb[0].mxu0 %v3037
        %v4510 = vpop.f32.mrb[0].mxu0
        %v4511 = vadd.f32 %v4462, %v4510
        %v4512 = vpop.f32.mrb[0].mxu0
        %v4513 = vpop.f32.mrb[0].mxu0
        %v4514 = vadd.f32 %v4462, %v4513
        %v4515 = vpop.f32.mrb[0].mxu0
        %4516 = vmatprep.mubr.bf16.mxu0 0
        %4517 = vmatmul.mubr.bf16.gmra.mrb[0].mxu0 %v3040
        %v4518 = vpop.f32.mrb[0].mxu0
        %v4519 = vadd.f32 %v4462, %v4518
        %v4520 = vpop.f32.mrb[0].mxu0
        %v4521 = vpop.f32.mrb[0].mxu0
        %v4522 = vadd.f32 %v4462, %v4521
        %v4523 = vpop.f32.mrb[0].mxu0
        %4524 = vdwg.mxu0
        %s4525 = scalar_lea.vmem %s5, 368
        %v4526 = vld [vmem:[%s4525] sm:$0xf]
        %v4527 = vld [vmem:[%s4525 + $0x4] sm:$0xf]
        %v4528 = vld [vmem:[%s4525 + $0x8] sm:$0xf]
        %v4529 = vld [vmem:[%s4525 + $0xc] sm:$0xf]
        %s4530 = scalar_lea.vmem %s6, 23
        %v4531 = vld [vmem:[%s4530] sm:$0x1]
        %v4533 = vlaneseq
        %v4534 = vshrl.u32 %v4533, 7
        %v4535 = vsub.s32 0, %v4534
        %v4536 = vrot.slane %v4531, %v4535
        %v4542 = vunpack.c.l.b16 %v4526
        %v4543 = vunpack.c.l.b16 %v4527
        %v4544 = vunpack.c.l.b16 %v4528
        %v4545 = vunpack.c.l.b16 %v4529
        %v4546 = vpack.c.b16 %v4543, %v4542
        %v4547 = vpack.c.b16 %v4545, %v4544
        %4550 = vmatprep.subr.bf16.mxu0 0
        %4551 = vmatpush1.bf16.msra.mxu0 %v4546
        %4552 = vmatprep.subr.bf16.mxu0 0
        %4553 = vmatpush1.bf16.msra.mxu0 %v4547
        %4554 = vmatprep.subr.bf16.mxu0 0
        %4555 = vmatpush1.bf16.msra.mxu0 0
        %4556 = vmatprep.subr.bf16.mxu0 0
        %4557 = vmatpush1.bf16.msra.mxu0 0
        %4558 = vmatprep.subr.bf16.mxu0 0
        %4559 = vmatpush1.bf16.msra.mxu0 0
        %4560 = vmatprep.subr.bf16.mxu0 0
        %4561 = vmatpush1.bf16.msra.mxu0 0
        %4562 = vmatprep.subr.bf16.mxu0 0
        %4563 = vmatpush1.bf16.msra.mxu0 0
        %4564 = vmatprep.subr.bf16.mxu0 0
        %4565 = vmatpush1.bf16.msra.mxu0 0
        %4566 = vmatprep.subr.bf16.mxu0 0
        %4567 = vmatpush1.bf16.msra.mxu0 0
        %4568 = vmatprep.subr.bf16.mxu0 0
        %4569 = vmatpush1.bf16.msra.mxu0 0
        %4570 = vmatprep.subr.bf16.mxu0 0
        %4571 = vmatpush1.bf16.msra.mxu0 0
        %4572 = vmatprep.subr.bf16.mxu0 0
        %4573 = vmatpush1.bf16.msra.mxu0 0
        %4574 = vmatprep.subr.bf16.mxu0 0
        %4575 = vmatpush1.bf16.msra.mxu0 0
        %4576 = vmatprep.subr.bf16.mxu0 0
        %4577 = vmatpush1.bf16.msra.mxu0 0
        %4578 = vmatprep.subr.bf16.mxu0 0
        %4579 = vmatpush1.bf16.msra.mxu0 0
        %4580 = vmatprep.subr.bf16.mxu0 0
        %4581 = vmatpush1.bf16.msra.mxu0 0
        %4582 = vmatprep.mubr.bf16.mxu0 0
        %4583 = vmatmul.mubr.bf16.gmra.mrb[0].mxu0 %v3037
        %v4584 = vpop.f32.mrb[0].mxu0
        %v4585 = vadd.f32 %v4536, %v4584
        %v4586 = vpop.f32.mrb[0].mxu0
        %v4587 = vpop.f32.mrb[0].mxu0
        %v4588 = vadd.f32 %v4536, %v4587
        %v4589 = vpop.f32.mrb[0].mxu0
        %4590 = vmatprep.mubr.bf16.mxu0 0
        %4591 = vmatmul.mubr.bf16.gmra.mrb[0].mxu0 %v3040
        %v4592 = vpop.f32.mrb[0].mxu0
        %v4593 = vadd.f32 %v4536, %v4592
        %v4594 = vpop.f32.mrb[0].mxu0
        %v4595 = vpop.f32.mrb[0].mxu0
        %v4596 = vadd.f32 %v4536, %v4595
        %v4597 = vpop.f32.mrb[0].mxu0
        %4598 = vdwg.mxu0
        %v4599 = vpack.c.bf16 %v4440, %v4437
        %v4600 = vpack.c.bf16 %v4448, %v4445
        %v4601 = vpack.c.bf16 %v4514, %v4511
        %v4602 = vpack.c.bf16 %v4522, %v4519
        %v4603 = vpack.c.bf16 %v4588, %v4585
        %v4604 = vpack.c.bf16 %v4596, %v4593
        %v4606 = vsel %vm1025, %v4599, 0
        %v4609 = vsel %vm1025, %v4600, 0
        %v4612 = vsel %vm1025, %v4601, 0
        %v4615 = vsel %vm1025, %v4602, 0
        %4617 = vmatprep.subr.bf16.mxu0 0
        %4618 = vmatpush1.bf16.xpose.msra.mxu0 %v4612
        %4619 = vmatprep.subr.bf16.mxu0 0
        %4620 = vmatpush1.bf16.xpose.msra.mxu0 %v4615
        %4621 = vmatprep.subr.bf16.mxu0 0
        %4622 = vmatpush1.bf16.xpose.msra.mxu0 0
        %4623 = vmatprep.subr.bf16.mxu0 0
        %4624 = vmatpush1.bf16.xpose.msra.mxu0 0
        %4625 = vmatprep.subr.bf16.mxu0 0
        %4626 = vmatpush1.bf16.xpose.msra.mxu0 0
        %4627 = vmatprep.subr.bf16.mxu0 0
        %4628 = vmatpush1.bf16.xpose.msra.mxu0 0
        %4629 = vmatprep.subr.bf16.mxu0 0
        %4630 = vmatpush1.bf16.xpose.msra.mxu0 0
        %4631 = vmatprep.subr.bf16.mxu0 0
        %4632 = vmatpush1.bf16.xpose.msra.mxu0 0
        %4633 = vmatprep.subr.bf16.mxu0 0
        %4634 = vmatpush1.bf16.xpose.msra.mxu0 0
        %4635 = vmatprep.subr.bf16.mxu0 0
        %4636 = vmatpush1.bf16.xpose.msra.mxu0 0
        %4637 = vmatprep.subr.bf16.mxu0 0
        %4638 = vmatpush1.bf16.xpose.msra.mxu0 0
        %4639 = vmatprep.subr.bf16.mxu0 0
        %4640 = vmatpush1.bf16.xpose.msra.mxu0 0
        %4641 = vmatprep.subr.bf16.mxu0 0
        %4642 = vmatpush1.bf16.xpose.msra.mxu0 0
        %4643 = vmatprep.subr.bf16.mxu0 0
        %4644 = vmatpush1.bf16.xpose.msra.mxu0 0
        %4645 = vmatprep.subr.bf16.mxu0 0
        %4646 = vmatpush1.bf16.xpose.msra.mxu0 0
        %4647 = vmatprep.subr.bf16.mxu0 0
        %4648 = vmatpush1.bf16.xpose.msra.mxu0 0
        %4649 = vmatprep.mubr.bf16.mxu0 0
        %4650 = vmatmul.mubr.bf16.gmra.mrb[0].mxu0 %v4606
        %v4651 = vpop.f32.mrb[0].mxu0
        %v4652 = vadd.f32 %v714, %v4651
        %v4653 = vpop.f32.mrb[0].mxu0
        %v4654 = vpop.f32.mrb[0].mxu0
        %v4655 = vadd.f32 %v714, %v4654
        %v4656 = vpop.f32.mrb[0].mxu0
        %4657 = vmatprep.mubr.bf16.mxu0 0
        %4658 = vmatmul.mubr.bf16.gmra.mrb[0].mxu0 %v4609
        %v4659 = vpop.f32.mrb[0].mxu0
        %v4660 = vadd.f32 %v714, %v4659
        %v4661 = vpop.f32.mrb[0].mxu0
        %v4662 = vpop.f32.mrb[0].mxu0
        %v4663 = vadd.f32 %v714, %v4662
        %v4664 = vpop.f32.mrb[0].mxu0
        %4665 = vdwg.mxu0
        %v4666 = vsel %vm717, %v4652, -inf
        %4667 = vmax.xlane.f32.xlu0 %v4666
        %v4668 = vpop.xlane.xlu0 %4667
        %v4669 = vsel %vm717, %v4655, -inf
        %4670 = vmax.xlane.f32.xlu0 %v4669
        %v4671 = vpop.xlane.xlu0 %4670
        %v4672 = vsel %vm717, %v4660, -inf
        %4673 = vmax.xlane.f32.xlu0 %v4672
        %v4674 = vpop.xlane.xlu0 %4673
        %v4675 = vsel %vm717, %v4663, -inf
        %4676 = vmax.xlane.f32.xlu0 %v4675
        %v4677 = vpop.xlane.xlu0 %4676
        %v4678 = vsub.f32 %v4652, %v4668
        %v4679 = vsub.f32 %v4655, %v4671
        %v4680 = vsub.f32 %v4660, %v4674
        %v4681 = vsub.f32 %v4663, %v4677
        %v4682 = vmul.f32 %v4678, 1.442695
        %v4683 = vpow.pop %v4682
        %v4684 = vmul.f32 %v4679, 1.442695
        %v4685 = vpow.pop %v4684
        %v4686 = vmul.f32 %v4680, 1.442695
        %v4687 = vpow.pop %v4686
        %v4688 = vmul.f32 %v4681, 1.442695
        %v4689 = vpow.pop %v4688
        %v4690 = vsel %vm717, %v4683, 0.0
        %4691 = vadd.xlane.f32.xlu0 %v4690
        %v4692 = vpop.xlane.xlu0 %4691
        %v4693 = vsel %vm717, %v4685, 0.0
        %4694 = vadd.xlane.f32.xlu0 %v4693
        %v4695 = vpop.xlane.xlu0 %4694
        %v4696 = vsel %vm717, %v4687, 0.0
        %4697 = vadd.xlane.f32.xlu0 %v4696
        %v4698 = vpop.xlane.xlu0 %4697
        %v4699 = vsel %vm717, %v4689, 0.0
        %4700 = vadd.xlane.f32.xlu0 %v4699
        %v4701 = vpop.xlane.xlu0 %4700
        %v4702 = vrcp.pop %v4692
        %v4703 = vrcp.pop %v4695
        %v4704 = vrcp.pop %v4698
        %v4705 = vrcp.pop %v4701
        %v4706 = vmul.f32 %v4683, %v4702
        %v4707 = vmul.f32 %v4685, %v4703
        %v4708 = vmul.f32 %v4687, %v4704
        %v4709 = vmul.f32 %v4689, %v4705
        %v4710 = vpack.c.bf16 %v4707, %v4706
        %v4711 = vpack.c.bf16 %v4709, %v4708
        %v4713 = vsel %vm717, %v4710, 0
        %v4716 = vsel %vm717, %v4711, 0
        %4718 = vmatprep.subr.bf16.mxu0 0
        %4719 = vmatpush1.bf16.msra.mxu0 %v4603
        %4720 = vmatprep.subr.bf16.mxu0 0
        %4721 = vmatpush1.bf16.msra.mxu0 %v4604
        %4722 = vmatprep.subr.bf16.mxu0 0
        %4723 = vmatpush1.bf16.msra.mxu0 0
        %4724 = vmatprep.subr.bf16.mxu0 0
        %4725 = vmatpush1.bf16.msra.mxu0 0
        %4726 = vmatprep.subr.bf16.mxu0 0
        %4727 = vmatpush1.bf16.msra.mxu0 0
        %4728 = vmatprep.subr.bf16.mxu0 0
        %4729 = vmatpush1.bf16.msra.mxu0 0
        %4730 = vmatprep.subr.bf16.mxu0 0
        %4731 = vmatpush1.bf16.msra.mxu0 0
        %4732 = vmatprep.subr.bf16.mxu0 0
        %4733 = vmatpush1.bf16.msra.mxu0 0
        %4734 = vmatprep.subr.bf16.mxu0 0
        %4735 = vmatpush1.bf16.msra.mxu0 0
        %4736 = vmatprep.subr.bf16.mxu0 0
        %4737 = vmatpush1.bf16.msra.mxu0 0
        %4738 = vmatprep.subr.bf16.mxu0 0
        %4739 = vmatpush1.bf16.msra.mxu0 0
        %4740 = vmatprep.subr.bf16.mxu0 0
        %4741 = vmatpush1.bf16.msra.mxu0 0
        %4742 = vmatprep.subr.bf16.mxu0 0
        %4743 = vmatpush1.bf16.msra.mxu0 0
        %4744 = vmatprep.subr.bf16.mxu0 0
        %4745 = vmatpush1.bf16.msra.mxu0 0
        %4746 = vmatprep.subr.bf16.mxu0 0
        %4747 = vmatpush1.bf16.msra.mxu0 0
        %4748 = vmatprep.subr.bf16.mxu0 0
        %4749 = vmatpush1.bf16.msra.mxu0 0
        %4750 = vmatprep.mubr.bf16.mxu0 0
        %4751 = vmatmul.mubr.bf16.gmra.mrb[0].mxu0 %v4713
        %v4752 = vpop.f32.mrb[0].mxu0
        %v4753 = vadd.f32 0.0, %v4752
        %v4754 = vpop.f32.mrb[0].mxu0
        %v4755 = vpop.f32.mrb[0].mxu0
        %v4756 = vadd.f32 0.0, %v4755
        %v4757 = vpop.f32.mrb[0].mxu0
        %4758 = vmatprep.mubr.bf16.mxu0 0
        %4759 = vmatmul.mubr.bf16.gmra.mrb[0].mxu0 %v4716
        %v4760 = vpop.f32.mrb[0].mxu0
        %v4761 = vadd.f32 0.0, %v4760
        %v4762 = vpop.f32.mrb[0].mxu0
        %v4763 = vpop.f32.mrb[0].mxu0
        %v4764 = vadd.f32 0.0, %v4763
        %v4765 = vpop.f32.mrb[0].mxu0
        %4766 = vdwg.mxu0
        %v4767 = vpack.c.bf16 %v4756, %v4753
        %v4768 = vpack.c.bf16 %v4764, %v4761
        %s4769 = scalar_lea.vmem %s7, 28
        %v4770 = vld [vmem:[%s4769] sm:$0xf]
        %v4772 = vsel %vm1025, %v4767, 0
        %v4775 = vsel %vm1025, %v4768, 0
        %v4778 = vsel %vm1591, %v4770, 0
        %4780 = vmatprep.subr.bf16.mxu0 0
        %4781 = vmatpush1.bf16.msra.mxu0 %v4778
        %4782 = vmatprep.subr.bf16.mxu0 0
        %4783 = vmatpush1.bf16.msra.mxu0 0
        %4784 = vmatprep.subr.bf16.mxu0 0
        %4785 = vmatpush1.bf16.msra.mxu0 0
        %4786 = vmatprep.subr.bf16.mxu0 0
        %4787 = vmatpush1.bf16.msra.mxu0 0
        %4788 = vmatprep.subr.bf16.mxu0 0
        %4789 = vmatpush1.bf16.msra.mxu0 0
        %4790 = vmatprep.subr.bf16.mxu0 0
        %4791 = vmatpush1.bf16.msra.mxu0 0
        %4792 = vmatprep.subr.bf16.mxu0 0
        %4793 = vmatpush1.bf16.msra.mxu0 0
        %4794 = vmatprep.subr.bf16.mxu0 0
        %4795 = vmatpush1.bf16.msra.mxu0 0
        %4796 = vmatprep.subr.bf16.mxu0 0
        %4797 = vmatpush1.bf16.msra.mxu0 0
        %4798 = vmatprep.subr.bf16.mxu0 0
        %4799 = vmatpush1.bf16.msra.mxu0 0
        %4800 = vmatprep.subr.bf16.mxu0 0
        %4801 = vmatpush1.bf16.msra.mxu0 0
        %4802 = vmatprep.subr.bf16.mxu0 0
        %4803 = vmatpush1.bf16.msra.mxu0 0
        %4804 = vmatprep.subr.bf16.mxu0 0
        %4805 = vmatpush1.bf16.msra.mxu0 0
        %4806 = vmatprep.subr.bf16.mxu0 0
        %4807 = vmatpush1.bf16.msra.mxu0 0
        %4808 = vmatprep.subr.bf16.mxu0 0
        %4809 = vmatpush1.bf16.msra.mxu0 0
        %4810 = vmatprep.subr.bf16.mxu0 0
        %4811 = vmatpush1.bf16.msra.mxu0 0
        %4812 = vmatprep.mubr.bf16.mxu0 0
        %4813 = vmatmul.mubr.bf16.gmra.mrb[0].mxu0 %v4772
        %v4814 = vpop.f32.mrb[0].mxu0
        %v4815 = vadd.f32 0.0, %v4814
        %v4816 = vpop.f32.mrb[0].mxu0
        %v4817 = vpop.f32.mrb[0].mxu0
        %v4818 = vadd.f32 0.0, %v4817
        %v4819 = vpop.f32.mrb[0].mxu0
        %4820 = vmatprep.mubr.bf16.mxu0 0
        %4821 = vmatmul.mubr.bf16.gmra.mrb[0].mxu0 %v4775
        %v4822 = vpop.f32.mrb[0].mxu0
        %v4823 = vadd.f32 0.0, %v4822
        %v4824 = vpop.f32.mrb[0].mxu0
        %v4825 = vpop.f32.mrb[0].mxu0
        %v4826 = vadd.f32 0.0, %v4825
        %v4827 = vpop.f32.mrb[0].mxu0
        %4828 = vdwg.mxu0
        %v4829 = vadd.f32 %v4373, %v4815
        %v4830 = vadd.f32 %v4374, %v4818
        %v4831 = vadd.f32 %v4375, %v4823
        %v4832 = vadd.f32 %v4376, %v4826
        %v4833 = vadd.f32 %v2929, %v4829
        %v4834 = vadd.f32 %v2930, %v4830
        %v4835 = vadd.f32 %v2931, %v4831
        %v4836 = vadd.f32 %v2932, %v4832
        %s4837 = scalar_lea.vmem %s8, 1
        %v4838 = vld [vmem:[%s4837] sm:$0x1]
        %v4840 = vlaneseq
        %v4841 = vshrl.u32 %v4840, 7
        %v4842 = vsub.s32 0, %v4841
        %v4843 = vrot.slane %v4838, %v4842
        %v4845 = vadd.f32 %v4833, %v4843
        %v4846 = vadd.f32 %v4834, %v4843
        %v4847 = vadd.f32 %v4835, %v4843
        %v4848 = vadd.f32 %v4836, %v4843
        %s4849 = scalar_lea.vmem %s9, 1
        %v4850 = vld [vmem:[%s4849] sm:$0x1]
        %s4851 = scalar_lea.vmem %s10, 1
        %v4852 = vld [vmem:[%s4851] sm:$0x1]
        %v4853 = vsel %vm717, %v4845, 0.0
        %4854 = vadd.xlane.f32.xlu0 %v4853
        %v4855 = vpop.xlane.xlu0 %4854
        %v4856 = vsel %vm717, %v4846, 0.0
        %4857 = vadd.xlane.f32.xlu0 %v4856
        %v4858 = vpop.xlane.xlu0 %4857
        %v4859 = vsel %vm717, %v4847, 0.0
        %4860 = vadd.xlane.f32.xlu0 %v4859
        %v4861 = vpop.xlane.xlu0 %4860
        %v4862 = vsel %vm717, %v4848, 0.0
        %4863 = vadd.xlane.f32.xlu0 %v4862
        %v4864 = vpop.xlane.xlu0 %4863
        %v4865 = vmul.f32 %v4855, %v730
        %v4866 = vmul.f32 %v4858, %v730
        %v4867 = vmul.f32 %v4861, %v730
        %v4868 = vmul.f32 %v4864, %v730
        %v4869 = vsub.f32 %v4845, %v4865
        %v4870 = vsub.f32 %v4846, %v4866
        %v4871 = vsub.f32 %v4847, %v4867
        %v4872 = vsub.f32 %v4848, %v4868
        %v4873 = vmul.f32 %v4869, %v4869
        %v4874 = vmul.f32 %v4870, %v4870
        %v4875 = vmul.f32 %v4871, %v4871
        %v4876 = vmul.f32 %v4872, %v4872
        %v4877 = vsel %vm717, %v4873, 0.0
        %4878 = vadd.xlane.f32.xlu0 %v4877
        %v4879 = vpop.xlane.xlu0 %4878
        %v4880 = vsel %vm717, %v4874, 0.0
        %4881 = vadd.xlane.f32.xlu0 %v4880
        %v4882 = vpop.xlane.xlu0 %4881
        %v4883 = vsel %vm717, %v4875, 0.0
        %4884 = vadd.xlane.f32.xlu0 %v4883
        %v4885 = vpop.xlane.xlu0 %4884
        %v4886 = vsel %vm717, %v4876, 0.0
        %4887 = vadd.xlane.f32.xlu0 %v4886
        %v4888 = vpop.xlane.xlu0 %4887
        %v4889 = vmul.f32 %v4879, %v730
        %v4890 = vmul.f32 %v4882, %v730
        %v4891 = vmul.f32 %v4885, %v730
        %v4892 = vmul.f32 %v4888, %v730
        %v4893 = vadd.f32 %v4889, 1e-06
        %v4894 = vadd.f32 %v4890, 1e-06
        %v4895 = vadd.f32 %v4891, 1e-06
        %v4896 = vadd.f32 %v4892, 1e-06
        %v4897 = vrsqrt.pop %v4893
        %v4898 = vrsqrt.pop %v4894
        %v4899 = vrsqrt.pop %v4895
        %v4900 = vrsqrt.pop %v4896
        %v4901 = vmul.f32 %v4869, %v4897
        %v4902 = vmul.f32 %v4870, %v4898
        %v4903 = vmul.f32 %v4871, %v4899
        %v4904 = vmul.f32 %v4872, %v4900
        %v4906 = vlaneseq
        %v4907 = vshrl.u32 %v4906, 7
        %v4908 = vsub.s32 0, %v4907
        %v4909 = vrot.slane %v4850, %v4908
        %v4911 = vmul.f32 %v4901, %v4909
        %v4912 = vmul.f32 %v4902, %v4909
        %v4913 = vmul.f32 %v4903, %v4909
        %v4914 = vmul.f32 %v4904, %v4909
        %v4916 = vlaneseq
        %v4917 = vshrl.u32 %v4916, 7
        %v4918 = vsub.s32 0, %v4917
        %v4919 = vrot.slane %v4852, %v4918
        %v4921 = vadd.f32 %v4911, %v4919
        %v4922 = vadd.f32 %v4912, %v4919
        %v4923 = vadd.f32 %v4913, %v4919
        %v4924 = vadd.f32 %v4914, %v4919
        %s4925 = scalar_lea.vmem %s11, 16
        %v4926 = vld [vmem:[%s4925] sm:$0xf]
        %v4927 = vld [vmem:[%s4925 + $0x4] sm:$0xf]
        %v4928 = vld [vmem:[%s4925 + $0x8] sm:$0xf]
        %v4929 = vld [vmem:[%s4925 + $0xc] sm:$0xf]
        %v4930 = vpack.c.bf16 %v4922, %v4921
        %v4931 = vpack.c.bf16 %v4924, %v4923
        %s4932 = scalar_lea.vmem %s12, 1
        %v4933 = vld [vmem:[%s4932] sm:$0x1]
        %v4935 = vlaneseq
        %v4936 = vshrl.u32 %v4935, 7
        %v4937 = vsub.s32 0, %v4936
        %v4938 = vrot.slane %v4933, %v4937
        %v4944 = vunpack.c.l.b16 %v4926
        %v4945 = vunpack.c.l.b16 %v4927
        %v4946 = vunpack.c.l.b16 %v4928
        %v4947 = vunpack.c.l.b16 %v4929
        %v4948 = vpack.c.b16 %v4945, %v4944
        %v4949 = vpack.c.b16 %v4947, %v4946
        %v4953 = vsel %vm717, %v4930, 0
        %v4956 = vsel %vm717, %v4931, 0
        %4958 = vmatprep.subr.bf16.mxu0 0
        %4959 = vmatpush1.bf16.msra.mxu0 %v4948
        %4960 = vmatprep.subr.bf16.mxu0 0
        %4961 = vmatpush1.bf16.msra.mxu0 %v4949
        %4962 = vmatprep.subr.bf16.mxu0 0
        %4963 = vmatpush1.bf16.msra.mxu0 0
        %4964 = vmatprep.subr.bf16.mxu0 0
        %4965 = vmatpush1.bf16.msra.mxu0 0
        %4966 = vmatprep.subr.bf16.mxu0 0
        %4967 = vmatpush1.bf16.msra.mxu0 0
        %4968 = vmatprep.subr.bf16.mxu0 0
        %4969 = vmatpush1.bf16.msra.mxu0 0
        %4970 = vmatprep.subr.bf16.mxu0 0
        %4971 = vmatpush1.bf16.msra.mxu0 0
        %4972 = vmatprep.subr.bf16.mxu0 0
        %4973 = vmatpush1.bf16.msra.mxu0 0
        %4974 = vmatprep.subr.bf16.mxu0 0
        %4975 = vmatpush1.bf16.msra.mxu0 0
        %4976 = vmatprep.subr.bf16.mxu0 0
        %4977 = vmatpush1.bf16.msra.mxu0 0
        %4978 = vmatprep.subr.bf16.mxu0 0
        %4979 = vmatpush1.bf16.msra.mxu0 0
        %4980 = vmatprep.subr.bf16.mxu0 0
        %4981 = vmatpush1.bf16.msra.mxu0 0
        %4982 = vmatprep.subr.bf16.mxu0 0
        %4983 = vmatpush1.bf16.msra.mxu0 0
        %4984 = vmatprep.subr.bf16.mxu0 0
        %4985 = vmatpush1.bf16.msra.mxu0 0
        %4986 = vmatprep.subr.bf16.mxu0 0
        %4987 = vmatpush1.bf16.msra.mxu0 0
        %4988 = vmatprep.subr.bf16.mxu0 0
        %4989 = vmatpush1.bf16.msra.mxu0 0
        %4990 = vmatprep.mubr.bf16.mxu0 0
        %4991 = vmatmul.mubr.bf16.gmra.mrb[0].mxu0 %v4953
        %v4992 = vpop.f32.mrb[0].mxu0
        %v4993 = vadd.f32 %v4938, %v4992
        %v4994 = vpop.f32.mrb[0].mxu0
        %v4995 = vpop.f32.mrb[0].mxu0
        %v4996 = vadd.f32 %v4938, %v4995
        %v4997 = vpop.f32.mrb[0].mxu0
        %4998 = vmatprep.mubr.bf16.mxu0 0
        %4999 = vmatmul.mubr.bf16.gmra.mrb[0].mxu0 %v4956
        %v5000 = vpop.f32.mrb[0].mxu0
        %v5001 = vadd.f32 %v4938, %v5000
        %v5002 = vpop.f32.mrb[0].mxu0
        %v5003 = vpop.f32.mrb[0].mxu0
        %v5004 = vadd.f32 %v4938, %v5003
        %v5005 = vpop.f32.mrb[0].mxu0
        %5006 = vdwg.mxu0
        %v5007 = vmul.f32 %v4993, 0.5
        %v5008 = vmul.f32 %v4996, 0.5
        %v5009 = vmul.f32 %v5001, 0.5
        %v5010 = vmul.f32 %v5004, 0.5
        %v5011 = vmul.f32 %v4993, 0.70710677
        %v5012 = vmul.f32 %v4996, 0.70710677
        %v5013 = vmul.f32 %v5001, 0.70710677
        %v5014 = vmul.f32 %v5004, 0.70710677
        %v5015 = verf.f32.pop %v5011
        %v5016 = verf.f32.pop %v5012
        %v5017 = verf.f32.pop %v5013
        %v5018 = verf.f32.pop %v5014
        %v5019 = vadd.f32 %v5015, 1.0
        %v5020 = vadd.f32 %v5016, 1.0
        %v5021 = vadd.f32 %v5017, 1.0
        %v5022 = vadd.f32 %v5018, 1.0
        %v5023 = vmul.f32 %v5007, %v5019
        %v5024 = vmul.f32 %v5008, %v5020
        %v5025 = vmul.f32 %v5009, %v5021
        %v5026 = vmul.f32 %v5010, %v5022
        %s5027 = scalar_lea.vmem %s13, 64
        %v5028 = vld [vmem:[%s5027] sm:$0xf]
        %v5029 = vld [vmem:[%s5027 + $0x4] sm:$0xf]
        %v5030 = vld [vmem:[%s5027 + $0x8] sm:$0xf]
        %v5031 = vld [vmem:[%s5027 + $0xc] sm:$0xf]
        %v5032 = vld [vmem:[%s5027 + $0x10] sm:$0xf]
        %v5033 = vld [vmem:[%s5027 + $0x14] sm:$0xf]
        %v5034 = vld [vmem:[%s5027 + $0x18] sm:$0xf]
        %v5035 = vld [vmem:[%s5027 + $0x1c] sm:$0xf]
        %v5036 = vld [vmem:[%s5027 + $0x20] sm:$0xf]
        %v5037 = vld [vmem:[%s5027 + $0x24] sm:$0xf]
        %v5038 = vld [vmem:[%s5027 + $0x28] sm:$0xf]
        %v5039 = vld [vmem:[%s5027 + $0x2c] sm:$0xf]
        %v5040 = vld [vmem:[%s5027 + $0x30] sm:$0xf]
        %v5041 = vld [vmem:[%s5027 + $0x34] sm:$0xf]
        %v5042 = vld [vmem:[%s5027 + $0x38] sm:$0xf]
        %v5043 = vld [vmem:[%s5027 + $0x3c] sm:$0xf]
        %v5044 = vpack.c.bf16 %v5024, %v5023
        %v5045 = vpack.c.bf16 %v5026, %v5025
        %v5062 = vunpack.c.l.b16 %v5028
        %v5063 = vunpack.c.l.b16 %v5029
        %v5064 = vunpack.c.l.b16 %v5030
        %v5065 = vunpack.c.l.b16 %v5031
        %v5066 = vunpack.c.l.b16 %v5032
        %v5067 = vunpack.c.l.b16 %v5033
        %v5068 = vunpack.c.l.b16 %v5034
        %v5069 = vunpack.c.l.b16 %v5035
        %v5070 = vunpack.c.l.b16 %v5036
        %v5071 = vunpack.c.l.b16 %v5037
        %v5072 = vunpack.c.l.b16 %v5038
        %v5073 = vunpack.c.l.b16 %v5039
        %v5074 = vunpack.c.l.b16 %v5040
        %v5075 = vunpack.c.l.b16 %v5041
        %v5076 = vunpack.c.l.b16 %v5042
        %v5077 = vunpack.c.l.b16 %v5043
        %v5078 = vpack.c.b16 %v5063, %v5062
        %v5079 = vpack.c.b16 %v5065, %v5064
        %v5080 = vpack.c.b16 %v5067, %v5066
        %v5081 = vpack.c.b16 %v5069, %v5068
        %v5082 = vpack.c.b16 %v5071, %v5070
        %v5083 = vpack.c.b16 %v5073, %v5072
        %v5084 = vpack.c.b16 %v5075, %v5074
        %v5085 = vpack.c.b16 %v5077, %v5076
        %5094 = vmatprep.subr.bf16.mxu0 0
        %5095 = vmatpush1.bf16.msra.mxu0 %v5078
        %5096 = vmatprep.subr.bf16.mxu0 0
        %5097 = vmatpush1.bf16.msra.mxu0 %v5079
        %5098 = vmatprep.subr.bf16.mxu0 0
        %5099 = vmatpush1.bf16.msra.mxu0 %v5080
        %5100 = vmatprep.subr.bf16.mxu0 0
        %5101 = vmatpush1.bf16.msra.mxu0 %v5081
        %5102 = vmatprep.subr.bf16.mxu0 0
        %5103 = vmatpush1.bf16.msra.mxu0 %v5082
        %5104 = vmatprep.subr.bf16.mxu0 0
        %5105 = vmatpush1.bf16.msra.mxu0 %v5083
        %5106 = vmatprep.subr.bf16.mxu0 0
        %5107 = vmatpush1.bf16.msra.mxu0 %v5084
        %5108 = vmatprep.subr.bf16.mxu0 0
        %5109 = vmatpush1.bf16.msra.mxu0 %v5085
        %5110 = vmatprep.subr.bf16.mxu0 0
        %5111 = vmatpush1.bf16.msra.mxu0 0
        %5112 = vmatprep.subr.bf16.mxu0 0
        %5113 = vmatpush1.bf16.msra.mxu0 0
        %5114 = vmatprep.subr.bf16.mxu0 0
        %5115 = vmatpush1.bf16.msra.mxu0 0
        %5116 = vmatprep.subr.bf16.mxu0 0
        %5117 = vmatpush1.bf16.msra.mxu0 0
        %5118 = vmatprep.subr.bf16.mxu0 0
        %5119 = vmatpush1.bf16.msra.mxu0 0
        %5120 = vmatprep.subr.bf16.mxu0 0
        %5121 = vmatpush1.bf16.msra.mxu0 0
        %5122 = vmatprep.subr.bf16.mxu0 0
        %5123 = vmatpush1.bf16.msra.mxu0 0
        %5124 = vmatprep.subr.bf16.mxu0 0
        %5125 = vmatpush1.bf16.msra.mxu0 0
        %5126 = vmatprep.mubr.bf16.mxu0 0
        %5127 = vmatmul.mubr.bf16.gmra.mrb[0].mxu0 %v5044
        %v5128 = vpop.f32.mrb[0].mxu0
        %v5129 = vadd.f32 0.0, %v5128
        %v5130 = vpop.f32.mrb[0].mxu0
        %v5131 = vpop.f32.mrb[0].mxu0
        %v5132 = vpop.f32.mrb[0].mxu0
        %5133 = vmatprep.mubr.bf16.mxu0 0
        %5134 = vmatmul.mubr.bf16.gmra.mrb[0].mxu0 %v5045
        %v5135 = vpop.f32.mrb[0].mxu0
        %v5136 = vpop.f32.mrb[0].mxu0
        %v5137 = vpop.f32.mrb[0].mxu0
        %v5138 = vpop.f32.mrb[0].mxu0
        %5139 = vdwg.mxu0
        %v5140 = vadd.f32 %v4845, %v5129
        %s5141 = scalar_lea.vmem %s14, 1
        %v5142 = vld [vmem:[%s5141] sm:$0x1]
        %v5144 = vlaneseq
        %v5145 = vshrl.u32 %v5144, 7
        %v5146 = vsub.s32 0, %v5145
        %v5147 = vrot.slane %v5142, %v5146
        %v5149 = vadd.f32 %v5140, %v5147
        %v5150 = vld [vmem:[%s15] sm:$0x1]
        %v5151 = vld [vmem:[%s16] sm:$0x1]
        %vm5152 = vcmask 253952
        %v5153 = vsel %vm5152, %v5149, 0.0
        %5154 = vadd.xlane.f32.xlu0 %v5153
        %v5155 = vpop.xlane.xlu0 %5154
        %v5156 = vmul.f32 %v5155, %v730
        %v5157 = vsub.f32 %v5149, %v5156
        %v5158 = vmul.f32 %v5157, %v5157
        %v5159 = vsel %vm5152, %v5158, 0.0
        %5160 = vadd.xlane.f32.xlu0 %v5159
        %v5161 = vpop.xlane.xlu0 %5160
        %v5162 = vmul.f32 %v5161, %v730
        %v5163 = vadd.f32 %v5162, 1e-06
        %v5164 = vrsqrt.pop %v5163
        %v5165 = vmul.f32 %v5157, %v5164
        %v5166 = vmul.f32 %v5165, %v5150
        %v5167 = vadd.f32 %v5166, %v5151
        %v5168 = vld [vmem:[%s17] sm:$0xf]
        %v5169 = vld [vmem:[%s17 + $0x4] sm:$0xf]
        %v5170 = vld [vmem:[%s17 + $0x8] sm:$0xf]
        %v5171 = vld [vmem:[%s17 + $0xc] sm:$0xf]
        %v5172 = vpack.c.bf16 %v5167, %v5167
        %v5173 = vld [vmem:[%s18] sm:$0x1]
        %v5178 = vunpack.c.l.b16 %v5168
        %v5179 = vunpack.c.l.b16 %v5169
        %v5180 = vunpack.c.l.b16 %v5170
        %v5181 = vunpack.c.l.b16 %v5171
        %v5182 = vpack.c.b16 %v5179, %v5178
        %v5183 = vpack.c.b16 %v5181, %v5180
        %v5187 = vsel %vm717, %v5172, 0
        %5189 = vmatprep.subr.bf16.mxu0 0
        %5190 = vmatpush1.bf16.msra.mxu0 %v5182
        %5191 = vmatprep.subr.bf16.mxu0 0
        %5192 = vmatpush1.bf16.msra.mxu0 %v5183
        %5193 = vmatprep.subr.bf16.mxu0 0
        %5194 = vmatpush1.bf16.msra.mxu0 0
        %5195 = vmatprep.subr.bf16.mxu0 0
        %5196 = vmatpush1.bf16.msra.mxu0 0
        %5197 = vmatprep.subr.bf16.mxu0 0
        %5198 = vmatpush1.bf16.msra.mxu0 0
        %5199 = vmatprep.subr.bf16.mxu0 0
        %5200 = vmatpush1.bf16.msra.mxu0 0
        %5201 = vmatprep.subr.bf16.mxu0 0
        %5202 = vmatpush1.bf16.msra.mxu0 0
        %5203 = vmatprep.subr.bf16.mxu0 0
        %5204 = vmatpush1.bf16.msra.mxu0 0
        %5205 = vmatprep.subr.bf16.mxu0 0
        %5206 = vmatpush1.bf16.msra.mxu0 0
        %5207 = vmatprep.subr.bf16.mxu0 0
        %5208 = vmatpush1.bf16.msra.mxu0 0
        %5209 = vmatprep.subr.bf16.mxu0 0
        %5210 = vmatpush1.bf16.msra.mxu0 0
        %5211 = vmatprep.subr.bf16.mxu0 0
        %5212 = vmatpush1.bf16.msra.mxu0 0
        %5213 = vmatprep.subr.bf16.mxu0 0
        %5214 = vmatpush1.bf16.msra.mxu0 0
        %5215 = vmatprep.subr.bf16.mxu0 0
        %5216 = vmatpush1.bf16.msra.mxu0 0
        %5217 = vmatprep.subr.bf16.mxu0 0
        %5218 = vmatpush1.bf16.msra.mxu0 0
        %5219 = vmatprep.subr.bf16.mxu0 0
        %5220 = vmatpush1.bf16.msra.mxu0 0
        %5221 = vmatprep.mubr.bf16.mxu0 0
        %5222 = vmatmul.mubr.bf16.gmra.mrb[0].mxu0 %v5187
        %v5223 = vpop.f32.mrb[0].mxu0
        %v5224 = vadd.f32 %v5173, %v5223
        %v5225 = vpop.f32.mrb[0].mxu0
        %v5226 = vpop.f32.mrb[0].mxu0
        %v5227 = vpop.f32.mrb[0].mxu0
        %5228 = vdwg.mxu0
        %5229 = vst [vmem:[%s594] sm:$0x1] %v5224
        %s5230 = sand.u32 %s445, 1
        %s5231 = scalar_lea.sflag [#allocation3], %s5230
        %s5232 = sand.u32 %s445, 1
        %s5233 = scalar_lea.vmem [#allocation2], %s5232
        // Predicated region
        $region97: #{vit_forward.1} parent=95 // pred_check
          %p5234 = pneg %p455
        $region98: #{vit_forward.1} parent=95 // pred_check_branch
          %5236 = sbr.rel (%p5234) target = $region100
        $region99: #{vit_forward.1} parent=95 // pred_region
          %s5238 = ssub.s32 16, 16
          %5239 = vsyncadd %s5231, %s5238
          %s5240 = smul.addr %s33, 16
          %s5241 = scalar_lea.hbm %s19, %s5240
          %s5243 = sshll.u32 %s5233, 4
          %s5244 = int_to_ptr.vmem [resolvable:$true] %s5243
          %5246 = dma.vmem_to_hbm [thread:$0]  %s5244, 16, %s5241, %s5231
        $region100: #{vit_forward.1} parent=95 // pred_fallthru
          _
      $region96: #{vit_forward.1} parent=5 // pred_fallthru
        _
      %p5247 = scmp.le.s32.totalorder 2, %s28
      // Predicated region
      $region101: #{vit_forward.1} parent=5 // pred_check
        %p5248 = pneg %p5247
      $region102: #{vit_forward.1} parent=5 // pred_check_branch
        %5250 = sbr.rel (%p5248) target = $region104
      $region103: #{vit_forward.1} parent=5 // pred_region
        %s5251 = ssub.s32 %s28, 2
        // Predicated region
        $region105: #{vit_forward.1} parent=103 // pred_check
          %p5252 = pneg %p461
        $region106: #{vit_forward.1} parent=103 // pred_check_branch
          %5254 = sbr.rel (%p5252) target = $region108
        $region107: #{vit_forward.1} parent=103 // pred_region
          %s5255 = sand.u32 %s446, 1
          %s5256 = scalar_lea.sflag [#allocation3], %s5255
          %s5257 = sand.u32 %s446, 1
          %s5258 = scalar_lea.vmem [#allocation2], %s5257
          %5259 = dma.done %s5256, 16
        $region108: #{vit_forward.1} parent=103 // pred_fallthru
          _
      $region104: #{vit_forward.1} parent=5 // pred_fallthru
        _
    $region6: #{vit_forward.1} parent=1 // loop_footer
      %s32 = sadd.s32 1, %s28
    $region7: #{vit_forward.1} parent=1 // loop_footer_branch
      %27 = sbr.rel target = $region3
    $region8: #{vit_forward.1} parent=1 // loop_exit
      _
    %5260 = vsyncpa [#allocation3], 1
    %s5261 = scalar_lea.sflag [#allocation3], 1
    %5262 = vsyncpa %s5261, 1

</llo_original>
